<compile_context>
chip_gen: v5e
topology: v5e:2x2
jax: 0.10.0
libtpu: 0.0.40
codegen_flags: <defaults>
</compile_context>

<pallas_src>
import functools
from math import sqrt

import numpy as np
import jax
import jax.numpy as jnp
from jax.experimental import pallas as pl
from jax.experimental.pallas import tpu as pltpu


# ----------------------------------------------------------------------------
# The single fused kernel
# ----------------------------------------------------------------------------
def _net_kernel(patches_ref, w1_ref, b1_ref,
                sel2_ref, w2_ref, b2_ref,
                sel3_ref, w3_ref, b3_ref,
                fw1_ref, fb1_ref, fw2_ref, fb2_ref,
                out_ref, a1_ref, a2_ref, *, batch):
    f32 = jnp.float32

    # ---- conv1 (+ReLU): im2col patches (B*16*16, 9) @ (9, 32) --------------
    y1 = jnp.dot(patches_ref[...], w1_ref[...], preferred_element_type=f32)
    y1 = jnp.maximum(y1 + b1_ref[...], 0.0)                    # (B*256, 32)

    # Scatter rows into the zero-padded flat plane a1: (B*18*18, 32),
    # flat index = (n*18 + h)*18 + w for padded coords (h, w).
    a1_ref[...] = jnp.zeros_like(a1_ref)
    for n in range(batch):
        for i in range(16):
            src = y1[(n * 16 + i) * 16:(n * 16 + i) * 16 + 16, :]
            d0 = (n * 18 + i + 1) * 18 + 1
            a1_ref[d0:d0 + 16, :] = src

    # ---- conv2 (+ReLU): 9 taps, each = gather matmul + channel matmul ------
    acc2 = jnp.broadcast_to(b2_ref[...], (batch * 8 * 8, 64))
    sel2w = sel2_ref.shape[1]
    for dy in range(3):
        for dx in range(3):
            off = dy * 18 + dx                                  # tap shift
            win = a1_ref[off:off + sel2w, :]                    # (sel2w, 32)
            dec = jnp.dot(sel2_ref[...], win,
                          preferred_element_type=f32)           # (B*64, 32)
            acc2 = acc2 + jnp.dot(dec, w2_ref[dy * 3 + dx],
                                  preferred_element_type=f32)   # (B*64, 64)
    y2 = jnp.maximum(acc2, 0.0)                                 # rows (n,i,j)

    # Padded flat plane a2: (B*10*10, 64)
    a2_ref[...] = jnp.zeros_like(a2_ref)
    for n in range(batch):
        for i in range(8):
            src = y2[(n * 8 + i) * 8:(n * 8 + i) * 8 + 8, :]
            d0 = (n * 10 + i + 1) * 10 + 1
            a2_ref[d0:d0 + 8, :] = src

    # ---- conv3 (+ReLU): output rows ordered (spatial p, batch n) -----------
    acc3 = jnp.broadcast_to(b3_ref[...], (16 * batch, 128))
    sel3w = sel3_ref.shape[1]
    for dy in range(3):
        for dx in range(3):
            off = dy * 10 + dx
            win = a2_ref[off:off + sel3w, :]                    # (sel3w, 64)
            dec = jnp.dot(sel3_ref[...], win,
                          preferred_element_type=f32)           # (16*B, 64)
            acc3 = acc3 + jnp.dot(dec, w3_ref[dy * 3 + dx],
                                  preferred_element_type=f32)   # (16*B, 128)
    y3 = jnp.maximum(acc3, 0.0)                                 # rows = p*B + n

    # ---- fc1 (+ReLU): accumulate over the 16 spatial positions -------------
    # fc1 weight rows were permuted at init so block p multiplies the
    # (B, 128)-channel slab of spatial position p -> no flatten / transpose.
    h = jnp.broadcast_to(fb1_ref[...], (batch, 128))
    for p in range(16):
        h = h + jnp.dot(y3[p * batch:(p + 1) * batch, :],
                        fw1_ref[p * 128:(p + 1) * 128, :],
                        preferred_element_type=f32)
    h = jnp.maximum(h, 0.0)                                     # (B, 128)

    # ---- fc2 + log_softmax --------------------------------------------------
    logits = jnp.dot(h, fw2_ref[...], preferred_element_type=f32) + fb2_ref[...]
    m = jnp.max(logits, axis=-1, keepdims=True)
    z = logits - m
    lse = jnp.log(jnp.sum(jnp.exp(z), axis=-1, keepdims=True))
    out_ref[...] = (z - lse).astype(out_ref.dtype)


# ----------------------------------------------------------------------------
# Wrapper: one pallas_call for the whole network
# ----------------------------------------------------------------------------
def net_forward(kparams, x_nchw):
    """Forward pass.  x_nchw: (B, 1, 32, 32) f32 -> (B, 10) log-probs."""
    batch = x_nchw.shape[0]
    assert x_nchw.shape[1:] == (1, 32, 32), x_nchw.shape

    # im2col for the *input layer only* (tiny; 9 strided slices of the image).
    xp = jnp.pad(x_nchw[:, 0, :, :], ((0, 0), (1, 1), (1, 1)))      # (B,34,34)
    cols = [xp[:, dy:dy + 32:2, dx:dx + 32:2]
            for dy in range(3) for dx in range(3)]                  # 9x(B,16,16)
    patches = jnp.stack(cols, axis=-1).reshape(batch * 256, 9)

    kernel = functools.partial(_net_kernel, batch=batch)
    vmem = pl.BlockSpec(memory_space=pltpu.MemorySpace.VMEM)
    return pl.pallas_call(
        kernel,
        out_shape=jax.ShapeDtypeStruct((batch, 10), jnp.float32),
        in_specs=[vmem] * 13,
        out_specs=vmem,
        scratch_shapes=[
            pltpu.VMEM((batch * 18 * 18, 32), jnp.float32),  # padded conv1 out
            pltpu.VMEM((batch * 10 * 10, 64), jnp.float32),  # padded conv2 out
        ],
    )(patches,
      kparams["w1"], kparams["b1"],
      kparams["sel2"], kparams["w2"], kparams["b2"],
      kparams["sel3"], kparams["w3"], kparams["b3"],
      kparams["fw1"], kparams["fb1"], kparams["fw2"], kparams["fb2"])


# ----------------------------------------------------------------------------
# One-time parameter layout prep (hoisted out of the hot path)
# ----------------------------------------------------------------------------
def _conv_weight_taps(w):
    """(Cout, Cin, 3, 3) torch layout -> (9, Cin, Cout), tap index t = dy*3+dx."""
    cout, cin = w.shape[0], w.shape[1]
    return jnp.transpose(w, (2, 3, 1, 0)).reshape(9, cin, cout)


def _selection_matrix(batch, hp, ho, width, spatial_major):
    """0/1 gather matrix: row q holds a 1 at flat padded-plane index
    (n*hp + 2i)*hp + 2j  (the tap-(0,0) source of output pixel (n,i,j));
    the per-tap offset dy*hp+dx is applied by shifting the plane slice."""
    sel = np.zeros((batch * ho * ho, width), np.float32)
    for n in range(batch):
        for i in range(ho):
            for j in range(ho):
                q = (i * ho + j) * batch + n if spatial_major \
                    else (n * ho + i) * ho + j
                sel[q, (n * hp + 2 * i) * hp + 2 * j] = 1.0
    return jnp.asarray(sel)


def prepare_params(params, batch):
    w1 = _conv_weight_taps(params["conv1_w"]).reshape(9, 32)   # Cin == 1
    w2 = _conv_weight_taps(params["conv2_w"])                  # (9, 32, 64)
    w3 = _conv_weight_taps(params["conv3_w"])                  # (9, 64, 128)

    # Permute fc1 rows: torch flatten index c*16 + p  ->  kernel index p*128 + c
    p_idx = np.arange(16)
    c_idx = np.arange(128)
    perm = (c_idx[None, :] * 16 + p_idx[:, None]).reshape(-1)
    fw1 = params["fc1_w"][perm, :]

    return dict(
        w1=w1, b1=params["conv1_b"].reshape(1, 32),
        w2=w2, b2=params["conv2_b"].reshape(1, 64),
        w3=w3, b3=params["conv3_b"].reshape(1, 128),
        fw1=fw1, fb1=params["fc1_b"].reshape(1, 128),
        fw2=params["fc2_w"], fb2=params["fc2_b"].reshape(1, 10),
        sel2=_selection_matrix(batch, hp=18, ho=8,
                               width=batch * 324 - 40, spatial_major=False),
        sel3=_selection_matrix(batch, hp=10, ho=4,
                               width=batch * 100 - 24, spatial_major=True),
    )


# ----------------------------------------------------------------------------
# Parameter init (deterministic, PyTorch-style uniform(-1/sqrt(fan_in), ...))
# ----------------------------------------------------------------------------
def init_params(key):
    ks = jax.random.split(key, 10)

    def conv_param(kw_, kb_, cout, cin, k):
        bound = 1.0 / sqrt(cin * k * k)
        w = jax.random.uniform(kw_, (cout, cin, k, k), jnp.float32, -bound, bound)
        b = jax.random.uniform(kb_, (cout,), jnp.float32, -bound, bound)
        return w, b

    def fc_param(kw_, kb_, fin, fout):
        bound = 1.0 / sqrt(fin)
        w = jax.random.uniform(kw_, (fin, fout), jnp.float32, -bound, bound)
        b = jax.random.uniform(kb_, (fout,), jnp.float32, -bound, bound)
        return w, b

    c1w, c1b = conv_param(ks[0], ks[1], 32, 1, 3)
    c2w, c2b = conv_param(ks[2], ks[3], 64, 32, 3)
    c3w, c3b = conv_param(ks[4], ks[5], 128, 64, 3)
    f1w, f1b = fc_param(ks[6], ks[7], 2048, 128)
    f2w, f2b = fc_param(ks[8], ks[9], 128, 10)
    return dict(conv1_w=c1w, conv1_b=c1b, conv2_w=c2w, conv2_b=c2b,
                conv3_w=c3w, conv3_b=c3b, fc1_w=f1w, fc1_b=f1b,
                fc2_w=f2w, fc2_b=f2b)


# ----------------------------------------------------------------------------
# Pure-JAX (XLA) reference of the exact PyTorch forward, for verification
# ----------------------------------------------------------------------------
def reference_forward(params, x):
    hi = jax.lax.Precision.HIGHEST

    def conv(z, w, b):
        z = jax.lax.conv_general_dilated(
            z, w, window_strides=(2, 2), padding=((1, 1), (1, 1)),
            dimension_numbers=("NCHW", "OIHW", "NCHW"), precision=hi)
        return jax.nn.relu(z + b[None, :, None, None])

    z = conv(x, params["conv1_w"], params["conv1_b"])
    z = conv(z, params["conv2_w"], params["conv2_b"])
    z = conv(z, params["conv3_w"], params["conv3_b"])
    z = z.reshape(z.shape[0], -1)                           # torch.flatten(x, 1)
    z = jax.nn.relu(jnp.dot(z, params["fc1_w"], precision=hi) + params["fc1_b"])
    z = jnp.dot(z, params["fc2_w"], precision=hi) + params["fc2_b"]
    return jax.nn.log_softmax(z, axis=-1)


if __name__ == "__main__":
    key = jax.random.PRNGKey(0)
    pkey, xkey = jax.random.split(key)
    params = init_params(pkey)

    batch = 2
    # Input must be 1-channel 32x32 so that 128*4*4 == 2048 matches fc1.
    x = jax.random.normal(xkey, (batch, 1, 32, 32), dtype=jnp.float32)

    kparams = prepare_params(params, batch)
    out = jax.block_until_ready(jax.jit(net_forward)(kparams, x))

    assert out.shape == (batch, 10), out.shape
    assert out.dtype == jnp.float32
    # rows are valid log-probabilities
    assert bool(jnp.all(jnp.abs(jnp.sum(jnp.exp(out), axis=1) - 1.0) < 1e-4))
    # matches the pure-JAX reference of the PyTorch module
    ref = jax.block_until_ready(reference_forward(params, x))
    assert bool(jnp.allclose(out, ref, atol=5e-2, rtol=5e-2)), \
        float(jnp.max(jnp.abs(out - ref)))
    print("KERNEL_OK")
</pallas_src>

<mosaic_0001>
module attributes {stable_mosaic.version = 11 : i64} {
  func.func @_net_kernel(%arg0: memref<512x9xf32, #tpu.memory_space<vmem>>, %arg1: memref<9x32xf32, #tpu.memory_space<vmem>>, %arg2: memref<1x32xf32, #tpu.memory_space<vmem>>, %arg3: memref<128x608xf32, #tpu.memory_space<vmem>>, %arg4: memref<9x32x64xf32, #tpu.memory_space<vmem>>, %arg5: memref<1x64xf32, #tpu.memory_space<vmem>>, %arg6: memref<32x176xf32, #tpu.memory_space<vmem>>, %arg7: memref<9x64x128xf32, #tpu.memory_space<vmem>>, %arg8: memref<1x128xf32, #tpu.memory_space<vmem>>, %arg9: memref<2048x128xf32, #tpu.memory_space<vmem>>, %arg10: memref<1x128xf32, #tpu.memory_space<vmem>>, %arg11: memref<128x10xf32, #tpu.memory_space<vmem>>, %arg12: memref<1x10xf32, #tpu.memory_space<vmem>>, %arg13: memref<2x10xf32, #tpu.memory_space<vmem>>, %arg14: memref<648x32xf32, #tpu.memory_space<vmem>>, %arg15: memref<200x64xf32, #tpu.memory_space<vmem>>) attributes {dimension_semantics = [], scalar_prefetch = 0 : i64, scratch_operands = 2 : i64, tpu.core_type = #tpu.core_type<tc>} {
    %c0 = arith.constant 0 : index
    %c0_0 = arith.constant 0 : index
    %0 = vector.load %arg0[%c0, %c0_0] : memref<512x9xf32, #tpu.memory_space<vmem>>, vector<512x9xf32>
    %c0_1 = arith.constant 0 : index
    %c0_2 = arith.constant 0 : index
    %1 = vector.load %arg1[%c0_1, %c0_2] : memref<9x32xf32, #tpu.memory_space<vmem>>, vector<9x32xf32>
    %cst = arith.constant dense<0.000000e+00> : vector<512x32xf32>
    %2 = tpu.matmul %0, %1, %cst {dimension_numbers = #tpu.dot_dimension_numbers<[1], [0], [0], [1], [0, 0, 1, 1], [], []>} : vector<512x9xf32>, vector<9x32xf32>, vector<512x32xf32> -> vector<512x32xf32>
    %c0_3 = arith.constant 0 : index
    %c0_4 = arith.constant 0 : index
    %3 = vector.load %arg2[%c0_3, %c0_4] : memref<1x32xf32, #tpu.memory_space<vmem>>, vector<1x32xf32>
    %4 = vector.broadcast %3 : vector<1x32xf32> to vector<512x32xf32>
    %5 = arith.addf %2, %4 : vector<512x32xf32>
    %cst_5 = arith.constant 0.000000e+00 : f32
    %6 = vector.broadcast %cst_5 : f32 to vector<512x32xf32>
    %7 = arith.maximumf %5, %6 : vector<512x32xf32>
    %cst_6 = arith.constant 0.000000e+00 : f32
    %8 = vector.broadcast %cst_6 : f32 to vector<648x32xf32>
    %c0_7 = arith.constant 0 : index
    %c0_8 = arith.constant 0 : index
    %9 = vector.load %arg14[%c0_7, %c0_8] : memref<648x32xf32, #tpu.memory_space<vmem>>, vector<648x32xf32>
    tpu.vector_store %arg14[%c0_7, %c0_8], %8 {strides = array<i32>} : memref<648x32xf32, #tpu.memory_space<vmem>>, vector<648x32xf32>,
    %10 = vector.extract_strided_slice %7 {offsets = [0, 0], sizes = [16, 32], strides = [1, 1]} : vector<512x32xf32> to vector<16x32xf32>
    %c19 = arith.constant 19 : index
    %c0_9 = arith.constant 0 : index
    %11 = vector.load %arg14[%c19, %c0_9] : memref<648x32xf32, #tpu.memory_space<vmem>>, vector<16x32xf32>
    tpu.vector_store %arg14[%c19, %c0_9], %10 {strides = array<i32>} : memref<648x32xf32, #tpu.memory_space<vmem>>, vector<16x32xf32>,
    %12 = vector.extract_strided_slice %7 {offsets = [16, 0], sizes = [16, 32], strides = [1, 1]} : vector<512x32xf32> to vector<16x32xf32>
    %c37 = arith.constant 37 : index
    %c0_10 = arith.constant 0 : index
    %13 = vector.load %arg14[%c37, %c0_10] : memref<648x32xf32, #tpu.memory_space<vmem>>, vector<16x32xf32>
    tpu.vector_store %arg14[%c37, %c0_10], %12 {strides = array<i32>} : memref<648x32xf32, #tpu.memory_space<vmem>>, vector<16x32xf32>,
    %14 = vector.extract_strided_slice %7 {offsets = [32, 0], sizes = [16, 32], strides = [1, 1]} : vector<512x32xf32> to vector<16x32xf32>
    %c55 = arith.constant 55 : index
    %c0_11 = arith.constant 0 : index
    %15 = vector.load %arg14[%c55, %c0_11] : memref<648x32xf32, #tpu.memory_space<vmem>>, vector<16x32xf32>
    tpu.vector_store %arg14[%c55, %c0_11], %14 {strides = array<i32>} : memref<648x32xf32, #tpu.memory_space<vmem>>, vector<16x32xf32>,
    %16 = vector.extract_strided_slice %7 {offsets = [48, 0], sizes = [16, 32], strides = [1, 1]} : vector<512x32xf32> to vector<16x32xf32>
    %c73 = arith.constant 73 : index
    %c0_12 = arith.constant 0 : index
    %17 = vector.load %arg14[%c73, %c0_12] : memref<648x32xf32, #tpu.memory_space<vmem>>, vector<16x32xf32>
    tpu.vector_store %arg14[%c73, %c0_12], %16 {strides = array<i32>} : memref<648x32xf32, #tpu.memory_space<vmem>>, vector<16x32xf32>,
    %18 = vector.extract_strided_slice %7 {offsets = [64, 0], sizes = [16, 32], strides = [1, 1]} : vector<512x32xf32> to vector<16x32xf32>
    %c91 = arith.constant 91 : index
    %c0_13 = arith.constant 0 : index
    %19 = vector.load %arg14[%c91, %c0_13] : memref<648x32xf32, #tpu.memory_space<vmem>>, vector<16x32xf32>
    tpu.vector_store %arg14[%c91, %c0_13], %18 {strides = array<i32>} : memref<648x32xf32, #tpu.memory_space<vmem>>, vector<16x32xf32>,
    %20 = vector.extract_strided_slice %7 {offsets = [80, 0], sizes = [16, 32], strides = [1, 1]} : vector<512x32xf32> to vector<16x32xf32>
    %c109 = arith.constant 109 : index
    %c0_14 = arith.constant 0 : index
    %21 = vector.load %arg14[%c109, %c0_14] : memref<648x32xf32, #tpu.memory_space<vmem>>, vector<16x32xf32>
    tpu.vector_store %arg14[%c109, %c0_14], %20 {strides = array<i32>} : memref<648x32xf32, #tpu.memory_space<vmem>>, vector<16x32xf32>,
    %22 = vector.extract_strided_slice %7 {offsets = [96, 0], sizes = [16, 32], strides = [1, 1]} : vector<512x32xf32> to vector<16x32xf32>
    %c127 = arith.constant 127 : index
    %c0_15 = arith.constant 0 : index
    %23 = vector.load %arg14[%c127, %c0_15] : memref<648x32xf32, #tpu.memory_space<vmem>>, vector<16x32xf32>
    tpu.vector_store %arg14[%c127, %c0_15], %22 {strides = array<i32>} : memref<648x32xf32, #tpu.memory_space<vmem>>, vector<16x32xf32>,
    %24 = vector.extract_strided_slice %7 {offsets = [112, 0], sizes = [16, 32], strides = [1, 1]} : vector<512x32xf32> to vector<16x32xf32>
    %c145 = arith.constant 145 : index
    %c0_16 = arith.constant 0 : index
    %25 = vector.load %arg14[%c145, %c0_16] : memref<648x32xf32, #tpu.memory_space<vmem>>, vector<16x32xf32>
    tpu.vector_store %arg14[%c145, %c0_16], %24 {strides = array<i32>} : memref<648x32xf32, #tpu.memory_space<vmem>>, vector<16x32xf32>,
    %26 = vector.extract_strided_slice %7 {offsets = [128, 0], sizes = [16, 32], strides = [1, 1]} : vector<512x32xf32> to vector<16x32xf32>
    %c163 = arith.constant 163 : index
    %c0_17 = arith.constant 0 : index
    %27 = vector.load %arg14[%c163, %c0_17] : memref<648x32xf32, #tpu.memory_space<vmem>>, vector<16x32xf32>
    tpu.vector_store %arg14[%c163, %c0_17], %26 {strides = array<i32>} : memref<648x32xf32, #tpu.memory_space<vmem>>, vector<16x32xf32>,
    %28 = vector.extract_strided_slice %7 {offsets = [144, 0], sizes = [16, 32], strides = [1, 1]} : vector<512x32xf32> to vector<16x32xf32>
    %c181 = arith.constant 181 : index
    %c0_18 = arith.constant 0 : index
    %29 = vector.load %arg14[%c181, %c0_18] : memref<648x32xf32, #tpu.memory_space<vmem>>, vector<16x32xf32>
    tpu.vector_store %arg14[%c181, %c0_18], %28 {strides = array<i32>} : memref<648x32xf32, #tpu.memory_space<vmem>>, vector<16x32xf32>,
    %30 = vector.extract_strided_slice %7 {offsets = [160, 0], sizes = [16, 32], strides = [1, 1]} : vector<512x32xf32> to vector<16x32xf32>
    %c199 = arith.constant 199 : index
    %c0_19 = arith.constant 0 : index
    %31 = vector.load %arg14[%c199, %c0_19] : memref<648x32xf32, #tpu.memory_space<vmem>>, vector<16x32xf32>
    tpu.vector_store %arg14[%c199, %c0_19], %30 {strides = array<i32>} : memref<648x32xf32, #tpu.memory_space<vmem>>, vector<16x32xf32>,
    %32 = vector.extract_strided_slice %7 {offsets = [176, 0], sizes = [16, 32], strides = [1, 1]} : vector<512x32xf32> to vector<16x32xf32>
    %c217 = arith.constant 217 : index
    %c0_20 = arith.constant 0 : index
    %33 = vector.load %arg14[%c217, %c0_20] : memref<648x32xf32, #tpu.memory_space<vmem>>, vector<16x32xf32>
    tpu.vector_store %arg14[%c217, %c0_20], %32 {strides = array<i32>} : memref<648x32xf32, #tpu.memory_space<vmem>>, vector<16x32xf32>,
    %34 = vector.extract_strided_slice %7 {offsets = [192, 0], sizes = [16, 32], strides = [1, 1]} : vector<512x32xf32> to vector<16x32xf32>
    %c235 = arith.constant 235 : index
    %c0_21 = arith.constant 0 : index
    %35 = vector.load %arg14[%c235, %c0_21] : memref<648x32xf32, #tpu.memory_space<vmem>>, vector<16x32xf32>
    tpu.vector_store %arg14[%c235, %c0_21], %34 {strides = array<i32>} : memref<648x32xf32, #tpu.memory_space<vmem>>, vector<16x32xf32>,
    %36 = vector.extract_strided_slice %7 {offsets = [208, 0], sizes = [16, 32], strides = [1, 1]} : vector<512x32xf32> to vector<16x32xf32>
    %c253 = arith.constant 253 : index
    %c0_22 = arith.constant 0 : index
    %37 = vector.load %arg14[%c253, %c0_22] : memref<648x32xf32, #tpu.memory_space<vmem>>, vector<16x32xf32>
    tpu.vector_store %arg14[%c253, %c0_22], %36 {strides = array<i32>} : memref<648x32xf32, #tpu.memory_space<vmem>>, vector<16x32xf32>,
    %38 = vector.extract_strided_slice %7 {offsets = [224, 0], sizes = [16, 32], strides = [1, 1]} : vector<512x32xf32> to vector<16x32xf32>
    %c271 = arith.constant 271 : index
    %c0_23 = arith.constant 0 : index
    %39 = vector.load %arg14[%c271, %c0_23] : memref<648x32xf32, #tpu.memory_space<vmem>>, vector<16x32xf32>
    tpu.vector_store %arg14[%c271, %c0_23], %38 {strides = array<i32>} : memref<648x32xf32, #tpu.memory_space<vmem>>, vector<16x32xf32>,
    %40 = vector.extract_strided_slice %7 {offsets = [240, 0], sizes = [16, 32], strides = [1, 1]} : vector<512x32xf32> to vector<16x32xf32>
    %c289 = arith.constant 289 : index
    %c0_24 = arith.constant 0 : index
    %41 = vector.load %arg14[%c289, %c0_24] : memref<648x32xf32, #tpu.memory_space<vmem>>, vector<16x32xf32>
    tpu.vector_store %arg14[%c289, %c0_24], %40 {strides = array<i32>} : memref<648x32xf32, #tpu.memory_space<vmem>>, vector<16x32xf32>,
    %42 = vector.extract_strided_slice %7 {offsets = [256, 0], sizes = [16, 32], strides = [1, 1]} : vector<512x32xf32> to vector<16x32xf32>
    %c343 = arith.constant 343 : index
    %c0_25 = arith.constant 0 : index
    %43 = vector.load %arg14[%c343, %c0_25] : memref<648x32xf32, #tpu.memory_space<vmem>>, vector<16x32xf32>
    tpu.vector_store %arg14[%c343, %c0_25], %42 {strides = array<i32>} : memref<648x32xf32, #tpu.memory_space<vmem>>, vector<16x32xf32>,
    %44 = vector.extract_strided_slice %7 {offsets = [272, 0], sizes = [16, 32], strides = [1, 1]} : vector<512x32xf32> to vector<16x32xf32>
    %c361 = arith.constant 361 : index
    %c0_26 = arith.constant 0 : index
    %45 = vector.load %arg14[%c361, %c0_26] : memref<648x32xf32, #tpu.memory_space<vmem>>, vector<16x32xf32>
    tpu.vector_store %arg14[%c361, %c0_26], %44 {strides = array<i32>} : memref<648x32xf32, #tpu.memory_space<vmem>>, vector<16x32xf32>,
    %46 = vector.extract_strided_slice %7 {offsets = [288, 0], sizes = [16, 32], strides = [1, 1]} : vector<512x32xf32> to vector<16x32xf32>
    %c379 = arith.constant 379 : index
    %c0_27 = arith.constant 0 : index
    %47 = vector.load %arg14[%c379, %c0_27] : memref<648x32xf32, #tpu.memory_space<vmem>>, vector<16x32xf32>
    tpu.vector_store %arg14[%c379, %c0_27], %46 {strides = array<i32>} : memref<648x32xf32, #tpu.memory_space<vmem>>, vector<16x32xf32>,
    %48 = vector.extract_strided_slice %7 {offsets = [304, 0], sizes = [16, 32], strides = [1, 1]} : vector<512x32xf32> to vector<16x32xf32>
    %c397 = arith.constant 397 : index
    %c0_28 = arith.constant 0 : index
    %49 = vector.load %arg14[%c397, %c0_28] : memref<648x32xf32, #tpu.memory_space<vmem>>, vector<16x32xf32>
    tpu.vector_store %arg14[%c397, %c0_28], %48 {strides = array<i32>} : memref<648x32xf32, #tpu.memory_space<vmem>>, vector<16x32xf32>,
    %50 = vector.extract_strided_slice %7 {offsets = [320, 0], sizes = [16, 32], strides = [1, 1]} : vector<512x32xf32> to vector<16x32xf32>
    %c415 = arith.constant 415 : index
    %c0_29 = arith.constant 0 : index
    %51 = vector.load %arg14[%c415, %c0_29] : memref<648x32xf32, #tpu.memory_space<vmem>>, vector<16x32xf32>
    tpu.vector_store %arg14[%c415, %c0_29], %50 {strides = array<i32>} : memref<648x32xf32, #tpu.memory_space<vmem>>, vector<16x32xf32>,
    %52 = vector.extract_strided_slice %7 {offsets = [336, 0], sizes = [16, 32], strides = [1, 1]} : vector<512x32xf32> to vector<16x32xf32>
    %c433 = arith.constant 433 : index
    %c0_30 = arith.constant 0 : index
    %53 = vector.load %arg14[%c433, %c0_30] : memref<648x32xf32, #tpu.memory_space<vmem>>, vector<16x32xf32>
    tpu.vector_store %arg14[%c433, %c0_30], %52 {strides = array<i32>} : memref<648x32xf32, #tpu.memory_space<vmem>>, vector<16x32xf32>,
    %54 = vector.extract_strided_slice %7 {offsets = [352, 0], sizes = [16, 32], strides = [1, 1]} : vector<512x32xf32> to vector<16x32xf32>
    %c451 = arith.constant 451 : index
    %c0_31 = arith.constant 0 : index
    %55 = vector.load %arg14[%c451, %c0_31] : memref<648x32xf32, #tpu.memory_space<vmem>>, vector<16x32xf32>
    tpu.vector_store %arg14[%c451, %c0_31], %54 {strides = array<i32>} : memref<648x32xf32, #tpu.memory_space<vmem>>, vector<16x32xf32>,
    %56 = vector.extract_strided_slice %7 {offsets = [368, 0], sizes = [16, 32], strides = [1, 1]} : vector<512x32xf32> to vector<16x32xf32>
    %c469 = arith.constant 469 : index
    %c0_32 = arith.constant 0 : index
    %57 = vector.load %arg14[%c469, %c0_32] : memref<648x32xf32, #tpu.memory_space<vmem>>, vector<16x32xf32>
    tpu.vector_store %arg14[%c469, %c0_32], %56 {strides = array<i32>} : memref<648x32xf32, #tpu.memory_space<vmem>>, vector<16x32xf32>,
    %58 = vector.extract_strided_slice %7 {offsets = [384, 0], sizes = [16, 32], strides = [1, 1]} : vector<512x32xf32> to vector<16x32xf32>
    %c487 = arith.constant 487 : index
    %c0_33 = arith.constant 0 : index
    %59 = vector.load %arg14[%c487, %c0_33] : memref<648x32xf32, #tpu.memory_space<vmem>>, vector<16x32xf32>
    tpu.vector_store %arg14[%c487, %c0_33], %58 {strides = array<i32>} : memref<648x32xf32, #tpu.memory_space<vmem>>, vector<16x32xf32>,
    %60 = vector.extract_strided_slice %7 {offsets = [400, 0], sizes = [16, 32], strides = [1, 1]} : vector<512x32xf32> to vector<16x32xf32>
    %c505 = arith.constant 505 : index
    %c0_34 = arith.constant 0 : index
    %61 = vector.load %arg14[%c505, %c0_34] : memref<648x32xf32, #tpu.memory_space<vmem>>, vector<16x32xf32>
    tpu.vector_store %arg14[%c505, %c0_34], %60 {strides = array<i32>} : memref<648x32xf32, #tpu.memory_space<vmem>>, vector<16x32xf32>,
    %62 = vector.extract_strided_slice %7 {offsets = [416, 0], sizes = [16, 32], strides = [1, 1]} : vector<512x32xf32> to vector<16x32xf32>
    %c523 = arith.constant 523 : index
    %c0_35 = arith.constant 0 : index
    %63 = vector.load %arg14[%c523, %c0_35] : memref<648x32xf32, #tpu.memory_space<vmem>>, vector<16x32xf32>
    tpu.vector_store %arg14[%c523, %c0_35], %62 {strides = array<i32>} : memref<648x32xf32, #tpu.memory_space<vmem>>, vector<16x32xf32>,
    %64 = vector.extract_strided_slice %7 {offsets = [432, 0], sizes = [16, 32], strides = [1, 1]} : vector<512x32xf32> to vector<16x32xf32>
    %c541 = arith.constant 541 : index
    %c0_36 = arith.constant 0 : index
    %65 = vector.load %arg14[%c541, %c0_36] : memref<648x32xf32, #tpu.memory_space<vmem>>, vector<16x32xf32>
    tpu.vector_store %arg14[%c541, %c0_36], %64 {strides = array<i32>} : memref<648x32xf32, #tpu.memory_space<vmem>>, vector<16x32xf32>,
    %66 = vector.extract_strided_slice %7 {offsets = [448, 0], sizes = [16, 32], strides = [1, 1]} : vector<512x32xf32> to vector<16x32xf32>
    %c559 = arith.constant 559 : index
    %c0_37 = arith.constant 0 : index
    %67 = vector.load %arg14[%c559, %c0_37] : memref<648x32xf32, #tpu.memory_space<vmem>>, vector<16x32xf32>
    tpu.vector_store %arg14[%c559, %c0_37], %66 {strides = array<i32>} : memref<648x32xf32, #tpu.memory_space<vmem>>, vector<16x32xf32>,
    %68 = vector.extract_strided_slice %7 {offsets = [464, 0], sizes = [16, 32], strides = [1, 1]} : vector<512x32xf32> to vector<16x32xf32>
    %c577 = arith.constant 577 : index
    %c0_38 = arith.constant 0 : index
    %69 = vector.load %arg14[%c577, %c0_38] : memref<648x32xf32, #tpu.memory_space<vmem>>, vector<16x32xf32>
    tpu.vector_store %arg14[%c577, %c0_38], %68 {strides = array<i32>} : memref<648x32xf32, #tpu.memory_space<vmem>>, vector<16x32xf32>,
    %70 = vector.extract_strided_slice %7 {offsets = [480, 0], sizes = [16, 32], strides = [1, 1]} : vector<512x32xf32> to vector<16x32xf32>
    %c595 = arith.constant 595 : index
    %c0_39 = arith.constant 0 : index
    %71 = vector.load %arg14[%c595, %c0_39] : memref<648x32xf32, #tpu.memory_space<vmem>>, vector<16x32xf32>
    tpu.vector_store %arg14[%c595, %c0_39], %70 {strides = array<i32>} : memref<648x32xf32, #tpu.memory_space<vmem>>, vector<16x32xf32>,
    %72 = vector.extract_strided_slice %7 {offsets = [496, 0], sizes = [16, 32], strides = [1, 1]} : vector<512x32xf32> to vector<16x32xf32>
    %c613 = arith.constant 613 : index
    %c0_40 = arith.constant 0 : index
    %73 = vector.load %arg14[%c613, %c0_40] : memref<648x32xf32, #tpu.memory_space<vmem>>, vector<16x32xf32>
    tpu.vector_store %arg14[%c613, %c0_40], %72 {strides = array<i32>} : memref<648x32xf32, #tpu.memory_space<vmem>>, vector<16x32xf32>,
    %c0_41 = arith.constant 0 : index
    %c0_42 = arith.constant 0 : index
    %74 = vector.load %arg5[%c0_41, %c0_42] : memref<1x64xf32, #tpu.memory_space<vmem>>, vector<1x64xf32>
    %75 = vector.shape_cast %74 : vector<1x64xf32> to vector<1x64xf32>
    %76 = vector.broadcast %75 : vector<1x64xf32> to vector<128x64xf32>
    %c0_43 = arith.constant 0 : index
    %c0_44 = arith.constant 0 : index
    %77 = vector.load %arg14[%c0_43, %c0_44] : memref<648x32xf32, #tpu.memory_space<vmem>>, vector<608x32xf32>
    %c0_45 = arith.constant 0 : index
    %c0_46 = arith.constant 0 : index
    %78 = vector.load %arg3[%c0_45, %c0_46] : memref<128x608xf32, #tpu.memory_space<vmem>>, vector<128x608xf32>
    %cst_47 = arith.constant dense<0.000000e+00> : vector<128x32xf32>
    %79 = tpu.matmul %78, %77, %cst_47 {dimension_numbers = #tpu.dot_dimension_numbers<[1], [0], [0], [1], [0, 0, 1, 1], [], []>} : vector<128x608xf32>, vector<608x32xf32>, vector<128x32xf32> -> vector<128x32xf32>
    %c0_48 = arith.constant 0 : index
    %c0_49 = arith.constant 0 : index
    %c0_50 = arith.constant 0 : index
    %80 = vector.load %arg4[%c0_48, %c0_49, %c0_50] : memref<9x32x64xf32, #tpu.memory_space<vmem>>, vector<1x32x64xf32>
    %81 = vector.shape_cast %80 : vector<1x32x64xf32> to vector<32x64xf32>
    %cst_51 = arith.constant dense<0.000000e+00> : vector<128x64xf32>
    %82 = tpu.matmul %79, %81, %cst_51 {dimension_numbers = #tpu.dot_dimension_numbers<[1], [0], [0], [1], [0, 0, 1, 1], [], []>} : vector<128x32xf32>, vector<32x64xf32>, vector<128x64xf32> -> vector<128x64xf32>
    %83 = arith.addf %76, %82 : vector<128x64xf32>
    %c1 = arith.constant 1 : index
    %c0_52 = arith.constant 0 : index
    %84 = vector.load %arg14[%c1, %c0_52] : memref<648x32xf32, #tpu.memory_space<vmem>>, vector<608x32xf32>
    %c0_53 = arith.constant 0 : index
    %c0_54 = arith.constant 0 : index
    %85 = vector.load %arg3[%c0_53, %c0_54] : memref<128x608xf32, #tpu.memory_space<vmem>>, vector<128x608xf32>
    %cst_55 = arith.constant dense<0.000000e+00> : vector<128x32xf32>
    %86 = tpu.matmul %85, %84, %cst_55 {dimension_numbers = #tpu.dot_dimension_numbers<[1], [0], [0], [1], [0, 0, 1, 1], [], []>} : vector<128x608xf32>, vector<608x32xf32>, vector<128x32xf32> -> vector<128x32xf32>
    %c1_56 = arith.constant 1 : index
    %c0_57 = arith.constant 0 : index
    %c0_58 = arith.constant 0 : index
    %87 = vector.load %arg4[%c1_56, %c0_57, %c0_58] : memref<9x32x64xf32, #tpu.memory_space<vmem>>, vector<1x32x64xf32>
    %88 = vector.shape_cast %87 : vector<1x32x64xf32> to vector<32x64xf32>
    %cst_59 = arith.constant dense<0.000000e+00> : vector<128x64xf32>
    %89 = tpu.matmul %86, %88, %cst_59 {dimension_numbers = #tpu.dot_dimension_numbers<[1], [0], [0], [1], [0, 0, 1, 1], [], []>} : vector<128x32xf32>, vector<32x64xf32>, vector<128x64xf32> -> vector<128x64xf32>
    %90 = arith.addf %83, %89 : vector<128x64xf32>
    %c2 = arith.constant 2 : index
    %c0_60 = arith.constant 0 : index
    %91 = vector.load %arg14[%c2, %c0_60] : memref<648x32xf32, #tpu.memory_space<vmem>>, vector<608x32xf32>
    %c0_61 = arith.constant 0 : index
    %c0_62 = arith.constant 0 : index
    %92 = vector.load %arg3[%c0_61, %c0_62] : memref<128x608xf32, #tpu.memory_space<vmem>>, vector<128x608xf32>
    %cst_63 = arith.constant dense<0.000000e+00> : vector<128x32xf32>
    %93 = tpu.matmul %92, %91, %cst_63 {dimension_numbers = #tpu.dot_dimension_numbers<[1], [0], [0], [1], [0, 0, 1, 1], [], []>} : vector<128x608xf32>, vector<608x32xf32>, vector<128x32xf32> -> vector<128x32xf32>
    %c2_64 = arith.constant 2 : index
    %c0_65 = arith.constant 0 : index
    %c0_66 = arith.constant 0 : index
    %94 = vector.load %arg4[%c2_64, %c0_65, %c0_66] : memref<9x32x64xf32, #tpu.memory_space<vmem>>, vector<1x32x64xf32>
    %95 = vector.shape_cast %94 : vector<1x32x64xf32> to vector<32x64xf32>
    %cst_67 = arith.constant dense<0.000000e+00> : vector<128x64xf32>
    %96 = tpu.matmul %93, %95, %cst_67 {dimension_numbers = #tpu.dot_dimension_numbers<[1], [0], [0], [1], [0, 0, 1, 1], [], []>} : vector<128x32xf32>, vector<32x64xf32>, vector<128x64xf32> -> vector<128x64xf32>
    %97 = arith.addf %90, %96 : vector<128x64xf32>
    %c18 = arith.constant 18 : index
    %c0_68 = arith.constant 0 : index
    %98 = vector.load %arg14[%c18, %c0_68] : memref<648x32xf32, #tpu.memory_space<vmem>>, vector<608x32xf32>
    %c0_69 = arith.constant 0 : index
    %c0_70 = arith.constant 0 : index
    %99 = vector.load %arg3[%c0_69, %c0_70] : memref<128x608xf32, #tpu.memory_space<vmem>>, vector<128x608xf32>
    %cst_71 = arith.constant dense<0.000000e+00> : vector<128x32xf32>
    %100 = tpu.matmul %99, %98, %cst_71 {dimension_numbers = #tpu.dot_dimension_numbers<[1], [0], [0], [1], [0, 0, 1, 1], [], []>} : vector<128x608xf32>, vector<608x32xf32>, vector<128x32xf32> -> vector<128x32xf32>
    %c3 = arith.constant 3 : index
    %c0_72 = arith.constant 0 : index
    %c0_73 = arith.constant 0 : index
    %101 = vector.load %arg4[%c3, %c0_72, %c0_73] : memref<9x32x64xf32, #tpu.memory_space<vmem>>, vector<1x32x64xf32>
    %102 = vector.shape_cast %101 : vector<1x32x64xf32> to vector<32x64xf32>
    %cst_74 = arith.constant dense<0.000000e+00> : vector<128x64xf32>
    %103 = tpu.matmul %100, %102, %cst_74 {dimension_numbers = #tpu.dot_dimension_numbers<[1], [0], [0], [1], [0, 0, 1, 1], [], []>} : vector<128x32xf32>, vector<32x64xf32>, vector<128x64xf32> -> vector<128x64xf32>
    %104 = arith.addf %97, %103 : vector<128x64xf32>
    %c19_75 = arith.constant 19 : index
    %c0_76 = arith.constant 0 : index
    %105 = vector.load %arg14[%c19_75, %c0_76] : memref<648x32xf32, #tpu.memory_space<vmem>>, vector<608x32xf32>
    %c0_77 = arith.constant 0 : index
    %c0_78 = arith.constant 0 : index
    %106 = vector.load %arg3[%c0_77, %c0_78] : memref<128x608xf32, #tpu.memory_space<vmem>>, vector<128x608xf32>
    %cst_79 = arith.constant dense<0.000000e+00> : vector<128x32xf32>
    %107 = tpu.matmul %106, %105, %cst_79 {dimension_numbers = #tpu.dot_dimension_numbers<[1], [0], [0], [1], [0, 0, 1, 1], [], []>} : vector<128x608xf32>, vector<608x32xf32>, vector<128x32xf32> -> vector<128x32xf32>
    %c4 = arith.constant 4 : index
    %c0_80 = arith.constant 0 : index
    %c0_81 = arith.constant 0 : index
    %108 = vector.load %arg4[%c4, %c0_80, %c0_81] : memref<9x32x64xf32, #tpu.memory_space<vmem>>, vector<1x32x64xf32>
    %109 = vector.shape_cast %108 : vector<1x32x64xf32> to vector<32x64xf32>
    %cst_82 = arith.constant dense<0.000000e+00> : vector<128x64xf32>
    %110 = tpu.matmul %107, %109, %cst_82 {dimension_numbers = #tpu.dot_dimension_numbers<[1], [0], [0], [1], [0, 0, 1, 1], [], []>} : vector<128x32xf32>, vector<32x64xf32>, vector<128x64xf32> -> vector<128x64xf32>
    %111 = arith.addf %104, %110 : vector<128x64xf32>
    %c20 = arith.constant 20 : index
    %c0_83 = arith.constant 0 : index
    %112 = vector.load %arg14[%c20, %c0_83] : memref<648x32xf32, #tpu.memory_space<vmem>>, vector<608x32xf32>
    %c0_84 = arith.constant 0 : index
    %c0_85 = arith.constant 0 : index
    %113 = vector.load %arg3[%c0_84, %c0_85] : memref<128x608xf32, #tpu.memory_space<vmem>>, vector<128x608xf32>
    %cst_86 = arith.constant dense<0.000000e+00> : vector<128x32xf32>
    %114 = tpu.matmul %113, %112, %cst_86 {dimension_numbers = #tpu.dot_dimension_numbers<[1], [0], [0], [1], [0, 0, 1, 1], [], []>} : vector<128x608xf32>, vector<608x32xf32>, vector<128x32xf32> -> vector<128x32xf32>
    %c5 = arith.constant 5 : index
    %c0_87 = arith.constant 0 : index
    %c0_88 = arith.constant 0 : index
    %115 = vector.load %arg4[%c5, %c0_87, %c0_88] : memref<9x32x64xf32, #tpu.memory_space<vmem>>, vector<1x32x64xf32>
    %116 = vector.shape_cast %115 : vector<1x32x64xf32> to vector<32x64xf32>
    %cst_89 = arith.constant dense<0.000000e+00> : vector<128x64xf32>
    %117 = tpu.matmul %114, %116, %cst_89 {dimension_numbers = #tpu.dot_dimension_numbers<[1], [0], [0], [1], [0, 0, 1, 1], [], []>} : vector<128x32xf32>, vector<32x64xf32>, vector<128x64xf32> -> vector<128x64xf32>
    %118 = arith.addf %111, %117 : vector<128x64xf32>
    %c36 = arith.constant 36 : index
    %c0_90 = arith.constant 0 : index
    %119 = vector.load %arg14[%c36, %c0_90] : memref<648x32xf32, #tpu.memory_space<vmem>>, vector<608x32xf32>
    %c0_91 = arith.constant 0 : index
    %c0_92 = arith.constant 0 : index
    %120 = vector.load %arg3[%c0_91, %c0_92] : memref<128x608xf32, #tpu.memory_space<vmem>>, vector<128x608xf32>
    %cst_93 = arith.constant dense<0.000000e+00> : vector<128x32xf32>
    %121 = tpu.matmul %120, %119, %cst_93 {dimension_numbers = #tpu.dot_dimension_numbers<[1], [0], [0], [1], [0, 0, 1, 1], [], []>} : vector<128x608xf32>, vector<608x32xf32>, vector<128x32xf32> -> vector<128x32xf32>
    %c6 = arith.constant 6 : index
    %c0_94 = arith.constant 0 : index
    %c0_95 = arith.constant 0 : index
    %122 = vector.load %arg4[%c6, %c0_94, %c0_95] : memref<9x32x64xf32, #tpu.memory_space<vmem>>, vector<1x32x64xf32>
    %123 = vector.shape_cast %122 : vector<1x32x64xf32> to vector<32x64xf32>
    %cst_96 = arith.constant dense<0.000000e+00> : vector<128x64xf32>
    %124 = tpu.matmul %121, %123, %cst_96 {dimension_numbers = #tpu.dot_dimension_numbers<[1], [0], [0], [1], [0, 0, 1, 1], [], []>} : vector<128x32xf32>, vector<32x64xf32>, vector<128x64xf32> -> vector<128x64xf32>
    %125 = arith.addf %118, %124 : vector<128x64xf32>
    %c37_97 = arith.constant 37 : index
    %c0_98 = arith.constant 0 : index
    %126 = vector.load %arg14[%c37_97, %c0_98] : memref<648x32xf32, #tpu.memory_space<vmem>>, vector<608x32xf32>
    %c0_99 = arith.constant 0 : index
    %c0_100 = arith.constant 0 : index
    %127 = vector.load %arg3[%c0_99, %c0_100] : memref<128x608xf32, #tpu.memory_space<vmem>>, vector<128x608xf32>
    %cst_101 = arith.constant dense<0.000000e+00> : vector<128x32xf32>
    %128 = tpu.matmul %127, %126, %cst_101 {dimension_numbers = #tpu.dot_dimension_numbers<[1], [0], [0], [1], [0, 0, 1, 1], [], []>} : vector<128x608xf32>, vector<608x32xf32>, vector<128x32xf32> -> vector<128x32xf32>
    %c7 = arith.constant 7 : index
    %c0_102 = arith.constant 0 : index
    %c0_103 = arith.constant 0 : index
    %129 = vector.load %arg4[%c7, %c0_102, %c0_103] : memref<9x32x64xf32, #tpu.memory_space<vmem>>, vector<1x32x64xf32>
    %130 = vector.shape_cast %129 : vector<1x32x64xf32> to vector<32x64xf32>
    %cst_104 = arith.constant dense<0.000000e+00> : vector<128x64xf32>
    %131 = tpu.matmul %128, %130, %cst_104 {dimension_numbers = #tpu.dot_dimension_numbers<[1], [0], [0], [1], [0, 0, 1, 1], [], []>} : vector<128x32xf32>, vector<32x64xf32>, vector<128x64xf32> -> vector<128x64xf32>
    %132 = arith.addf %125, %131 : vector<128x64xf32>
    %c38 = arith.constant 38 : index
    %c0_105 = arith.constant 0 : index
    %133 = vector.load %arg14[%c38, %c0_105] : memref<648x32xf32, #tpu.memory_space<vmem>>, vector<608x32xf32>
    %c0_106 = arith.constant 0 : index
    %c0_107 = arith.constant 0 : index
    %134 = vector.load %arg3[%c0_106, %c0_107] : memref<128x608xf32, #tpu.memory_space<vmem>>, vector<128x608xf32>
    %cst_108 = arith.constant dense<0.000000e+00> : vector<128x32xf32>
    %135 = tpu.matmul %134, %133, %cst_108 {dimension_numbers = #tpu.dot_dimension_numbers<[1], [0], [0], [1], [0, 0, 1, 1], [], []>} : vector<128x608xf32>, vector<608x32xf32>, vector<128x32xf32> -> vector<128x32xf32>
    %c8 = arith.constant 8 : index
    %c0_109 = arith.constant 0 : index
    %c0_110 = arith.constant 0 : index
    %136 = vector.load %arg4[%c8, %c0_109, %c0_110] : memref<9x32x64xf32, #tpu.memory_space<vmem>>, vector<1x32x64xf32>
    %137 = vector.shape_cast %136 : vector<1x32x64xf32> to vector<32x64xf32>
    %cst_111 = arith.constant dense<0.000000e+00> : vector<128x64xf32>
    %138 = tpu.matmul %135, %137, %cst_111 {dimension_numbers = #tpu.dot_dimension_numbers<[1], [0], [0], [1], [0, 0, 1, 1], [], []>} : vector<128x32xf32>, vector<32x64xf32>, vector<128x64xf32> -> vector<128x64xf32>
    %139 = arith.addf %132, %138 : vector<128x64xf32>
    %cst_112 = arith.constant 0.000000e+00 : f32
    %140 = vector.broadcast %cst_112 : f32 to vector<128x64xf32>
    %141 = arith.maximumf %139, %140 : vector<128x64xf32>
    %cst_113 = arith.constant 0.000000e+00 : f32
    %142 = vector.broadcast %cst_113 : f32 to vector<200x64xf32>
    %c0_114 = arith.constant 0 : index
    %c0_115 = arith.constant 0 : index
    %143 = vector.load %arg15[%c0_114, %c0_115] : memref<200x64xf32, #tpu.memory_space<vmem>>, vector<200x64xf32>
    tpu.vector_store %arg15[%c0_114, %c0_115], %142 {strides = array<i32>} : memref<200x64xf32, #tpu.memory_space<vmem>>, vector<200x64xf32>,
    %144 = vector.extract_strided_slice %141 {offsets = [0, 0], sizes = [8, 64], strides = [1, 1]} : vector<128x64xf32> to vector<8x64xf32>
    %c11 = arith.constant 11 : index
    %c0_116 = arith.constant 0 : index
    %145 = vector.load %arg15[%c11, %c0_116] : memref<200x64xf32, #tpu.memory_space<vmem>>, vector<8x64xf32>
    tpu.vector_store %arg15[%c11, %c0_116], %144 {strides = array<i32>} : memref<200x64xf32, #tpu.memory_space<vmem>>, vector<8x64xf32>,
    %146 = vector.extract_strided_slice %141 {offsets = [8, 0], sizes = [8, 64], strides = [1, 1]} : vector<128x64xf32> to vector<8x64xf32>
    %c21 = arith.constant 21 : index
    %c0_117 = arith.constant 0 : index
    %147 = vector.load %arg15[%c21, %c0_117] : memref<200x64xf32, #tpu.memory_space<vmem>>, vector<8x64xf32>
    tpu.vector_store %arg15[%c21, %c0_117], %146 {strides = array<i32>} : memref<200x64xf32, #tpu.memory_space<vmem>>, vector<8x64xf32>,
    %148 = vector.extract_strided_slice %141 {offsets = [16, 0], sizes = [8, 64], strides = [1, 1]} : vector<128x64xf32> to vector<8x64xf32>
    %c31 = arith.constant 31 : index
    %c0_118 = arith.constant 0 : index
    %149 = vector.load %arg15[%c31, %c0_118] : memref<200x64xf32, #tpu.memory_space<vmem>>, vector<8x64xf32>
    tpu.vector_store %arg15[%c31, %c0_118], %148 {strides = array<i32>} : memref<200x64xf32, #tpu.memory_space<vmem>>, vector<8x64xf32>,
    %150 = vector.extract_strided_slice %141 {offsets = [24, 0], sizes = [8, 64], strides = [1, 1]} : vector<128x64xf32> to vector<8x64xf32>
    %c41 = arith.constant 41 : index
    %c0_119 = arith.constant 0 : index
    %151 = vector.load %arg15[%c41, %c0_119] : memref<200x64xf32, #tpu.memory_space<vmem>>, vector<8x64xf32>
    tpu.vector_store %arg15[%c41, %c0_119], %150 {strides = array<i32>} : memref<200x64xf32, #tpu.memory_space<vmem>>, vector<8x64xf32>,
    %152 = vector.extract_strided_slice %141 {offsets = [32, 0], sizes = [8, 64], strides = [1, 1]} : vector<128x64xf32> to vector<8x64xf32>
    %c51 = arith.constant 51 : index
    %c0_120 = arith.constant 0 : index
    %153 = vector.load %arg15[%c51, %c0_120] : memref<200x64xf32, #tpu.memory_space<vmem>>, vector<8x64xf32>
    tpu.vector_store %arg15[%c51, %c0_120], %152 {strides = array<i32>} : memref<200x64xf32, #tpu.memory_space<vmem>>, vector<8x64xf32>,
    %154 = vector.extract_strided_slice %141 {offsets = [40, 0], sizes = [8, 64], strides = [1, 1]} : vector<128x64xf32> to vector<8x64xf32>
    %c61 = arith.constant 61 : index
    %c0_121 = arith.constant 0 : index
    %155 = vector.load %arg15[%c61, %c0_121] : memref<200x64xf32, #tpu.memory_space<vmem>>, vector<8x64xf32>
    tpu.vector_store %arg15[%c61, %c0_121], %154 {strides = array<i32>} : memref<200x64xf32, #tpu.memory_space<vmem>>, vector<8x64xf32>,
    %156 = vector.extract_strided_slice %141 {offsets = [48, 0], sizes = [8, 64], strides = [1, 1]} : vector<128x64xf32> to vector<8x64xf32>
    %c71 = arith.constant 71 : index
    %c0_122 = arith.constant 0 : index
    %157 = vector.load %arg15[%c71, %c0_122] : memref<200x64xf32, #tpu.memory_space<vmem>>, vector<8x64xf32>
    tpu.vector_store %arg15[%c71, %c0_122], %156 {strides = array<i32>} : memref<200x64xf32, #tpu.memory_space<vmem>>, vector<8x64xf32>,
    %158 = vector.extract_strided_slice %141 {offsets = [56, 0], sizes = [8, 64], strides = [1, 1]} : vector<128x64xf32> to vector<8x64xf32>
    %c81 = arith.constant 81 : index
    %c0_123 = arith.constant 0 : index
    %159 = vector.load %arg15[%c81, %c0_123] : memref<200x64xf32, #tpu.memory_space<vmem>>, vector<8x64xf32>
    tpu.vector_store %arg15[%c81, %c0_123], %158 {strides = array<i32>} : memref<200x64xf32, #tpu.memory_space<vmem>>, vector<8x64xf32>,
    %160 = vector.extract_strided_slice %141 {offsets = [64, 0], sizes = [8, 64], strides = [1, 1]} : vector<128x64xf32> to vector<8x64xf32>
    %c111 = arith.constant 111 : index
    %c0_124 = arith.constant 0 : index
    %161 = vector.load %arg15[%c111, %c0_124] : memref<200x64xf32, #tpu.memory_space<vmem>>, vector<8x64xf32>
    tpu.vector_store %arg15[%c111, %c0_124], %160 {strides = array<i32>} : memref<200x64xf32, #tpu.memory_space<vmem>>, vector<8x64xf32>,
    %162 = vector.extract_strided_slice %141 {offsets = [72, 0], sizes = [8, 64], strides = [1, 1]} : vector<128x64xf32> to vector<8x64xf32>
    %c121 = arith.constant 121 : index
    %c0_125 = arith.constant 0 : index
    %163 = vector.load %arg15[%c121, %c0_125] : memref<200x64xf32, #tpu.memory_space<vmem>>, vector<8x64xf32>
    tpu.vector_store %arg15[%c121, %c0_125], %162 {strides = array<i32>} : memref<200x64xf32, #tpu.memory_space<vmem>>, vector<8x64xf32>,
    %164 = vector.extract_strided_slice %141 {offsets = [80, 0], sizes = [8, 64], strides = [1, 1]} : vector<128x64xf32> to vector<8x64xf32>
    %c131 = arith.constant 131 : index
    %c0_126 = arith.constant 0 : index
    %165 = vector.load %arg15[%c131, %c0_126] : memref<200x64xf32, #tpu.memory_space<vmem>>, vector<8x64xf32>
    tpu.vector_store %arg15[%c131, %c0_126], %164 {strides = array<i32>} : memref<200x64xf32, #tpu.memory_space<vmem>>, vector<8x64xf32>,
    %166 = vector.extract_strided_slice %141 {offsets = [88, 0], sizes = [8, 64], strides = [1, 1]} : vector<128x64xf32> to vector<8x64xf32>
    %c141 = arith.constant 141 : index
    %c0_127 = arith.constant 0 : index
    %167 = vector.load %arg15[%c141, %c0_127] : memref<200x64xf32, #tpu.memory_space<vmem>>, vector<8x64xf32>
    tpu.vector_store %arg15[%c141, %c0_127], %166 {strides = array<i32>} : memref<200x64xf32, #tpu.memory_space<vmem>>, vector<8x64xf32>,
    %168 = vector.extract_strided_slice %141 {offsets = [96, 0], sizes = [8, 64], strides = [1, 1]} : vector<128x64xf32> to vector<8x64xf32>
    %c151 = arith.constant 151 : index
    %c0_128 = arith.constant 0 : index
    %169 = vector.load %arg15[%c151, %c0_128] : memref<200x64xf32, #tpu.memory_space<vmem>>, vector<8x64xf32>
    tpu.vector_store %arg15[%c151, %c0_128], %168 {strides = array<i32>} : memref<200x64xf32, #tpu.memory_space<vmem>>, vector<8x64xf32>,
    %170 = vector.extract_strided_slice %141 {offsets = [104, 0], sizes = [8, 64], strides = [1, 1]} : vector<128x64xf32> to vector<8x64xf32>
    %c161 = arith.constant 161 : index
    %c0_129 = arith.constant 0 : index
    %171 = vector.load %arg15[%c161, %c0_129] : memref<200x64xf32, #tpu.memory_space<vmem>>, vector<8x64xf32>
    tpu.vector_store %arg15[%c161, %c0_129], %170 {strides = array<i32>} : memref<200x64xf32, #tpu.memory_space<vmem>>, vector<8x64xf32>,
    %172 = vector.extract_strided_slice %141 {offsets = [112, 0], sizes = [8, 64], strides = [1, 1]} : vector<128x64xf32> to vector<8x64xf32>
    %c171 = arith.constant 171 : index
    %c0_130 = arith.constant 0 : index
    %173 = vector.load %arg15[%c171, %c0_130] : memref<200x64xf32, #tpu.memory_space<vmem>>, vector<8x64xf32>
    tpu.vector_store %arg15[%c171, %c0_130], %172 {strides = array<i32>} : memref<200x64xf32, #tpu.memory_space<vmem>>, vector<8x64xf32>,
    %174 = vector.extract_strided_slice %141 {offsets = [120, 0], sizes = [8, 64], strides = [1, 1]} : vector<128x64xf32> to vector<8x64xf32>
    %c181_131 = arith.constant 181 : index
    %c0_132 = arith.constant 0 : index
    %175 = vector.load %arg15[%c181_131, %c0_132] : memref<200x64xf32, #tpu.memory_space<vmem>>, vector<8x64xf32>
    tpu.vector_store %arg15[%c181_131, %c0_132], %174 {strides = array<i32>} : memref<200x64xf32, #tpu.memory_space<vmem>>, vector<8x64xf32>,
    %c0_133 = arith.constant 0 : index
    %c0_134 = arith.constant 0 : index
    %176 = vector.load %arg8[%c0_133, %c0_134] : memref<1x128xf32, #tpu.memory_space<vmem>>, vector<1x128xf32>
    %177 = vector.shape_cast %176 : vector<1x128xf32> to vector<1x128xf32>
    %178 = vector.broadcast %177 : vector<1x128xf32> to vector<32x128xf32>
    %c0_135 = arith.constant 0 : index
    %c0_136 = arith.constant 0 : index
    %179 = vector.load %arg15[%c0_135, %c0_136] : memref<200x64xf32, #tpu.memory_space<vmem>>, vector<176x64xf32>
    %c0_137 = arith.constant 0 : index
    %c0_138 = arith.constant 0 : index
    %180 = vector.load %arg6[%c0_137, %c0_138] : memref<32x176xf32, #tpu.memory_space<vmem>>, vector<32x176xf32>
    %cst_139 = arith.constant dense<0.000000e+00> : vector<32x64xf32>
    %181 = tpu.matmul %180, %179, %cst_139 {dimension_numbers = #tpu.dot_dimension_numbers<[1], [0], [0], [1], [0, 0, 1, 1], [], []>} : vector<32x176xf32>, vector<176x64xf32>, vector<32x64xf32> -> vector<32x64xf32>
    %c0_140 = arith.constant 0 : index
    %c0_141 = arith.constant 0 : index
    %c0_142 = arith.constant 0 : index
    %182 = vector.load %arg7[%c0_140, %c0_141, %c0_142] : memref<9x64x128xf32, #tpu.memory_space<vmem>>, vector<1x64x128xf32>
    %183 = vector.shape_cast %182 : vector<1x64x128xf32> to vector<64x128xf32>
    %cst_143 = arith.constant dense<0.000000e+00> : vector<32x128xf32>
    %184 = tpu.matmul %181, %183, %cst_143 {dimension_numbers = #tpu.dot_dimension_numbers<[1], [0], [0], [1], [0, 0, 1, 1], [], []>} : vector<32x64xf32>, vector<64x128xf32>, vector<32x128xf32> -> vector<32x128xf32>
    %185 = arith.addf %178, %184 : vector<32x128xf32>
    %c1_144 = arith.constant 1 : index
    %c0_145 = arith.constant 0 : index
    %186 = vector.load %arg15[%c1_144, %c0_145] : memref<200x64xf32, #tpu.memory_space<vmem>>, vector<176x64xf32>
    %c0_146 = arith.constant 0 : index
    %c0_147 = arith.constant 0 : index
    %187 = vector.load %arg6[%c0_146, %c0_147] : memref<32x176xf32, #tpu.memory_space<vmem>>, vector<32x176xf32>
    %cst_148 = arith.constant dense<0.000000e+00> : vector<32x64xf32>
    %188 = tpu.matmul %187, %186, %cst_148 {dimension_numbers = #tpu.dot_dimension_numbers<[1], [0], [0], [1], [0, 0, 1, 1], [], []>} : vector<32x176xf32>, vector<176x64xf32>, vector<32x64xf32> -> vector<32x64xf32>
    %c1_149 = arith.constant 1 : index
    %c0_150 = arith.constant 0 : index
    %c0_151 = arith.constant 0 : index
    %189 = vector.load %arg7[%c1_149, %c0_150, %c0_151] : memref<9x64x128xf32, #tpu.memory_space<vmem>>, vector<1x64x128xf32>
    %190 = vector.shape_cast %189 : vector<1x64x128xf32> to vector<64x128xf32>
    %cst_152 = arith.constant dense<0.000000e+00> : vector<32x128xf32>
    %191 = tpu.matmul %188, %190, %cst_152 {dimension_numbers = #tpu.dot_dimension_numbers<[1], [0], [0], [1], [0, 0, 1, 1], [], []>} : vector<32x64xf32>, vector<64x128xf32>, vector<32x128xf32> -> vector<32x128xf32>
    %192 = arith.addf %185, %191 : vector<32x128xf32>
    %c2_153 = arith.constant 2 : index
    %c0_154 = arith.constant 0 : index
    %193 = vector.load %arg15[%c2_153, %c0_154] : memref<200x64xf32, #tpu.memory_space<vmem>>, vector<176x64xf32>
    %c0_155 = arith.constant 0 : index
    %c0_156 = arith.constant 0 : index
    %194 = vector.load %arg6[%c0_155, %c0_156] : memref<32x176xf32, #tpu.memory_space<vmem>>, vector<32x176xf32>
    %cst_157 = arith.constant dense<0.000000e+00> : vector<32x64xf32>
    %195 = tpu.matmul %194, %193, %cst_157 {dimension_numbers = #tpu.dot_dimension_numbers<[1], [0], [0], [1], [0, 0, 1, 1], [], []>} : vector<32x176xf32>, vector<176x64xf32>, vector<32x64xf32> -> vector<32x64xf32>
    %c2_158 = arith.constant 2 : index
    %c0_159 = arith.constant 0 : index
    %c0_160 = arith.constant 0 : index
    %196 = vector.load %arg7[%c2_158, %c0_159, %c0_160] : memref<9x64x128xf32, #tpu.memory_space<vmem>>, vector<1x64x128xf32>
    %197 = vector.shape_cast %196 : vector<1x64x128xf32> to vector<64x128xf32>
    %cst_161 = arith.constant dense<0.000000e+00> : vector<32x128xf32>
    %198 = tpu.matmul %195, %197, %cst_161 {dimension_numbers = #tpu.dot_dimension_numbers<[1], [0], [0], [1], [0, 0, 1, 1], [], []>} : vector<32x64xf32>, vector<64x128xf32>, vector<32x128xf32> -> vector<32x128xf32>
    %199 = arith.addf %192, %198 : vector<32x128xf32>
    %c10 = arith.constant 10 : index
    %c0_162 = arith.constant 0 : index
    %200 = vector.load %arg15[%c10, %c0_162] : memref<200x64xf32, #tpu.memory_space<vmem>>, vector<176x64xf32>
    %c0_163 = arith.constant 0 : index
    %c0_164 = arith.constant 0 : index
    %201 = vector.load %arg6[%c0_163, %c0_164] : memref<32x176xf32, #tpu.memory_space<vmem>>, vector<32x176xf32>
    %cst_165 = arith.constant dense<0.000000e+00> : vector<32x64xf32>
    %202 = tpu.matmul %201, %200, %cst_165 {dimension_numbers = #tpu.dot_dimension_numbers<[1], [0], [0], [1], [0, 0, 1, 1], [], []>} : vector<32x176xf32>, vector<176x64xf32>, vector<32x64xf32> -> vector<32x64xf32>
    %c3_166 = arith.constant 3 : index
    %c0_167 = arith.constant 0 : index
    %c0_168 = arith.constant 0 : index
    %203 = vector.load %arg7[%c3_166, %c0_167, %c0_168] : memref<9x64x128xf32, #tpu.memory_space<vmem>>, vector<1x64x128xf32>
    %204 = vector.shape_cast %203 : vector<1x64x128xf32> to vector<64x128xf32>
    %cst_169 = arith.constant dense<0.000000e+00> : vector<32x128xf32>
    %205 = tpu.matmul %202, %204, %cst_169 {dimension_numbers = #tpu.dot_dimension_numbers<[1], [0], [0], [1], [0, 0, 1, 1], [], []>} : vector<32x64xf32>, vector<64x128xf32>, vector<32x128xf32> -> vector<32x128xf32>
    %206 = arith.addf %199, %205 : vector<32x128xf32>
    %c11_170 = arith.constant 11 : index
    %c0_171 = arith.constant 0 : index
    %207 = vector.load %arg15[%c11_170, %c0_171] : memref<200x64xf32, #tpu.memory_space<vmem>>, vector<176x64xf32>
    %c0_172 = arith.constant 0 : index
    %c0_173 = arith.constant 0 : index
    %208 = vector.load %arg6[%c0_172, %c0_173] : memref<32x176xf32, #tpu.memory_space<vmem>>, vector<32x176xf32>
    %cst_174 = arith.constant dense<0.000000e+00> : vector<32x64xf32>
    %209 = tpu.matmul %208, %207, %cst_174 {dimension_numbers = #tpu.dot_dimension_numbers<[1], [0], [0], [1], [0, 0, 1, 1], [], []>} : vector<32x176xf32>, vector<176x64xf32>, vector<32x64xf32> -> vector<32x64xf32>
    %c4_175 = arith.constant 4 : index
    %c0_176 = arith.constant 0 : index
    %c0_177 = arith.constant 0 : index
    %210 = vector.load %arg7[%c4_175, %c0_176, %c0_177] : memref<9x64x128xf32, #tpu.memory_space<vmem>>, vector<1x64x128xf32>
    %211 = vector.shape_cast %210 : vector<1x64x128xf32> to vector<64x128xf32>
    %cst_178 = arith.constant dense<0.000000e+00> : vector<32x128xf32>
    %212 = tpu.matmul %209, %211, %cst_178 {dimension_numbers = #tpu.dot_dimension_numbers<[1], [0], [0], [1], [0, 0, 1, 1], [], []>} : vector<32x64xf32>, vector<64x128xf32>, vector<32x128xf32> -> vector<32x128xf32>
    %213 = arith.addf %206, %212 : vector<32x128xf32>
    %c12 = arith.constant 12 : index
    %c0_179 = arith.constant 0 : index
    %214 = vector.load %arg15[%c12, %c0_179] : memref<200x64xf32, #tpu.memory_space<vmem>>, vector<176x64xf32>
    %c0_180 = arith.constant 0 : index
    %c0_181 = arith.constant 0 : index
    %215 = vector.load %arg6[%c0_180, %c0_181] : memref<32x176xf32, #tpu.memory_space<vmem>>, vector<32x176xf32>
    %cst_182 = arith.constant dense<0.000000e+00> : vector<32x64xf32>
    %216 = tpu.matmul %215, %214, %cst_182 {dimension_numbers = #tpu.dot_dimension_numbers<[1], [0], [0], [1], [0, 0, 1, 1], [], []>} : vector<32x176xf32>, vector<176x64xf32>, vector<32x64xf32> -> vector<32x64xf32>
    %c5_183 = arith.constant 5 : index
    %c0_184 = arith.constant 0 : index
    %c0_185 = arith.constant 0 : index
    %217 = vector.load %arg7[%c5_183, %c0_184, %c0_185] : memref<9x64x128xf32, #tpu.memory_space<vmem>>, vector<1x64x128xf32>
    %218 = vector.shape_cast %217 : vector<1x64x128xf32> to vector<64x128xf32>
    %cst_186 = arith.constant dense<0.000000e+00> : vector<32x128xf32>
    %219 = tpu.matmul %216, %218, %cst_186 {dimension_numbers = #tpu.dot_dimension_numbers<[1], [0], [0], [1], [0, 0, 1, 1], [], []>} : vector<32x64xf32>, vector<64x128xf32>, vector<32x128xf32> -> vector<32x128xf32>
    %220 = arith.addf %213, %219 : vector<32x128xf32>
    %c20_187 = arith.constant 20 : index
    %c0_188 = arith.constant 0 : index
    %221 = vector.load %arg15[%c20_187, %c0_188] : memref<200x64xf32, #tpu.memory_space<vmem>>, vector<176x64xf32>
    %c0_189 = arith.constant 0 : index
    %c0_190 = arith.constant 0 : index
    %222 = vector.load %arg6[%c0_189, %c0_190] : memref<32x176xf32, #tpu.memory_space<vmem>>, vector<32x176xf32>
    %cst_191 = arith.constant dense<0.000000e+00> : vector<32x64xf32>
    %223 = tpu.matmul %222, %221, %cst_191 {dimension_numbers = #tpu.dot_dimension_numbers<[1], [0], [0], [1], [0, 0, 1, 1], [], []>} : vector<32x176xf32>, vector<176x64xf32>, vector<32x64xf32> -> vector<32x64xf32>
    %c6_192 = arith.constant 6 : index
    %c0_193 = arith.constant 0 : index
    %c0_194 = arith.constant 0 : index
    %224 = vector.load %arg7[%c6_192, %c0_193, %c0_194] : memref<9x64x128xf32, #tpu.memory_space<vmem>>, vector<1x64x128xf32>
    %225 = vector.shape_cast %224 : vector<1x64x128xf32> to vector<64x128xf32>
    %cst_195 = arith.constant dense<0.000000e+00> : vector<32x128xf32>
    %226 = tpu.matmul %223, %225, %cst_195 {dimension_numbers = #tpu.dot_dimension_numbers<[1], [0], [0], [1], [0, 0, 1, 1], [], []>} : vector<32x64xf32>, vector<64x128xf32>, vector<32x128xf32> -> vector<32x128xf32>
    %227 = arith.addf %220, %226 : vector<32x128xf32>
    %c21_196 = arith.constant 21 : index
    %c0_197 = arith.constant 0 : index
    %228 = vector.load %arg15[%c21_196, %c0_197] : memref<200x64xf32, #tpu.memory_space<vmem>>, vector<176x64xf32>
    %c0_198 = arith.constant 0 : index
    %c0_199 = arith.constant 0 : index
    %229 = vector.load %arg6[%c0_198, %c0_199] : memref<32x176xf32, #tpu.memory_space<vmem>>, vector<32x176xf32>
    %cst_200 = arith.constant dense<0.000000e+00> : vector<32x64xf32>
    %230 = tpu.matmul %229, %228, %cst_200 {dimension_numbers = #tpu.dot_dimension_numbers<[1], [0], [0], [1], [0, 0, 1, 1], [], []>} : vector<32x176xf32>, vector<176x64xf32>, vector<32x64xf32> -> vector<32x64xf32>
    %c7_201 = arith.constant 7 : index
    %c0_202 = arith.constant 0 : index
    %c0_203 = arith.constant 0 : index
    %231 = vector.load %arg7[%c7_201, %c0_202, %c0_203] : memref<9x64x128xf32, #tpu.memory_space<vmem>>, vector<1x64x128xf32>
    %232 = vector.shape_cast %231 : vector<1x64x128xf32> to vector<64x128xf32>
    %cst_204 = arith.constant dense<0.000000e+00> : vector<32x128xf32>
    %233 = tpu.matmul %230, %232, %cst_204 {dimension_numbers = #tpu.dot_dimension_numbers<[1], [0], [0], [1], [0, 0, 1, 1], [], []>} : vector<32x64xf32>, vector<64x128xf32>, vector<32x128xf32> -> vector<32x128xf32>
    %234 = arith.addf %227, %233 : vector<32x128xf32>
    %c22 = arith.constant 22 : index
    %c0_205 = arith.constant 0 : index
    %235 = vector.load %arg15[%c22, %c0_205] : memref<200x64xf32, #tpu.memory_space<vmem>>, vector<176x64xf32>
    %c0_206 = arith.constant 0 : index
    %c0_207 = arith.constant 0 : index
    %236 = vector.load %arg6[%c0_206, %c0_207] : memref<32x176xf32, #tpu.memory_space<vmem>>, vector<32x176xf32>
    %cst_208 = arith.constant dense<0.000000e+00> : vector<32x64xf32>
    %237 = tpu.matmul %236, %235, %cst_208 {dimension_numbers = #tpu.dot_dimension_numbers<[1], [0], [0], [1], [0, 0, 1, 1], [], []>} : vector<32x176xf32>, vector<176x64xf32>, vector<32x64xf32> -> vector<32x64xf32>
    %c8_209 = arith.constant 8 : index
    %c0_210 = arith.constant 0 : index
    %c0_211 = arith.constant 0 : index
    %238 = vector.load %arg7[%c8_209, %c0_210, %c0_211] : memref<9x64x128xf32, #tpu.memory_space<vmem>>, vector<1x64x128xf32>
    %239 = vector.shape_cast %238 : vector<1x64x128xf32> to vector<64x128xf32>
    %cst_212 = arith.constant dense<0.000000e+00> : vector<32x128xf32>
    %240 = tpu.matmul %237, %239, %cst_212 {dimension_numbers = #tpu.dot_dimension_numbers<[1], [0], [0], [1], [0, 0, 1, 1], [], []>} : vector<32x64xf32>, vector<64x128xf32>, vector<32x128xf32> -> vector<32x128xf32>
    %241 = arith.addf %234, %240 : vector<32x128xf32>
    %cst_213 = arith.constant 0.000000e+00 : f32
    %242 = vector.broadcast %cst_213 : f32 to vector<32x128xf32>
    %243 = arith.maximumf %241, %242 : vector<32x128xf32>
    %c0_214 = arith.constant 0 : index
    %c0_215 = arith.constant 0 : index
    %244 = vector.load %arg10[%c0_214, %c0_215] : memref<1x128xf32, #tpu.memory_space<vmem>>, vector<1x128xf32>
    %245 = vector.shape_cast %244 : vector<1x128xf32> to vector<1x128xf32>
    %246 = vector.broadcast %245 : vector<1x128xf32> to vector<2x128xf32>
    %247 = vector.extract_strided_slice %243 {offsets = [0, 0], sizes = [2, 128], strides = [1, 1]} : vector<32x128xf32> to vector<2x128xf32>
    %c0_216 = arith.constant 0 : index
    %c0_217 = arith.constant 0 : index
    %248 = vector.load %arg9[%c0_216, %c0_217] : memref<2048x128xf32, #tpu.memory_space<vmem>>, vector<128x128xf32>
    %cst_218 = arith.constant dense<0.000000e+00> : vector<2x128xf32>
    %249 = tpu.matmul %247, %248, %cst_218 {dimension_numbers = #tpu.dot_dimension_numbers<[1], [0], [0], [1], [0, 0, 1, 1], [], []>} : vector<2x128xf32>, vector<128x128xf32>, vector<2x128xf32> -> vector<2x128xf32>
    %250 = arith.addf %246, %249 : vector<2x128xf32>
    %251 = vector.extract_strided_slice %243 {offsets = [2, 0], sizes = [2, 128], strides = [1, 1]} : vector<32x128xf32> to vector<2x128xf32>
    %c128 = arith.constant 128 : index
    %c0_219 = arith.constant 0 : index
    %252 = vector.load %arg9[%c128, %c0_219] : memref<2048x128xf32, #tpu.memory_space<vmem>>, vector<128x128xf32>
    %cst_220 = arith.constant dense<0.000000e+00> : vector<2x128xf32>
    %253 = tpu.matmul %251, %252, %cst_220 {dimension_numbers = #tpu.dot_dimension_numbers<[1], [0], [0], [1], [0, 0, 1, 1], [], []>} : vector<2x128xf32>, vector<128x128xf32>, vector<2x128xf32> -> vector<2x128xf32>
    %254 = arith.addf %250, %253 : vector<2x128xf32>
    %255 = vector.extract_strided_slice %243 {offsets = [4, 0], sizes = [2, 128], strides = [1, 1]} : vector<32x128xf32> to vector<2x128xf32>
    %c256 = arith.constant 256 : index
    %c0_221 = arith.constant 0 : index
    %256 = vector.load %arg9[%c256, %c0_221] : memref<2048x128xf32, #tpu.memory_space<vmem>>, vector<128x128xf32>
    %cst_222 = arith.constant dense<0.000000e+00> : vector<2x128xf32>
    %257 = tpu.matmul %255, %256, %cst_222 {dimension_numbers = #tpu.dot_dimension_numbers<[1], [0], [0], [1], [0, 0, 1, 1], [], []>} : vector<2x128xf32>, vector<128x128xf32>, vector<2x128xf32> -> vector<2x128xf32>
    %258 = arith.addf %254, %257 : vector<2x128xf32>
    %259 = vector.extract_strided_slice %243 {offsets = [6, 0], sizes = [2, 128], strides = [1, 1]} : vector<32x128xf32> to vector<2x128xf32>
    %c384 = arith.constant 384 : index
    %c0_223 = arith.constant 0 : index
    %260 = vector.load %arg9[%c384, %c0_223] : memref<2048x128xf32, #tpu.memory_space<vmem>>, vector<128x128xf32>
    %cst_224 = arith.constant dense<0.000000e+00> : vector<2x128xf32>
    %261 = tpu.matmul %259, %260, %cst_224 {dimension_numbers = #tpu.dot_dimension_numbers<[1], [0], [0], [1], [0, 0, 1, 1], [], []>} : vector<2x128xf32>, vector<128x128xf32>, vector<2x128xf32> -> vector<2x128xf32>
    %262 = arith.addf %258, %261 : vector<2x128xf32>
    %263 = vector.extract_strided_slice %243 {offsets = [8, 0], sizes = [2, 128], strides = [1, 1]} : vector<32x128xf32> to vector<2x128xf32>
    %c512 = arith.constant 512 : index
    %c0_225 = arith.constant 0 : index
    %264 = vector.load %arg9[%c512, %c0_225] : memref<2048x128xf32, #tpu.memory_space<vmem>>, vector<128x128xf32>
    %cst_226 = arith.constant dense<0.000000e+00> : vector<2x128xf32>
    %265 = tpu.matmul %263, %264, %cst_226 {dimension_numbers = #tpu.dot_dimension_numbers<[1], [0], [0], [1], [0, 0, 1, 1], [], []>} : vector<2x128xf32>, vector<128x128xf32>, vector<2x128xf32> -> vector<2x128xf32>
    %266 = arith.addf %262, %265 : vector<2x128xf32>
    %267 = vector.extract_strided_slice %243 {offsets = [10, 0], sizes = [2, 128], strides = [1, 1]} : vector<32x128xf32> to vector<2x128xf32>
    %c640 = arith.constant 640 : index
    %c0_227 = arith.constant 0 : index
    %268 = vector.load %arg9[%c640, %c0_227] : memref<2048x128xf32, #tpu.memory_space<vmem>>, vector<128x128xf32>
    %cst_228 = arith.constant dense<0.000000e+00> : vector<2x128xf32>
    %269 = tpu.matmul %267, %268, %cst_228 {dimension_numbers = #tpu.dot_dimension_numbers<[1], [0], [0], [1], [0, 0, 1, 1], [], []>} : vector<2x128xf32>, vector<128x128xf32>, vector<2x128xf32> -> vector<2x128xf32>
    %270 = arith.addf %266, %269 : vector<2x128xf32>
    %271 = vector.extract_strided_slice %243 {offsets = [12, 0], sizes = [2, 128], strides = [1, 1]} : vector<32x128xf32> to vector<2x128xf32>
    %c768 = arith.constant 768 : index
    %c0_229 = arith.constant 0 : index
    %272 = vector.load %arg9[%c768, %c0_229] : memref<2048x128xf32, #tpu.memory_space<vmem>>, vector<128x128xf32>
    %cst_230 = arith.constant dense<0.000000e+00> : vector<2x128xf32>
    %273 = tpu.matmul %271, %272, %cst_230 {dimension_numbers = #tpu.dot_dimension_numbers<[1], [0], [0], [1], [0, 0, 1, 1], [], []>} : vector<2x128xf32>, vector<128x128xf32>, vector<2x128xf32> -> vector<2x128xf32>
    %274 = arith.addf %270, %273 : vector<2x128xf32>
    %275 = vector.extract_strided_slice %243 {offsets = [14, 0], sizes = [2, 128], strides = [1, 1]} : vector<32x128xf32> to vector<2x128xf32>
    %c896 = arith.constant 896 : index
    %c0_231 = arith.constant 0 : index
    %276 = vector.load %arg9[%c896, %c0_231] : memref<2048x128xf32, #tpu.memory_space<vmem>>, vector<128x128xf32>
    %cst_232 = arith.constant dense<0.000000e+00> : vector<2x128xf32>
    %277 = tpu.matmul %275, %276, %cst_232 {dimension_numbers = #tpu.dot_dimension_numbers<[1], [0], [0], [1], [0, 0, 1, 1], [], []>} : vector<2x128xf32>, vector<128x128xf32>, vector<2x128xf32> -> vector<2x128xf32>
    %278 = arith.addf %274, %277 : vector<2x128xf32>
    %279 = vector.extract_strided_slice %243 {offsets = [16, 0], sizes = [2, 128], strides = [1, 1]} : vector<32x128xf32> to vector<2x128xf32>
    %c1024 = arith.constant 1024 : index
    %c0_233 = arith.constant 0 : index
    %280 = vector.load %arg9[%c1024, %c0_233] : memref<2048x128xf32, #tpu.memory_space<vmem>>, vector<128x128xf32>
    %cst_234 = arith.constant dense<0.000000e+00> : vector<2x128xf32>
    %281 = tpu.matmul %279, %280, %cst_234 {dimension_numbers = #tpu.dot_dimension_numbers<[1], [0], [0], [1], [0, 0, 1, 1], [], []>} : vector<2x128xf32>, vector<128x128xf32>, vector<2x128xf32> -> vector<2x128xf32>
    %282 = arith.addf %278, %281 : vector<2x128xf32>
    %283 = vector.extract_strided_slice %243 {offsets = [18, 0], sizes = [2, 128], strides = [1, 1]} : vector<32x128xf32> to vector<2x128xf32>
    %c1152 = arith.constant 1152 : index
    %c0_235 = arith.constant 0 : index
    %284 = vector.load %arg9[%c1152, %c0_235] : memref<2048x128xf32, #tpu.memory_space<vmem>>, vector<128x128xf32>
    %cst_236 = arith.constant dense<0.000000e+00> : vector<2x128xf32>
    %285 = tpu.matmul %283, %284, %cst_236 {dimension_numbers = #tpu.dot_dimension_numbers<[1], [0], [0], [1], [0, 0, 1, 1], [], []>} : vector<2x128xf32>, vector<128x128xf32>, vector<2x128xf32> -> vector<2x128xf32>
    %286 = arith.addf %282, %285 : vector<2x128xf32>
    %287 = vector.extract_strided_slice %243 {offsets = [20, 0], sizes = [2, 128], strides = [1, 1]} : vector<32x128xf32> to vector<2x128xf32>
    %c1280 = arith.constant 1280 : index
    %c0_237 = arith.constant 0 : index
    %288 = vector.load %arg9[%c1280, %c0_237] : memref<2048x128xf32, #tpu.memory_space<vmem>>, vector<128x128xf32>
    %cst_238 = arith.constant dense<0.000000e+00> : vector<2x128xf32>
    %289 = tpu.matmul %287, %288, %cst_238 {dimension_numbers = #tpu.dot_dimension_numbers<[1], [0], [0], [1], [0, 0, 1, 1], [], []>} : vector<2x128xf32>, vector<128x128xf32>, vector<2x128xf32> -> vector<2x128xf32>
    %290 = arith.addf %286, %289 : vector<2x128xf32>
    %291 = vector.extract_strided_slice %243 {offsets = [22, 0], sizes = [2, 128], strides = [1, 1]} : vector<32x128xf32> to vector<2x128xf32>
    %c1408 = arith.constant 1408 : index
    %c0_239 = arith.constant 0 : index
    %292 = vector.load %arg9[%c1408, %c0_239] : memref<2048x128xf32, #tpu.memory_space<vmem>>, vector<128x128xf32>
    %cst_240 = arith.constant dense<0.000000e+00> : vector<2x128xf32>
    %293 = tpu.matmul %291, %292, %cst_240 {dimension_numbers = #tpu.dot_dimension_numbers<[1], [0], [0], [1], [0, 0, 1, 1], [], []>} : vector<2x128xf32>, vector<128x128xf32>, vector<2x128xf32> -> vector<2x128xf32>
    %294 = arith.addf %290, %293 : vector<2x128xf32>
    %295 = vector.extract_strided_slice %243 {offsets = [24, 0], sizes = [2, 128], strides = [1, 1]} : vector<32x128xf32> to vector<2x128xf32>
    %c1536 = arith.constant 1536 : index
    %c0_241 = arith.constant 0 : index
    %296 = vector.load %arg9[%c1536, %c0_241] : memref<2048x128xf32, #tpu.memory_space<vmem>>, vector<128x128xf32>
    %cst_242 = arith.constant dense<0.000000e+00> : vector<2x128xf32>
    %297 = tpu.matmul %295, %296, %cst_242 {dimension_numbers = #tpu.dot_dimension_numbers<[1], [0], [0], [1], [0, 0, 1, 1], [], []>} : vector<2x128xf32>, vector<128x128xf32>, vector<2x128xf32> -> vector<2x128xf32>
    %298 = arith.addf %294, %297 : vector<2x128xf32>
    %299 = vector.extract_strided_slice %243 {offsets = [26, 0], sizes = [2, 128], strides = [1, 1]} : vector<32x128xf32> to vector<2x128xf32>
    %c1664 = arith.constant 1664 : index
    %c0_243 = arith.constant 0 : index
    %300 = vector.load %arg9[%c1664, %c0_243] : memref<2048x128xf32, #tpu.memory_space<vmem>>, vector<128x128xf32>
    %cst_244 = arith.constant dense<0.000000e+00> : vector<2x128xf32>
    %301 = tpu.matmul %299, %300, %cst_244 {dimension_numbers = #tpu.dot_dimension_numbers<[1], [0], [0], [1], [0, 0, 1, 1], [], []>} : vector<2x128xf32>, vector<128x128xf32>, vector<2x128xf32> -> vector<2x128xf32>
    %302 = arith.addf %298, %301 : vector<2x128xf32>
    %303 = vector.extract_strided_slice %243 {offsets = [28, 0], sizes = [2, 128], strides = [1, 1]} : vector<32x128xf32> to vector<2x128xf32>
    %c1792 = arith.constant 1792 : index
    %c0_245 = arith.constant 0 : index
    %304 = vector.load %arg9[%c1792, %c0_245] : memref<2048x128xf32, #tpu.memory_space<vmem>>, vector<128x128xf32>
    %cst_246 = arith.constant dense<0.000000e+00> : vector<2x128xf32>
    %305 = tpu.matmul %303, %304, %cst_246 {dimension_numbers = #tpu.dot_dimension_numbers<[1], [0], [0], [1], [0, 0, 1, 1], [], []>} : vector<2x128xf32>, vector<128x128xf32>, vector<2x128xf32> -> vector<2x128xf32>
    %306 = arith.addf %302, %305 : vector<2x128xf32>
    %307 = vector.extract_strided_slice %243 {offsets = [30, 0], sizes = [2, 128], strides = [1, 1]} : vector<32x128xf32> to vector<2x128xf32>
    %c1920 = arith.constant 1920 : index
    %c0_247 = arith.constant 0 : index
    %308 = vector.load %arg9[%c1920, %c0_247] : memref<2048x128xf32, #tpu.memory_space<vmem>>, vector<128x128xf32>
    %cst_248 = arith.constant dense<0.000000e+00> : vector<2x128xf32>
    %309 = tpu.matmul %307, %308, %cst_248 {dimension_numbers = #tpu.dot_dimension_numbers<[1], [0], [0], [1], [0, 0, 1, 1], [], []>} : vector<2x128xf32>, vector<128x128xf32>, vector<2x128xf32> -> vector<2x128xf32>
    %310 = arith.addf %306, %309 : vector<2x128xf32>
    %cst_249 = arith.constant 0.000000e+00 : f32
    %311 = vector.broadcast %cst_249 : f32 to vector<2x128xf32>
    %312 = arith.maximumf %310, %311 : vector<2x128xf32>
    %c0_250 = arith.constant 0 : index
    %c0_251 = arith.constant 0 : index
    %313 = vector.load %arg11[%c0_250, %c0_251] : memref<128x10xf32, #tpu.memory_space<vmem>>, vector<128x10xf32>
    %cst_252 = arith.constant dense<0.000000e+00> : vector<2x10xf32>
    %314 = tpu.matmul %312, %313, %cst_252 {dimension_numbers = #tpu.dot_dimension_numbers<[1], [0], [0], [1], [0, 0, 1, 1], [], []>} : vector<2x128xf32>, vector<128x10xf32>, vector<2x10xf32> -> vector<2x10xf32>
    %c0_253 = arith.constant 0 : index
    %c0_254 = arith.constant 0 : index
    %315 = vector.load %arg12[%c0_253, %c0_254] : memref<1x10xf32, #tpu.memory_space<vmem>>, vector<1x10xf32>
    %316 = vector.broadcast %315 : vector<1x10xf32> to vector<2x10xf32>
    %317 = arith.addf %314, %316 : vector<2x10xf32>
    %cst_255 = arith.constant dense<0xFF800000> : vector<2xf32>
    %318 = vector.multi_reduction <maximumf>, %317, %cst_255 [1] : vector<2x10xf32> to vector<2xf32>
    %319 = vector.shape_cast %318 : vector<2xf32> to vector<2x1xf32>
    %320 = vector.broadcast %319 : vector<2x1xf32> to vector<2x10xf32>
    %321 = arith.subf %317, %320 : vector<2x10xf32>
    %322 = math.exp %321 : vector<2x10xf32>
    %cst_256 = arith.constant dense<0.000000e+00> : vector<2xf32>
    %323 = vector.multi_reduction <add>, %322, %cst_256 [1] : vector<2x10xf32> to vector<2xf32>
    %324 = vector.shape_cast %323 : vector<2xf32> to vector<2x1xf32>
    %325 = math.log %324 : vector<2x1xf32>
    %326 = vector.broadcast %325 : vector<2x1xf32> to vector<2x10xf32>
    %327 = arith.subf %321, %326 : vector<2x10xf32>
    %c0_257 = arith.constant 0 : index
    %c0_258 = arith.constant 0 : index
    %328 = vector.load %arg13[%c0_257, %c0_258] : memref<2x10xf32, #tpu.memory_space<vmem>>, vector<2x10xf32>
    tpu.vector_store %arg13[%c0_257, %c0_258], %327 {strides = array<i32>} : memref<2x10xf32, #tpu.memory_space<vmem>>, vector<2x10xf32>,
    return
  }
}

</mosaic_0001>

<llo_original>
// kernel: net_forward.1
$region0: #{net_forward.1}
  #allocation0 [shape = 'u32[]', space=smem, size = 0x4, offset = 0x4, fixed_abs, tag = 'smem constant byte address 0x4 - core index']
  #allocation1 [shape = 'u32[72,128]{1,0:T(1,128)}', space=vmem, size = 0x9000, scoped, tag = 'internal scratch']
  #allocation2 [shape = 'f32[648,32]{1,0:T(8,128)}', space=vmem, size = 0x51000, scoped, tag = 'scratch operand']
  #allocation3 [shape = 'f32[200,64]{1,0:T(8,128)}', space=vmem, size = 0x19000, scoped, tag = 'scratch operand']
  %s0 = inlined_call_operand.vmem [shape: f32[512,9], index: 0, kind: input, shape index: {}]
  %s1 = inlined_call_operand.vmem [shape: f32[9,32], index: 1, kind: input, shape index: {}]
  %s2 = inlined_call_operand.vmem [shape: f32[1,32], index: 2, kind: input, shape index: {}]
  %s3 = inlined_call_operand.vmem [shape: f32[128,608], index: 3, kind: input, shape index: {}]
  %s4 = inlined_call_operand.vmem [shape: f32[9,32,64], index: 4, kind: input, shape index: {}]
  %s5 = inlined_call_operand.vmem [shape: f32[1,64], index: 5, kind: input, shape index: {}]
  %s6 = inlined_call_operand.vmem [shape: f32[32,176], index: 6, kind: input, shape index: {}]
  %s7 = inlined_call_operand.vmem [shape: f32[9,64,128], index: 7, kind: input, shape index: {}]
  %s8 = inlined_call_operand.vmem [shape: f32[1,128], index: 8, kind: input, shape index: {}]
  %s9 = inlined_call_operand.hbm [shape: f32[2048,128], index: 9, kind: input, shape index: {}]
  %s10 = inlined_call_operand.vmem [shape: f32[1,128], index: 10, kind: input, shape index: {}]
  %s11 = inlined_call_operand.vmem [shape: f32[128,10], index: 11, kind: input, shape index: {}]
  %s12 = inlined_call_operand.vmem [shape: f32[1,10], index: 12, kind: input, shape index: {}]
  %s13 = inlined_call_operand.hbm [shape: f32[2,10], index: 13, kind: output, shape index: {}]
  %s14 = sld [smem:[#allocation0]]
  $region66: #{net_forward.1} parent=0
    _
  %s16 = ssub.s32 1, %s14
  %s17 = scalar_select 0, %s16, %s14
  $region1: #{net_forward.1} parent=0
    #allocation4 [shape = 'u8[1048576]{0}', space=vmem, size = 0x100000, scoped, tag = 'input window, operand 9, single buffered']
    #allocation5 [shape = 's32[1]{0}', space=sflag, size = 0x4, scoped, tag = 'scoped memory for net_forward.1']
    #allocation6 [shape = 's32[1]{0}', space=sflag, size = 0x4, scoped, tag = 'scoped memory for net_forward.1']
    #allocation7 [shape = 'u8[1024]{0}', space=vmem, size = 0x400, scoped, tag = 'output window, operand 0, single buffered']
    %18 = vsyncpa [#allocation5], 0
    %19 = vsyncpa [#allocation6], 0
    // Predicated region
    $region2: #{net_forward.1} parent=1 // pred_check
      _
    $region3: #{net_forward.1} parent=1 // pred_check_branch
      %21 = sbr.rel (0) target = $region5
    $region4: #{net_forward.1} parent=1 // pred_region
      _
    $region5: #{net_forward.1} parent=1 // pred_fallthru
      _
    // Predicated region
    $region6: #{net_forward.1} parent=1 // pred_check
      _
    $region7: #{net_forward.1} parent=1 // pred_check_branch
      %23 = sbr.rel (0) target = $region9
    $region8: #{net_forward.1} parent=1 // pred_region
      _
    $region9: #{net_forward.1} parent=1 // pred_fallthru
      _
    // Predicated region
    $region10: #{net_forward.1} parent=1 // pred_check
      _
    $region11: #{net_forward.1} parent=1 // pred_check_branch
      %25 = sbr.rel (0) target = $region13
    $region12: #{net_forward.1} parent=1 // pred_region
      _
    $region13: #{net_forward.1} parent=1 // pred_fallthru
      _
    // Predicated region
    $region14: #{net_forward.1} parent=1 // pred_check
      _
    $region15: #{net_forward.1} parent=1 // pred_check_branch
      %27 = sbr.rel (0) target = $region17
    $region16: #{net_forward.1} parent=1 // pred_region
      _
    $region17: #{net_forward.1} parent=1 // pred_fallthru
      _
    // Predicated region
    $region18: #{net_forward.1} parent=1 // pred_check
      _
    $region19: #{net_forward.1} parent=1 // pred_check_branch
      %29 = sbr.rel (0) target = $region21
    $region20: #{net_forward.1} parent=1 // pred_region
      _
    $region21: #{net_forward.1} parent=1 // pred_fallthru
      _
    // Predicated region
    $region22: #{net_forward.1} parent=1 // pred_check
      _
    $region23: #{net_forward.1} parent=1 // pred_check_branch
      %31 = sbr.rel (0) target = $region25
    $region24: #{net_forward.1} parent=1 // pred_region
      _
    $region25: #{net_forward.1} parent=1 // pred_fallthru
      _
    // Predicated region
    $region26: #{net_forward.1} parent=1 // pred_check
      _
    $region27: #{net_forward.1} parent=1 // pred_check_branch
      %33 = sbr.rel (0) target = $region29
    $region28: #{net_forward.1} parent=1 // pred_region
      _
    $region29: #{net_forward.1} parent=1 // pred_fallthru
      _
    // Predicated region
    $region30: #{net_forward.1} parent=1 // pred_check
      _
    $region31: #{net_forward.1} parent=1 // pred_check_branch
      %35 = sbr.rel (0) target = $region33
    $region32: #{net_forward.1} parent=1 // pred_region
      _
    $region33: #{net_forward.1} parent=1 // pred_fallthru
      _
    // Predicated region
    $region34: #{net_forward.1} parent=1 // pred_check
      _
    $region35: #{net_forward.1} parent=1 // pred_check_branch
      %37 = sbr.rel (0) target = $region37
    $region36: #{net_forward.1} parent=1 // pred_region
      _
    $region37: #{net_forward.1} parent=1 // pred_fallthru
      _
    // Predicated region
    $region38: #{net_forward.1} parent=1 // pred_check
      _
    $region39: #{net_forward.1} parent=1 // pred_check_branch
      %39 = sbr.rel (0) target = $region41
    $region40: #{net_forward.1} parent=1 // pred_region
      %41 = vsyncadd [#allocation5], 0
      %s42 = sshll.u32 %s9, 4
      %s43 = int_to_ptr.hbm [resolvable:$true] %s42
      %s44 = sshll.u32 [#allocation4], 4
      %s45 = int_to_ptr.vmem [resolvable:$true] %s44
      %50 = dma.hbm_to_vmem [thread:$0]  %s43, 32768, %s45, [#allocation5], 128, 128, 8
    $region41: #{net_forward.1} parent=1 // pred_fallthru
      _
    // Predicated region
    $region42: #{net_forward.1} parent=1 // pred_check
      _
    $region43: #{net_forward.1} parent=1 // pred_check_branch
      %52 = sbr.rel (0) target = $region45
    $region44: #{net_forward.1} parent=1 // pred_region
      _
    $region45: #{net_forward.1} parent=1 // pred_fallthru
      _
    // Predicated region
    $region46: #{net_forward.1} parent=1 // pred_check
      _
    $region47: #{net_forward.1} parent=1 // pred_check_branch
      %54 = sbr.rel (0) target = $region49
    $region48: #{net_forward.1} parent=1 // pred_region
      _
    $region49: #{net_forward.1} parent=1 // pred_fallthru
      _
    // Predicated region
    $region50: #{net_forward.1} parent=1 // pred_check
      _
    $region51: #{net_forward.1} parent=1 // pred_check_branch
      %56 = sbr.rel (0) target = $region53
    $region52: #{net_forward.1} parent=1 // pred_region
      _
    $region53: #{net_forward.1} parent=1 // pred_fallthru
      _
    // Predicated region
    $region54: #{net_forward.1} parent=1 // pred_check
      _
    $region55: #{net_forward.1} parent=1 // pred_check_branch
      %58 = sbr.rel (0) target = $region57
    $region56: #{net_forward.1} parent=1 // pred_region
      %60 = dma.done [#allocation5], 32768
    $region57: #{net_forward.1} parent=1 // pred_fallthru
      _
    %v61 = vld [vmem:[%s0] sm:$0xff]
    %v62 = vld [vmem:[%s0 + $0x8] sm:$0xff]
    %v63 = vld [vmem:[%s0 + $0x10] sm:$0xff]
    %v64 = vld [vmem:[%s0 + $0x18] sm:$0xff]
    %v65 = vld [vmem:[%s0 + $0x20] sm:$0xff]
    %v66 = vld [vmem:[%s0 + $0x28] sm:$0xff]
    %v67 = vld [vmem:[%s0 + $0x30] sm:$0xff]
    %v68 = vld [vmem:[%s0 + $0x38] sm:$0xff]
    %v69 = vld [vmem:[%s0 + $0x40] sm:$0xff]
    %v70 = vld [vmem:[%s0 + $0x48] sm:$0xff]
    %v71 = vld [vmem:[%s0 + $0x50] sm:$0xff]
    %v72 = vld [vmem:[%s0 + $0x58] sm:$0xff]
    %v73 = vld [vmem:[%s0 + $0x60] sm:$0xff]
    %v74 = vld [vmem:[%s0 + $0x68] sm:$0xff]
    %v75 = vld [vmem:[%s0 + $0x70] sm:$0xff]
    %v76 = vld [vmem:[%s0 + $0x78] sm:$0xff]
    %v77 = vld [vmem:[%s0 + $0x80] sm:$0xff]
    %v78 = vld [vmem:[%s0 + $0x88] sm:$0xff]
    %v79 = vld [vmem:[%s0 + $0x90] sm:$0xff]
    %v80 = vld [vmem:[%s0 + $0x98] sm:$0xff]
    %v81 = vld [vmem:[%s0 + $0xa0] sm:$0xff]
    %v82 = vld [vmem:[%s0 + $0xa8] sm:$0xff]
    %v83 = vld [vmem:[%s0 + $0xb0] sm:$0xff]
    %v84 = vld [vmem:[%s0 + $0xb8] sm:$0xff]
    %v85 = vld [vmem:[%s0 + $0xc0] sm:$0xff]
    %v86 = vld [vmem:[%s0 + $0xc8] sm:$0xff]
    %v87 = vld [vmem:[%s0 + $0xd0] sm:$0xff]
    %v88 = vld [vmem:[%s0 + $0xd8] sm:$0xff]
    %v89 = vld [vmem:[%s0 + $0xe0] sm:$0xff]
    %v90 = vld [vmem:[%s0 + $0xe8] sm:$0xff]
    %v91 = vld [vmem:[%s0 + $0xf0] sm:$0xff]
    %v92 = vld [vmem:[%s0 + $0xf8] sm:$0xff]
    %v93 = vld [vmem:[%s0 + $0x100] sm:$0xff]
    %v94 = vld [vmem:[%s0 + $0x108] sm:$0xff]
    %v95 = vld [vmem:[%s0 + $0x110] sm:$0xff]
    %v96 = vld [vmem:[%s0 + $0x118] sm:$0xff]
    %v97 = vld [vmem:[%s0 + $0x120] sm:$0xff]
    %v98 = vld [vmem:[%s0 + $0x128] sm:$0xff]
    %v99 = vld [vmem:[%s0 + $0x130] sm:$0xff]
    %v100 = vld [vmem:[%s0 + $0x138] sm:$0xff]
    %v101 = vld [vmem:[%s0 + $0x140] sm:$0xff]
    %v102 = vld [vmem:[%s0 + $0x148] sm:$0xff]
    %v103 = vld [vmem:[%s0 + $0x150] sm:$0xff]
    %v104 = vld [vmem:[%s0 + $0x158] sm:$0xff]
    %v105 = vld [vmem:[%s0 + $0x160] sm:$0xff]
    %v106 = vld [vmem:[%s0 + $0x168] sm:$0xff]
    %v107 = vld [vmem:[%s0 + $0x170] sm:$0xff]
    %v108 = vld [vmem:[%s0 + $0x178] sm:$0xff]
    %v109 = vld [vmem:[%s0 + $0x180] sm:$0xff]
    %v110 = vld [vmem:[%s0 + $0x188] sm:$0xff]
    %v111 = vld [vmem:[%s0 + $0x190] sm:$0xff]
    %v112 = vld [vmem:[%s0 + $0x198] sm:$0xff]
    %v113 = vld [vmem:[%s0 + $0x1a0] sm:$0xff]
    %v114 = vld [vmem:[%s0 + $0x1a8] sm:$0xff]
    %v115 = vld [vmem:[%s0 + $0x1b0] sm:$0xff]
    %v116 = vld [vmem:[%s0 + $0x1b8] sm:$0xff]
    %v117 = vld [vmem:[%s0 + $0x1c0] sm:$0xff]
    %v118 = vld [vmem:[%s0 + $0x1c8] sm:$0xff]
    %v119 = vld [vmem:[%s0 + $0x1d0] sm:$0xff]
    %v120 = vld [vmem:[%s0 + $0x1d8] sm:$0xff]
    %v121 = vld [vmem:[%s0 + $0x1e0] sm:$0xff]
    %v122 = vld [vmem:[%s0 + $0x1e8] sm:$0xff]
    %v123 = vld [vmem:[%s0 + $0x1f0] sm:$0xff]
    %v124 = vld [vmem:[%s0 + $0x1f8] sm:$0xff]
    %v125 = vld [vmem:[%s1] sm:$0xff]
    %v126 = vld [vmem:[%s1 + $0x8] sm:$0x1]
    %v127 = vld [vmem:[%s2] sm:$0x1]
    %v129 = vperm.slane %v127, 0
    %vm131 = vcmask 72704
    %v133 = vsel %vm131, %v61, 0
    %v136 = vsel %vm131, %v62, 0
    %v139 = vsel %vm131, %v63, 0
    %v142 = vsel %vm131, %v64, 0
    %v145 = vsel %vm131, %v65, 0
    %v148 = vsel %vm131, %v66, 0
    %v151 = vsel %vm131, %v67, 0
    %v154 = vsel %vm131, %v68, 0
    %v157 = vsel %vm131, %v69, 0
    %v160 = vsel %vm131, %v70, 0
    %v163 = vsel %vm131, %v71, 0
    %v166 = vsel %vm131, %v72, 0
    %v169 = vsel %vm131, %v73, 0
    %v172 = vsel %vm131, %v74, 0
    %v175 = vsel %vm131, %v75, 0
    %v178 = vsel %vm131, %v76, 0
    %v181 = vsel %vm131, %v77, 0
    %v184 = vsel %vm131, %v78, 0
    %v187 = vsel %vm131, %v79, 0
    %v190 = vsel %vm131, %v80, 0
    %v193 = vsel %vm131, %v81, 0
    %v196 = vsel %vm131, %v82, 0
    %v199 = vsel %vm131, %v83, 0
    %v202 = vsel %vm131, %v84, 0
    %v205 = vsel %vm131, %v85, 0
    %v208 = vsel %vm131, %v86, 0
    %v211 = vsel %vm131, %v87, 0
    %v214 = vsel %vm131, %v88, 0
    %v217 = vsel %vm131, %v89, 0
    %v220 = vsel %vm131, %v90, 0
    %v223 = vsel %vm131, %v91, 0
    %v226 = vsel %vm131, %v92, 0
    %v229 = vsel %vm131, %v93, 0
    %v232 = vsel %vm131, %v94, 0
    %v235 = vsel %vm131, %v95, 0
    %v238 = vsel %vm131, %v96, 0
    %v241 = vsel %vm131, %v97, 0
    %v244 = vsel %vm131, %v98, 0
    %v247 = vsel %vm131, %v99, 0
    %v250 = vsel %vm131, %v100, 0
    %v253 = vsel %vm131, %v101, 0
    %v256 = vsel %vm131, %v102, 0
    %v259 = vsel %vm131, %v103, 0
    %v262 = vsel %vm131, %v104, 0
    %v265 = vsel %vm131, %v105, 0
    %v268 = vsel %vm131, %v106, 0
    %v271 = vsel %vm131, %v107, 0
    %v274 = vsel %vm131, %v108, 0
    %v277 = vsel %vm131, %v109, 0
    %v280 = vsel %vm131, %v110, 0
    %v283 = vsel %vm131, %v111, 0
    %v286 = vsel %vm131, %v112, 0
    %v289 = vsel %vm131, %v113, 0
    %v292 = vsel %vm131, %v114, 0
    %v295 = vsel %vm131, %v115, 0
    %v298 = vsel %vm131, %v116, 0
    %v301 = vsel %vm131, %v117, 0
    %v304 = vsel %vm131, %v118, 0
    %v307 = vsel %vm131, %v119, 0
    %v310 = vsel %vm131, %v120, 0
    %v313 = vsel %vm131, %v121, 0
    %v316 = vsel %vm131, %v122, 0
    %v319 = vsel %vm131, %v123, 0
    %v322 = vsel %vm131, %v124, 0
    %vm324 = vcmask 1040384
    %v326 = vsel %vm324, %v126, 0
    %328 = vmatpush.msra.mxu0 0.0
    %329 = vmatpush.msra.mxu0 0.0
    %330 = vmatpush.msra.mxu0 0.0
    %331 = vmatpush.msra.mxu0 0.0
    %332 = vmatpush.msra.mxu0 0.0
    %333 = vmatpush.msra.mxu0 0.0
    %334 = vmatpush.msra.mxu0 0.0
    %335 = vmatpush.msra.mxu0 0.0
    %336 = vmatpush.msra.mxu0 0.0
    %337 = vmatpush.msra.mxu0 0.0
    %338 = vmatpush.msra.mxu0 0.0
    %339 = vmatpush.msra.mxu0 0.0
    %340 = vmatpush.msra.mxu0 0.0
    %341 = vmatpush.msra.mxu0 0.0
    %342 = vmatpush.msra.mxu0 %v326
    %343 = vmatpush.msra.mxu0 %v125
    %344 = vmatmul.f32.gmra.mxu0 %v133
    %v345 = vpop.f32.mrf.mxu0
    %v346 = vadd.f32 %v129, %v345
    %347 = vmatmul.f32.gmra.mxu0 %v136
    %v348 = vpop.f32.mrf.mxu0
    %v349 = vadd.f32 %v129, %v348
    %350 = vmatmul.f32.gmra.mxu0 %v139
    %v351 = vpop.f32.mrf.mxu0
    %v352 = vadd.f32 %v129, %v351
    %353 = vmatmul.f32.gmra.mxu0 %v142
    %v354 = vpop.f32.mrf.mxu0
    %v355 = vadd.f32 %v129, %v354
    %356 = vmatmul.f32.gmra.mxu0 %v145
    %v357 = vpop.f32.mrf.mxu0
    %v358 = vadd.f32 %v129, %v357
    %359 = vmatmul.f32.gmra.mxu0 %v148
    %v360 = vpop.f32.mrf.mxu0
    %v361 = vadd.f32 %v129, %v360
    %362 = vmatmul.f32.gmra.mxu0 %v151
    %v363 = vpop.f32.mrf.mxu0
    %v364 = vadd.f32 %v129, %v363
    %365 = vmatmul.f32.gmra.mxu0 %v154
    %v366 = vpop.f32.mrf.mxu0
    %v367 = vadd.f32 %v129, %v366
    %368 = vmatmul.f32.gmra.mxu0 %v157
    %v369 = vpop.f32.mrf.mxu0
    %v370 = vadd.f32 %v129, %v369
    %371 = vmatmul.f32.gmra.mxu0 %v160
    %v372 = vpop.f32.mrf.mxu0
    %v373 = vadd.f32 %v129, %v372
    %374 = vmatmul.f32.gmra.mxu0 %v163
    %v375 = vpop.f32.mrf.mxu0
    %v376 = vadd.f32 %v129, %v375
    %377 = vmatmul.f32.gmra.mxu0 %v166
    %v378 = vpop.f32.mrf.mxu0
    %v379 = vadd.f32 %v129, %v378
    %380 = vmatmul.f32.gmra.mxu0 %v169
    %v381 = vpop.f32.mrf.mxu0
    %v382 = vadd.f32 %v129, %v381
    %383 = vmatmul.f32.gmra.mxu0 %v172
    %v384 = vpop.f32.mrf.mxu0
    %v385 = vadd.f32 %v129, %v384
    %386 = vmatmul.f32.gmra.mxu0 %v175
    %v387 = vpop.f32.mrf.mxu0
    %v388 = vadd.f32 %v129, %v387
    %389 = vmatmul.f32.gmra.mxu0 %v178
    %v390 = vpop.f32.mrf.mxu0
    %v391 = vadd.f32 %v129, %v390
    %392 = vmatmul.f32.gmra.mxu0 %v181
    %v393 = vpop.f32.mrf.mxu0
    %v394 = vadd.f32 %v129, %v393
    %395 = vmatmul.f32.gmra.mxu0 %v184
    %v396 = vpop.f32.mrf.mxu0
    %v397 = vadd.f32 %v129, %v396
    %398 = vmatmul.f32.gmra.mxu0 %v187
    %v399 = vpop.f32.mrf.mxu0
    %v400 = vadd.f32 %v129, %v399
    %401 = vmatmul.f32.gmra.mxu0 %v190
    %v402 = vpop.f32.mrf.mxu0
    %v403 = vadd.f32 %v129, %v402
    %404 = vmatmul.f32.gmra.mxu0 %v193
    %v405 = vpop.f32.mrf.mxu0
    %v406 = vadd.f32 %v129, %v405
    %407 = vmatmul.f32.gmra.mxu0 %v196
    %v408 = vpop.f32.mrf.mxu0
    %v409 = vadd.f32 %v129, %v408
    %410 = vmatmul.f32.gmra.mxu0 %v199
    %v411 = vpop.f32.mrf.mxu0
    %v412 = vadd.f32 %v129, %v411
    %413 = vmatmul.f32.gmra.mxu0 %v202
    %v414 = vpop.f32.mrf.mxu0
    %v415 = vadd.f32 %v129, %v414
    %416 = vmatmul.f32.gmra.mxu0 %v205
    %v417 = vpop.f32.mrf.mxu0
    %v418 = vadd.f32 %v129, %v417
    %419 = vmatmul.f32.gmra.mxu0 %v208
    %v420 = vpop.f32.mrf.mxu0
    %v421 = vadd.f32 %v129, %v420
    %422 = vmatmul.f32.gmra.mxu0 %v211
    %v423 = vpop.f32.mrf.mxu0
    %v424 = vadd.f32 %v129, %v423
    %425 = vmatmul.f32.gmra.mxu0 %v214
    %v426 = vpop.f32.mrf.mxu0
    %v427 = vadd.f32 %v129, %v426
    %428 = vmatmul.f32.gmra.mxu0 %v217
    %v429 = vpop.f32.mrf.mxu0
    %v430 = vadd.f32 %v129, %v429
    %431 = vmatmul.f32.gmra.mxu0 %v220
    %v432 = vpop.f32.mrf.mxu0
    %v433 = vadd.f32 %v129, %v432
    %434 = vmatmul.f32.gmra.mxu0 %v223
    %v435 = vpop.f32.mrf.mxu0
    %v436 = vadd.f32 %v129, %v435
    %437 = vmatmul.f32.gmra.mxu0 %v226
    %v438 = vpop.f32.mrf.mxu0
    %v439 = vadd.f32 %v129, %v438
    %440 = vmatmul.f32.gmra.mxu0 %v229
    %v441 = vpop.f32.mrf.mxu0
    %v442 = vadd.f32 %v129, %v441
    %443 = vmatmul.f32.gmra.mxu0 %v232
    %v444 = vpop.f32.mrf.mxu0
    %v445 = vadd.f32 %v129, %v444
    %446 = vmatmul.f32.gmra.mxu0 %v235
    %v447 = vpop.f32.mrf.mxu0
    %v448 = vadd.f32 %v129, %v447
    %449 = vmatmul.f32.gmra.mxu0 %v238
    %v450 = vpop.f32.mrf.mxu0
    %v451 = vadd.f32 %v129, %v450
    %452 = vmatmul.f32.gmra.mxu0 %v241
    %v453 = vpop.f32.mrf.mxu0
    %v454 = vadd.f32 %v129, %v453
    %455 = vmatmul.f32.gmra.mxu0 %v244
    %v456 = vpop.f32.mrf.mxu0
    %v457 = vadd.f32 %v129, %v456
    %458 = vmatmul.f32.gmra.mxu0 %v247
    %v459 = vpop.f32.mrf.mxu0
    %v460 = vadd.f32 %v129, %v459
    %461 = vmatmul.f32.gmra.mxu0 %v250
    %v462 = vpop.f32.mrf.mxu0
    %v463 = vadd.f32 %v129, %v462
    %464 = vmatmul.f32.gmra.mxu0 %v253
    %v465 = vpop.f32.mrf.mxu0
    %v466 = vadd.f32 %v129, %v465
    %467 = vmatmul.f32.gmra.mxu0 %v256
    %v468 = vpop.f32.mrf.mxu0
    %v469 = vadd.f32 %v129, %v468
    %470 = vmatmul.f32.gmra.mxu0 %v259
    %v471 = vpop.f32.mrf.mxu0
    %v472 = vadd.f32 %v129, %v471
    %473 = vmatmul.f32.gmra.mxu0 %v262
    %v474 = vpop.f32.mrf.mxu0
    %v475 = vadd.f32 %v129, %v474
    %476 = vmatmul.f32.gmra.mxu0 %v265
    %v477 = vpop.f32.mrf.mxu0
    %v478 = vadd.f32 %v129, %v477
    %479 = vmatmul.f32.gmra.mxu0 %v268
    %v480 = vpop.f32.mrf.mxu0
    %v481 = vadd.f32 %v129, %v480
    %482 = vmatmul.f32.gmra.mxu0 %v271
    %v483 = vpop.f32.mrf.mxu0
    %v484 = vadd.f32 %v129, %v483
    %485 = vmatmul.f32.gmra.mxu0 %v274
    %v486 = vpop.f32.mrf.mxu0
    %v487 = vadd.f32 %v129, %v486
    %488 = vmatmul.f32.gmra.mxu0 %v277
    %v489 = vpop.f32.mrf.mxu0
    %v490 = vadd.f32 %v129, %v489
    %491 = vmatmul.f32.gmra.mxu0 %v280
    %v492 = vpop.f32.mrf.mxu0
    %v493 = vadd.f32 %v129, %v492
    %494 = vmatmul.f32.gmra.mxu0 %v283
    %v495 = vpop.f32.mrf.mxu0
    %v496 = vadd.f32 %v129, %v495
    %497 = vmatmul.f32.gmra.mxu0 %v286
    %v498 = vpop.f32.mrf.mxu0
    %v499 = vadd.f32 %v129, %v498
    %500 = vmatmul.f32.gmra.mxu0 %v289
    %v501 = vpop.f32.mrf.mxu0
    %v502 = vadd.f32 %v129, %v501
    %503 = vmatmul.f32.gmra.mxu0 %v292
    %v504 = vpop.f32.mrf.mxu0
    %v505 = vadd.f32 %v129, %v504
    %506 = vmatmul.f32.gmra.mxu0 %v295
    %v507 = vpop.f32.mrf.mxu0
    %v508 = vadd.f32 %v129, %v507
    %509 = vmatmul.f32.gmra.mxu0 %v298
    %v510 = vpop.f32.mrf.mxu0
    %v511 = vadd.f32 %v129, %v510
    %512 = vmatmul.f32.gmra.mxu0 %v301
    %v513 = vpop.f32.mrf.mxu0
    %v514 = vadd.f32 %v129, %v513
    %515 = vmatmul.f32.gmra.mxu0 %v304
    %v516 = vpop.f32.mrf.mxu0
    %v517 = vadd.f32 %v129, %v516
    %518 = vmatmul.f32.gmra.mxu0 %v307
    %v519 = vpop.f32.mrf.mxu0
    %v520 = vadd.f32 %v129, %v519
    %521 = vmatmul.f32.gmra.mxu0 %v310
    %v522 = vpop.f32.mrf.mxu0
    %v523 = vadd.f32 %v129, %v522
    %524 = vmatmul.f32.gmra.mxu0 %v313
    %v525 = vpop.f32.mrf.mxu0
    %v526 = vadd.f32 %v129, %v525
    %527 = vmatmul.f32.gmra.mxu0 %v316
    %v528 = vpop.f32.mrf.mxu0
    %v529 = vadd.f32 %v129, %v528
    %530 = vmatmul.f32.gmra.mxu0 %v319
    %v531 = vpop.f32.mrf.mxu0
    %v532 = vadd.f32 %v129, %v531
    %533 = vmatmul.f32.gmra.mxu0 %v322
    %v534 = vpop.f32.mrf.mxu0
    %v535 = vadd.f32 %v129, %v534
    %536 = vdwg.mxu0
    %v537 = vmax.f32 %v346, 0.0
    %v538 = vmax.f32 %v349, 0.0
    %v539 = vmax.f32 %v352, 0.0
    %v540 = vmax.f32 %v355, 0.0
    %v541 = vmax.f32 %v358, 0.0
    %v542 = vmax.f32 %v361, 0.0
    %v543 = vmax.f32 %v364, 0.0
    %v544 = vmax.f32 %v367, 0.0
    %v545 = vmax.f32 %v370, 0.0
    %v546 = vmax.f32 %v373, 0.0
    %v547 = vmax.f32 %v376, 0.0
    %v548 = vmax.f32 %v379, 0.0
    %v549 = vmax.f32 %v382, 0.0
    %v550 = vmax.f32 %v385, 0.0
    %v551 = vmax.f32 %v388, 0.0
    %v552 = vmax.f32 %v391, 0.0
    %v553 = vmax.f32 %v394, 0.0
    %v554 = vmax.f32 %v397, 0.0
    %v555 = vmax.f32 %v400, 0.0
    %v556 = vmax.f32 %v403, 0.0
    %v557 = vmax.f32 %v406, 0.0
    %v558 = vmax.f32 %v409, 0.0
    %v559 = vmax.f32 %v412, 0.0
    %v560 = vmax.f32 %v415, 0.0
    %v561 = vmax.f32 %v418, 0.0
    %v562 = vmax.f32 %v421, 0.0
    %v563 = vmax.f32 %v424, 0.0
    %v564 = vmax.f32 %v427, 0.0
    %v565 = vmax.f32 %v430, 0.0
    %v566 = vmax.f32 %v433, 0.0
    %v567 = vmax.f32 %v436, 0.0
    %v568 = vmax.f32 %v439, 0.0
    %v569 = vmax.f32 %v442, 0.0
    %v570 = vmax.f32 %v445, 0.0
    %v571 = vmax.f32 %v448, 0.0
    %v572 = vmax.f32 %v451, 0.0
    %v573 = vmax.f32 %v454, 0.0
    %v574 = vmax.f32 %v457, 0.0
    %v575 = vmax.f32 %v460, 0.0
    %v576 = vmax.f32 %v463, 0.0
    %v577 = vmax.f32 %v466, 0.0
    %v578 = vmax.f32 %v469, 0.0
    %v579 = vmax.f32 %v472, 0.0
    %v580 = vmax.f32 %v475, 0.0
    %v581 = vmax.f32 %v478, 0.0
    %v582 = vmax.f32 %v481, 0.0
    %v583 = vmax.f32 %v484, 0.0
    %v584 = vmax.f32 %v487, 0.0
    %v585 = vmax.f32 %v490, 0.0
    %v586 = vmax.f32 %v493, 0.0
    %v587 = vmax.f32 %v496, 0.0
    %v588 = vmax.f32 %v499, 0.0
    %v589 = vmax.f32 %v502, 0.0
    %v590 = vmax.f32 %v505, 0.0
    %v591 = vmax.f32 %v508, 0.0
    %v592 = vmax.f32 %v511, 0.0
    %v593 = vmax.f32 %v514, 0.0
    %v594 = vmax.f32 %v517, 0.0
    %v595 = vmax.f32 %v520, 0.0
    %v596 = vmax.f32 %v523, 0.0
    %v597 = vmax.f32 %v526, 0.0
    %v598 = vmax.f32 %v529, 0.0
    %v599 = vmax.f32 %v532, 0.0
    %v600 = vmax.f32 %v535, 0.0
    %vm601 = vcmask 261120
    %602 = vst.msk [vmem:[#allocation2] sm:$0xff] %vm601, 0.0
    %603 = vst.msk [vmem:[#allocation2 + $0x8] sm:$0xff] %vm601, 0.0
    %604 = vst.msk [vmem:[#allocation2 + $0x10] sm:$0xff] %vm601, 0.0
    %605 = vst.msk [vmem:[#allocation2 + $0x18] sm:$0xff] %vm601, 0.0
    %606 = vst.msk [vmem:[#allocation2 + $0x20] sm:$0xff] %vm601, 0.0
    %607 = vst.msk [vmem:[#allocation2 + $0x28] sm:$0xff] %vm601, 0.0
    %608 = vst.msk [vmem:[#allocation2 + $0x30] sm:$0xff] %vm601, 0.0
    %609 = vst.msk [vmem:[#allocation2 + $0x38] sm:$0xff] %vm601, 0.0
    %610 = vst.msk [vmem:[#allocation2 + $0x40] sm:$0xff] %vm601, 0.0
    %611 = vst.msk [vmem:[#allocation2 + $0x48] sm:$0xff] %vm601, 0.0
    %612 = vst.msk [vmem:[#allocation2 + $0x50] sm:$0xff] %vm601, 0.0
    %613 = vst.msk [vmem:[#allocation2 + $0x58] sm:$0xff] %vm601, 0.0
    %614 = vst.msk [vmem:[#allocation2 + $0x60] sm:$0xff] %vm601, 0.0
    %615 = vst.msk [vmem:[#allocation2 + $0x68] sm:$0xff] %vm601, 0.0
    %616 = vst.msk [vmem:[#allocation2 + $0x70] sm:$0xff] %vm601, 0.0
    %617 = vst.msk [vmem:[#allocation2 + $0x78] sm:$0xff] %vm601, 0.0
    %618 = vst.msk [vmem:[#allocation2 + $0x80] sm:$0xff] %vm601, 0.0
    %619 = vst.msk [vmem:[#allocation2 + $0x88] sm:$0xff] %vm601, 0.0
    %620 = vst.msk [vmem:[#allocation2 + $0x90] sm:$0xff] %vm601, 0.0
    %621 = vst.msk [vmem:[#allocation2 + $0x98] sm:$0xff] %vm601, 0.0
    %622 = vst.msk [vmem:[#allocation2 + $0xa0] sm:$0xff] %vm601, 0.0
    %623 = vst.msk [vmem:[#allocation2 + $0xa8] sm:$0xff] %vm601, 0.0
    %624 = vst.msk [vmem:[#allocation2 + $0xb0] sm:$0xff] %vm601, 0.0
    %625 = vst.msk [vmem:[#allocation2 + $0xb8] sm:$0xff] %vm601, 0.0
    %626 = vst.msk [vmem:[#allocation2 + $0xc0] sm:$0xff] %vm601, 0.0
    %627 = vst.msk [vmem:[#allocation2 + $0xc8] sm:$0xff] %vm601, 0.0
    %628 = vst.msk [vmem:[#allocation2 + $0xd0] sm:$0xff] %vm601, 0.0
    %629 = vst.msk [vmem:[#allocation2 + $0xd8] sm:$0xff] %vm601, 0.0
    %630 = vst.msk [vmem:[#allocation2 + $0xe0] sm:$0xff] %vm601, 0.0
    %631 = vst.msk [vmem:[#allocation2 + $0xe8] sm:$0xff] %vm601, 0.0
    %632 = vst.msk [vmem:[#allocation2 + $0xf0] sm:$0xff] %vm601, 0.0
    %633 = vst.msk [vmem:[#allocation2 + $0xf8] sm:$0xff] %vm601, 0.0
    %634 = vst.msk [vmem:[#allocation2 + $0x100] sm:$0xff] %vm601, 0.0
    %635 = vst.msk [vmem:[#allocation2 + $0x108] sm:$0xff] %vm601, 0.0
    %636 = vst.msk [vmem:[#allocation2 + $0x110] sm:$0xff] %vm601, 0.0
    %637 = vst.msk [vmem:[#allocation2 + $0x118] sm:$0xff] %vm601, 0.0
    %638 = vst.msk [vmem:[#allocation2 + $0x120] sm:$0xff] %vm601, 0.0
    %639 = vst.msk [vmem:[#allocation2 + $0x128] sm:$0xff] %vm601, 0.0
    %640 = vst.msk [vmem:[#allocation2 + $0x130] sm:$0xff] %vm601, 0.0
    %641 = vst.msk [vmem:[#allocation2 + $0x138] sm:$0xff] %vm601, 0.0
    %642 = vst.msk [vmem:[#allocation2 + $0x140] sm:$0xff] %vm601, 0.0
    %643 = vst.msk [vmem:[#allocation2 + $0x148] sm:$0xff] %vm601, 0.0
    %644 = vst.msk [vmem:[#allocation2 + $0x150] sm:$0xff] %vm601, 0.0
    %645 = vst.msk [vmem:[#allocation2 + $0x158] sm:$0xff] %vm601, 0.0
    %646 = vst.msk [vmem:[#allocation2 + $0x160] sm:$0xff] %vm601, 0.0
    %647 = vst.msk [vmem:[#allocation2 + $0x168] sm:$0xff] %vm601, 0.0
    %648 = vst.msk [vmem:[#allocation2 + $0x170] sm:$0xff] %vm601, 0.0
    %649 = vst.msk [vmem:[#allocation2 + $0x178] sm:$0xff] %vm601, 0.0
    %650 = vst.msk [vmem:[#allocation2 + $0x180] sm:$0xff] %vm601, 0.0
    %651 = vst.msk [vmem:[#allocation2 + $0x188] sm:$0xff] %vm601, 0.0
    %652 = vst.msk [vmem:[#allocation2 + $0x190] sm:$0xff] %vm601, 0.0
    %653 = vst.msk [vmem:[#allocation2 + $0x198] sm:$0xff] %vm601, 0.0
    %654 = vst.msk [vmem:[#allocation2 + $0x1a0] sm:$0xff] %vm601, 0.0
    %655 = vst.msk [vmem:[#allocation2 + $0x1a8] sm:$0xff] %vm601, 0.0
    %656 = vst.msk [vmem:[#allocation2 + $0x1b0] sm:$0xff] %vm601, 0.0
    %657 = vst.msk [vmem:[#allocation2 + $0x1b8] sm:$0xff] %vm601, 0.0
    %658 = vst.msk [vmem:[#allocation2 + $0x1c0] sm:$0xff] %vm601, 0.0
    %659 = vst.msk [vmem:[#allocation2 + $0x1c8] sm:$0xff] %vm601, 0.0
    %660 = vst.msk [vmem:[#allocation2 + $0x1d0] sm:$0xff] %vm601, 0.0
    %661 = vst.msk [vmem:[#allocation2 + $0x1d8] sm:$0xff] %vm601, 0.0
    %662 = vst.msk [vmem:[#allocation2 + $0x1e0] sm:$0xff] %vm601, 0.0
    %663 = vst.msk [vmem:[#allocation2 + $0x1e8] sm:$0xff] %vm601, 0.0
    %664 = vst.msk [vmem:[#allocation2 + $0x1f0] sm:$0xff] %vm601, 0.0
    %665 = vst.msk [vmem:[#allocation2 + $0x1f8] sm:$0xff] %vm601, 0.0
    %666 = vst.msk [vmem:[#allocation2 + $0x200] sm:$0xff] %vm601, 0.0
    %667 = vst.msk [vmem:[#allocation2 + $0x208] sm:$0xff] %vm601, 0.0
    %668 = vst.msk [vmem:[#allocation2 + $0x210] sm:$0xff] %vm601, 0.0
    %669 = vst.msk [vmem:[#allocation2 + $0x218] sm:$0xff] %vm601, 0.0
    %670 = vst.msk [vmem:[#allocation2 + $0x220] sm:$0xff] %vm601, 0.0
    %671 = vst.msk [vmem:[#allocation2 + $0x228] sm:$0xff] %vm601, 0.0
    %672 = vst.msk [vmem:[#allocation2 + $0x230] sm:$0xff] %vm601, 0.0
    %673 = vst.msk [vmem:[#allocation2 + $0x238] sm:$0xff] %vm601, 0.0
    %674 = vst.msk [vmem:[#allocation2 + $0x240] sm:$0xff] %vm601, 0.0
    %675 = vst.msk [vmem:[#allocation2 + $0x248] sm:$0xff] %vm601, 0.0
    %676 = vst.msk [vmem:[#allocation2 + $0x250] sm:$0xff] %vm601, 0.0
    %677 = vst.msk [vmem:[#allocation2 + $0x258] sm:$0xff] %vm601, 0.0
    %678 = vst.msk [vmem:[#allocation2 + $0x260] sm:$0xff] %vm601, 0.0
    %679 = vst.msk [vmem:[#allocation2 + $0x268] sm:$0xff] %vm601, 0.0
    %680 = vst.msk [vmem:[#allocation2 + $0x270] sm:$0xff] %vm601, 0.0
    %681 = vst.msk [vmem:[#allocation2 + $0x278] sm:$0xff] %vm601, 0.0
    %682 = vst.msk [vmem:[#allocation2 + $0x280] sm:$0xff] %vm601, 0.0
    %683 = vst.msk [vmem:[#allocation2 + $0x13] sm:$0xff] %vm601, %v537
    %684 = vst.msk [vmem:[#allocation2 + $0x1b] sm:$0xff] %vm601, %v538
    %685 = vst.msk [vmem:[#allocation2 + $0x25] sm:$0xff] %vm601, %v539
    %686 = vst.msk [vmem:[#allocation2 + $0x2d] sm:$0xff] %vm601, %v540
    %687 = vst.msk [vmem:[#allocation2 + $0x37] sm:$0xff] %vm601, %v541
    %688 = vst.msk [vmem:[#allocation2 + $0x3f] sm:$0xff] %vm601, %v542
    %689 = vst.msk [vmem:[#allocation2 + $0x49] sm:$0xff] %vm601, %v543
    %690 = vst.msk [vmem:[#allocation2 + $0x51] sm:$0xff] %vm601, %v544
    %691 = vst.msk [vmem:[#allocation2 + $0x5b] sm:$0xff] %vm601, %v545
    %692 = vst.msk [vmem:[#allocation2 + $0x63] sm:$0xff] %vm601, %v546
    %693 = vst.msk [vmem:[#allocation2 + $0x6d] sm:$0xff] %vm601, %v547
    %694 = vst.msk [vmem:[#allocation2 + $0x75] sm:$0xff] %vm601, %v548
    %695 = vst.msk [vmem:[#allocation2 + $0x7f] sm:$0xff] %vm601, %v549
    %696 = vst.msk [vmem:[#allocation2 + $0x87] sm:$0xff] %vm601, %v550
    %697 = vst.msk [vmem:[#allocation2 + $0x91] sm:$0xff] %vm601, %v551
    %698 = vst.msk [vmem:[#allocation2 + $0x99] sm:$0xff] %vm601, %v552
    %699 = vst.msk [vmem:[#allocation2 + $0xa3] sm:$0xff] %vm601, %v553
    %700 = vst.msk [vmem:[#allocation2 + $0xab] sm:$0xff] %vm601, %v554
    %701 = vst.msk [vmem:[#allocation2 + $0xb5] sm:$0xff] %vm601, %v555
    %702 = vst.msk [vmem:[#allocation2 + $0xbd] sm:$0xff] %vm601, %v556
    %703 = vst.msk [vmem:[#allocation2 + $0xc7] sm:$0xff] %vm601, %v557
    %704 = vst.msk [vmem:[#allocation2 + $0xcf] sm:$0xff] %vm601, %v558
    %705 = vst.msk [vmem:[#allocation2 + $0xd9] sm:$0xff] %vm601, %v559
    %706 = vst.msk [vmem:[#allocation2 + $0xe1] sm:$0xff] %vm601, %v560
    %707 = vst.msk [vmem:[#allocation2 + $0xeb] sm:$0xff] %vm601, %v561
    %708 = vst.msk [vmem:[#allocation2 + $0xf3] sm:$0xff] %vm601, %v562
    %709 = vst.msk [vmem:[#allocation2 + $0xfd] sm:$0xff] %vm601, %v563
    %710 = vst.msk [vmem:[#allocation2 + $0x105] sm:$0xff] %vm601, %v564
    %711 = vst.msk [vmem:[#allocation2 + $0x10f] sm:$0xff] %vm601, %v565
    %712 = vst.msk [vmem:[#allocation2 + $0x117] sm:$0xff] %vm601, %v566
    %713 = vst.msk [vmem:[#allocation2 + $0x121] sm:$0xff] %vm601, %v567
    %714 = vst.msk [vmem:[#allocation2 + $0x129] sm:$0xff] %vm601, %v568
    %715 = vst.msk [vmem:[#allocation2 + $0x157] sm:$0xff] %vm601, %v569
    %716 = vst.msk [vmem:[#allocation2 + $0x15f] sm:$0xff] %vm601, %v570
    %717 = vst.msk [vmem:[#allocation2 + $0x169] sm:$0xff] %vm601, %v571
    %718 = vst.msk [vmem:[#allocation2 + $0x171] sm:$0xff] %vm601, %v572
    %719 = vst.msk [vmem:[#allocation2 + $0x17b] sm:$0xff] %vm601, %v573
    %720 = vst.msk [vmem:[#allocation2 + $0x183] sm:$0xff] %vm601, %v574
    %721 = vst.msk [vmem:[#allocation2 + $0x18d] sm:$0xff] %vm601, %v575
    %722 = vst.msk [vmem:[#allocation2 + $0x195] sm:$0xff] %vm601, %v576
    %723 = vst.msk [vmem:[#allocation2 + $0x19f] sm:$0xff] %vm601, %v577
    %724 = vst.msk [vmem:[#allocation2 + $0x1a7] sm:$0xff] %vm601, %v578
    %725 = vst.msk [vmem:[#allocation2 + $0x1b1] sm:$0xff] %vm601, %v579
    %726 = vst.msk [vmem:[#allocation2 + $0x1b9] sm:$0xff] %vm601, %v580
    %727 = vst.msk [vmem:[#allocation2 + $0x1c3] sm:$0xff] %vm601, %v581
    %728 = vst.msk [vmem:[#allocation2 + $0x1cb] sm:$0xff] %vm601, %v582
    %729 = vst.msk [vmem:[#allocation2 + $0x1d5] sm:$0xff] %vm601, %v583
    %730 = vst.msk [vmem:[#allocation2 + $0x1dd] sm:$0xff] %vm601, %v584
    %731 = vst.msk [vmem:[#allocation2 + $0x1e7] sm:$0xff] %vm601, %v585
    %732 = vst.msk [vmem:[#allocation2 + $0x1ef] sm:$0xff] %vm601, %v586
    %733 = vst.msk [vmem:[#allocation2 + $0x1f9] sm:$0xff] %vm601, %v587
    %734 = vst.msk [vmem:[#allocation2 + $0x201] sm:$0xff] %vm601, %v588
    %735 = vst.msk [vmem:[#allocation2 + $0x20b] sm:$0xff] %vm601, %v589
    %736 = vst.msk [vmem:[#allocation2 + $0x213] sm:$0xff] %vm601, %v590
    %737 = vst.msk [vmem:[#allocation2 + $0x21d] sm:$0xff] %vm601, %v591
    %738 = vst.msk [vmem:[#allocation2 + $0x225] sm:$0xff] %vm601, %v592
    %739 = vst.msk [vmem:[#allocation2 + $0x22f] sm:$0xff] %vm601, %v593
    %740 = vst.msk [vmem:[#allocation2 + $0x237] sm:$0xff] %vm601, %v594
    %741 = vst.msk [vmem:[#allocation2 + $0x241] sm:$0xff] %vm601, %v595
    %742 = vst.msk [vmem:[#allocation2 + $0x249] sm:$0xff] %vm601, %v596
    %743 = vst.msk [vmem:[#allocation2 + $0x253] sm:$0xff] %vm601, %v597
    %744 = vst.msk [vmem:[#allocation2 + $0x25b] sm:$0xff] %vm601, %v598
    %745 = vst.msk [vmem:[#allocation2 + $0x265] sm:$0xff] %vm601, %v599
    %746 = vst.msk [vmem:[#allocation2 + $0x26d] sm:$0xff] %vm601, %v600
    %v747 = vld [vmem:[%s5] sm:$0x1]
    %v749 = vperm.slane %v747, 0
    %v751 = vld [vmem:[#allocation2] sm:$0xff]
    %v752 = vld [vmem:[#allocation2 + $0x8] sm:$0xff]
    %v753 = vld [vmem:[#allocation2 + $0x10] sm:$0xff]
    %v754 = vld [vmem:[#allocation2 + $0x18] sm:$0xff]
    %v755 = vld [vmem:[#allocation2 + $0x20] sm:$0xff]
    %v756 = vld [vmem:[#allocation2 + $0x28] sm:$0xff]
    %v757 = vld [vmem:[#allocation2 + $0x30] sm:$0xff]
    %v758 = vld [vmem:[#allocation2 + $0x38] sm:$0xff]
    %v759 = vld [vmem:[#allocation2 + $0x40] sm:$0xff]
    %v760 = vld [vmem:[#allocation2 + $0x48] sm:$0xff]
    %v761 = vld [vmem:[#allocation2 + $0x50] sm:$0xff]
    %v762 = vld [vmem:[#allocation2 + $0x58] sm:$0xff]
    %v763 = vld [vmem:[#allocation2 + $0x60] sm:$0xff]
    %v764 = vld [vmem:[#allocation2 + $0x68] sm:$0xff]
    %v765 = vld [vmem:[#allocation2 + $0x70] sm:$0xff]
    %v766 = vld [vmem:[#allocation2 + $0x78] sm:$0xff]
    %v767 = vld [vmem:[#allocation2 + $0x80] sm:$0xff]
    %v768 = vld [vmem:[#allocation2 + $0x88] sm:$0xff]
    %v769 = vld [vmem:[#allocation2 + $0x90] sm:$0xff]
    %v770 = vld [vmem:[#allocation2 + $0x98] sm:$0xff]
    %v771 = vld [vmem:[#allocation2 + $0xa0] sm:$0xff]
    %v772 = vld [vmem:[#allocation2 + $0xa8] sm:$0xff]
    %v773 = vld [vmem:[#allocation2 + $0xb0] sm:$0xff]
    %v774 = vld [vmem:[#allocation2 + $0xb8] sm:$0xff]
    %v775 = vld [vmem:[#allocation2 + $0xc0] sm:$0xff]
    %v776 = vld [vmem:[#allocation2 + $0xc8] sm:$0xff]
    %v777 = vld [vmem:[#allocation2 + $0xd0] sm:$0xff]
    %v778 = vld [vmem:[#allocation2 + $0xd8] sm:$0xff]
    %v779 = vld [vmem:[#allocation2 + $0xe0] sm:$0xff]
    %v780 = vld [vmem:[#allocation2 + $0xe8] sm:$0xff]
    %v781 = vld [vmem:[#allocation2 + $0xf0] sm:$0xff]
    %v782 = vld [vmem:[#allocation2 + $0xf8] sm:$0xff]
    %v783 = vld [vmem:[#allocation2 + $0x100] sm:$0xff]
    %v784 = vld [vmem:[#allocation2 + $0x108] sm:$0xff]
    %v785 = vld [vmem:[#allocation2 + $0x110] sm:$0xff]
    %v786 = vld [vmem:[#allocation2 + $0x118] sm:$0xff]
    %v787 = vld [vmem:[#allocation2 + $0x120] sm:$0xff]
    %v788 = vld [vmem:[#allocation2 + $0x128] sm:$0xff]
    %v789 = vld [vmem:[#allocation2 + $0x130] sm:$0xff]
    %v790 = vld [vmem:[#allocation2 + $0x138] sm:$0xff]
    %v791 = vld [vmem:[#allocation2 + $0x140] sm:$0xff]
    %v792 = vld [vmem:[#allocation2 + $0x148] sm:$0xff]
    %v793 = vld [vmem:[#allocation2 + $0x150] sm:$0xff]
    %v794 = vld [vmem:[#allocation2 + $0x158] sm:$0xff]
    %v795 = vld [vmem:[#allocation2 + $0x160] sm:$0xff]
    %v796 = vld [vmem:[#allocation2 + $0x168] sm:$0xff]
    %v797 = vld [vmem:[#allocation2 + $0x170] sm:$0xff]
    %v798 = vld [vmem:[#allocation2 + $0x178] sm:$0xff]
    %v799 = vld [vmem:[#allocation2 + $0x180] sm:$0xff]
    %v800 = vld [vmem:[#allocation2 + $0x188] sm:$0xff]
    %v801 = vld [vmem:[#allocation2 + $0x190] sm:$0xff]
    %v802 = vld [vmem:[#allocation2 + $0x198] sm:$0xff]
    %v803 = vld [vmem:[#allocation2 + $0x1a0] sm:$0xff]
    %v804 = vld [vmem:[#allocation2 + $0x1a8] sm:$0xff]
    %v805 = vld [vmem:[#allocation2 + $0x1b0] sm:$0xff]
    %v806 = vld [vmem:[#allocation2 + $0x1b8] sm:$0xff]
    %v807 = vld [vmem:[#allocation2 + $0x1c0] sm:$0xff]
    %v808 = vld [vmem:[#allocation2 + $0x1c8] sm:$0xff]
    %v809 = vld [vmem:[#allocation2 + $0x1d0] sm:$0xff]
    %v810 = vld [vmem:[#allocation2 + $0x1d8] sm:$0xff]
    %v811 = vld [vmem:[#allocation2 + $0x1e0] sm:$0xff]
    %v812 = vld [vmem:[#allocation2 + $0x1e8] sm:$0xff]
    %v813 = vld [vmem:[#allocation2 + $0x1f0] sm:$0xff]
    %v814 = vld [vmem:[#allocation2 + $0x1f8] sm:$0xff]
    %v815 = vld [vmem:[#allocation2 + $0x200] sm:$0xff]
    %v816 = vld [vmem:[#allocation2 + $0x208] sm:$0xff]
    %v817 = vld [vmem:[#allocation2 + $0x210] sm:$0xff]
    %v818 = vld [vmem:[#allocation2 + $0x218] sm:$0xff]
    %v819 = vld [vmem:[#allocation2 + $0x220] sm:$0xff]
    %v820 = vld [vmem:[#allocation2 + $0x228] sm:$0xff]
    %v821 = vld [vmem:[#allocation2 + $0x230] sm:$0xff]
    %v822 = vld [vmem:[#allocation2 + $0x238] sm:$0xff]
    %v823 = vld [vmem:[#allocation2 + $0x240] sm:$0xff]
    %v824 = vld [vmem:[#allocation2 + $0x248] sm:$0xff]
    %v825 = vld [vmem:[#allocation2 + $0x250] sm:$0xff]
    %v826 = vld [vmem:[#allocation2 + $0x258] sm:$0xff]
    %v827 = vld [vmem:[%s3] sm:$0xff]
    %v828 = vld [vmem:[%s3 + $0x8] sm:$0xff]
    %v829 = vld [vmem:[%s3 + $0x10] sm:$0xff]
    %v830 = vld [vmem:[%s3 + $0x18] sm:$0xff]
    %v831 = vld [vmem:[%s3 + $0x20] sm:$0xff]
    %v832 = vld [vmem:[%s3 + $0x28] sm:$0xff]
    %v833 = vld [vmem:[%s3 + $0x30] sm:$0xff]
    %v834 = vld [vmem:[%s3 + $0x38] sm:$0xff]
    %v835 = vld [vmem:[%s3 + $0x40] sm:$0xff]
    %v836 = vld [vmem:[%s3 + $0x48] sm:$0xff]
    %v837 = vld [vmem:[%s3 + $0x50] sm:$0xff]
    %v838 = vld [vmem:[%s3 + $0x58] sm:$0xff]
    %v839 = vld [vmem:[%s3 + $0x60] sm:$0xff]
    %v840 = vld [vmem:[%s3 + $0x68] sm:$0xff]
    %v841 = vld [vmem:[%s3 + $0x70] sm:$0xff]
    %v842 = vld [vmem:[%s3 + $0x78] sm:$0xff]
    %v843 = vld [vmem:[%s3 + $0x80] sm:$0xff]
    %v844 = vld [vmem:[%s3 + $0x88] sm:$0xff]
    %v845 = vld [vmem:[%s3 + $0x90] sm:$0xff]
    %v846 = vld [vmem:[%s3 + $0x98] sm:$0xff]
    %v847 = vld [vmem:[%s3 + $0xa0] sm:$0xff]
    %v848 = vld [vmem:[%s3 + $0xa8] sm:$0xff]
    %v849 = vld [vmem:[%s3 + $0xb0] sm:$0xff]
    %v850 = vld [vmem:[%s3 + $0xb8] sm:$0xff]
    %v851 = vld [vmem:[%s3 + $0xc0] sm:$0xff]
    %v852 = vld [vmem:[%s3 + $0xc8] sm:$0xff]
    %v853 = vld [vmem:[%s3 + $0xd0] sm:$0xff]
    %v854 = vld [vmem:[%s3 + $0xd8] sm:$0xff]
    %v855 = vld [vmem:[%s3 + $0xe0] sm:$0xff]
    %v856 = vld [vmem:[%s3 + $0xe8] sm:$0xff]
    %v857 = vld [vmem:[%s3 + $0xf0] sm:$0xff]
    %v858 = vld [vmem:[%s3 + $0xf8] sm:$0xff]
    %v859 = vld [vmem:[%s3 + $0x100] sm:$0xff]
    %v860 = vld [vmem:[%s3 + $0x108] sm:$0xff]
    %v861 = vld [vmem:[%s3 + $0x110] sm:$0xff]
    %v862 = vld [vmem:[%s3 + $0x118] sm:$0xff]
    %v863 = vld [vmem:[%s3 + $0x120] sm:$0xff]
    %v864 = vld [vmem:[%s3 + $0x128] sm:$0xff]
    %v865 = vld [vmem:[%s3 + $0x130] sm:$0xff]
    %v866 = vld [vmem:[%s3 + $0x138] sm:$0xff]
    %v867 = vld [vmem:[%s3 + $0x140] sm:$0xff]
    %v868 = vld [vmem:[%s3 + $0x148] sm:$0xff]
    %v869 = vld [vmem:[%s3 + $0x150] sm:$0xff]
    %v870 = vld [vmem:[%s3 + $0x158] sm:$0xff]
    %v871 = vld [vmem:[%s3 + $0x160] sm:$0xff]
    %v872 = vld [vmem:[%s3 + $0x168] sm:$0xff]
    %v873 = vld [vmem:[%s3 + $0x170] sm:$0xff]
    %v874 = vld [vmem:[%s3 + $0x178] sm:$0xff]
    %v875 = vld [vmem:[%s3 + $0x180] sm:$0xff]
    %v876 = vld [vmem:[%s3 + $0x188] sm:$0xff]
    %v877 = vld [vmem:[%s3 + $0x190] sm:$0xff]
    %v878 = vld [vmem:[%s3 + $0x198] sm:$0xff]
    %v879 = vld [vmem:[%s3 + $0x1a0] sm:$0xff]
    %v880 = vld [vmem:[%s3 + $0x1a8] sm:$0xff]
    %v881 = vld [vmem:[%s3 + $0x1b0] sm:$0xff]
    %v882 = vld [vmem:[%s3 + $0x1b8] sm:$0xff]
    %v883 = vld [vmem:[%s3 + $0x1c0] sm:$0xff]
    %v884 = vld [vmem:[%s3 + $0x1c8] sm:$0xff]
    %v885 = vld [vmem:[%s3 + $0x1d0] sm:$0xff]
    %v886 = vld [vmem:[%s3 + $0x1d8] sm:$0xff]
    %v887 = vld [vmem:[%s3 + $0x1e0] sm:$0xff]
    %v888 = vld [vmem:[%s3 + $0x1e8] sm:$0xff]
    %v889 = vld [vmem:[%s3 + $0x1f0] sm:$0xff]
    %v890 = vld [vmem:[%s3 + $0x1f8] sm:$0xff]
    %v891 = vld [vmem:[%s3 + $0x200] sm:$0xff]
    %v892 = vld [vmem:[%s3 + $0x208] sm:$0xff]
    %v893 = vld [vmem:[%s3 + $0x210] sm:$0xff]
    %v894 = vld [vmem:[%s3 + $0x218] sm:$0xff]
    %v895 = vld [vmem:[%s3 + $0x220] sm:$0xff]
    %v896 = vld [vmem:[%s3 + $0x228] sm:$0xff]
    %v897 = vld [vmem:[%s3 + $0x230] sm:$0xff]
    %v898 = vld [vmem:[%s3 + $0x238] sm:$0xff]
    %v899 = vld [vmem:[%s3 + $0x240] sm:$0xff]
    %v900 = vld [vmem:[%s3 + $0x248] sm:$0xff]
    %v901 = vld [vmem:[%s3 + $0x250] sm:$0xff]
    %v902 = vld [vmem:[%s3 + $0x258] sm:$0xff]
    %v903 = vld [vmem:[%s3 + $0x260] sm:$0xff]
    %v904 = vld [vmem:[%s3 + $0x268] sm:$0xff]
    %v905 = vld [vmem:[%s3 + $0x270] sm:$0xff]
    %v906 = vld [vmem:[%s3 + $0x278] sm:$0xff]
    %vm907 = vcmask 785408
    %v909 = vsel %vm907, %v831, 0
    %v912 = vsel %vm907, %v836, 0
    %v915 = vsel %vm907, %v841, 0
    %v918 = vsel %vm907, %v846, 0
    %v921 = vsel %vm907, %v851, 0
    %v924 = vsel %vm907, %v856, 0
    %v927 = vsel %vm907, %v861, 0
    %v930 = vsel %vm907, %v866, 0
    %v933 = vsel %vm907, %v871, 0
    %v936 = vsel %vm907, %v876, 0
    %v939 = vsel %vm907, %v881, 0
    %v942 = vsel %vm907, %v886, 0
    %v945 = vsel %vm907, %v891, 0
    %v948 = vsel %vm907, %v896, 0
    %v951 = vsel %vm907, %v901, 0
    %v954 = vsel %vm907, %v906, 0
    %956 = vmatpush.msra.mxu0 %v766
    %957 = vmatpush.msra.mxu0 %v765
    %958 = vmatpush.msra.mxu0 %v764
    %959 = vmatpush.msra.mxu0 %v763
    %960 = vmatpush.msra.mxu0 %v762
    %961 = vmatpush.msra.mxu0 %v761
    %962 = vmatpush.msra.mxu0 %v760
    %963 = vmatpush.msra.mxu0 %v759
    %964 = vmatpush.msra.mxu0 %v758
    %965 = vmatpush.msra.mxu0 %v757
    %966 = vmatpush.msra.mxu0 %v756
    %967 = vmatpush.msra.mxu0 %v755
    %968 = vmatpush.msra.mxu0 %v754
    %969 = vmatpush.msra.mxu0 %v753
    %970 = vmatpush.msra.mxu0 %v752
    %971 = vmatpush.msra.mxu0 %v751
    %972 = vmatmul.f32.gmra.mxu0 %v827
    %v973 = vpop.f32.mrf.mxu0
    %v974 = vadd.f32 0.0, %v973
    %975 = vmatmul.f32.gmra.mxu0 %v832
    %v976 = vpop.f32.mrf.mxu0
    %v977 = vadd.f32 0.0, %v976
    %978 = vmatmul.f32.gmra.mxu0 %v837
    %v979 = vpop.f32.mrf.mxu0
    %v980 = vadd.f32 0.0, %v979
    %981 = vmatmul.f32.gmra.mxu0 %v842
    %v982 = vpop.f32.mrf.mxu0
    %v983 = vadd.f32 0.0, %v982
    %984 = vmatmul.f32.gmra.mxu0 %v847
    %v985 = vpop.f32.mrf.mxu0
    %v986 = vadd.f32 0.0, %v985
    %987 = vmatmul.f32.gmra.mxu0 %v852
    %v988 = vpop.f32.mrf.mxu0
    %v989 = vadd.f32 0.0, %v988
    %990 = vmatmul.f32.gmra.mxu0 %v857
    %v991 = vpop.f32.mrf.mxu0
    %v992 = vadd.f32 0.0, %v991
    %993 = vmatmul.f32.gmra.mxu0 %v862
    %v994 = vpop.f32.mrf.mxu0
    %v995 = vadd.f32 0.0, %v994
    %996 = vmatmul.f32.gmra.mxu0 %v867
    %v997 = vpop.f32.mrf.mxu0
    %v998 = vadd.f32 0.0, %v997
    %999 = vmatmul.f32.gmra.mxu0 %v872
    %v1000 = vpop.f32.mrf.mxu0
    %v1001 = vadd.f32 0.0, %v1000
    %1002 = vmatmul.f32.gmra.mxu0 %v877
    %v1003 = vpop.f32.mrf.mxu0
    %v1004 = vadd.f32 0.0, %v1003
    %1005 = vmatmul.f32.gmra.mxu0 %v882
    %v1006 = vpop.f32.mrf.mxu0
    %v1007 = vadd.f32 0.0, %v1006
    %1008 = vmatmul.f32.gmra.mxu0 %v887
    %v1009 = vpop.f32.mrf.mxu0
    %v1010 = vadd.f32 0.0, %v1009
    %1011 = vmatmul.f32.gmra.mxu0 %v892
    %v1012 = vpop.f32.mrf.mxu0
    %v1013 = vadd.f32 0.0, %v1012
    %1014 = vmatmul.f32.gmra.mxu0 %v897
    %v1015 = vpop.f32.mrf.mxu0
    %v1016 = vadd.f32 0.0, %v1015
    %1017 = vmatmul.f32.gmra.mxu0 %v902
    %v1018 = vpop.f32.mrf.mxu0
    %v1019 = vadd.f32 0.0, %v1018
    %1020 = vdwg.mxu0
    %1021 = vmatpush.msra.mxu0 %v782
    %1022 = vmatpush.msra.mxu0 %v781
    %1023 = vmatpush.msra.mxu0 %v780
    %1024 = vmatpush.msra.mxu0 %v779
    %1025 = vmatpush.msra.mxu0 %v778
    %1026 = vmatpush.msra.mxu0 %v777
    %1027 = vmatpush.msra.mxu0 %v776
    %1028 = vmatpush.msra.mxu0 %v775
    %1029 = vmatpush.msra.mxu0 %v774
    %1030 = vmatpush.msra.mxu0 %v773
    %1031 = vmatpush.msra.mxu0 %v772
    %1032 = vmatpush.msra.mxu0 %v771
    %1033 = vmatpush.msra.mxu0 %v770
    %1034 = vmatpush.msra.mxu0 %v769
    %1035 = vmatpush.msra.mxu0 %v768
    %1036 = vmatpush.msra.mxu0 %v767
    %1037 = vmatmul.f32.gmra.mxu0 %v828
    %v1038 = vpop.f32.mrf.mxu0
    %v1039 = vadd.f32 %v974, %v1038
    %1040 = vmatmul.f32.gmra.mxu0 %v833
    %v1041 = vpop.f32.mrf.mxu0
    %v1042 = vadd.f32 %v977, %v1041
    %1043 = vmatmul.f32.gmra.mxu0 %v838
    %v1044 = vpop.f32.mrf.mxu0
    %v1045 = vadd.f32 %v980, %v1044
    %1046 = vmatmul.f32.gmra.mxu0 %v843
    %v1047 = vpop.f32.mrf.mxu0
    %v1048 = vadd.f32 %v983, %v1047
    %1049 = vmatmul.f32.gmra.mxu0 %v848
    %v1050 = vpop.f32.mrf.mxu0
    %v1051 = vadd.f32 %v986, %v1050
    %1052 = vmatmul.f32.gmra.mxu0 %v853
    %v1053 = vpop.f32.mrf.mxu0
    %v1054 = vadd.f32 %v989, %v1053
    %1055 = vmatmul.f32.gmra.mxu0 %v858
    %v1056 = vpop.f32.mrf.mxu0
    %v1057 = vadd.f32 %v992, %v1056
    %1058 = vmatmul.f32.gmra.mxu0 %v863
    %v1059 = vpop.f32.mrf.mxu0
    %v1060 = vadd.f32 %v995, %v1059
    %1061 = vmatmul.f32.gmra.mxu0 %v868
    %v1062 = vpop.f32.mrf.mxu0
    %v1063 = vadd.f32 %v998, %v1062
    %1064 = vmatmul.f32.gmra.mxu0 %v873
    %v1065 = vpop.f32.mrf.mxu0
    %v1066 = vadd.f32 %v1001, %v1065
    %1067 = vmatmul.f32.gmra.mxu0 %v878
    %v1068 = vpop.f32.mrf.mxu0
    %v1069 = vadd.f32 %v1004, %v1068
    %1070 = vmatmul.f32.gmra.mxu0 %v883
    %v1071 = vpop.f32.mrf.mxu0
    %v1072 = vadd.f32 %v1007, %v1071
    %1073 = vmatmul.f32.gmra.mxu0 %v888
    %v1074 = vpop.f32.mrf.mxu0
    %v1075 = vadd.f32 %v1010, %v1074
    %1076 = vmatmul.f32.gmra.mxu0 %v893
    %v1077 = vpop.f32.mrf.mxu0
    %v1078 = vadd.f32 %v1013, %v1077
    %1079 = vmatmul.f32.gmra.mxu0 %v898
    %v1080 = vpop.f32.mrf.mxu0
    %v1081 = vadd.f32 %v1016, %v1080
    %1082 = vmatmul.f32.gmra.mxu0 %v903
    %v1083 = vpop.f32.mrf.mxu0
    %v1084 = vadd.f32 %v1019, %v1083
    %1085 = vdwg.mxu0
    %1086 = vmatpush.msra.mxu0 %v798
    %1087 = vmatpush.msra.mxu0 %v797
    %1088 = vmatpush.msra.mxu0 %v796
    %1089 = vmatpush.msra.mxu0 %v795
    %1090 = vmatpush.msra.mxu0 %v794
    %1091 = vmatpush.msra.mxu0 %v793
    %1092 = vmatpush.msra.mxu0 %v792
    %1093 = vmatpush.msra.mxu0 %v791
    %1094 = vmatpush.msra.mxu0 %v790
    %1095 = vmatpush.msra.mxu0 %v789
    %1096 = vmatpush.msra.mxu0 %v788
    %1097 = vmatpush.msra.mxu0 %v787
    %1098 = vmatpush.msra.mxu0 %v786
    %1099 = vmatpush.msra.mxu0 %v785
    %1100 = vmatpush.msra.mxu0 %v784
    %1101 = vmatpush.msra.mxu0 %v783
    %1102 = vmatmul.f32.gmra.mxu0 %v829
    %v1103 = vpop.f32.mrf.mxu0
    %v1104 = vadd.f32 %v1039, %v1103
    %1105 = vmatmul.f32.gmra.mxu0 %v834
    %v1106 = vpop.f32.mrf.mxu0
    %v1107 = vadd.f32 %v1042, %v1106
    %1108 = vmatmul.f32.gmra.mxu0 %v839
    %v1109 = vpop.f32.mrf.mxu0
    %v1110 = vadd.f32 %v1045, %v1109
    %1111 = vmatmul.f32.gmra.mxu0 %v844
    %v1112 = vpop.f32.mrf.mxu0
    %v1113 = vadd.f32 %v1048, %v1112
    %1114 = vmatmul.f32.gmra.mxu0 %v849
    %v1115 = vpop.f32.mrf.mxu0
    %v1116 = vadd.f32 %v1051, %v1115
    %1117 = vmatmul.f32.gmra.mxu0 %v854
    %v1118 = vpop.f32.mrf.mxu0
    %v1119 = vadd.f32 %v1054, %v1118
    %1120 = vmatmul.f32.gmra.mxu0 %v859
    %v1121 = vpop.f32.mrf.mxu0
    %v1122 = vadd.f32 %v1057, %v1121
    %1123 = vmatmul.f32.gmra.mxu0 %v864
    %v1124 = vpop.f32.mrf.mxu0
    %v1125 = vadd.f32 %v1060, %v1124
    %1126 = vmatmul.f32.gmra.mxu0 %v869
    %v1127 = vpop.f32.mrf.mxu0
    %v1128 = vadd.f32 %v1063, %v1127
    %1129 = vmatmul.f32.gmra.mxu0 %v874
    %v1130 = vpop.f32.mrf.mxu0
    %v1131 = vadd.f32 %v1066, %v1130
    %1132 = vmatmul.f32.gmra.mxu0 %v879
    %v1133 = vpop.f32.mrf.mxu0
    %v1134 = vadd.f32 %v1069, %v1133
    %1135 = vmatmul.f32.gmra.mxu0 %v884
    %v1136 = vpop.f32.mrf.mxu0
    %v1137 = vadd.f32 %v1072, %v1136
    %1138 = vmatmul.f32.gmra.mxu0 %v889
    %v1139 = vpop.f32.mrf.mxu0
    %v1140 = vadd.f32 %v1075, %v1139
    %1141 = vmatmul.f32.gmra.mxu0 %v894
    %v1142 = vpop.f32.mrf.mxu0
    %v1143 = vadd.f32 %v1078, %v1142
    %1144 = vmatmul.f32.gmra.mxu0 %v899
    %v1145 = vpop.f32.mrf.mxu0
    %v1146 = vadd.f32 %v1081, %v1145
    %1147 = vmatmul.f32.gmra.mxu0 %v904
    %v1148 = vpop.f32.mrf.mxu0
    %v1149 = vadd.f32 %v1084, %v1148
    %1150 = vdwg.mxu0
    %1151 = vmatpush.msra.mxu0 %v814
    %1152 = vmatpush.msra.mxu0 %v813
    %1153 = vmatpush.msra.mxu0 %v812
    %1154 = vmatpush.msra.mxu0 %v811
    %1155 = vmatpush.msra.mxu0 %v810
    %1156 = vmatpush.msra.mxu0 %v809
    %1157 = vmatpush.msra.mxu0 %v808
    %1158 = vmatpush.msra.mxu0 %v807
    %1159 = vmatpush.msra.mxu0 %v806
    %1160 = vmatpush.msra.mxu0 %v805
    %1161 = vmatpush.msra.mxu0 %v804
    %1162 = vmatpush.msra.mxu0 %v803
    %1163 = vmatpush.msra.mxu0 %v802
    %1164 = vmatpush.msra.mxu0 %v801
    %1165 = vmatpush.msra.mxu0 %v800
    %1166 = vmatpush.msra.mxu0 %v799
    %1167 = vmatmul.f32.gmra.mxu0 %v830
    %v1168 = vpop.f32.mrf.mxu0
    %v1169 = vadd.f32 %v1104, %v1168
    %1170 = vmatmul.f32.gmra.mxu0 %v835
    %v1171 = vpop.f32.mrf.mxu0
    %v1172 = vadd.f32 %v1107, %v1171
    %1173 = vmatmul.f32.gmra.mxu0 %v840
    %v1174 = vpop.f32.mrf.mxu0
    %v1175 = vadd.f32 %v1110, %v1174
    %1176 = vmatmul.f32.gmra.mxu0 %v845
    %v1177 = vpop.f32.mrf.mxu0
    %v1178 = vadd.f32 %v1113, %v1177
    %1179 = vmatmul.f32.gmra.mxu0 %v850
    %v1180 = vpop.f32.mrf.mxu0
    %v1181 = vadd.f32 %v1116, %v1180
    %1182 = vmatmul.f32.gmra.mxu0 %v855
    %v1183 = vpop.f32.mrf.mxu0
    %v1184 = vadd.f32 %v1119, %v1183
    %1185 = vmatmul.f32.gmra.mxu0 %v860
    %v1186 = vpop.f32.mrf.mxu0
    %v1187 = vadd.f32 %v1122, %v1186
    %1188 = vmatmul.f32.gmra.mxu0 %v865
    %v1189 = vpop.f32.mrf.mxu0
    %v1190 = vadd.f32 %v1125, %v1189
    %1191 = vmatmul.f32.gmra.mxu0 %v870
    %v1192 = vpop.f32.mrf.mxu0
    %v1193 = vadd.f32 %v1128, %v1192
    %1194 = vmatmul.f32.gmra.mxu0 %v875
    %v1195 = vpop.f32.mrf.mxu0
    %v1196 = vadd.f32 %v1131, %v1195
    %1197 = vmatmul.f32.gmra.mxu0 %v880
    %v1198 = vpop.f32.mrf.mxu0
    %v1199 = vadd.f32 %v1134, %v1198
    %1200 = vmatmul.f32.gmra.mxu0 %v885
    %v1201 = vpop.f32.mrf.mxu0
    %v1202 = vadd.f32 %v1137, %v1201
    %1203 = vmatmul.f32.gmra.mxu0 %v890
    %v1204 = vpop.f32.mrf.mxu0
    %v1205 = vadd.f32 %v1140, %v1204
    %1206 = vmatmul.f32.gmra.mxu0 %v895
    %v1207 = vpop.f32.mrf.mxu0
    %v1208 = vadd.f32 %v1143, %v1207
    %1209 = vmatmul.f32.gmra.mxu0 %v900
    %v1210 = vpop.f32.mrf.mxu0
    %v1211 = vadd.f32 %v1146, %v1210
    %1212 = vmatmul.f32.gmra.mxu0 %v905
    %v1213 = vpop.f32.mrf.mxu0
    %v1214 = vadd.f32 %v1149, %v1213
    %1215 = vdwg.mxu0
    %1216 = vmatpush.msra.mxu0 0.0
    %1217 = vmatpush.msra.mxu0 0.0
    %1218 = vmatpush.msra.mxu0 0.0
    %1219 = vmatpush.msra.mxu0 0.0
    %1220 = vmatpush.msra.mxu0 %v826
    %1221 = vmatpush.msra.mxu0 %v825
    %1222 = vmatpush.msra.mxu0 %v824
    %1223 = vmatpush.msra.mxu0 %v823
    %1224 = vmatpush.msra.mxu0 %v822
    %1225 = vmatpush.msra.mxu0 %v821
    %1226 = vmatpush.msra.mxu0 %v820
    %1227 = vmatpush.msra.mxu0 %v819
    %1228 = vmatpush.msra.mxu0 %v818
    %1229 = vmatpush.msra.mxu0 %v817
    %1230 = vmatpush.msra.mxu0 %v816
    %1231 = vmatpush.msra.mxu0 %v815
    %1232 = vmatmul.f32.gmra.mxu0 %v909
    %v1233 = vpop.f32.mrf.mxu0
    %v1234 = vadd.f32 %v1169, %v1233
    %1235 = vmatmul.f32.gmra.mxu0 %v912
    %v1236 = vpop.f32.mrf.mxu0
    %v1237 = vadd.f32 %v1172, %v1236
    %1238 = vmatmul.f32.gmra.mxu0 %v915
    %v1239 = vpop.f32.mrf.mxu0
    %v1240 = vadd.f32 %v1175, %v1239
    %1241 = vmatmul.f32.gmra.mxu0 %v918
    %v1242 = vpop.f32.mrf.mxu0
    %v1243 = vadd.f32 %v1178, %v1242
    %1244 = vmatmul.f32.gmra.mxu0 %v921
    %v1245 = vpop.f32.mrf.mxu0
    %v1246 = vadd.f32 %v1181, %v1245
    %1247 = vmatmul.f32.gmra.mxu0 %v924
    %v1248 = vpop.f32.mrf.mxu0
    %v1249 = vadd.f32 %v1184, %v1248
    %1250 = vmatmul.f32.gmra.mxu0 %v927
    %v1251 = vpop.f32.mrf.mxu0
    %v1252 = vadd.f32 %v1187, %v1251
    %1253 = vmatmul.f32.gmra.mxu0 %v930
    %v1254 = vpop.f32.mrf.mxu0
    %v1255 = vadd.f32 %v1190, %v1254
    %1256 = vmatmul.f32.gmra.mxu0 %v933
    %v1257 = vpop.f32.mrf.mxu0
    %v1258 = vadd.f32 %v1193, %v1257
    %1259 = vmatmul.f32.gmra.mxu0 %v936
    %v1260 = vpop.f32.mrf.mxu0
    %v1261 = vadd.f32 %v1196, %v1260
    %1262 = vmatmul.f32.gmra.mxu0 %v939
    %v1263 = vpop.f32.mrf.mxu0
    %v1264 = vadd.f32 %v1199, %v1263
    %1265 = vmatmul.f32.gmra.mxu0 %v942
    %v1266 = vpop.f32.mrf.mxu0
    %v1267 = vadd.f32 %v1202, %v1266
    %1268 = vmatmul.f32.gmra.mxu0 %v945
    %v1269 = vpop.f32.mrf.mxu0
    %v1270 = vadd.f32 %v1205, %v1269
    %1271 = vmatmul.f32.gmra.mxu0 %v948
    %v1272 = vpop.f32.mrf.mxu0
    %v1273 = vadd.f32 %v1208, %v1272
    %1274 = vmatmul.f32.gmra.mxu0 %v951
    %v1275 = vpop.f32.mrf.mxu0
    %v1276 = vadd.f32 %v1211, %v1275
    %1277 = vmatmul.f32.gmra.mxu0 %v954
    %v1278 = vpop.f32.mrf.mxu0
    %v1279 = vadd.f32 %v1214, %v1278
    %1280 = vdwg.mxu0
    %v1281 = vld [vmem:[%s4] sm:$0xff]
    %v1282 = vld [vmem:[%s4 + $0x8] sm:$0xff]
    %v1283 = vld [vmem:[%s4 + $0x10] sm:$0xff]
    %v1284 = vld [vmem:[%s4 + $0x18] sm:$0xff]
    %v1286 = vsel %vm601, %v1234, 0
    %v1289 = vsel %vm601, %v1237, 0
    %v1292 = vsel %vm601, %v1240, 0
    %v1295 = vsel %vm601, %v1243, 0
    %v1298 = vsel %vm601, %v1246, 0
    %v1301 = vsel %vm601, %v1249, 0
    %v1304 = vsel %vm601, %v1252, 0
    %v1307 = vsel %vm601, %v1255, 0
    %v1310 = vsel %vm601, %v1258, 0
    %v1313 = vsel %vm601, %v1261, 0
    %v1316 = vsel %vm601, %v1264, 0
    %v1319 = vsel %vm601, %v1267, 0
    %v1322 = vsel %vm601, %v1270, 0
    %v1325 = vsel %vm601, %v1273, 0
    %v1328 = vsel %vm601, %v1276, 0
    %v1331 = vsel %vm601, %v1279, 0
    %1333 = vmatpush.msra.mxu0 0.0
    %1334 = vmatpush.msra.mxu0 0.0
    %1335 = vmatpush.msra.mxu0 0.0
    %1336 = vmatpush.msra.mxu0 0.0
    %1337 = vmatpush.msra.mxu0 0.0
    %1338 = vmatpush.msra.mxu0 0.0
    %1339 = vmatpush.msra.mxu0 0.0
    %1340 = vmatpush.msra.mxu0 0.0
    %1341 = vmatpush.msra.mxu0 0.0
    %1342 = vmatpush.msra.mxu0 0.0
    %1343 = vmatpush.msra.mxu0 0.0
    %1344 = vmatpush.msra.mxu0 0.0
    %1345 = vmatpush.msra.mxu0 %v1284
    %1346 = vmatpush.msra.mxu0 %v1283
    %1347 = vmatpush.msra.mxu0 %v1282
    %1348 = vmatpush.msra.mxu0 %v1281
    %1349 = vmatmul.f32.gmra.mxu0 %v1286
    %v1350 = vpop.f32.mrf.mxu0
    %v1351 = vadd.f32 0.0, %v1350
    %1352 = vmatmul.f32.gmra.mxu0 %v1289
    %v1353 = vpop.f32.mrf.mxu0
    %v1354 = vadd.f32 0.0, %v1353
    %1355 = vmatmul.f32.gmra.mxu0 %v1292
    %v1356 = vpop.f32.mrf.mxu0
    %v1357 = vadd.f32 0.0, %v1356
    %1358 = vmatmul.f32.gmra.mxu0 %v1295
    %v1359 = vpop.f32.mrf.mxu0
    %v1360 = vadd.f32 0.0, %v1359
    %1361 = vmatmul.f32.gmra.mxu0 %v1298
    %v1362 = vpop.f32.mrf.mxu0
    %v1363 = vadd.f32 0.0, %v1362
    %1364 = vmatmul.f32.gmra.mxu0 %v1301
    %v1365 = vpop.f32.mrf.mxu0
    %v1366 = vadd.f32 0.0, %v1365
    %1367 = vmatmul.f32.gmra.mxu0 %v1304
    %v1368 = vpop.f32.mrf.mxu0
    %v1369 = vadd.f32 0.0, %v1368
    %1370 = vmatmul.f32.gmra.mxu0 %v1307
    %v1371 = vpop.f32.mrf.mxu0
    %v1372 = vadd.f32 0.0, %v1371
    %1373 = vmatmul.f32.gmra.mxu0 %v1310
    %v1374 = vpop.f32.mrf.mxu0
    %v1375 = vadd.f32 0.0, %v1374
    %1376 = vmatmul.f32.gmra.mxu0 %v1313
    %v1377 = vpop.f32.mrf.mxu0
    %v1378 = vadd.f32 0.0, %v1377
    %1379 = vmatmul.f32.gmra.mxu0 %v1316
    %v1380 = vpop.f32.mrf.mxu0
    %v1381 = vadd.f32 0.0, %v1380
    %1382 = vmatmul.f32.gmra.mxu0 %v1319
    %v1383 = vpop.f32.mrf.mxu0
    %v1384 = vadd.f32 0.0, %v1383
    %1385 = vmatmul.f32.gmra.mxu0 %v1322
    %v1386 = vpop.f32.mrf.mxu0
    %v1387 = vadd.f32 0.0, %v1386
    %1388 = vmatmul.f32.gmra.mxu0 %v1325
    %v1389 = vpop.f32.mrf.mxu0
    %v1390 = vadd.f32 0.0, %v1389
    %1391 = vmatmul.f32.gmra.mxu0 %v1328
    %v1392 = vpop.f32.mrf.mxu0
    %v1393 = vadd.f32 0.0, %v1392
    %1394 = vmatmul.f32.gmra.mxu0 %v1331
    %v1395 = vpop.f32.mrf.mxu0
    %v1396 = vadd.f32 0.0, %v1395
    %1397 = vdwg.mxu0
    %v1398 = vadd.f32 %v749, %v1351
    %v1399 = vadd.f32 %v749, %v1354
    %v1400 = vadd.f32 %v749, %v1357
    %v1401 = vadd.f32 %v749, %v1360
    %v1402 = vadd.f32 %v749, %v1363
    %v1403 = vadd.f32 %v749, %v1366
    %v1404 = vadd.f32 %v749, %v1369
    %v1405 = vadd.f32 %v749, %v1372
    %v1406 = vadd.f32 %v749, %v1375
    %v1407 = vadd.f32 %v749, %v1378
    %v1408 = vadd.f32 %v749, %v1381
    %v1409 = vadd.f32 %v749, %v1384
    %v1410 = vadd.f32 %v749, %v1387
    %v1411 = vadd.f32 %v749, %v1390
    %v1412 = vadd.f32 %v749, %v1393
    %v1413 = vadd.f32 %v749, %v1396
    %v1414 = vld [vmem:[#allocation2 + $0x1] sm:$0xff]
    %v1415 = vld [vmem:[#allocation2 + $0x9] sm:$0xff]
    %v1416 = vld [vmem:[#allocation2 + $0x11] sm:$0xff]
    %v1417 = vld [vmem:[#allocation2 + $0x19] sm:$0xff]
    %v1418 = vld [vmem:[#allocation2 + $0x21] sm:$0xff]
    %v1419 = vld [vmem:[#allocation2 + $0x29] sm:$0xff]
    %v1420 = vld [vmem:[#allocation2 + $0x31] sm:$0xff]
    %v1421 = vld [vmem:[#allocation2 + $0x39] sm:$0xff]
    %v1422 = vld [vmem:[#allocation2 + $0x41] sm:$0xff]
    %v1423 = vld [vmem:[#allocation2 + $0x49] sm:$0xff]
    %v1424 = vld [vmem:[#allocation2 + $0x51] sm:$0xff]
    %v1425 = vld [vmem:[#allocation2 + $0x59] sm:$0xff]
    %v1426 = vld [vmem:[#allocation2 + $0x61] sm:$0xff]
    %v1427 = vld [vmem:[#allocation2 + $0x69] sm:$0xff]
    %v1428 = vld [vmem:[#allocation2 + $0x71] sm:$0xff]
    %v1429 = vld [vmem:[#allocation2 + $0x79] sm:$0xff]
    %v1430 = vld [vmem:[#allocation2 + $0x81] sm:$0xff]
    %v1431 = vld [vmem:[#allocation2 + $0x89] sm:$0xff]
    %v1432 = vld [vmem:[#allocation2 + $0x91] sm:$0xff]
    %v1433 = vld [vmem:[#allocation2 + $0x99] sm:$0xff]
    %v1434 = vld [vmem:[#allocation2 + $0xa1] sm:$0xff]
    %v1435 = vld [vmem:[#allocation2 + $0xa9] sm:$0xff]
    %v1436 = vld [vmem:[#allocation2 + $0xb1] sm:$0xff]
    %v1437 = vld [vmem:[#allocation2 + $0xb9] sm:$0xff]
    %v1438 = vld [vmem:[#allocation2 + $0xc1] sm:$0xff]
    %v1439 = vld [vmem:[#allocation2 + $0xc9] sm:$0xff]
    %v1440 = vld [vmem:[#allocation2 + $0xd1] sm:$0xff]
    %v1441 = vld [vmem:[#allocation2 + $0xd9] sm:$0xff]
    %v1442 = vld [vmem:[#allocation2 + $0xe1] sm:$0xff]
    %v1443 = vld [vmem:[#allocation2 + $0xe9] sm:$0xff]
    %v1444 = vld [vmem:[#allocation2 + $0xf1] sm:$0xff]
    %v1445 = vld [vmem:[#allocation2 + $0xf9] sm:$0xff]
    %v1446 = vld [vmem:[#allocation2 + $0x101] sm:$0xff]
    %v1447 = vld [vmem:[#allocation2 + $0x109] sm:$0xff]
    %v1448 = vld [vmem:[#allocation2 + $0x111] sm:$0xff]
    %v1449 = vld [vmem:[#allocation2 + $0x119] sm:$0xff]
    %v1450 = vld [vmem:[#allocation2 + $0x121] sm:$0xff]
    %v1451 = vld [vmem:[#allocation2 + $0x129] sm:$0xff]
    %v1452 = vld [vmem:[#allocation2 + $0x131] sm:$0xff]
    %v1453 = vld [vmem:[#allocation2 + $0x139] sm:$0xff]
    %v1454 = vld [vmem:[#allocation2 + $0x141] sm:$0xff]
    %v1455 = vld [vmem:[#allocation2 + $0x149] sm:$0xff]
    %v1456 = vld [vmem:[#allocation2 + $0x151] sm:$0xff]
    %v1457 = vld [vmem:[#allocation2 + $0x159] sm:$0xff]
    %v1458 = vld [vmem:[#allocation2 + $0x161] sm:$0xff]
    %v1459 = vld [vmem:[#allocation2 + $0x169] sm:$0xff]
    %v1460 = vld [vmem:[#allocation2 + $0x171] sm:$0xff]
    %v1461 = vld [vmem:[#allocation2 + $0x179] sm:$0xff]
    %v1462 = vld [vmem:[#allocation2 + $0x181] sm:$0xff]
    %v1463 = vld [vmem:[#allocation2 + $0x189] sm:$0xff]
    %v1464 = vld [vmem:[#allocation2 + $0x191] sm:$0xff]
    %v1465 = vld [vmem:[#allocation2 + $0x199] sm:$0xff]
    %v1466 = vld [vmem:[#allocation2 + $0x1a1] sm:$0xff]
    %v1467 = vld [vmem:[#allocation2 + $0x1a9] sm:$0xff]
    %v1468 = vld [vmem:[#allocation2 + $0x1b1] sm:$0xff]
    %v1469 = vld [vmem:[#allocation2 + $0x1b9] sm:$0xff]
    %v1470 = vld [vmem:[#allocation2 + $0x1c1] sm:$0xff]
    %v1471 = vld [vmem:[#allocation2 + $0x1c9] sm:$0xff]
    %v1472 = vld [vmem:[#allocation2 + $0x1d1] sm:$0xff]
    %v1473 = vld [vmem:[#allocation2 + $0x1d9] sm:$0xff]
    %v1474 = vld [vmem:[#allocation2 + $0x1e1] sm:$0xff]
    %v1475 = vld [vmem:[#allocation2 + $0x1e9] sm:$0xff]
    %v1476 = vld [vmem:[#allocation2 + $0x1f1] sm:$0xff]
    %v1477 = vld [vmem:[#allocation2 + $0x1f9] sm:$0xff]
    %v1478 = vld [vmem:[#allocation2 + $0x201] sm:$0xff]
    %v1479 = vld [vmem:[#allocation2 + $0x209] sm:$0xff]
    %v1480 = vld [vmem:[#allocation2 + $0x211] sm:$0xff]
    %v1481 = vld [vmem:[#allocation2 + $0x219] sm:$0xff]
    %v1482 = vld [vmem:[#allocation2 + $0x221] sm:$0xff]
    %v1483 = vld [vmem:[#allocation2 + $0x229] sm:$0xff]
    %v1484 = vld [vmem:[#allocation2 + $0x231] sm:$0xff]
    %v1485 = vld [vmem:[#allocation2 + $0x239] sm:$0xff]
    %v1486 = vld [vmem:[#allocation2 + $0x241] sm:$0xff]
    %v1487 = vld [vmem:[#allocation2 + $0x249] sm:$0xff]
    %v1488 = vld [vmem:[#allocation2 + $0x251] sm:$0xff]
    %v1489 = vld [vmem:[#allocation2 + $0x259] sm:$0xff]
    %1490 = vmatpush.msra.mxu0 %v1429
    %1491 = vmatpush.msra.mxu0 %v1428
    %1492 = vmatpush.msra.mxu0 %v1427
    %1493 = vmatpush.msra.mxu0 %v1426
    %1494 = vmatpush.msra.mxu0 %v1425
    %1495 = vmatpush.msra.mxu0 %v1424
    %1496 = vmatpush.msra.mxu0 %v1423
    %1497 = vmatpush.msra.mxu0 %v1422
    %1498 = vmatpush.msra.mxu0 %v1421
    %1499 = vmatpush.msra.mxu0 %v1420
    %1500 = vmatpush.msra.mxu0 %v1419
    %1501 = vmatpush.msra.mxu0 %v1418
    %1502 = vmatpush.msra.mxu0 %v1417
    %1503 = vmatpush.msra.mxu0 %v1416
    %1504 = vmatpush.msra.mxu0 %v1415
    %1505 = vmatpush.msra.mxu0 %v1414
    %1506 = vmatmul.f32.gmra.mxu0 %v827
    %v1507 = vpop.f32.mrf.mxu0
    %v1508 = vadd.f32 0.0, %v1507
    %1509 = vmatmul.f32.gmra.mxu0 %v832
    %v1510 = vpop.f32.mrf.mxu0
    %v1511 = vadd.f32 0.0, %v1510
    %1512 = vmatmul.f32.gmra.mxu0 %v837
    %v1513 = vpop.f32.mrf.mxu0
    %v1514 = vadd.f32 0.0, %v1513
    %1515 = vmatmul.f32.gmra.mxu0 %v842
    %v1516 = vpop.f32.mrf.mxu0
    %v1517 = vadd.f32 0.0, %v1516
    %1518 = vmatmul.f32.gmra.mxu0 %v847
    %v1519 = vpop.f32.mrf.mxu0
    %v1520 = vadd.f32 0.0, %v1519
    %1521 = vmatmul.f32.gmra.mxu0 %v852
    %v1522 = vpop.f32.mrf.mxu0
    %v1523 = vadd.f32 0.0, %v1522
    %1524 = vmatmul.f32.gmra.mxu0 %v857
    %v1525 = vpop.f32.mrf.mxu0
    %v1526 = vadd.f32 0.0, %v1525
    %1527 = vmatmul.f32.gmra.mxu0 %v862
    %v1528 = vpop.f32.mrf.mxu0
    %v1529 = vadd.f32 0.0, %v1528
    %1530 = vmatmul.f32.gmra.mxu0 %v867
    %v1531 = vpop.f32.mrf.mxu0
    %v1532 = vadd.f32 0.0, %v1531
    %1533 = vmatmul.f32.gmra.mxu0 %v872
    %v1534 = vpop.f32.mrf.mxu0
    %v1535 = vadd.f32 0.0, %v1534
    %1536 = vmatmul.f32.gmra.mxu0 %v877
    %v1537 = vpop.f32.mrf.mxu0
    %v1538 = vadd.f32 0.0, %v1537
    %1539 = vmatmul.f32.gmra.mxu0 %v882
    %v1540 = vpop.f32.mrf.mxu0
    %v1541 = vadd.f32 0.0, %v1540
    %1542 = vmatmul.f32.gmra.mxu0 %v887
    %v1543 = vpop.f32.mrf.mxu0
    %v1544 = vadd.f32 0.0, %v1543
    %1545 = vmatmul.f32.gmra.mxu0 %v892
    %v1546 = vpop.f32.mrf.mxu0
    %v1547 = vadd.f32 0.0, %v1546
    %1548 = vmatmul.f32.gmra.mxu0 %v897
    %v1549 = vpop.f32.mrf.mxu0
    %v1550 = vadd.f32 0.0, %v1549
    %1551 = vmatmul.f32.gmra.mxu0 %v902
    %v1552 = vpop.f32.mrf.mxu0
    %v1553 = vadd.f32 0.0, %v1552
    %1554 = vdwg.mxu0
    %1555 = vmatpush.msra.mxu0 %v1445
    %1556 = vmatpush.msra.mxu0 %v1444
    %1557 = vmatpush.msra.mxu0 %v1443
    %1558 = vmatpush.msra.mxu0 %v1442
    %1559 = vmatpush.msra.mxu0 %v1441
    %1560 = vmatpush.msra.mxu0 %v1440
    %1561 = vmatpush.msra.mxu0 %v1439
    %1562 = vmatpush.msra.mxu0 %v1438
    %1563 = vmatpush.msra.mxu0 %v1437
    %1564 = vmatpush.msra.mxu0 %v1436
    %1565 = vmatpush.msra.mxu0 %v1435
    %1566 = vmatpush.msra.mxu0 %v1434
    %1567 = vmatpush.msra.mxu0 %v1433
    %1568 = vmatpush.msra.mxu0 %v1432
    %1569 = vmatpush.msra.mxu0 %v1431
    %1570 = vmatpush.msra.mxu0 %v1430
    %1571 = vmatmul.f32.gmra.mxu0 %v828
    %v1572 = vpop.f32.mrf.mxu0
    %v1573 = vadd.f32 %v1508, %v1572
    %1574 = vmatmul.f32.gmra.mxu0 %v833
    %v1575 = vpop.f32.mrf.mxu0
    %v1576 = vadd.f32 %v1511, %v1575
    %1577 = vmatmul.f32.gmra.mxu0 %v838
    %v1578 = vpop.f32.mrf.mxu0
    %v1579 = vadd.f32 %v1514, %v1578
    %1580 = vmatmul.f32.gmra.mxu0 %v843
    %v1581 = vpop.f32.mrf.mxu0
    %v1582 = vadd.f32 %v1517, %v1581
    %1583 = vmatmul.f32.gmra.mxu0 %v848
    %v1584 = vpop.f32.mrf.mxu0
    %v1585 = vadd.f32 %v1520, %v1584
    %1586 = vmatmul.f32.gmra.mxu0 %v853
    %v1587 = vpop.f32.mrf.mxu0
    %v1588 = vadd.f32 %v1523, %v1587
    %1589 = vmatmul.f32.gmra.mxu0 %v858
    %v1590 = vpop.f32.mrf.mxu0
    %v1591 = vadd.f32 %v1526, %v1590
    %1592 = vmatmul.f32.gmra.mxu0 %v863
    %v1593 = vpop.f32.mrf.mxu0
    %v1594 = vadd.f32 %v1529, %v1593
    %1595 = vmatmul.f32.gmra.mxu0 %v868
    %v1596 = vpop.f32.mrf.mxu0
    %v1597 = vadd.f32 %v1532, %v1596
    %1598 = vmatmul.f32.gmra.mxu0 %v873
    %v1599 = vpop.f32.mrf.mxu0
    %v1600 = vadd.f32 %v1535, %v1599
    %1601 = vmatmul.f32.gmra.mxu0 %v878
    %v1602 = vpop.f32.mrf.mxu0
    %v1603 = vadd.f32 %v1538, %v1602
    %1604 = vmatmul.f32.gmra.mxu0 %v883
    %v1605 = vpop.f32.mrf.mxu0
    %v1606 = vadd.f32 %v1541, %v1605
    %1607 = vmatmul.f32.gmra.mxu0 %v888
    %v1608 = vpop.f32.mrf.mxu0
    %v1609 = vadd.f32 %v1544, %v1608
    %1610 = vmatmul.f32.gmra.mxu0 %v893
    %v1611 = vpop.f32.mrf.mxu0
    %v1612 = vadd.f32 %v1547, %v1611
    %1613 = vmatmul.f32.gmra.mxu0 %v898
    %v1614 = vpop.f32.mrf.mxu0
    %v1615 = vadd.f32 %v1550, %v1614
    %1616 = vmatmul.f32.gmra.mxu0 %v903
    %v1617 = vpop.f32.mrf.mxu0
    %v1618 = vadd.f32 %v1553, %v1617
    %1619 = vdwg.mxu0
    %1620 = vmatpush.msra.mxu0 %v1461
    %1621 = vmatpush.msra.mxu0 %v1460
    %1622 = vmatpush.msra.mxu0 %v1459
    %1623 = vmatpush.msra.mxu0 %v1458
    %1624 = vmatpush.msra.mxu0 %v1457
    %1625 = vmatpush.msra.mxu0 %v1456
    %1626 = vmatpush.msra.mxu0 %v1455
    %1627 = vmatpush.msra.mxu0 %v1454
    %1628 = vmatpush.msra.mxu0 %v1453
    %1629 = vmatpush.msra.mxu0 %v1452
    %1630 = vmatpush.msra.mxu0 %v1451
    %1631 = vmatpush.msra.mxu0 %v1450
    %1632 = vmatpush.msra.mxu0 %v1449
    %1633 = vmatpush.msra.mxu0 %v1448
    %1634 = vmatpush.msra.mxu0 %v1447
    %1635 = vmatpush.msra.mxu0 %v1446
    %1636 = vmatmul.f32.gmra.mxu0 %v829
    %v1637 = vpop.f32.mrf.mxu0
    %v1638 = vadd.f32 %v1573, %v1637
    %1639 = vmatmul.f32.gmra.mxu0 %v834
    %v1640 = vpop.f32.mrf.mxu0
    %v1641 = vadd.f32 %v1576, %v1640
    %1642 = vmatmul.f32.gmra.mxu0 %v839
    %v1643 = vpop.f32.mrf.mxu0
    %v1644 = vadd.f32 %v1579, %v1643
    %1645 = vmatmul.f32.gmra.mxu0 %v844
    %v1646 = vpop.f32.mrf.mxu0
    %v1647 = vadd.f32 %v1582, %v1646
    %1648 = vmatmul.f32.gmra.mxu0 %v849
    %v1649 = vpop.f32.mrf.mxu0
    %v1650 = vadd.f32 %v1585, %v1649
    %1651 = vmatmul.f32.gmra.mxu0 %v854
    %v1652 = vpop.f32.mrf.mxu0
    %v1653 = vadd.f32 %v1588, %v1652
    %1654 = vmatmul.f32.gmra.mxu0 %v859
    %v1655 = vpop.f32.mrf.mxu0
    %v1656 = vadd.f32 %v1591, %v1655
    %1657 = vmatmul.f32.gmra.mxu0 %v864
    %v1658 = vpop.f32.mrf.mxu0
    %v1659 = vadd.f32 %v1594, %v1658
    %1660 = vmatmul.f32.gmra.mxu0 %v869
    %v1661 = vpop.f32.mrf.mxu0
    %v1662 = vadd.f32 %v1597, %v1661
    %1663 = vmatmul.f32.gmra.mxu0 %v874
    %v1664 = vpop.f32.mrf.mxu0
    %v1665 = vadd.f32 %v1600, %v1664
    %1666 = vmatmul.f32.gmra.mxu0 %v879
    %v1667 = vpop.f32.mrf.mxu0
    %v1668 = vadd.f32 %v1603, %v1667
    %1669 = vmatmul.f32.gmra.mxu0 %v884
    %v1670 = vpop.f32.mrf.mxu0
    %v1671 = vadd.f32 %v1606, %v1670
    %1672 = vmatmul.f32.gmra.mxu0 %v889
    %v1673 = vpop.f32.mrf.mxu0
    %v1674 = vadd.f32 %v1609, %v1673
    %1675 = vmatmul.f32.gmra.mxu0 %v894
    %v1676 = vpop.f32.mrf.mxu0
    %v1677 = vadd.f32 %v1612, %v1676
    %1678 = vmatmul.f32.gmra.mxu0 %v899
    %v1679 = vpop.f32.mrf.mxu0
    %v1680 = vadd.f32 %v1615, %v1679
    %1681 = vmatmul.f32.gmra.mxu0 %v904
    %v1682 = vpop.f32.mrf.mxu0
    %v1683 = vadd.f32 %v1618, %v1682
    %1684 = vdwg.mxu0
    %1685 = vmatpush.msra.mxu0 %v1477
    %1686 = vmatpush.msra.mxu0 %v1476
    %1687 = vmatpush.msra.mxu0 %v1475
    %1688 = vmatpush.msra.mxu0 %v1474
    %1689 = vmatpush.msra.mxu0 %v1473
    %1690 = vmatpush.msra.mxu0 %v1472
    %1691 = vmatpush.msra.mxu0 %v1471
    %1692 = vmatpush.msra.mxu0 %v1470
    %1693 = vmatpush.msra.mxu0 %v1469
    %1694 = vmatpush.msra.mxu0 %v1468
    %1695 = vmatpush.msra.mxu0 %v1467
    %1696 = vmatpush.msra.mxu0 %v1466
    %1697 = vmatpush.msra.mxu0 %v1465
    %1698 = vmatpush.msra.mxu0 %v1464
    %1699 = vmatpush.msra.mxu0 %v1463
    %1700 = vmatpush.msra.mxu0 %v1462
    %1701 = vmatmul.f32.gmra.mxu0 %v830
    %v1702 = vpop.f32.mrf.mxu0
    %v1703 = vadd.f32 %v1638, %v1702
    %1704 = vmatmul.f32.gmra.mxu0 %v835
    %v1705 = vpop.f32.mrf.mxu0
    %v1706 = vadd.f32 %v1641, %v1705
    %1707 = vmatmul.f32.gmra.mxu0 %v840
    %v1708 = vpop.f32.mrf.mxu0
    %v1709 = vadd.f32 %v1644, %v1708
    %1710 = vmatmul.f32.gmra.mxu0 %v845
    %v1711 = vpop.f32.mrf.mxu0
    %v1712 = vadd.f32 %v1647, %v1711
    %1713 = vmatmul.f32.gmra.mxu0 %v850
    %v1714 = vpop.f32.mrf.mxu0
    %v1715 = vadd.f32 %v1650, %v1714
    %1716 = vmatmul.f32.gmra.mxu0 %v855
    %v1717 = vpop.f32.mrf.mxu0
    %v1718 = vadd.f32 %v1653, %v1717
    %1719 = vmatmul.f32.gmra.mxu0 %v860
    %v1720 = vpop.f32.mrf.mxu0
    %v1721 = vadd.f32 %v1656, %v1720
    %1722 = vmatmul.f32.gmra.mxu0 %v865
    %v1723 = vpop.f32.mrf.mxu0
    %v1724 = vadd.f32 %v1659, %v1723
    %1725 = vmatmul.f32.gmra.mxu0 %v870
    %v1726 = vpop.f32.mrf.mxu0
    %v1727 = vadd.f32 %v1662, %v1726
    %1728 = vmatmul.f32.gmra.mxu0 %v875
    %v1729 = vpop.f32.mrf.mxu0
    %v1730 = vadd.f32 %v1665, %v1729
    %1731 = vmatmul.f32.gmra.mxu0 %v880
    %v1732 = vpop.f32.mrf.mxu0
    %v1733 = vadd.f32 %v1668, %v1732
    %1734 = vmatmul.f32.gmra.mxu0 %v885
    %v1735 = vpop.f32.mrf.mxu0
    %v1736 = vadd.f32 %v1671, %v1735
    %1737 = vmatmul.f32.gmra.mxu0 %v890
    %v1738 = vpop.f32.mrf.mxu0
    %v1739 = vadd.f32 %v1674, %v1738
    %1740 = vmatmul.f32.gmra.mxu0 %v895
    %v1741 = vpop.f32.mrf.mxu0
    %v1742 = vadd.f32 %v1677, %v1741
    %1743 = vmatmul.f32.gmra.mxu0 %v900
    %v1744 = vpop.f32.mrf.mxu0
    %v1745 = vadd.f32 %v1680, %v1744
    %1746 = vmatmul.f32.gmra.mxu0 %v905
    %v1747 = vpop.f32.mrf.mxu0
    %v1748 = vadd.f32 %v1683, %v1747
    %1749 = vdwg.mxu0
    %1750 = vmatpush.msra.mxu0 0.0
    %1751 = vmatpush.msra.mxu0 0.0
    %1752 = vmatpush.msra.mxu0 0.0
    %1753 = vmatpush.msra.mxu0 0.0
    %1754 = vmatpush.msra.mxu0 %v1489
    %1755 = vmatpush.msra.mxu0 %v1488
    %1756 = vmatpush.msra.mxu0 %v1487
    %1757 = vmatpush.msra.mxu0 %v1486
    %1758 = vmatpush.msra.mxu0 %v1485
    %1759 = vmatpush.msra.mxu0 %v1484
    %1760 = vmatpush.msra.mxu0 %v1483
    %1761 = vmatpush.msra.mxu0 %v1482
    %1762 = vmatpush.msra.mxu0 %v1481
    %1763 = vmatpush.msra.mxu0 %v1480
    %1764 = vmatpush.msra.mxu0 %v1479
    %1765 = vmatpush.msra.mxu0 %v1478
    %1766 = vmatmul.f32.gmra.mxu0 %v909
    %v1767 = vpop.f32.mrf.mxu0
    %v1768 = vadd.f32 %v1703, %v1767
    %1769 = vmatmul.f32.gmra.mxu0 %v912
    %v1770 = vpop.f32.mrf.mxu0
    %v1771 = vadd.f32 %v1706, %v1770
    %1772 = vmatmul.f32.gmra.mxu0 %v915
    %v1773 = vpop.f32.mrf.mxu0
    %v1774 = vadd.f32 %v1709, %v1773
    %1775 = vmatmul.f32.gmra.mxu0 %v918
    %v1776 = vpop.f32.mrf.mxu0
    %v1777 = vadd.f32 %v1712, %v1776
    %1778 = vmatmul.f32.gmra.mxu0 %v921
    %v1779 = vpop.f32.mrf.mxu0
    %v1780 = vadd.f32 %v1715, %v1779
    %1781 = vmatmul.f32.gmra.mxu0 %v924
    %v1782 = vpop.f32.mrf.mxu0
    %v1783 = vadd.f32 %v1718, %v1782
    %1784 = vmatmul.f32.gmra.mxu0 %v927
    %v1785 = vpop.f32.mrf.mxu0
    %v1786 = vadd.f32 %v1721, %v1785
    %1787 = vmatmul.f32.gmra.mxu0 %v930
    %v1788 = vpop.f32.mrf.mxu0
    %v1789 = vadd.f32 %v1724, %v1788
    %1790 = vmatmul.f32.gmra.mxu0 %v933
    %v1791 = vpop.f32.mrf.mxu0
    %v1792 = vadd.f32 %v1727, %v1791
    %1793 = vmatmul.f32.gmra.mxu0 %v936
    %v1794 = vpop.f32.mrf.mxu0
    %v1795 = vadd.f32 %v1730, %v1794
    %1796 = vmatmul.f32.gmra.mxu0 %v939
    %v1797 = vpop.f32.mrf.mxu0
    %v1798 = vadd.f32 %v1733, %v1797
    %1799 = vmatmul.f32.gmra.mxu0 %v942
    %v1800 = vpop.f32.mrf.mxu0
    %v1801 = vadd.f32 %v1736, %v1800
    %1802 = vmatmul.f32.gmra.mxu0 %v945
    %v1803 = vpop.f32.mrf.mxu0
    %v1804 = vadd.f32 %v1739, %v1803
    %1805 = vmatmul.f32.gmra.mxu0 %v948
    %v1806 = vpop.f32.mrf.mxu0
    %v1807 = vadd.f32 %v1742, %v1806
    %1808 = vmatmul.f32.gmra.mxu0 %v951
    %v1809 = vpop.f32.mrf.mxu0
    %v1810 = vadd.f32 %v1745, %v1809
    %1811 = vmatmul.f32.gmra.mxu0 %v954
    %v1812 = vpop.f32.mrf.mxu0
    %v1813 = vadd.f32 %v1748, %v1812
    %1814 = vdwg.mxu0
    %s1815 = scalar_lea.vmem %s4, 32
    %v1816 = vld [vmem:[%s1815] sm:$0xff]
    %v1817 = vld [vmem:[%s1815 + $0x8] sm:$0xff]
    %v1818 = vld [vmem:[%s1815 + $0x10] sm:$0xff]
    %v1819 = vld [vmem:[%s1815 + $0x18] sm:$0xff]
    %v1821 = vsel %vm601, %v1768, 0
    %v1824 = vsel %vm601, %v1771, 0
    %v1827 = vsel %vm601, %v1774, 0
    %v1830 = vsel %vm601, %v1777, 0
    %v1833 = vsel %vm601, %v1780, 0
    %v1836 = vsel %vm601, %v1783, 0
    %v1839 = vsel %vm601, %v1786, 0
    %v1842 = vsel %vm601, %v1789, 0
    %v1845 = vsel %vm601, %v1792, 0
    %v1848 = vsel %vm601, %v1795, 0
    %v1851 = vsel %vm601, %v1798, 0
    %v1854 = vsel %vm601, %v1801, 0
    %v1857 = vsel %vm601, %v1804, 0
    %v1860 = vsel %vm601, %v1807, 0
    %v1863 = vsel %vm601, %v1810, 0
    %v1866 = vsel %vm601, %v1813, 0
    %1868 = vmatpush.msra.mxu0 0.0
    %1869 = vmatpush.msra.mxu0 0.0
    %1870 = vmatpush.msra.mxu0 0.0
    %1871 = vmatpush.msra.mxu0 0.0
    %1872 = vmatpush.msra.mxu0 0.0
    %1873 = vmatpush.msra.mxu0 0.0
    %1874 = vmatpush.msra.mxu0 0.0
    %1875 = vmatpush.msra.mxu0 0.0
    %1876 = vmatpush.msra.mxu0 0.0
    %1877 = vmatpush.msra.mxu0 0.0
    %1878 = vmatpush.msra.mxu0 0.0
    %1879 = vmatpush.msra.mxu0 0.0
    %1880 = vmatpush.msra.mxu0 %v1819
    %1881 = vmatpush.msra.mxu0 %v1818
    %1882 = vmatpush.msra.mxu0 %v1817
    %1883 = vmatpush.msra.mxu0 %v1816
    %1884 = vmatmul.f32.gmra.mxu0 %v1821
    %v1885 = vpop.f32.mrf.mxu0
    %v1886 = vadd.f32 0.0, %v1885
    %1887 = vmatmul.f32.gmra.mxu0 %v1824
    %v1888 = vpop.f32.mrf.mxu0
    %v1889 = vadd.f32 0.0, %v1888
    %1890 = vmatmul.f32.gmra.mxu0 %v1827
    %v1891 = vpop.f32.mrf.mxu0
    %v1892 = vadd.f32 0.0, %v1891
    %1893 = vmatmul.f32.gmra.mxu0 %v1830
    %v1894 = vpop.f32.mrf.mxu0
    %v1895 = vadd.f32 0.0, %v1894
    %1896 = vmatmul.f32.gmra.mxu0 %v1833
    %v1897 = vpop.f32.mrf.mxu0
    %v1898 = vadd.f32 0.0, %v1897
    %1899 = vmatmul.f32.gmra.mxu0 %v1836
    %v1900 = vpop.f32.mrf.mxu0
    %v1901 = vadd.f32 0.0, %v1900
    %1902 = vmatmul.f32.gmra.mxu0 %v1839
    %v1903 = vpop.f32.mrf.mxu0
    %v1904 = vadd.f32 0.0, %v1903
    %1905 = vmatmul.f32.gmra.mxu0 %v1842
    %v1906 = vpop.f32.mrf.mxu0
    %v1907 = vadd.f32 0.0, %v1906
    %1908 = vmatmul.f32.gmra.mxu0 %v1845
    %v1909 = vpop.f32.mrf.mxu0
    %v1910 = vadd.f32 0.0, %v1909
    %1911 = vmatmul.f32.gmra.mxu0 %v1848
    %v1912 = vpop.f32.mrf.mxu0
    %v1913 = vadd.f32 0.0, %v1912
    %1914 = vmatmul.f32.gmra.mxu0 %v1851
    %v1915 = vpop.f32.mrf.mxu0
    %v1916 = vadd.f32 0.0, %v1915
    %1917 = vmatmul.f32.gmra.mxu0 %v1854
    %v1918 = vpop.f32.mrf.mxu0
    %v1919 = vadd.f32 0.0, %v1918
    %1920 = vmatmul.f32.gmra.mxu0 %v1857
    %v1921 = vpop.f32.mrf.mxu0
    %v1922 = vadd.f32 0.0, %v1921
    %1923 = vmatmul.f32.gmra.mxu0 %v1860
    %v1924 = vpop.f32.mrf.mxu0
    %v1925 = vadd.f32 0.0, %v1924
    %1926 = vmatmul.f32.gmra.mxu0 %v1863
    %v1927 = vpop.f32.mrf.mxu0
    %v1928 = vadd.f32 0.0, %v1927
    %1929 = vmatmul.f32.gmra.mxu0 %v1866
    %v1930 = vpop.f32.mrf.mxu0
    %v1931 = vadd.f32 0.0, %v1930
    %1932 = vdwg.mxu0
    %v1933 = vadd.f32 %v1398, %v1886
    %v1934 = vadd.f32 %v1399, %v1889
    %v1935 = vadd.f32 %v1400, %v1892
    %v1936 = vadd.f32 %v1401, %v1895
    %v1937 = vadd.f32 %v1402, %v1898
    %v1938 = vadd.f32 %v1403, %v1901
    %v1939 = vadd.f32 %v1404, %v1904
    %v1940 = vadd.f32 %v1405, %v1907
    %v1941 = vadd.f32 %v1406, %v1910
    %v1942 = vadd.f32 %v1407, %v1913
    %v1943 = vadd.f32 %v1408, %v1916
    %v1944 = vadd.f32 %v1409, %v1919
    %v1945 = vadd.f32 %v1410, %v1922
    %v1946 = vadd.f32 %v1411, %v1925
    %v1947 = vadd.f32 %v1412, %v1928
    %v1948 = vadd.f32 %v1413, %v1931
    %v1949 = vld [vmem:[#allocation2 + $0x2] sm:$0xff]
    %v1950 = vld [vmem:[#allocation2 + $0xa] sm:$0xff]
    %v1951 = vld [vmem:[#allocation2 + $0x12] sm:$0xff]
    %v1952 = vld [vmem:[#allocation2 + $0x1a] sm:$0xff]
    %v1953 = vld [vmem:[#allocation2 + $0x22] sm:$0xff]
    %v1954 = vld [vmem:[#allocation2 + $0x2a] sm:$0xff]
    %v1955 = vld [vmem:[#allocation2 + $0x32] sm:$0xff]
    %v1956 = vld [vmem:[#allocation2 + $0x3a] sm:$0xff]
    %v1957 = vld [vmem:[#allocation2 + $0x42] sm:$0xff]
    %v1958 = vld [vmem:[#allocation2 + $0x4a] sm:$0xff]
    %v1959 = vld [vmem:[#allocation2 + $0x52] sm:$0xff]
    %v1960 = vld [vmem:[#allocation2 + $0x5a] sm:$0xff]
    %v1961 = vld [vmem:[#allocation2 + $0x62] sm:$0xff]
    %v1962 = vld [vmem:[#allocation2 + $0x6a] sm:$0xff]
    %v1963 = vld [vmem:[#allocation2 + $0x72] sm:$0xff]
    %v1964 = vld [vmem:[#allocation2 + $0x7a] sm:$0xff]
    %v1965 = vld [vmem:[#allocation2 + $0x82] sm:$0xff]
    %v1966 = vld [vmem:[#allocation2 + $0x8a] sm:$0xff]
    %v1967 = vld [vmem:[#allocation2 + $0x92] sm:$0xff]
    %v1968 = vld [vmem:[#allocation2 + $0x9a] sm:$0xff]
    %v1969 = vld [vmem:[#allocation2 + $0xa2] sm:$0xff]
    %v1970 = vld [vmem:[#allocation2 + $0xaa] sm:$0xff]
    %v1971 = vld [vmem:[#allocation2 + $0xb2] sm:$0xff]
    %v1972 = vld [vmem:[#allocation2 + $0xba] sm:$0xff]
    %v1973 = vld [vmem:[#allocation2 + $0xc2] sm:$0xff]
    %v1974 = vld [vmem:[#allocation2 + $0xca] sm:$0xff]
    %v1975 = vld [vmem:[#allocation2 + $0xd2] sm:$0xff]
    %v1976 = vld [vmem:[#allocation2 + $0xda] sm:$0xff]
    %v1977 = vld [vmem:[#allocation2 + $0xe2] sm:$0xff]
    %v1978 = vld [vmem:[#allocation2 + $0xea] sm:$0xff]
    %v1979 = vld [vmem:[#allocation2 + $0xf2] sm:$0xff]
    %v1980 = vld [vmem:[#allocation2 + $0xfa] sm:$0xff]
    %v1981 = vld [vmem:[#allocation2 + $0x102] sm:$0xff]
    %v1982 = vld [vmem:[#allocation2 + $0x10a] sm:$0xff]
    %v1983 = vld [vmem:[#allocation2 + $0x112] sm:$0xff]
    %v1984 = vld [vmem:[#allocation2 + $0x11a] sm:$0xff]
    %v1985 = vld [vmem:[#allocation2 + $0x122] sm:$0xff]
    %v1986 = vld [vmem:[#allocation2 + $0x12a] sm:$0xff]
    %v1987 = vld [vmem:[#allocation2 + $0x132] sm:$0xff]
    %v1988 = vld [vmem:[#allocation2 + $0x13a] sm:$0xff]
    %v1989 = vld [vmem:[#allocation2 + $0x142] sm:$0xff]
    %v1990 = vld [vmem:[#allocation2 + $0x14a] sm:$0xff]
    %v1991 = vld [vmem:[#allocation2 + $0x152] sm:$0xff]
    %v1992 = vld [vmem:[#allocation2 + $0x15a] sm:$0xff]
    %v1993 = vld [vmem:[#allocation2 + $0x162] sm:$0xff]
    %v1994 = vld [vmem:[#allocation2 + $0x16a] sm:$0xff]
    %v1995 = vld [vmem:[#allocation2 + $0x172] sm:$0xff]
    %v1996 = vld [vmem:[#allocation2 + $0x17a] sm:$0xff]
    %v1997 = vld [vmem:[#allocation2 + $0x182] sm:$0xff]
    %v1998 = vld [vmem:[#allocation2 + $0x18a] sm:$0xff]
    %v1999 = vld [vmem:[#allocation2 + $0x192] sm:$0xff]
    %v2000 = vld [vmem:[#allocation2 + $0x19a] sm:$0xff]
    %v2001 = vld [vmem:[#allocation2 + $0x1a2] sm:$0xff]
    %v2002 = vld [vmem:[#allocation2 + $0x1aa] sm:$0xff]
    %v2003 = vld [vmem:[#allocation2 + $0x1b2] sm:$0xff]
    %v2004 = vld [vmem:[#allocation2 + $0x1ba] sm:$0xff]
    %v2005 = vld [vmem:[#allocation2 + $0x1c2] sm:$0xff]
    %v2006 = vld [vmem:[#allocation2 + $0x1ca] sm:$0xff]
    %v2007 = vld [vmem:[#allocation2 + $0x1d2] sm:$0xff]
    %v2008 = vld [vmem:[#allocation2 + $0x1da] sm:$0xff]
    %v2009 = vld [vmem:[#allocation2 + $0x1e2] sm:$0xff]
    %v2010 = vld [vmem:[#allocation2 + $0x1ea] sm:$0xff]
    %v2011 = vld [vmem:[#allocation2 + $0x1f2] sm:$0xff]
    %v2012 = vld [vmem:[#allocation2 + $0x1fa] sm:$0xff]
    %v2013 = vld [vmem:[#allocation2 + $0x202] sm:$0xff]
    %v2014 = vld [vmem:[#allocation2 + $0x20a] sm:$0xff]
    %v2015 = vld [vmem:[#allocation2 + $0x212] sm:$0xff]
    %v2016 = vld [vmem:[#allocation2 + $0x21a] sm:$0xff]
    %v2017 = vld [vmem:[#allocation2 + $0x222] sm:$0xff]
    %v2018 = vld [vmem:[#allocation2 + $0x22a] sm:$0xff]
    %v2019 = vld [vmem:[#allocation2 + $0x232] sm:$0xff]
    %v2020 = vld [vmem:[#allocation2 + $0x23a] sm:$0xff]
    %v2021 = vld [vmem:[#allocation2 + $0x242] sm:$0xff]
    %v2022 = vld [vmem:[#allocation2 + $0x24a] sm:$0xff]
    %v2023 = vld [vmem:[#allocation2 + $0x252] sm:$0xff]
    %v2024 = vld [vmem:[#allocation2 + $0x25a] sm:$0xff]
    %2025 = vmatpush.msra.mxu0 %v1964
    %2026 = vmatpush.msra.mxu0 %v1963
    %2027 = vmatpush.msra.mxu0 %v1962
    %2028 = vmatpush.msra.mxu0 %v1961
    %2029 = vmatpush.msra.mxu0 %v1960
    %2030 = vmatpush.msra.mxu0 %v1959
    %2031 = vmatpush.msra.mxu0 %v1958
    %2032 = vmatpush.msra.mxu0 %v1957
    %2033 = vmatpush.msra.mxu0 %v1956
    %2034 = vmatpush.msra.mxu0 %v1955
    %2035 = vmatpush.msra.mxu0 %v1954
    %2036 = vmatpush.msra.mxu0 %v1953
    %2037 = vmatpush.msra.mxu0 %v1952
    %2038 = vmatpush.msra.mxu0 %v1951
    %2039 = vmatpush.msra.mxu0 %v1950
    %2040 = vmatpush.msra.mxu0 %v1949
    %2041 = vmatmul.f32.gmra.mxu0 %v827
    %v2042 = vpop.f32.mrf.mxu0
    %v2043 = vadd.f32 0.0, %v2042
    %2044 = vmatmul.f32.gmra.mxu0 %v832
    %v2045 = vpop.f32.mrf.mxu0
    %v2046 = vadd.f32 0.0, %v2045
    %2047 = vmatmul.f32.gmra.mxu0 %v837
    %v2048 = vpop.f32.mrf.mxu0
    %v2049 = vadd.f32 0.0, %v2048
    %2050 = vmatmul.f32.gmra.mxu0 %v842
    %v2051 = vpop.f32.mrf.mxu0
    %v2052 = vadd.f32 0.0, %v2051
    %2053 = vmatmul.f32.gmra.mxu0 %v847
    %v2054 = vpop.f32.mrf.mxu0
    %v2055 = vadd.f32 0.0, %v2054
    %2056 = vmatmul.f32.gmra.mxu0 %v852
    %v2057 = vpop.f32.mrf.mxu0
    %v2058 = vadd.f32 0.0, %v2057
    %2059 = vmatmul.f32.gmra.mxu0 %v857
    %v2060 = vpop.f32.mrf.mxu0
    %v2061 = vadd.f32 0.0, %v2060
    %2062 = vmatmul.f32.gmra.mxu0 %v862
    %v2063 = vpop.f32.mrf.mxu0
    %v2064 = vadd.f32 0.0, %v2063
    %2065 = vmatmul.f32.gmra.mxu0 %v867
    %v2066 = vpop.f32.mrf.mxu0
    %v2067 = vadd.f32 0.0, %v2066
    %2068 = vmatmul.f32.gmra.mxu0 %v872
    %v2069 = vpop.f32.mrf.mxu0
    %v2070 = vadd.f32 0.0, %v2069
    %2071 = vmatmul.f32.gmra.mxu0 %v877
    %v2072 = vpop.f32.mrf.mxu0
    %v2073 = vadd.f32 0.0, %v2072
    %2074 = vmatmul.f32.gmra.mxu0 %v882
    %v2075 = vpop.f32.mrf.mxu0
    %v2076 = vadd.f32 0.0, %v2075
    %2077 = vmatmul.f32.gmra.mxu0 %v887
    %v2078 = vpop.f32.mrf.mxu0
    %v2079 = vadd.f32 0.0, %v2078
    %2080 = vmatmul.f32.gmra.mxu0 %v892
    %v2081 = vpop.f32.mrf.mxu0
    %v2082 = vadd.f32 0.0, %v2081
    %2083 = vmatmul.f32.gmra.mxu0 %v897
    %v2084 = vpop.f32.mrf.mxu0
    %v2085 = vadd.f32 0.0, %v2084
    %2086 = vmatmul.f32.gmra.mxu0 %v902
    %v2087 = vpop.f32.mrf.mxu0
    %v2088 = vadd.f32 0.0, %v2087
    %2089 = vdwg.mxu0
    %2090 = vmatpush.msra.mxu0 %v1980
    %2091 = vmatpush.msra.mxu0 %v1979
    %2092 = vmatpush.msra.mxu0 %v1978
    %2093 = vmatpush.msra.mxu0 %v1977
    %2094 = vmatpush.msra.mxu0 %v1976
    %2095 = vmatpush.msra.mxu0 %v1975
    %2096 = vmatpush.msra.mxu0 %v1974
    %2097 = vmatpush.msra.mxu0 %v1973
    %2098 = vmatpush.msra.mxu0 %v1972
    %2099 = vmatpush.msra.mxu0 %v1971
    %2100 = vmatpush.msra.mxu0 %v1970
    %2101 = vmatpush.msra.mxu0 %v1969
    %2102 = vmatpush.msra.mxu0 %v1968
    %2103 = vmatpush.msra.mxu0 %v1967
    %2104 = vmatpush.msra.mxu0 %v1966
    %2105 = vmatpush.msra.mxu0 %v1965
    %2106 = vmatmul.f32.gmra.mxu0 %v828
    %v2107 = vpop.f32.mrf.mxu0
    %v2108 = vadd.f32 %v2043, %v2107
    %2109 = vmatmul.f32.gmra.mxu0 %v833
    %v2110 = vpop.f32.mrf.mxu0
    %v2111 = vadd.f32 %v2046, %v2110
    %2112 = vmatmul.f32.gmra.mxu0 %v838
    %v2113 = vpop.f32.mrf.mxu0
    %v2114 = vadd.f32 %v2049, %v2113
    %2115 = vmatmul.f32.gmra.mxu0 %v843
    %v2116 = vpop.f32.mrf.mxu0
    %v2117 = vadd.f32 %v2052, %v2116
    %2118 = vmatmul.f32.gmra.mxu0 %v848
    %v2119 = vpop.f32.mrf.mxu0
    %v2120 = vadd.f32 %v2055, %v2119
    %2121 = vmatmul.f32.gmra.mxu0 %v853
    %v2122 = vpop.f32.mrf.mxu0
    %v2123 = vadd.f32 %v2058, %v2122
    %2124 = vmatmul.f32.gmra.mxu0 %v858
    %v2125 = vpop.f32.mrf.mxu0
    %v2126 = vadd.f32 %v2061, %v2125
    %2127 = vmatmul.f32.gmra.mxu0 %v863
    %v2128 = vpop.f32.mrf.mxu0
    %v2129 = vadd.f32 %v2064, %v2128
    %2130 = vmatmul.f32.gmra.mxu0 %v868
    %v2131 = vpop.f32.mrf.mxu0
    %v2132 = vadd.f32 %v2067, %v2131
    %2133 = vmatmul.f32.gmra.mxu0 %v873
    %v2134 = vpop.f32.mrf.mxu0
    %v2135 = vadd.f32 %v2070, %v2134
    %2136 = vmatmul.f32.gmra.mxu0 %v878
    %v2137 = vpop.f32.mrf.mxu0
    %v2138 = vadd.f32 %v2073, %v2137
    %2139 = vmatmul.f32.gmra.mxu0 %v883
    %v2140 = vpop.f32.mrf.mxu0
    %v2141 = vadd.f32 %v2076, %v2140
    %2142 = vmatmul.f32.gmra.mxu0 %v888
    %v2143 = vpop.f32.mrf.mxu0
    %v2144 = vadd.f32 %v2079, %v2143
    %2145 = vmatmul.f32.gmra.mxu0 %v893
    %v2146 = vpop.f32.mrf.mxu0
    %v2147 = vadd.f32 %v2082, %v2146
    %2148 = vmatmul.f32.gmra.mxu0 %v898
    %v2149 = vpop.f32.mrf.mxu0
    %v2150 = vadd.f32 %v2085, %v2149
    %2151 = vmatmul.f32.gmra.mxu0 %v903
    %v2152 = vpop.f32.mrf.mxu0
    %v2153 = vadd.f32 %v2088, %v2152
    %2154 = vdwg.mxu0
    %2155 = vmatpush.msra.mxu0 %v1996
    %2156 = vmatpush.msra.mxu0 %v1995
    %2157 = vmatpush.msra.mxu0 %v1994
    %2158 = vmatpush.msra.mxu0 %v1993
    %2159 = vmatpush.msra.mxu0 %v1992
    %2160 = vmatpush.msra.mxu0 %v1991
    %2161 = vmatpush.msra.mxu0 %v1990
    %2162 = vmatpush.msra.mxu0 %v1989
    %2163 = vmatpush.msra.mxu0 %v1988
    %2164 = vmatpush.msra.mxu0 %v1987
    %2165 = vmatpush.msra.mxu0 %v1986
    %2166 = vmatpush.msra.mxu0 %v1985
    %2167 = vmatpush.msra.mxu0 %v1984
    %2168 = vmatpush.msra.mxu0 %v1983
    %2169 = vmatpush.msra.mxu0 %v1982
    %2170 = vmatpush.msra.mxu0 %v1981
    %2171 = vmatmul.f32.gmra.mxu0 %v829
    %v2172 = vpop.f32.mrf.mxu0
    %v2173 = vadd.f32 %v2108, %v2172
    %2174 = vmatmul.f32.gmra.mxu0 %v834
    %v2175 = vpop.f32.mrf.mxu0
    %v2176 = vadd.f32 %v2111, %v2175
    %2177 = vmatmul.f32.gmra.mxu0 %v839
    %v2178 = vpop.f32.mrf.mxu0
    %v2179 = vadd.f32 %v2114, %v2178
    %2180 = vmatmul.f32.gmra.mxu0 %v844
    %v2181 = vpop.f32.mrf.mxu0
    %v2182 = vadd.f32 %v2117, %v2181
    %2183 = vmatmul.f32.gmra.mxu0 %v849
    %v2184 = vpop.f32.mrf.mxu0
    %v2185 = vadd.f32 %v2120, %v2184
    %2186 = vmatmul.f32.gmra.mxu0 %v854
    %v2187 = vpop.f32.mrf.mxu0
    %v2188 = vadd.f32 %v2123, %v2187
    %2189 = vmatmul.f32.gmra.mxu0 %v859
    %v2190 = vpop.f32.mrf.mxu0
    %v2191 = vadd.f32 %v2126, %v2190
    %2192 = vmatmul.f32.gmra.mxu0 %v864
    %v2193 = vpop.f32.mrf.mxu0
    %v2194 = vadd.f32 %v2129, %v2193
    %2195 = vmatmul.f32.gmra.mxu0 %v869
    %v2196 = vpop.f32.mrf.mxu0
    %v2197 = vadd.f32 %v2132, %v2196
    %2198 = vmatmul.f32.gmra.mxu0 %v874
    %v2199 = vpop.f32.mrf.mxu0
    %v2200 = vadd.f32 %v2135, %v2199
    %2201 = vmatmul.f32.gmra.mxu0 %v879
    %v2202 = vpop.f32.mrf.mxu0
    %v2203 = vadd.f32 %v2138, %v2202
    %2204 = vmatmul.f32.gmra.mxu0 %v884
    %v2205 = vpop.f32.mrf.mxu0
    %v2206 = vadd.f32 %v2141, %v2205
    %2207 = vmatmul.f32.gmra.mxu0 %v889
    %v2208 = vpop.f32.mrf.mxu0
    %v2209 = vadd.f32 %v2144, %v2208
    %2210 = vmatmul.f32.gmra.mxu0 %v894
    %v2211 = vpop.f32.mrf.mxu0
    %v2212 = vadd.f32 %v2147, %v2211
    %2213 = vmatmul.f32.gmra.mxu0 %v899
    %v2214 = vpop.f32.mrf.mxu0
    %v2215 = vadd.f32 %v2150, %v2214
    %2216 = vmatmul.f32.gmra.mxu0 %v904
    %v2217 = vpop.f32.mrf.mxu0
    %v2218 = vadd.f32 %v2153, %v2217
    %2219 = vdwg.mxu0
    %2220 = vmatpush.msra.mxu0 %v2012
    %2221 = vmatpush.msra.mxu0 %v2011
    %2222 = vmatpush.msra.mxu0 %v2010
    %2223 = vmatpush.msra.mxu0 %v2009
    %2224 = vmatpush.msra.mxu0 %v2008
    %2225 = vmatpush.msra.mxu0 %v2007
    %2226 = vmatpush.msra.mxu0 %v2006
    %2227 = vmatpush.msra.mxu0 %v2005
    %2228 = vmatpush.msra.mxu0 %v2004
    %2229 = vmatpush.msra.mxu0 %v2003
    %2230 = vmatpush.msra.mxu0 %v2002
    %2231 = vmatpush.msra.mxu0 %v2001
    %2232 = vmatpush.msra.mxu0 %v2000
    %2233 = vmatpush.msra.mxu0 %v1999
    %2234 = vmatpush.msra.mxu0 %v1998
    %2235 = vmatpush.msra.mxu0 %v1997
    %2236 = vmatmul.f32.gmra.mxu0 %v830
    %v2237 = vpop.f32.mrf.mxu0
    %v2238 = vadd.f32 %v2173, %v2237
    %2239 = vmatmul.f32.gmra.mxu0 %v835
    %v2240 = vpop.f32.mrf.mxu0
    %v2241 = vadd.f32 %v2176, %v2240
    %2242 = vmatmul.f32.gmra.mxu0 %v840
    %v2243 = vpop.f32.mrf.mxu0
    %v2244 = vadd.f32 %v2179, %v2243
    %2245 = vmatmul.f32.gmra.mxu0 %v845
    %v2246 = vpop.f32.mrf.mxu0
    %v2247 = vadd.f32 %v2182, %v2246
    %2248 = vmatmul.f32.gmra.mxu0 %v850
    %v2249 = vpop.f32.mrf.mxu0
    %v2250 = vadd.f32 %v2185, %v2249
    %2251 = vmatmul.f32.gmra.mxu0 %v855
    %v2252 = vpop.f32.mrf.mxu0
    %v2253 = vadd.f32 %v2188, %v2252
    %2254 = vmatmul.f32.gmra.mxu0 %v860
    %v2255 = vpop.f32.mrf.mxu0
    %v2256 = vadd.f32 %v2191, %v2255
    %2257 = vmatmul.f32.gmra.mxu0 %v865
    %v2258 = vpop.f32.mrf.mxu0
    %v2259 = vadd.f32 %v2194, %v2258
    %2260 = vmatmul.f32.gmra.mxu0 %v870
    %v2261 = vpop.f32.mrf.mxu0
    %v2262 = vadd.f32 %v2197, %v2261
    %2263 = vmatmul.f32.gmra.mxu0 %v875
    %v2264 = vpop.f32.mrf.mxu0
    %v2265 = vadd.f32 %v2200, %v2264
    %2266 = vmatmul.f32.gmra.mxu0 %v880
    %v2267 = vpop.f32.mrf.mxu0
    %v2268 = vadd.f32 %v2203, %v2267
    %2269 = vmatmul.f32.gmra.mxu0 %v885
    %v2270 = vpop.f32.mrf.mxu0
    %v2271 = vadd.f32 %v2206, %v2270
    %2272 = vmatmul.f32.gmra.mxu0 %v890
    %v2273 = vpop.f32.mrf.mxu0
    %v2274 = vadd.f32 %v2209, %v2273
    %2275 = vmatmul.f32.gmra.mxu0 %v895
    %v2276 = vpop.f32.mrf.mxu0
    %v2277 = vadd.f32 %v2212, %v2276
    %2278 = vmatmul.f32.gmra.mxu0 %v900
    %v2279 = vpop.f32.mrf.mxu0
    %v2280 = vadd.f32 %v2215, %v2279
    %2281 = vmatmul.f32.gmra.mxu0 %v905
    %v2282 = vpop.f32.mrf.mxu0
    %v2283 = vadd.f32 %v2218, %v2282
    %2284 = vdwg.mxu0
    %2285 = vmatpush.msra.mxu0 0.0
    %2286 = vmatpush.msra.mxu0 0.0
    %2287 = vmatpush.msra.mxu0 0.0
    %2288 = vmatpush.msra.mxu0 0.0
    %2289 = vmatpush.msra.mxu0 %v2024
    %2290 = vmatpush.msra.mxu0 %v2023
    %2291 = vmatpush.msra.mxu0 %v2022
    %2292 = vmatpush.msra.mxu0 %v2021
    %2293 = vmatpush.msra.mxu0 %v2020
    %2294 = vmatpush.msra.mxu0 %v2019
    %2295 = vmatpush.msra.mxu0 %v2018
    %2296 = vmatpush.msra.mxu0 %v2017
    %2297 = vmatpush.msra.mxu0 %v2016
    %2298 = vmatpush.msra.mxu0 %v2015
    %2299 = vmatpush.msra.mxu0 %v2014
    %2300 = vmatpush.msra.mxu0 %v2013
    %2301 = vmatmul.f32.gmra.mxu0 %v909
    %v2302 = vpop.f32.mrf.mxu0
    %v2303 = vadd.f32 %v2238, %v2302
    %2304 = vmatmul.f32.gmra.mxu0 %v912
    %v2305 = vpop.f32.mrf.mxu0
    %v2306 = vadd.f32 %v2241, %v2305
    %2307 = vmatmul.f32.gmra.mxu0 %v915
    %v2308 = vpop.f32.mrf.mxu0
    %v2309 = vadd.f32 %v2244, %v2308
    %2310 = vmatmul.f32.gmra.mxu0 %v918
    %v2311 = vpop.f32.mrf.mxu0
    %v2312 = vadd.f32 %v2247, %v2311
    %2313 = vmatmul.f32.gmra.mxu0 %v921
    %v2314 = vpop.f32.mrf.mxu0
    %v2315 = vadd.f32 %v2250, %v2314
    %2316 = vmatmul.f32.gmra.mxu0 %v924
    %v2317 = vpop.f32.mrf.mxu0
    %v2318 = vadd.f32 %v2253, %v2317
    %2319 = vmatmul.f32.gmra.mxu0 %v927
    %v2320 = vpop.f32.mrf.mxu0
    %v2321 = vadd.f32 %v2256, %v2320
    %2322 = vmatmul.f32.gmra.mxu0 %v930
    %v2323 = vpop.f32.mrf.mxu0
    %v2324 = vadd.f32 %v2259, %v2323
    %2325 = vmatmul.f32.gmra.mxu0 %v933
    %v2326 = vpop.f32.mrf.mxu0
    %v2327 = vadd.f32 %v2262, %v2326
    %2328 = vmatmul.f32.gmra.mxu0 %v936
    %v2329 = vpop.f32.mrf.mxu0
    %v2330 = vadd.f32 %v2265, %v2329
    %2331 = vmatmul.f32.gmra.mxu0 %v939
    %v2332 = vpop.f32.mrf.mxu0
    %v2333 = vadd.f32 %v2268, %v2332
    %2334 = vmatmul.f32.gmra.mxu0 %v942
    %v2335 = vpop.f32.mrf.mxu0
    %v2336 = vadd.f32 %v2271, %v2335
    %2337 = vmatmul.f32.gmra.mxu0 %v945
    %v2338 = vpop.f32.mrf.mxu0
    %v2339 = vadd.f32 %v2274, %v2338
    %2340 = vmatmul.f32.gmra.mxu0 %v948
    %v2341 = vpop.f32.mrf.mxu0
    %v2342 = vadd.f32 %v2277, %v2341
    %2343 = vmatmul.f32.gmra.mxu0 %v951
    %v2344 = vpop.f32.mrf.mxu0
    %v2345 = vadd.f32 %v2280, %v2344
    %2346 = vmatmul.f32.gmra.mxu0 %v954
    %v2347 = vpop.f32.mrf.mxu0
    %v2348 = vadd.f32 %v2283, %v2347
    %2349 = vdwg.mxu0
    %s2350 = scalar_lea.vmem %s4, 64
    %v2351 = vld [vmem:[%s2350] sm:$0xff]
    %v2352 = vld [vmem:[%s2350 + $0x8] sm:$0xff]
    %v2353 = vld [vmem:[%s2350 + $0x10] sm:$0xff]
    %v2354 = vld [vmem:[%s2350 + $0x18] sm:$0xff]
    %v2356 = vsel %vm601, %v2303, 0
    %v2359 = vsel %vm601, %v2306, 0
    %v2362 = vsel %vm601, %v2309, 0
    %v2365 = vsel %vm601, %v2312, 0
    %v2368 = vsel %vm601, %v2315, 0
    %v2371 = vsel %vm601, %v2318, 0
    %v2374 = vsel %vm601, %v2321, 0
    %v2377 = vsel %vm601, %v2324, 0
    %v2380 = vsel %vm601, %v2327, 0
    %v2383 = vsel %vm601, %v2330, 0
    %v2386 = vsel %vm601, %v2333, 0
    %v2389 = vsel %vm601, %v2336, 0
    %v2392 = vsel %vm601, %v2339, 0
    %v2395 = vsel %vm601, %v2342, 0
    %v2398 = vsel %vm601, %v2345, 0
    %v2401 = vsel %vm601, %v2348, 0
    %2403 = vmatpush.msra.mxu0 0.0
    %2404 = vmatpush.msra.mxu0 0.0
    %2405 = vmatpush.msra.mxu0 0.0
    %2406 = vmatpush.msra.mxu0 0.0
    %2407 = vmatpush.msra.mxu0 0.0
    %2408 = vmatpush.msra.mxu0 0.0
    %2409 = vmatpush.msra.mxu0 0.0
    %2410 = vmatpush.msra.mxu0 0.0
    %2411 = vmatpush.msra.mxu0 0.0
    %2412 = vmatpush.msra.mxu0 0.0
    %2413 = vmatpush.msra.mxu0 0.0
    %2414 = vmatpush.msra.mxu0 0.0
    %2415 = vmatpush.msra.mxu0 %v2354
    %2416 = vmatpush.msra.mxu0 %v2353
    %2417 = vmatpush.msra.mxu0 %v2352
    %2418 = vmatpush.msra.mxu0 %v2351
    %2419 = vmatmul.f32.gmra.mxu0 %v2356
    %v2420 = vpop.f32.mrf.mxu0
    %v2421 = vadd.f32 0.0, %v2420
    %2422 = vmatmul.f32.gmra.mxu0 %v2359
    %v2423 = vpop.f32.mrf.mxu0
    %v2424 = vadd.f32 0.0, %v2423
    %2425 = vmatmul.f32.gmra.mxu0 %v2362
    %v2426 = vpop.f32.mrf.mxu0
    %v2427 = vadd.f32 0.0, %v2426
    %2428 = vmatmul.f32.gmra.mxu0 %v2365
    %v2429 = vpop.f32.mrf.mxu0
    %v2430 = vadd.f32 0.0, %v2429
    %2431 = vmatmul.f32.gmra.mxu0 %v2368
    %v2432 = vpop.f32.mrf.mxu0
    %v2433 = vadd.f32 0.0, %v2432
    %2434 = vmatmul.f32.gmra.mxu0 %v2371
    %v2435 = vpop.f32.mrf.mxu0
    %v2436 = vadd.f32 0.0, %v2435
    %2437 = vmatmul.f32.gmra.mxu0 %v2374
    %v2438 = vpop.f32.mrf.mxu0
    %v2439 = vadd.f32 0.0, %v2438
    %2440 = vmatmul.f32.gmra.mxu0 %v2377
    %v2441 = vpop.f32.mrf.mxu0
    %v2442 = vadd.f32 0.0, %v2441
    %2443 = vmatmul.f32.gmra.mxu0 %v2380
    %v2444 = vpop.f32.mrf.mxu0
    %v2445 = vadd.f32 0.0, %v2444
    %2446 = vmatmul.f32.gmra.mxu0 %v2383
    %v2447 = vpop.f32.mrf.mxu0
    %v2448 = vadd.f32 0.0, %v2447
    %2449 = vmatmul.f32.gmra.mxu0 %v2386
    %v2450 = vpop.f32.mrf.mxu0
    %v2451 = vadd.f32 0.0, %v2450
    %2452 = vmatmul.f32.gmra.mxu0 %v2389
    %v2453 = vpop.f32.mrf.mxu0
    %v2454 = vadd.f32 0.0, %v2453
    %2455 = vmatmul.f32.gmra.mxu0 %v2392
    %v2456 = vpop.f32.mrf.mxu0
    %v2457 = vadd.f32 0.0, %v2456
    %2458 = vmatmul.f32.gmra.mxu0 %v2395
    %v2459 = vpop.f32.mrf.mxu0
    %v2460 = vadd.f32 0.0, %v2459
    %2461 = vmatmul.f32.gmra.mxu0 %v2398
    %v2462 = vpop.f32.mrf.mxu0
    %v2463 = vadd.f32 0.0, %v2462
    %2464 = vmatmul.f32.gmra.mxu0 %v2401
    %v2465 = vpop.f32.mrf.mxu0
    %v2466 = vadd.f32 0.0, %v2465
    %2467 = vdwg.mxu0
    %v2468 = vadd.f32 %v1933, %v2421
    %v2469 = vadd.f32 %v1934, %v2424
    %v2470 = vadd.f32 %v1935, %v2427
    %v2471 = vadd.f32 %v1936, %v2430
    %v2472 = vadd.f32 %v1937, %v2433
    %v2473 = vadd.f32 %v1938, %v2436
    %v2474 = vadd.f32 %v1939, %v2439
    %v2475 = vadd.f32 %v1940, %v2442
    %v2476 = vadd.f32 %v1941, %v2445
    %v2477 = vadd.f32 %v1942, %v2448
    %v2478 = vadd.f32 %v1943, %v2451
    %v2479 = vadd.f32 %v1944, %v2454
    %v2480 = vadd.f32 %v1945, %v2457
    %v2481 = vadd.f32 %v1946, %v2460
    %v2482 = vadd.f32 %v1947, %v2463
    %v2483 = vadd.f32 %v1948, %v2466
    %v2484 = vld [vmem:[#allocation2 + $0x12] sm:$0xff]
    %v2485 = vld [vmem:[#allocation2 + $0x1a] sm:$0xff]
    %v2486 = vld [vmem:[#allocation2 + $0x22] sm:$0xff]
    %v2487 = vld [vmem:[#allocation2 + $0x2a] sm:$0xff]
    %v2488 = vld [vmem:[#allocation2 + $0x32] sm:$0xff]
    %v2489 = vld [vmem:[#allocation2 + $0x3a] sm:$0xff]
    %v2490 = vld [vmem:[#allocation2 + $0x42] sm:$0xff]
    %v2491 = vld [vmem:[#allocation2 + $0x4a] sm:$0xff]
    %v2492 = vld [vmem:[#allocation2 + $0x52] sm:$0xff]
    %v2493 = vld [vmem:[#allocation2 + $0x5a] sm:$0xff]
    %v2494 = vld [vmem:[#allocation2 + $0x62] sm:$0xff]
    %v2495 = vld [vmem:[#allocation2 + $0x6a] sm:$0xff]
    %v2496 = vld [vmem:[#allocation2 + $0x72] sm:$0xff]
    %v2497 = vld [vmem:[#allocation2 + $0x7a] sm:$0xff]
    %v2498 = vld [vmem:[#allocation2 + $0x82] sm:$0xff]
    %v2499 = vld [vmem:[#allocation2 + $0x8a] sm:$0xff]
    %v2500 = vld [vmem:[#allocation2 + $0x92] sm:$0xff]
    %v2501 = vld [vmem:[#allocation2 + $0x9a] sm:$0xff]
    %v2502 = vld [vmem:[#allocation2 + $0xa2] sm:$0xff]
    %v2503 = vld [vmem:[#allocation2 + $0xaa] sm:$0xff]
    %v2504 = vld [vmem:[#allocation2 + $0xb2] sm:$0xff]
    %v2505 = vld [vmem:[#allocation2 + $0xba] sm:$0xff]
    %v2506 = vld [vmem:[#allocation2 + $0xc2] sm:$0xff]
    %v2507 = vld [vmem:[#allocation2 + $0xca] sm:$0xff]
    %v2508 = vld [vmem:[#allocation2 + $0xd2] sm:$0xff]
    %v2509 = vld [vmem:[#allocation2 + $0xda] sm:$0xff]
    %v2510 = vld [vmem:[#allocation2 + $0xe2] sm:$0xff]
    %v2511 = vld [vmem:[#allocation2 + $0xea] sm:$0xff]
    %v2512 = vld [vmem:[#allocation2 + $0xf2] sm:$0xff]
    %v2513 = vld [vmem:[#allocation2 + $0xfa] sm:$0xff]
    %v2514 = vld [vmem:[#allocation2 + $0x102] sm:$0xff]
    %v2515 = vld [vmem:[#allocation2 + $0x10a] sm:$0xff]
    %v2516 = vld [vmem:[#allocation2 + $0x112] sm:$0xff]
    %v2517 = vld [vmem:[#allocation2 + $0x11a] sm:$0xff]
    %v2518 = vld [vmem:[#allocation2 + $0x122] sm:$0xff]
    %v2519 = vld [vmem:[#allocation2 + $0x12a] sm:$0xff]
    %v2520 = vld [vmem:[#allocation2 + $0x132] sm:$0xff]
    %v2521 = vld [vmem:[#allocation2 + $0x13a] sm:$0xff]
    %v2522 = vld [vmem:[#allocation2 + $0x142] sm:$0xff]
    %v2523 = vld [vmem:[#allocation2 + $0x14a] sm:$0xff]
    %v2524 = vld [vmem:[#allocation2 + $0x152] sm:$0xff]
    %v2525 = vld [vmem:[#allocation2 + $0x15a] sm:$0xff]
    %v2526 = vld [vmem:[#allocation2 + $0x162] sm:$0xff]
    %v2527 = vld [vmem:[#allocation2 + $0x16a] sm:$0xff]
    %v2528 = vld [vmem:[#allocation2 + $0x172] sm:$0xff]
    %v2529 = vld [vmem:[#allocation2 + $0x17a] sm:$0xff]
    %v2530 = vld [vmem:[#allocation2 + $0x182] sm:$0xff]
    %v2531 = vld [vmem:[#allocation2 + $0x18a] sm:$0xff]
    %v2532 = vld [vmem:[#allocation2 + $0x192] sm:$0xff]
    %v2533 = vld [vmem:[#allocation2 + $0x19a] sm:$0xff]
    %v2534 = vld [vmem:[#allocation2 + $0x1a2] sm:$0xff]
    %v2535 = vld [vmem:[#allocation2 + $0x1aa] sm:$0xff]
    %v2536 = vld [vmem:[#allocation2 + $0x1b2] sm:$0xff]
    %v2537 = vld [vmem:[#allocation2 + $0x1ba] sm:$0xff]
    %v2538 = vld [vmem:[#allocation2 + $0x1c2] sm:$0xff]
    %v2539 = vld [vmem:[#allocation2 + $0x1ca] sm:$0xff]
    %v2540 = vld [vmem:[#allocation2 + $0x1d2] sm:$0xff]
    %v2541 = vld [vmem:[#allocation2 + $0x1da] sm:$0xff]
    %v2542 = vld [vmem:[#allocation2 + $0x1e2] sm:$0xff]
    %v2543 = vld [vmem:[#allocation2 + $0x1ea] sm:$0xff]
    %v2544 = vld [vmem:[#allocation2 + $0x1f2] sm:$0xff]
    %v2545 = vld [vmem:[#allocation2 + $0x1fa] sm:$0xff]
    %v2546 = vld [vmem:[#allocation2 + $0x202] sm:$0xff]
    %v2547 = vld [vmem:[#allocation2 + $0x20a] sm:$0xff]
    %v2548 = vld [vmem:[#allocation2 + $0x212] sm:$0xff]
    %v2549 = vld [vmem:[#allocation2 + $0x21a] sm:$0xff]
    %v2550 = vld [vmem:[#allocation2 + $0x222] sm:$0xff]
    %v2551 = vld [vmem:[#allocation2 + $0x22a] sm:$0xff]
    %v2552 = vld [vmem:[#allocation2 + $0x232] sm:$0xff]
    %v2553 = vld [vmem:[#allocation2 + $0x23a] sm:$0xff]
    %v2554 = vld [vmem:[#allocation2 + $0x242] sm:$0xff]
    %v2555 = vld [vmem:[#allocation2 + $0x24a] sm:$0xff]
    %v2556 = vld [vmem:[#allocation2 + $0x252] sm:$0xff]
    %v2557 = vld [vmem:[#allocation2 + $0x25a] sm:$0xff]
    %v2558 = vld [vmem:[#allocation2 + $0x262] sm:$0xff]
    %v2559 = vld [vmem:[#allocation2 + $0x26a] sm:$0xff]
    %2560 = vmatpush.msra.mxu0 %v2499
    %2561 = vmatpush.msra.mxu0 %v2498
    %2562 = vmatpush.msra.mxu0 %v2497
    %2563 = vmatpush.msra.mxu0 %v2496
    %2564 = vmatpush.msra.mxu0 %v2495
    %2565 = vmatpush.msra.mxu0 %v2494
    %2566 = vmatpush.msra.mxu0 %v2493
    %2567 = vmatpush.msra.mxu0 %v2492
    %2568 = vmatpush.msra.mxu0 %v2491
    %2569 = vmatpush.msra.mxu0 %v2490
    %2570 = vmatpush.msra.mxu0 %v2489
    %2571 = vmatpush.msra.mxu0 %v2488
    %2572 = vmatpush.msra.mxu0 %v2487
    %2573 = vmatpush.msra.mxu0 %v2486
    %2574 = vmatpush.msra.mxu0 %v2485
    %2575 = vmatpush.msra.mxu0 %v2484
    %2576 = vmatmul.f32.gmra.mxu0 %v827
    %v2577 = vpop.f32.mrf.mxu0
    %v2578 = vadd.f32 0.0, %v2577
    %2579 = vmatmul.f32.gmra.mxu0 %v832
    %v2580 = vpop.f32.mrf.mxu0
    %v2581 = vadd.f32 0.0, %v2580
    %2582 = vmatmul.f32.gmra.mxu0 %v837
    %v2583 = vpop.f32.mrf.mxu0
    %v2584 = vadd.f32 0.0, %v2583
    %2585 = vmatmul.f32.gmra.mxu0 %v842
    %v2586 = vpop.f32.mrf.mxu0
    %v2587 = vadd.f32 0.0, %v2586
    %2588 = vmatmul.f32.gmra.mxu0 %v847
    %v2589 = vpop.f32.mrf.mxu0
    %v2590 = vadd.f32 0.0, %v2589
    %2591 = vmatmul.f32.gmra.mxu0 %v852
    %v2592 = vpop.f32.mrf.mxu0
    %v2593 = vadd.f32 0.0, %v2592
    %2594 = vmatmul.f32.gmra.mxu0 %v857
    %v2595 = vpop.f32.mrf.mxu0
    %v2596 = vadd.f32 0.0, %v2595
    %2597 = vmatmul.f32.gmra.mxu0 %v862
    %v2598 = vpop.f32.mrf.mxu0
    %v2599 = vadd.f32 0.0, %v2598
    %2600 = vmatmul.f32.gmra.mxu0 %v867
    %v2601 = vpop.f32.mrf.mxu0
    %v2602 = vadd.f32 0.0, %v2601
    %2603 = vmatmul.f32.gmra.mxu0 %v872
    %v2604 = vpop.f32.mrf.mxu0
    %v2605 = vadd.f32 0.0, %v2604
    %2606 = vmatmul.f32.gmra.mxu0 %v877
    %v2607 = vpop.f32.mrf.mxu0
    %v2608 = vadd.f32 0.0, %v2607
    %2609 = vmatmul.f32.gmra.mxu0 %v882
    %v2610 = vpop.f32.mrf.mxu0
    %v2611 = vadd.f32 0.0, %v2610
    %2612 = vmatmul.f32.gmra.mxu0 %v887
    %v2613 = vpop.f32.mrf.mxu0
    %v2614 = vadd.f32 0.0, %v2613
    %2615 = vmatmul.f32.gmra.mxu0 %v892
    %v2616 = vpop.f32.mrf.mxu0
    %v2617 = vadd.f32 0.0, %v2616
    %2618 = vmatmul.f32.gmra.mxu0 %v897
    %v2619 = vpop.f32.mrf.mxu0
    %v2620 = vadd.f32 0.0, %v2619
    %2621 = vmatmul.f32.gmra.mxu0 %v902
    %v2622 = vpop.f32.mrf.mxu0
    %v2623 = vadd.f32 0.0, %v2622
    %2624 = vdwg.mxu0
    %2625 = vmatpush.msra.mxu0 %v2515
    %2626 = vmatpush.msra.mxu0 %v2514
    %2627 = vmatpush.msra.mxu0 %v2513
    %2628 = vmatpush.msra.mxu0 %v2512
    %2629 = vmatpush.msra.mxu0 %v2511
    %2630 = vmatpush.msra.mxu0 %v2510
    %2631 = vmatpush.msra.mxu0 %v2509
    %2632 = vmatpush.msra.mxu0 %v2508
    %2633 = vmatpush.msra.mxu0 %v2507
    %2634 = vmatpush.msra.mxu0 %v2506
    %2635 = vmatpush.msra.mxu0 %v2505
    %2636 = vmatpush.msra.mxu0 %v2504
    %2637 = vmatpush.msra.mxu0 %v2503
    %2638 = vmatpush.msra.mxu0 %v2502
    %2639 = vmatpush.msra.mxu0 %v2501
    %2640 = vmatpush.msra.mxu0 %v2500
    %2641 = vmatmul.f32.gmra.mxu0 %v828
    %v2642 = vpop.f32.mrf.mxu0
    %v2643 = vadd.f32 %v2578, %v2642
    %2644 = vmatmul.f32.gmra.mxu0 %v833
    %v2645 = vpop.f32.mrf.mxu0
    %v2646 = vadd.f32 %v2581, %v2645
    %2647 = vmatmul.f32.gmra.mxu0 %v838
    %v2648 = vpop.f32.mrf.mxu0
    %v2649 = vadd.f32 %v2584, %v2648
    %2650 = vmatmul.f32.gmra.mxu0 %v843
    %v2651 = vpop.f32.mrf.mxu0
    %v2652 = vadd.f32 %v2587, %v2651
    %2653 = vmatmul.f32.gmra.mxu0 %v848
    %v2654 = vpop.f32.mrf.mxu0
    %v2655 = vadd.f32 %v2590, %v2654
    %2656 = vmatmul.f32.gmra.mxu0 %v853
    %v2657 = vpop.f32.mrf.mxu0
    %v2658 = vadd.f32 %v2593, %v2657
    %2659 = vmatmul.f32.gmra.mxu0 %v858
    %v2660 = vpop.f32.mrf.mxu0
    %v2661 = vadd.f32 %v2596, %v2660
    %2662 = vmatmul.f32.gmra.mxu0 %v863
    %v2663 = vpop.f32.mrf.mxu0
    %v2664 = vadd.f32 %v2599, %v2663
    %2665 = vmatmul.f32.gmra.mxu0 %v868
    %v2666 = vpop.f32.mrf.mxu0
    %v2667 = vadd.f32 %v2602, %v2666
    %2668 = vmatmul.f32.gmra.mxu0 %v873
    %v2669 = vpop.f32.mrf.mxu0
    %v2670 = vadd.f32 %v2605, %v2669
    %2671 = vmatmul.f32.gmra.mxu0 %v878
    %v2672 = vpop.f32.mrf.mxu0
    %v2673 = vadd.f32 %v2608, %v2672
    %2674 = vmatmul.f32.gmra.mxu0 %v883
    %v2675 = vpop.f32.mrf.mxu0
    %v2676 = vadd.f32 %v2611, %v2675
    %2677 = vmatmul.f32.gmra.mxu0 %v888
    %v2678 = vpop.f32.mrf.mxu0
    %v2679 = vadd.f32 %v2614, %v2678
    %2680 = vmatmul.f32.gmra.mxu0 %v893
    %v2681 = vpop.f32.mrf.mxu0
    %v2682 = vadd.f32 %v2617, %v2681
    %2683 = vmatmul.f32.gmra.mxu0 %v898
    %v2684 = vpop.f32.mrf.mxu0
    %v2685 = vadd.f32 %v2620, %v2684
    %2686 = vmatmul.f32.gmra.mxu0 %v903
    %v2687 = vpop.f32.mrf.mxu0
    %v2688 = vadd.f32 %v2623, %v2687
    %2689 = vdwg.mxu0
    %2690 = vmatpush.msra.mxu0 %v2531
    %2691 = vmatpush.msra.mxu0 %v2530
    %2692 = vmatpush.msra.mxu0 %v2529
    %2693 = vmatpush.msra.mxu0 %v2528
    %2694 = vmatpush.msra.mxu0 %v2527
    %2695 = vmatpush.msra.mxu0 %v2526
    %2696 = vmatpush.msra.mxu0 %v2525
    %2697 = vmatpush.msra.mxu0 %v2524
    %2698 = vmatpush.msra.mxu0 %v2523
    %2699 = vmatpush.msra.mxu0 %v2522
    %2700 = vmatpush.msra.mxu0 %v2521
    %2701 = vmatpush.msra.mxu0 %v2520
    %2702 = vmatpush.msra.mxu0 %v2519
    %2703 = vmatpush.msra.mxu0 %v2518
    %2704 = vmatpush.msra.mxu0 %v2517
    %2705 = vmatpush.msra.mxu0 %v2516
    %2706 = vmatmul.f32.gmra.mxu0 %v829
    %v2707 = vpop.f32.mrf.mxu0
    %v2708 = vadd.f32 %v2643, %v2707
    %2709 = vmatmul.f32.gmra.mxu0 %v834
    %v2710 = vpop.f32.mrf.mxu0
    %v2711 = vadd.f32 %v2646, %v2710
    %2712 = vmatmul.f32.gmra.mxu0 %v839
    %v2713 = vpop.f32.mrf.mxu0
    %v2714 = vadd.f32 %v2649, %v2713
    %2715 = vmatmul.f32.gmra.mxu0 %v844
    %v2716 = vpop.f32.mrf.mxu0
    %v2717 = vadd.f32 %v2652, %v2716
    %2718 = vmatmul.f32.gmra.mxu0 %v849
    %v2719 = vpop.f32.mrf.mxu0
    %v2720 = vadd.f32 %v2655, %v2719
    %2721 = vmatmul.f32.gmra.mxu0 %v854
    %v2722 = vpop.f32.mrf.mxu0
    %v2723 = vadd.f32 %v2658, %v2722
    %2724 = vmatmul.f32.gmra.mxu0 %v859
    %v2725 = vpop.f32.mrf.mxu0
    %v2726 = vadd.f32 %v2661, %v2725
    %2727 = vmatmul.f32.gmra.mxu0 %v864
    %v2728 = vpop.f32.mrf.mxu0
    %v2729 = vadd.f32 %v2664, %v2728
    %2730 = vmatmul.f32.gmra.mxu0 %v869
    %v2731 = vpop.f32.mrf.mxu0
    %v2732 = vadd.f32 %v2667, %v2731
    %2733 = vmatmul.f32.gmra.mxu0 %v874
    %v2734 = vpop.f32.mrf.mxu0
    %v2735 = vadd.f32 %v2670, %v2734
    %2736 = vmatmul.f32.gmra.mxu0 %v879
    %v2737 = vpop.f32.mrf.mxu0
    %v2738 = vadd.f32 %v2673, %v2737
    %2739 = vmatmul.f32.gmra.mxu0 %v884
    %v2740 = vpop.f32.mrf.mxu0
    %v2741 = vadd.f32 %v2676, %v2740
    %2742 = vmatmul.f32.gmra.mxu0 %v889
    %v2743 = vpop.f32.mrf.mxu0
    %v2744 = vadd.f32 %v2679, %v2743
    %2745 = vmatmul.f32.gmra.mxu0 %v894
    %v2746 = vpop.f32.mrf.mxu0
    %v2747 = vadd.f32 %v2682, %v2746
    %2748 = vmatmul.f32.gmra.mxu0 %v899
    %v2749 = vpop.f32.mrf.mxu0
    %v2750 = vadd.f32 %v2685, %v2749
    %2751 = vmatmul.f32.gmra.mxu0 %v904
    %v2752 = vpop.f32.mrf.mxu0
    %v2753 = vadd.f32 %v2688, %v2752
    %2754 = vdwg.mxu0
    %2755 = vmatpush.msra.mxu0 %v2547
    %2756 = vmatpush.msra.mxu0 %v2546
    %2757 = vmatpush.msra.mxu0 %v2545
    %2758 = vmatpush.msra.mxu0 %v2544
    %2759 = vmatpush.msra.mxu0 %v2543
    %2760 = vmatpush.msra.mxu0 %v2542
    %2761 = vmatpush.msra.mxu0 %v2541
    %2762 = vmatpush.msra.mxu0 %v2540
    %2763 = vmatpush.msra.mxu0 %v2539
    %2764 = vmatpush.msra.mxu0 %v2538
    %2765 = vmatpush.msra.mxu0 %v2537
    %2766 = vmatpush.msra.mxu0 %v2536
    %2767 = vmatpush.msra.mxu0 %v2535
    %2768 = vmatpush.msra.mxu0 %v2534
    %2769 = vmatpush.msra.mxu0 %v2533
    %2770 = vmatpush.msra.mxu0 %v2532
    %2771 = vmatmul.f32.gmra.mxu0 %v830
    %v2772 = vpop.f32.mrf.mxu0
    %v2773 = vadd.f32 %v2708, %v2772
    %2774 = vmatmul.f32.gmra.mxu0 %v835
    %v2775 = vpop.f32.mrf.mxu0
    %v2776 = vadd.f32 %v2711, %v2775
    %2777 = vmatmul.f32.gmra.mxu0 %v840
    %v2778 = vpop.f32.mrf.mxu0
    %v2779 = vadd.f32 %v2714, %v2778
    %2780 = vmatmul.f32.gmra.mxu0 %v845
    %v2781 = vpop.f32.mrf.mxu0
    %v2782 = vadd.f32 %v2717, %v2781
    %2783 = vmatmul.f32.gmra.mxu0 %v850
    %v2784 = vpop.f32.mrf.mxu0
    %v2785 = vadd.f32 %v2720, %v2784
    %2786 = vmatmul.f32.gmra.mxu0 %v855
    %v2787 = vpop.f32.mrf.mxu0
    %v2788 = vadd.f32 %v2723, %v2787
    %2789 = vmatmul.f32.gmra.mxu0 %v860
    %v2790 = vpop.f32.mrf.mxu0
    %v2791 = vadd.f32 %v2726, %v2790
    %2792 = vmatmul.f32.gmra.mxu0 %v865
    %v2793 = vpop.f32.mrf.mxu0
    %v2794 = vadd.f32 %v2729, %v2793
    %2795 = vmatmul.f32.gmra.mxu0 %v870
    %v2796 = vpop.f32.mrf.mxu0
    %v2797 = vadd.f32 %v2732, %v2796
    %2798 = vmatmul.f32.gmra.mxu0 %v875
    %v2799 = vpop.f32.mrf.mxu0
    %v2800 = vadd.f32 %v2735, %v2799
    %2801 = vmatmul.f32.gmra.mxu0 %v880
    %v2802 = vpop.f32.mrf.mxu0
    %v2803 = vadd.f32 %v2738, %v2802
    %2804 = vmatmul.f32.gmra.mxu0 %v885
    %v2805 = vpop.f32.mrf.mxu0
    %v2806 = vadd.f32 %v2741, %v2805
    %2807 = vmatmul.f32.gmra.mxu0 %v890
    %v2808 = vpop.f32.mrf.mxu0
    %v2809 = vadd.f32 %v2744, %v2808
    %2810 = vmatmul.f32.gmra.mxu0 %v895
    %v2811 = vpop.f32.mrf.mxu0
    %v2812 = vadd.f32 %v2747, %v2811
    %2813 = vmatmul.f32.gmra.mxu0 %v900
    %v2814 = vpop.f32.mrf.mxu0
    %v2815 = vadd.f32 %v2750, %v2814
    %2816 = vmatmul.f32.gmra.mxu0 %v905
    %v2817 = vpop.f32.mrf.mxu0
    %v2818 = vadd.f32 %v2753, %v2817
    %2819 = vdwg.mxu0
    %2820 = vmatpush.msra.mxu0 0.0
    %2821 = vmatpush.msra.mxu0 0.0
    %2822 = vmatpush.msra.mxu0 0.0
    %2823 = vmatpush.msra.mxu0 0.0
    %2824 = vmatpush.msra.mxu0 %v2559
    %2825 = vmatpush.msra.mxu0 %v2558
    %2826 = vmatpush.msra.mxu0 %v2557
    %2827 = vmatpush.msra.mxu0 %v2556
    %2828 = vmatpush.msra.mxu0 %v2555
    %2829 = vmatpush.msra.mxu0 %v2554
    %2830 = vmatpush.msra.mxu0 %v2553
    %2831 = vmatpush.msra.mxu0 %v2552
    %2832 = vmatpush.msra.mxu0 %v2551
    %2833 = vmatpush.msra.mxu0 %v2550
    %2834 = vmatpush.msra.mxu0 %v2549
    %2835 = vmatpush.msra.mxu0 %v2548
    %2836 = vmatmul.f32.gmra.mxu0 %v909
    %v2837 = vpop.f32.mrf.mxu0
    %v2838 = vadd.f32 %v2773, %v2837
    %2839 = vmatmul.f32.gmra.mxu0 %v912
    %v2840 = vpop.f32.mrf.mxu0
    %v2841 = vadd.f32 %v2776, %v2840
    %2842 = vmatmul.f32.gmra.mxu0 %v915
    %v2843 = vpop.f32.mrf.mxu0
    %v2844 = vadd.f32 %v2779, %v2843
    %2845 = vmatmul.f32.gmra.mxu0 %v918
    %v2846 = vpop.f32.mrf.mxu0
    %v2847 = vadd.f32 %v2782, %v2846
    %2848 = vmatmul.f32.gmra.mxu0 %v921
    %v2849 = vpop.f32.mrf.mxu0
    %v2850 = vadd.f32 %v2785, %v2849
    %2851 = vmatmul.f32.gmra.mxu0 %v924
    %v2852 = vpop.f32.mrf.mxu0
    %v2853 = vadd.f32 %v2788, %v2852
    %2854 = vmatmul.f32.gmra.mxu0 %v927
    %v2855 = vpop.f32.mrf.mxu0
    %v2856 = vadd.f32 %v2791, %v2855
    %2857 = vmatmul.f32.gmra.mxu0 %v930
    %v2858 = vpop.f32.mrf.mxu0
    %v2859 = vadd.f32 %v2794, %v2858
    %2860 = vmatmul.f32.gmra.mxu0 %v933
    %v2861 = vpop.f32.mrf.mxu0
    %v2862 = vadd.f32 %v2797, %v2861
    %2863 = vmatmul.f32.gmra.mxu0 %v936
    %v2864 = vpop.f32.mrf.mxu0
    %v2865 = vadd.f32 %v2800, %v2864
    %2866 = vmatmul.f32.gmra.mxu0 %v939
    %v2867 = vpop.f32.mrf.mxu0
    %v2868 = vadd.f32 %v2803, %v2867
    %2869 = vmatmul.f32.gmra.mxu0 %v942
    %v2870 = vpop.f32.mrf.mxu0
    %v2871 = vadd.f32 %v2806, %v2870
    %2872 = vmatmul.f32.gmra.mxu0 %v945
    %v2873 = vpop.f32.mrf.mxu0
    %v2874 = vadd.f32 %v2809, %v2873
    %2875 = vmatmul.f32.gmra.mxu0 %v948
    %v2876 = vpop.f32.mrf.mxu0
    %v2877 = vadd.f32 %v2812, %v2876
    %2878 = vmatmul.f32.gmra.mxu0 %v951
    %v2879 = vpop.f32.mrf.mxu0
    %v2880 = vadd.f32 %v2815, %v2879
    %2881 = vmatmul.f32.gmra.mxu0 %v954
    %v2882 = vpop.f32.mrf.mxu0
    %v2883 = vadd.f32 %v2818, %v2882
    %2884 = vdwg.mxu0
    %s2885 = scalar_lea.vmem %s4, 96
    %v2886 = vld [vmem:[%s2885] sm:$0xff]
    %v2887 = vld [vmem:[%s2885 + $0x8] sm:$0xff]
    %v2888 = vld [vmem:[%s2885 + $0x10] sm:$0xff]
    %v2889 = vld [vmem:[%s2885 + $0x18] sm:$0xff]
    %v2891 = vsel %vm601, %v2838, 0
    %v2894 = vsel %vm601, %v2841, 0
    %v2897 = vsel %vm601, %v2844, 0
    %v2900 = vsel %vm601, %v2847, 0
    %v2903 = vsel %vm601, %v2850, 0
    %v2906 = vsel %vm601, %v2853, 0
    %v2909 = vsel %vm601, %v2856, 0
    %v2912 = vsel %vm601, %v2859, 0
    %v2915 = vsel %vm601, %v2862, 0
    %v2918 = vsel %vm601, %v2865, 0
    %v2921 = vsel %vm601, %v2868, 0
    %v2924 = vsel %vm601, %v2871, 0
    %v2927 = vsel %vm601, %v2874, 0
    %v2930 = vsel %vm601, %v2877, 0
    %v2933 = vsel %vm601, %v2880, 0
    %v2936 = vsel %vm601, %v2883, 0
    %2938 = vmatpush.msra.mxu0 0.0
    %2939 = vmatpush.msra.mxu0 0.0
    %2940 = vmatpush.msra.mxu0 0.0
    %2941 = vmatpush.msra.mxu0 0.0
    %2942 = vmatpush.msra.mxu0 0.0
    %2943 = vmatpush.msra.mxu0 0.0
    %2944 = vmatpush.msra.mxu0 0.0
    %2945 = vmatpush.msra.mxu0 0.0
    %2946 = vmatpush.msra.mxu0 0.0
    %2947 = vmatpush.msra.mxu0 0.0
    %2948 = vmatpush.msra.mxu0 0.0
    %2949 = vmatpush.msra.mxu0 0.0
    %2950 = vmatpush.msra.mxu0 %v2889
    %2951 = vmatpush.msra.mxu0 %v2888
    %2952 = vmatpush.msra.mxu0 %v2887
    %2953 = vmatpush.msra.mxu0 %v2886
    %2954 = vmatmul.f32.gmra.mxu0 %v2891
    %v2955 = vpop.f32.mrf.mxu0
    %v2956 = vadd.f32 0.0, %v2955
    %2957 = vmatmul.f32.gmra.mxu0 %v2894
    %v2958 = vpop.f32.mrf.mxu0
    %v2959 = vadd.f32 0.0, %v2958
    %2960 = vmatmul.f32.gmra.mxu0 %v2897
    %v2961 = vpop.f32.mrf.mxu0
    %v2962 = vadd.f32 0.0, %v2961
    %2963 = vmatmul.f32.gmra.mxu0 %v2900
    %v2964 = vpop.f32.mrf.mxu0
    %v2965 = vadd.f32 0.0, %v2964
    %2966 = vmatmul.f32.gmra.mxu0 %v2903
    %v2967 = vpop.f32.mrf.mxu0
    %v2968 = vadd.f32 0.0, %v2967
    %2969 = vmatmul.f32.gmra.mxu0 %v2906
    %v2970 = vpop.f32.mrf.mxu0
    %v2971 = vadd.f32 0.0, %v2970
    %2972 = vmatmul.f32.gmra.mxu0 %v2909
    %v2973 = vpop.f32.mrf.mxu0
    %v2974 = vadd.f32 0.0, %v2973
    %2975 = vmatmul.f32.gmra.mxu0 %v2912
    %v2976 = vpop.f32.mrf.mxu0
    %v2977 = vadd.f32 0.0, %v2976
    %2978 = vmatmul.f32.gmra.mxu0 %v2915
    %v2979 = vpop.f32.mrf.mxu0
    %v2980 = vadd.f32 0.0, %v2979
    %2981 = vmatmul.f32.gmra.mxu0 %v2918
    %v2982 = vpop.f32.mrf.mxu0
    %v2983 = vadd.f32 0.0, %v2982
    %2984 = vmatmul.f32.gmra.mxu0 %v2921
    %v2985 = vpop.f32.mrf.mxu0
    %v2986 = vadd.f32 0.0, %v2985
    %2987 = vmatmul.f32.gmra.mxu0 %v2924
    %v2988 = vpop.f32.mrf.mxu0
    %v2989 = vadd.f32 0.0, %v2988
    %2990 = vmatmul.f32.gmra.mxu0 %v2927
    %v2991 = vpop.f32.mrf.mxu0
    %v2992 = vadd.f32 0.0, %v2991
    %2993 = vmatmul.f32.gmra.mxu0 %v2930
    %v2994 = vpop.f32.mrf.mxu0
    %v2995 = vadd.f32 0.0, %v2994
    %2996 = vmatmul.f32.gmra.mxu0 %v2933
    %v2997 = vpop.f32.mrf.mxu0
    %v2998 = vadd.f32 0.0, %v2997
    %2999 = vmatmul.f32.gmra.mxu0 %v2936
    %v3000 = vpop.f32.mrf.mxu0
    %v3001 = vadd.f32 0.0, %v3000
    %3002 = vdwg.mxu0
    %v3003 = vadd.f32 %v2468, %v2956
    %v3004 = vadd.f32 %v2469, %v2959
    %v3005 = vadd.f32 %v2470, %v2962
    %v3006 = vadd.f32 %v2471, %v2965
    %v3007 = vadd.f32 %v2472, %v2968
    %v3008 = vadd.f32 %v2473, %v2971
    %v3009 = vadd.f32 %v2474, %v2974
    %v3010 = vadd.f32 %v2475, %v2977
    %v3011 = vadd.f32 %v2476, %v2980
    %v3012 = vadd.f32 %v2477, %v2983
    %v3013 = vadd.f32 %v2478, %v2986
    %v3014 = vadd.f32 %v2479, %v2989
    %v3015 = vadd.f32 %v2480, %v2992
    %v3016 = vadd.f32 %v2481, %v2995
    %v3017 = vadd.f32 %v2482, %v2998
    %v3018 = vadd.f32 %v2483, %v3001
    %v3019 = vld [vmem:[#allocation2 + $0x13] sm:$0xff]
    %v3020 = vld [vmem:[#allocation2 + $0x1b] sm:$0xff]
    %v3021 = vld [vmem:[#allocation2 + $0x23] sm:$0xff]
    %v3022 = vld [vmem:[#allocation2 + $0x2b] sm:$0xff]
    %v3023 = vld [vmem:[#allocation2 + $0x33] sm:$0xff]
    %v3024 = vld [vmem:[#allocation2 + $0x3b] sm:$0xff]
    %v3025 = vld [vmem:[#allocation2 + $0x43] sm:$0xff]
    %v3026 = vld [vmem:[#allocation2 + $0x4b] sm:$0xff]
    %v3027 = vld [vmem:[#allocation2 + $0x53] sm:$0xff]
    %v3028 = vld [vmem:[#allocation2 + $0x5b] sm:$0xff]
    %v3029 = vld [vmem:[#allocation2 + $0x63] sm:$0xff]
    %v3030 = vld [vmem:[#allocation2 + $0x6b] sm:$0xff]
    %v3031 = vld [vmem:[#allocation2 + $0x73] sm:$0xff]
    %v3032 = vld [vmem:[#allocation2 + $0x7b] sm:$0xff]
    %v3033 = vld [vmem:[#allocation2 + $0x83] sm:$0xff]
    %v3034 = vld [vmem:[#allocation2 + $0x8b] sm:$0xff]
    %v3035 = vld [vmem:[#allocation2 + $0x93] sm:$0xff]
    %v3036 = vld [vmem:[#allocation2 + $0x9b] sm:$0xff]
    %v3037 = vld [vmem:[#allocation2 + $0xa3] sm:$0xff]
    %v3038 = vld [vmem:[#allocation2 + $0xab] sm:$0xff]
    %v3039 = vld [vmem:[#allocation2 + $0xb3] sm:$0xff]
    %v3040 = vld [vmem:[#allocation2 + $0xbb] sm:$0xff]
    %v3041 = vld [vmem:[#allocation2 + $0xc3] sm:$0xff]
    %v3042 = vld [vmem:[#allocation2 + $0xcb] sm:$0xff]
    %v3043 = vld [vmem:[#allocation2 + $0xd3] sm:$0xff]
    %v3044 = vld [vmem:[#allocation2 + $0xdb] sm:$0xff]
    %v3045 = vld [vmem:[#allocation2 + $0xe3] sm:$0xff]
    %v3046 = vld [vmem:[#allocation2 + $0xeb] sm:$0xff]
    %v3047 = vld [vmem:[#allocation2 + $0xf3] sm:$0xff]
    %v3048 = vld [vmem:[#allocation2 + $0xfb] sm:$0xff]
    %v3049 = vld [vmem:[#allocation2 + $0x103] sm:$0xff]
    %v3050 = vld [vmem:[#allocation2 + $0x10b] sm:$0xff]
    %v3051 = vld [vmem:[#allocation2 + $0x113] sm:$0xff]
    %v3052 = vld [vmem:[#allocation2 + $0x11b] sm:$0xff]
    %v3053 = vld [vmem:[#allocation2 + $0x123] sm:$0xff]
    %v3054 = vld [vmem:[#allocation2 + $0x12b] sm:$0xff]
    %v3055 = vld [vmem:[#allocation2 + $0x133] sm:$0xff]
    %v3056 = vld [vmem:[#allocation2 + $0x13b] sm:$0xff]
    %v3057 = vld [vmem:[#allocation2 + $0x143] sm:$0xff]
    %v3058 = vld [vmem:[#allocation2 + $0x14b] sm:$0xff]
    %v3059 = vld [vmem:[#allocation2 + $0x153] sm:$0xff]
    %v3060 = vld [vmem:[#allocation2 + $0x15b] sm:$0xff]
    %v3061 = vld [vmem:[#allocation2 + $0x163] sm:$0xff]
    %v3062 = vld [vmem:[#allocation2 + $0x16b] sm:$0xff]
    %v3063 = vld [vmem:[#allocation2 + $0x173] sm:$0xff]
    %v3064 = vld [vmem:[#allocation2 + $0x17b] sm:$0xff]
    %v3065 = vld [vmem:[#allocation2 + $0x183] sm:$0xff]
    %v3066 = vld [vmem:[#allocation2 + $0x18b] sm:$0xff]
    %v3067 = vld [vmem:[#allocation2 + $0x193] sm:$0xff]
    %v3068 = vld [vmem:[#allocation2 + $0x19b] sm:$0xff]
    %v3069 = vld [vmem:[#allocation2 + $0x1a3] sm:$0xff]
    %v3070 = vld [vmem:[#allocation2 + $0x1ab] sm:$0xff]
    %v3071 = vld [vmem:[#allocation2 + $0x1b3] sm:$0xff]
    %v3072 = vld [vmem:[#allocation2 + $0x1bb] sm:$0xff]
    %v3073 = vld [vmem:[#allocation2 + $0x1c3] sm:$0xff]
    %v3074 = vld [vmem:[#allocation2 + $0x1cb] sm:$0xff]
    %v3075 = vld [vmem:[#allocation2 + $0x1d3] sm:$0xff]
    %v3076 = vld [vmem:[#allocation2 + $0x1db] sm:$0xff]
    %v3077 = vld [vmem:[#allocation2 + $0x1e3] sm:$0xff]
    %v3078 = vld [vmem:[#allocation2 + $0x1eb] sm:$0xff]
    %v3079 = vld [vmem:[#allocation2 + $0x1f3] sm:$0xff]
    %v3080 = vld [vmem:[#allocation2 + $0x1fb] sm:$0xff]
    %v3081 = vld [vmem:[#allocation2 + $0x203] sm:$0xff]
    %v3082 = vld [vmem:[#allocation2 + $0x20b] sm:$0xff]
    %v3083 = vld [vmem:[#allocation2 + $0x213] sm:$0xff]
    %v3084 = vld [vmem:[#allocation2 + $0x21b] sm:$0xff]
    %v3085 = vld [vmem:[#allocation2 + $0x223] sm:$0xff]
    %v3086 = vld [vmem:[#allocation2 + $0x22b] sm:$0xff]
    %v3087 = vld [vmem:[#allocation2 + $0x233] sm:$0xff]
    %v3088 = vld [vmem:[#allocation2 + $0x23b] sm:$0xff]
    %v3089 = vld [vmem:[#allocation2 + $0x243] sm:$0xff]
    %v3090 = vld [vmem:[#allocation2 + $0x24b] sm:$0xff]
    %v3091 = vld [vmem:[#allocation2 + $0x253] sm:$0xff]
    %v3092 = vld [vmem:[#allocation2 + $0x25b] sm:$0xff]
    %v3093 = vld [vmem:[#allocation2 + $0x263] sm:$0xff]
    %v3094 = vld [vmem:[#allocation2 + $0x26b] sm:$0xff]
    %3095 = vmatpush.msra.mxu0 %v3034
    %3096 = vmatpush.msra.mxu0 %v3033
    %3097 = vmatpush.msra.mxu0 %v3032
    %3098 = vmatpush.msra.mxu0 %v3031
    %3099 = vmatpush.msra.mxu0 %v3030
    %3100 = vmatpush.msra.mxu0 %v3029
    %3101 = vmatpush.msra.mxu0 %v3028
    %3102 = vmatpush.msra.mxu0 %v3027
    %3103 = vmatpush.msra.mxu0 %v3026
    %3104 = vmatpush.msra.mxu0 %v3025
    %3105 = vmatpush.msra.mxu0 %v3024
    %3106 = vmatpush.msra.mxu0 %v3023
    %3107 = vmatpush.msra.mxu0 %v3022
    %3108 = vmatpush.msra.mxu0 %v3021
    %3109 = vmatpush.msra.mxu0 %v3020
    %3110 = vmatpush.msra.mxu0 %v3019
    %3111 = vmatmul.f32.gmra.mxu0 %v827
    %v3112 = vpop.f32.mrf.mxu0
    %v3113 = vadd.f32 0.0, %v3112
    %3114 = vmatmul.f32.gmra.mxu0 %v832
    %v3115 = vpop.f32.mrf.mxu0
    %v3116 = vadd.f32 0.0, %v3115
    %3117 = vmatmul.f32.gmra.mxu0 %v837
    %v3118 = vpop.f32.mrf.mxu0
    %v3119 = vadd.f32 0.0, %v3118
    %3120 = vmatmul.f32.gmra.mxu0 %v842
    %v3121 = vpop.f32.mrf.mxu0
    %v3122 = vadd.f32 0.0, %v3121
    %3123 = vmatmul.f32.gmra.mxu0 %v847
    %v3124 = vpop.f32.mrf.mxu0
    %v3125 = vadd.f32 0.0, %v3124
    %3126 = vmatmul.f32.gmra.mxu0 %v852
    %v3127 = vpop.f32.mrf.mxu0
    %v3128 = vadd.f32 0.0, %v3127
    %3129 = vmatmul.f32.gmra.mxu0 %v857
    %v3130 = vpop.f32.mrf.mxu0
    %v3131 = vadd.f32 0.0, %v3130
    %3132 = vmatmul.f32.gmra.mxu0 %v862
    %v3133 = vpop.f32.mrf.mxu0
    %v3134 = vadd.f32 0.0, %v3133
    %3135 = vmatmul.f32.gmra.mxu0 %v867
    %v3136 = vpop.f32.mrf.mxu0
    %v3137 = vadd.f32 0.0, %v3136
    %3138 = vmatmul.f32.gmra.mxu0 %v872
    %v3139 = vpop.f32.mrf.mxu0
    %v3140 = vadd.f32 0.0, %v3139
    %3141 = vmatmul.f32.gmra.mxu0 %v877
    %v3142 = vpop.f32.mrf.mxu0
    %v3143 = vadd.f32 0.0, %v3142
    %3144 = vmatmul.f32.gmra.mxu0 %v882
    %v3145 = vpop.f32.mrf.mxu0
    %v3146 = vadd.f32 0.0, %v3145
    %3147 = vmatmul.f32.gmra.mxu0 %v887
    %v3148 = vpop.f32.mrf.mxu0
    %v3149 = vadd.f32 0.0, %v3148
    %3150 = vmatmul.f32.gmra.mxu0 %v892
    %v3151 = vpop.f32.mrf.mxu0
    %v3152 = vadd.f32 0.0, %v3151
    %3153 = vmatmul.f32.gmra.mxu0 %v897
    %v3154 = vpop.f32.mrf.mxu0
    %v3155 = vadd.f32 0.0, %v3154
    %3156 = vmatmul.f32.gmra.mxu0 %v902
    %v3157 = vpop.f32.mrf.mxu0
    %v3158 = vadd.f32 0.0, %v3157
    %3159 = vdwg.mxu0
    %3160 = vmatpush.msra.mxu0 %v3050
    %3161 = vmatpush.msra.mxu0 %v3049
    %3162 = vmatpush.msra.mxu0 %v3048
    %3163 = vmatpush.msra.mxu0 %v3047
    %3164 = vmatpush.msra.mxu0 %v3046
    %3165 = vmatpush.msra.mxu0 %v3045
    %3166 = vmatpush.msra.mxu0 %v3044
    %3167 = vmatpush.msra.mxu0 %v3043
    %3168 = vmatpush.msra.mxu0 %v3042
    %3169 = vmatpush.msra.mxu0 %v3041
    %3170 = vmatpush.msra.mxu0 %v3040
    %3171 = vmatpush.msra.mxu0 %v3039
    %3172 = vmatpush.msra.mxu0 %v3038
    %3173 = vmatpush.msra.mxu0 %v3037
    %3174 = vmatpush.msra.mxu0 %v3036
    %3175 = vmatpush.msra.mxu0 %v3035
    %3176 = vmatmul.f32.gmra.mxu0 %v828
    %v3177 = vpop.f32.mrf.mxu0
    %v3178 = vadd.f32 %v3113, %v3177
    %3179 = vmatmul.f32.gmra.mxu0 %v833
    %v3180 = vpop.f32.mrf.mxu0
    %v3181 = vadd.f32 %v3116, %v3180
    %3182 = vmatmul.f32.gmra.mxu0 %v838
    %v3183 = vpop.f32.mrf.mxu0
    %v3184 = vadd.f32 %v3119, %v3183
    %3185 = vmatmul.f32.gmra.mxu0 %v843
    %v3186 = vpop.f32.mrf.mxu0
    %v3187 = vadd.f32 %v3122, %v3186
    %3188 = vmatmul.f32.gmra.mxu0 %v848
    %v3189 = vpop.f32.mrf.mxu0
    %v3190 = vadd.f32 %v3125, %v3189
    %3191 = vmatmul.f32.gmra.mxu0 %v853
    %v3192 = vpop.f32.mrf.mxu0
    %v3193 = vadd.f32 %v3128, %v3192
    %3194 = vmatmul.f32.gmra.mxu0 %v858
    %v3195 = vpop.f32.mrf.mxu0
    %v3196 = vadd.f32 %v3131, %v3195
    %3197 = vmatmul.f32.gmra.mxu0 %v863
    %v3198 = vpop.f32.mrf.mxu0
    %v3199 = vadd.f32 %v3134, %v3198
    %3200 = vmatmul.f32.gmra.mxu0 %v868
    %v3201 = vpop.f32.mrf.mxu0
    %v3202 = vadd.f32 %v3137, %v3201
    %3203 = vmatmul.f32.gmra.mxu0 %v873
    %v3204 = vpop.f32.mrf.mxu0
    %v3205 = vadd.f32 %v3140, %v3204
    %3206 = vmatmul.f32.gmra.mxu0 %v878
    %v3207 = vpop.f32.mrf.mxu0
    %v3208 = vadd.f32 %v3143, %v3207
    %3209 = vmatmul.f32.gmra.mxu0 %v883
    %v3210 = vpop.f32.mrf.mxu0
    %v3211 = vadd.f32 %v3146, %v3210
    %3212 = vmatmul.f32.gmra.mxu0 %v888
    %v3213 = vpop.f32.mrf.mxu0
    %v3214 = vadd.f32 %v3149, %v3213
    %3215 = vmatmul.f32.gmra.mxu0 %v893
    %v3216 = vpop.f32.mrf.mxu0
    %v3217 = vadd.f32 %v3152, %v3216
    %3218 = vmatmul.f32.gmra.mxu0 %v898
    %v3219 = vpop.f32.mrf.mxu0
    %v3220 = vadd.f32 %v3155, %v3219
    %3221 = vmatmul.f32.gmra.mxu0 %v903
    %v3222 = vpop.f32.mrf.mxu0
    %v3223 = vadd.f32 %v3158, %v3222
    %3224 = vdwg.mxu0
    %3225 = vmatpush.msra.mxu0 %v3066
    %3226 = vmatpush.msra.mxu0 %v3065
    %3227 = vmatpush.msra.mxu0 %v3064
    %3228 = vmatpush.msra.mxu0 %v3063
    %3229 = vmatpush.msra.mxu0 %v3062
    %3230 = vmatpush.msra.mxu0 %v3061
    %3231 = vmatpush.msra.mxu0 %v3060
    %3232 = vmatpush.msra.mxu0 %v3059
    %3233 = vmatpush.msra.mxu0 %v3058
    %3234 = vmatpush.msra.mxu0 %v3057
    %3235 = vmatpush.msra.mxu0 %v3056
    %3236 = vmatpush.msra.mxu0 %v3055
    %3237 = vmatpush.msra.mxu0 %v3054
    %3238 = vmatpush.msra.mxu0 %v3053
    %3239 = vmatpush.msra.mxu0 %v3052
    %3240 = vmatpush.msra.mxu0 %v3051
    %3241 = vmatmul.f32.gmra.mxu0 %v829
    %v3242 = vpop.f32.mrf.mxu0
    %v3243 = vadd.f32 %v3178, %v3242
    %3244 = vmatmul.f32.gmra.mxu0 %v834
    %v3245 = vpop.f32.mrf.mxu0
    %v3246 = vadd.f32 %v3181, %v3245
    %3247 = vmatmul.f32.gmra.mxu0 %v839
    %v3248 = vpop.f32.mrf.mxu0
    %v3249 = vadd.f32 %v3184, %v3248
    %3250 = vmatmul.f32.gmra.mxu0 %v844
    %v3251 = vpop.f32.mrf.mxu0
    %v3252 = vadd.f32 %v3187, %v3251
    %3253 = vmatmul.f32.gmra.mxu0 %v849
    %v3254 = vpop.f32.mrf.mxu0
    %v3255 = vadd.f32 %v3190, %v3254
    %3256 = vmatmul.f32.gmra.mxu0 %v854
    %v3257 = vpop.f32.mrf.mxu0
    %v3258 = vadd.f32 %v3193, %v3257
    %3259 = vmatmul.f32.gmra.mxu0 %v859
    %v3260 = vpop.f32.mrf.mxu0
    %v3261 = vadd.f32 %v3196, %v3260
    %3262 = vmatmul.f32.gmra.mxu0 %v864
    %v3263 = vpop.f32.mrf.mxu0
    %v3264 = vadd.f32 %v3199, %v3263
    %3265 = vmatmul.f32.gmra.mxu0 %v869
    %v3266 = vpop.f32.mrf.mxu0
    %v3267 = vadd.f32 %v3202, %v3266
    %3268 = vmatmul.f32.gmra.mxu0 %v874
    %v3269 = vpop.f32.mrf.mxu0
    %v3270 = vadd.f32 %v3205, %v3269
    %3271 = vmatmul.f32.gmra.mxu0 %v879
    %v3272 = vpop.f32.mrf.mxu0
    %v3273 = vadd.f32 %v3208, %v3272
    %3274 = vmatmul.f32.gmra.mxu0 %v884
    %v3275 = vpop.f32.mrf.mxu0
    %v3276 = vadd.f32 %v3211, %v3275
    %3277 = vmatmul.f32.gmra.mxu0 %v889
    %v3278 = vpop.f32.mrf.mxu0
    %v3279 = vadd.f32 %v3214, %v3278
    %3280 = vmatmul.f32.gmra.mxu0 %v894
    %v3281 = vpop.f32.mrf.mxu0
    %v3282 = vadd.f32 %v3217, %v3281
    %3283 = vmatmul.f32.gmra.mxu0 %v899
    %v3284 = vpop.f32.mrf.mxu0
    %v3285 = vadd.f32 %v3220, %v3284
    %3286 = vmatmul.f32.gmra.mxu0 %v904
    %v3287 = vpop.f32.mrf.mxu0
    %v3288 = vadd.f32 %v3223, %v3287
    %3289 = vdwg.mxu0
    %3290 = vmatpush.msra.mxu0 %v3082
    %3291 = vmatpush.msra.mxu0 %v3081
    %3292 = vmatpush.msra.mxu0 %v3080
    %3293 = vmatpush.msra.mxu0 %v3079
    %3294 = vmatpush.msra.mxu0 %v3078
    %3295 = vmatpush.msra.mxu0 %v3077
    %3296 = vmatpush.msra.mxu0 %v3076
    %3297 = vmatpush.msra.mxu0 %v3075
    %3298 = vmatpush.msra.mxu0 %v3074
    %3299 = vmatpush.msra.mxu0 %v3073
    %3300 = vmatpush.msra.mxu0 %v3072
    %3301 = vmatpush.msra.mxu0 %v3071
    %3302 = vmatpush.msra.mxu0 %v3070
    %3303 = vmatpush.msra.mxu0 %v3069
    %3304 = vmatpush.msra.mxu0 %v3068
    %3305 = vmatpush.msra.mxu0 %v3067
    %3306 = vmatmul.f32.gmra.mxu0 %v830
    %v3307 = vpop.f32.mrf.mxu0
    %v3308 = vadd.f32 %v3243, %v3307
    %3309 = vmatmul.f32.gmra.mxu0 %v835
    %v3310 = vpop.f32.mrf.mxu0
    %v3311 = vadd.f32 %v3246, %v3310
    %3312 = vmatmul.f32.gmra.mxu0 %v840
    %v3313 = vpop.f32.mrf.mxu0
    %v3314 = vadd.f32 %v3249, %v3313
    %3315 = vmatmul.f32.gmra.mxu0 %v845
    %v3316 = vpop.f32.mrf.mxu0
    %v3317 = vadd.f32 %v3252, %v3316
    %3318 = vmatmul.f32.gmra.mxu0 %v850
    %v3319 = vpop.f32.mrf.mxu0
    %v3320 = vadd.f32 %v3255, %v3319
    %3321 = vmatmul.f32.gmra.mxu0 %v855
    %v3322 = vpop.f32.mrf.mxu0
    %v3323 = vadd.f32 %v3258, %v3322
    %3324 = vmatmul.f32.gmra.mxu0 %v860
    %v3325 = vpop.f32.mrf.mxu0
    %v3326 = vadd.f32 %v3261, %v3325
    %3327 = vmatmul.f32.gmra.mxu0 %v865
    %v3328 = vpop.f32.mrf.mxu0
    %v3329 = vadd.f32 %v3264, %v3328
    %3330 = vmatmul.f32.gmra.mxu0 %v870
    %v3331 = vpop.f32.mrf.mxu0
    %v3332 = vadd.f32 %v3267, %v3331
    %3333 = vmatmul.f32.gmra.mxu0 %v875
    %v3334 = vpop.f32.mrf.mxu0
    %v3335 = vadd.f32 %v3270, %v3334
    %3336 = vmatmul.f32.gmra.mxu0 %v880
    %v3337 = vpop.f32.mrf.mxu0
    %v3338 = vadd.f32 %v3273, %v3337
    %3339 = vmatmul.f32.gmra.mxu0 %v885
    %v3340 = vpop.f32.mrf.mxu0
    %v3341 = vadd.f32 %v3276, %v3340
    %3342 = vmatmul.f32.gmra.mxu0 %v890
    %v3343 = vpop.f32.mrf.mxu0
    %v3344 = vadd.f32 %v3279, %v3343
    %3345 = vmatmul.f32.gmra.mxu0 %v895
    %v3346 = vpop.f32.mrf.mxu0
    %v3347 = vadd.f32 %v3282, %v3346
    %3348 = vmatmul.f32.gmra.mxu0 %v900
    %v3349 = vpop.f32.mrf.mxu0
    %v3350 = vadd.f32 %v3285, %v3349
    %3351 = vmatmul.f32.gmra.mxu0 %v905
    %v3352 = vpop.f32.mrf.mxu0
    %v3353 = vadd.f32 %v3288, %v3352
    %3354 = vdwg.mxu0
    %3355 = vmatpush.msra.mxu0 0.0
    %3356 = vmatpush.msra.mxu0 0.0
    %3357 = vmatpush.msra.mxu0 0.0
    %3358 = vmatpush.msra.mxu0 0.0
    %3359 = vmatpush.msra.mxu0 %v3094
    %3360 = vmatpush.msra.mxu0 %v3093
    %3361 = vmatpush.msra.mxu0 %v3092
    %3362 = vmatpush.msra.mxu0 %v3091
    %3363 = vmatpush.msra.mxu0 %v3090
    %3364 = vmatpush.msra.mxu0 %v3089
    %3365 = vmatpush.msra.mxu0 %v3088
    %3366 = vmatpush.msra.mxu0 %v3087
    %3367 = vmatpush.msra.mxu0 %v3086
    %3368 = vmatpush.msra.mxu0 %v3085
    %3369 = vmatpush.msra.mxu0 %v3084
    %3370 = vmatpush.msra.mxu0 %v3083
    %3371 = vmatmul.f32.gmra.mxu0 %v909
    %v3372 = vpop.f32.mrf.mxu0
    %v3373 = vadd.f32 %v3308, %v3372
    %3374 = vmatmul.f32.gmra.mxu0 %v912
    %v3375 = vpop.f32.mrf.mxu0
    %v3376 = vadd.f32 %v3311, %v3375
    %3377 = vmatmul.f32.gmra.mxu0 %v915
    %v3378 = vpop.f32.mrf.mxu0
    %v3379 = vadd.f32 %v3314, %v3378
    %3380 = vmatmul.f32.gmra.mxu0 %v918
    %v3381 = vpop.f32.mrf.mxu0
    %v3382 = vadd.f32 %v3317, %v3381
    %3383 = vmatmul.f32.gmra.mxu0 %v921
    %v3384 = vpop.f32.mrf.mxu0
    %v3385 = vadd.f32 %v3320, %v3384
    %3386 = vmatmul.f32.gmra.mxu0 %v924
    %v3387 = vpop.f32.mrf.mxu0
    %v3388 = vadd.f32 %v3323, %v3387
    %3389 = vmatmul.f32.gmra.mxu0 %v927
    %v3390 = vpop.f32.mrf.mxu0
    %v3391 = vadd.f32 %v3326, %v3390
    %3392 = vmatmul.f32.gmra.mxu0 %v930
    %v3393 = vpop.f32.mrf.mxu0
    %v3394 = vadd.f32 %v3329, %v3393
    %3395 = vmatmul.f32.gmra.mxu0 %v933
    %v3396 = vpop.f32.mrf.mxu0
    %v3397 = vadd.f32 %v3332, %v3396
    %3398 = vmatmul.f32.gmra.mxu0 %v936
    %v3399 = vpop.f32.mrf.mxu0
    %v3400 = vadd.f32 %v3335, %v3399
    %3401 = vmatmul.f32.gmra.mxu0 %v939
    %v3402 = vpop.f32.mrf.mxu0
    %v3403 = vadd.f32 %v3338, %v3402
    %3404 = vmatmul.f32.gmra.mxu0 %v942
    %v3405 = vpop.f32.mrf.mxu0
    %v3406 = vadd.f32 %v3341, %v3405
    %3407 = vmatmul.f32.gmra.mxu0 %v945
    %v3408 = vpop.f32.mrf.mxu0
    %v3409 = vadd.f32 %v3344, %v3408
    %3410 = vmatmul.f32.gmra.mxu0 %v948
    %v3411 = vpop.f32.mrf.mxu0
    %v3412 = vadd.f32 %v3347, %v3411
    %3413 = vmatmul.f32.gmra.mxu0 %v951
    %v3414 = vpop.f32.mrf.mxu0
    %v3415 = vadd.f32 %v3350, %v3414
    %3416 = vmatmul.f32.gmra.mxu0 %v954
    %v3417 = vpop.f32.mrf.mxu0
    %v3418 = vadd.f32 %v3353, %v3417
    %3419 = vdwg.mxu0
    %s3420 = scalar_lea.vmem %s4, 128
    %v3421 = vld [vmem:[%s3420] sm:$0xff]
    %v3422 = vld [vmem:[%s3420 + $0x8] sm:$0xff]
    %v3423 = vld [vmem:[%s3420 + $0x10] sm:$0xff]
    %v3424 = vld [vmem:[%s3420 + $0x18] sm:$0xff]
    %v3426 = vsel %vm601, %v3373, 0
    %v3429 = vsel %vm601, %v3376, 0
    %v3432 = vsel %vm601, %v3379, 0
    %v3435 = vsel %vm601, %v3382, 0
    %v3438 = vsel %vm601, %v3385, 0
    %v3441 = vsel %vm601, %v3388, 0
    %v3444 = vsel %vm601, %v3391, 0
    %v3447 = vsel %vm601, %v3394, 0
    %v3450 = vsel %vm601, %v3397, 0
    %v3453 = vsel %vm601, %v3400, 0
    %v3456 = vsel %vm601, %v3403, 0
    %v3459 = vsel %vm601, %v3406, 0
    %v3462 = vsel %vm601, %v3409, 0
    %v3465 = vsel %vm601, %v3412, 0
    %v3468 = vsel %vm601, %v3415, 0
    %v3471 = vsel %vm601, %v3418, 0
    %3473 = vmatpush.msra.mxu0 0.0
    %3474 = vmatpush.msra.mxu0 0.0
    %3475 = vmatpush.msra.mxu0 0.0
    %3476 = vmatpush.msra.mxu0 0.0
    %3477 = vmatpush.msra.mxu0 0.0
    %3478 = vmatpush.msra.mxu0 0.0
    %3479 = vmatpush.msra.mxu0 0.0
    %3480 = vmatpush.msra.mxu0 0.0
    %3481 = vmatpush.msra.mxu0 0.0
    %3482 = vmatpush.msra.mxu0 0.0
    %3483 = vmatpush.msra.mxu0 0.0
    %3484 = vmatpush.msra.mxu0 0.0
    %3485 = vmatpush.msra.mxu0 %v3424
    %3486 = vmatpush.msra.mxu0 %v3423
    %3487 = vmatpush.msra.mxu0 %v3422
    %3488 = vmatpush.msra.mxu0 %v3421
    %3489 = vmatmul.f32.gmra.mxu0 %v3426
    %v3490 = vpop.f32.mrf.mxu0
    %v3491 = vadd.f32 0.0, %v3490
    %3492 = vmatmul.f32.gmra.mxu0 %v3429
    %v3493 = vpop.f32.mrf.mxu0
    %v3494 = vadd.f32 0.0, %v3493
    %3495 = vmatmul.f32.gmra.mxu0 %v3432
    %v3496 = vpop.f32.mrf.mxu0
    %v3497 = vadd.f32 0.0, %v3496
    %3498 = vmatmul.f32.gmra.mxu0 %v3435
    %v3499 = vpop.f32.mrf.mxu0
    %v3500 = vadd.f32 0.0, %v3499
    %3501 = vmatmul.f32.gmra.mxu0 %v3438
    %v3502 = vpop.f32.mrf.mxu0
    %v3503 = vadd.f32 0.0, %v3502
    %3504 = vmatmul.f32.gmra.mxu0 %v3441
    %v3505 = vpop.f32.mrf.mxu0
    %v3506 = vadd.f32 0.0, %v3505
    %3507 = vmatmul.f32.gmra.mxu0 %v3444
    %v3508 = vpop.f32.mrf.mxu0
    %v3509 = vadd.f32 0.0, %v3508
    %3510 = vmatmul.f32.gmra.mxu0 %v3447
    %v3511 = vpop.f32.mrf.mxu0
    %v3512 = vadd.f32 0.0, %v3511
    %3513 = vmatmul.f32.gmra.mxu0 %v3450
    %v3514 = vpop.f32.mrf.mxu0
    %v3515 = vadd.f32 0.0, %v3514
    %3516 = vmatmul.f32.gmra.mxu0 %v3453
    %v3517 = vpop.f32.mrf.mxu0
    %v3518 = vadd.f32 0.0, %v3517
    %3519 = vmatmul.f32.gmra.mxu0 %v3456
    %v3520 = vpop.f32.mrf.mxu0
    %v3521 = vadd.f32 0.0, %v3520
    %3522 = vmatmul.f32.gmra.mxu0 %v3459
    %v3523 = vpop.f32.mrf.mxu0
    %v3524 = vadd.f32 0.0, %v3523
    %3525 = vmatmul.f32.gmra.mxu0 %v3462
    %v3526 = vpop.f32.mrf.mxu0
    %v3527 = vadd.f32 0.0, %v3526
    %3528 = vmatmul.f32.gmra.mxu0 %v3465
    %v3529 = vpop.f32.mrf.mxu0
    %v3530 = vadd.f32 0.0, %v3529
    %3531 = vmatmul.f32.gmra.mxu0 %v3468
    %v3532 = vpop.f32.mrf.mxu0
    %v3533 = vadd.f32 0.0, %v3532
    %3534 = vmatmul.f32.gmra.mxu0 %v3471
    %v3535 = vpop.f32.mrf.mxu0
    %v3536 = vadd.f32 0.0, %v3535
    %3537 = vdwg.mxu0
    %v3538 = vadd.f32 %v3003, %v3491
    %v3539 = vadd.f32 %v3004, %v3494
    %v3540 = vadd.f32 %v3005, %v3497
    %v3541 = vadd.f32 %v3006, %v3500
    %v3542 = vadd.f32 %v3007, %v3503
    %v3543 = vadd.f32 %v3008, %v3506
    %v3544 = vadd.f32 %v3009, %v3509
    %v3545 = vadd.f32 %v3010, %v3512
    %v3546 = vadd.f32 %v3011, %v3515
    %v3547 = vadd.f32 %v3012, %v3518
    %v3548 = vadd.f32 %v3013, %v3521
    %v3549 = vadd.f32 %v3014, %v3524
    %v3550 = vadd.f32 %v3015, %v3527
    %v3551 = vadd.f32 %v3016, %v3530
    %v3552 = vadd.f32 %v3017, %v3533
    %v3553 = vadd.f32 %v3018, %v3536
    %v3554 = vld [vmem:[#allocation2 + $0x14] sm:$0xff]
    %v3555 = vld [vmem:[#allocation2 + $0x1c] sm:$0xff]
    %v3556 = vld [vmem:[#allocation2 + $0x24] sm:$0xff]
    %v3557 = vld [vmem:[#allocation2 + $0x2c] sm:$0xff]
    %v3558 = vld [vmem:[#allocation2 + $0x34] sm:$0xff]
    %v3559 = vld [vmem:[#allocation2 + $0x3c] sm:$0xff]
    %v3560 = vld [vmem:[#allocation2 + $0x44] sm:$0xff]
    %v3561 = vld [vmem:[#allocation2 + $0x4c] sm:$0xff]
    %v3562 = vld [vmem:[#allocation2 + $0x54] sm:$0xff]
    %v3563 = vld [vmem:[#allocation2 + $0x5c] sm:$0xff]
    %v3564 = vld [vmem:[#allocation2 + $0x64] sm:$0xff]
    %v3565 = vld [vmem:[#allocation2 + $0x6c] sm:$0xff]
    %v3566 = vld [vmem:[#allocation2 + $0x74] sm:$0xff]
    %v3567 = vld [vmem:[#allocation2 + $0x7c] sm:$0xff]
    %v3568 = vld [vmem:[#allocation2 + $0x84] sm:$0xff]
    %v3569 = vld [vmem:[#allocation2 + $0x8c] sm:$0xff]
    %v3570 = vld [vmem:[#allocation2 + $0x94] sm:$0xff]
    %v3571 = vld [vmem:[#allocation2 + $0x9c] sm:$0xff]
    %v3572 = vld [vmem:[#allocation2 + $0xa4] sm:$0xff]
    %v3573 = vld [vmem:[#allocation2 + $0xac] sm:$0xff]
    %v3574 = vld [vmem:[#allocation2 + $0xb4] sm:$0xff]
    %v3575 = vld [vmem:[#allocation2 + $0xbc] sm:$0xff]
    %v3576 = vld [vmem:[#allocation2 + $0xc4] sm:$0xff]
    %v3577 = vld [vmem:[#allocation2 + $0xcc] sm:$0xff]
    %v3578 = vld [vmem:[#allocation2 + $0xd4] sm:$0xff]
    %v3579 = vld [vmem:[#allocation2 + $0xdc] sm:$0xff]
    %v3580 = vld [vmem:[#allocation2 + $0xe4] sm:$0xff]
    %v3581 = vld [vmem:[#allocation2 + $0xec] sm:$0xff]
    %v3582 = vld [vmem:[#allocation2 + $0xf4] sm:$0xff]
    %v3583 = vld [vmem:[#allocation2 + $0xfc] sm:$0xff]
    %v3584 = vld [vmem:[#allocation2 + $0x104] sm:$0xff]
    %v3585 = vld [vmem:[#allocation2 + $0x10c] sm:$0xff]
    %v3586 = vld [vmem:[#allocation2 + $0x114] sm:$0xff]
    %v3587 = vld [vmem:[#allocation2 + $0x11c] sm:$0xff]
    %v3588 = vld [vmem:[#allocation2 + $0x124] sm:$0xff]
    %v3589 = vld [vmem:[#allocation2 + $0x12c] sm:$0xff]
    %v3590 = vld [vmem:[#allocation2 + $0x134] sm:$0xff]
    %v3591 = vld [vmem:[#allocation2 + $0x13c] sm:$0xff]
    %v3592 = vld [vmem:[#allocation2 + $0x144] sm:$0xff]
    %v3593 = vld [vmem:[#allocation2 + $0x14c] sm:$0xff]
    %v3594 = vld [vmem:[#allocation2 + $0x154] sm:$0xff]
    %v3595 = vld [vmem:[#allocation2 + $0x15c] sm:$0xff]
    %v3596 = vld [vmem:[#allocation2 + $0x164] sm:$0xff]
    %v3597 = vld [vmem:[#allocation2 + $0x16c] sm:$0xff]
    %v3598 = vld [vmem:[#allocation2 + $0x174] sm:$0xff]
    %v3599 = vld [vmem:[#allocation2 + $0x17c] sm:$0xff]
    %v3600 = vld [vmem:[#allocation2 + $0x184] sm:$0xff]
    %v3601 = vld [vmem:[#allocation2 + $0x18c] sm:$0xff]
    %v3602 = vld [vmem:[#allocation2 + $0x194] sm:$0xff]
    %v3603 = vld [vmem:[#allocation2 + $0x19c] sm:$0xff]
    %v3604 = vld [vmem:[#allocation2 + $0x1a4] sm:$0xff]
    %v3605 = vld [vmem:[#allocation2 + $0x1ac] sm:$0xff]
    %v3606 = vld [vmem:[#allocation2 + $0x1b4] sm:$0xff]
    %v3607 = vld [vmem:[#allocation2 + $0x1bc] sm:$0xff]
    %v3608 = vld [vmem:[#allocation2 + $0x1c4] sm:$0xff]
    %v3609 = vld [vmem:[#allocation2 + $0x1cc] sm:$0xff]
    %v3610 = vld [vmem:[#allocation2 + $0x1d4] sm:$0xff]
    %v3611 = vld [vmem:[#allocation2 + $0x1dc] sm:$0xff]
    %v3612 = vld [vmem:[#allocation2 + $0x1e4] sm:$0xff]
    %v3613 = vld [vmem:[#allocation2 + $0x1ec] sm:$0xff]
    %v3614 = vld [vmem:[#allocation2 + $0x1f4] sm:$0xff]
    %v3615 = vld [vmem:[#allocation2 + $0x1fc] sm:$0xff]
    %v3616 = vld [vmem:[#allocation2 + $0x204] sm:$0xff]
    %v3617 = vld [vmem:[#allocation2 + $0x20c] sm:$0xff]
    %v3618 = vld [vmem:[#allocation2 + $0x214] sm:$0xff]
    %v3619 = vld [vmem:[#allocation2 + $0x21c] sm:$0xff]
    %v3620 = vld [vmem:[#allocation2 + $0x224] sm:$0xff]
    %v3621 = vld [vmem:[#allocation2 + $0x22c] sm:$0xff]
    %v3622 = vld [vmem:[#allocation2 + $0x234] sm:$0xff]
    %v3623 = vld [vmem:[#allocation2 + $0x23c] sm:$0xff]
    %v3624 = vld [vmem:[#allocation2 + $0x244] sm:$0xff]
    %v3625 = vld [vmem:[#allocation2 + $0x24c] sm:$0xff]
    %v3626 = vld [vmem:[#allocation2 + $0x254] sm:$0xff]
    %v3627 = vld [vmem:[#allocation2 + $0x25c] sm:$0xff]
    %v3628 = vld [vmem:[#allocation2 + $0x264] sm:$0xff]
    %v3629 = vld [vmem:[#allocation2 + $0x26c] sm:$0xff]
    %3630 = vmatpush.msra.mxu0 %v3569
    %3631 = vmatpush.msra.mxu0 %v3568
    %3632 = vmatpush.msra.mxu0 %v3567
    %3633 = vmatpush.msra.mxu0 %v3566
    %3634 = vmatpush.msra.mxu0 %v3565
    %3635 = vmatpush.msra.mxu0 %v3564
    %3636 = vmatpush.msra.mxu0 %v3563
    %3637 = vmatpush.msra.mxu0 %v3562
    %3638 = vmatpush.msra.mxu0 %v3561
    %3639 = vmatpush.msra.mxu0 %v3560
    %3640 = vmatpush.msra.mxu0 %v3559
    %3641 = vmatpush.msra.mxu0 %v3558
    %3642 = vmatpush.msra.mxu0 %v3557
    %3643 = vmatpush.msra.mxu0 %v3556
    %3644 = vmatpush.msra.mxu0 %v3555
    %3645 = vmatpush.msra.mxu0 %v3554
    %3646 = vmatmul.f32.gmra.mxu0 %v827
    %v3647 = vpop.f32.mrf.mxu0
    %v3648 = vadd.f32 0.0, %v3647
    %3649 = vmatmul.f32.gmra.mxu0 %v832
    %v3650 = vpop.f32.mrf.mxu0
    %v3651 = vadd.f32 0.0, %v3650
    %3652 = vmatmul.f32.gmra.mxu0 %v837
    %v3653 = vpop.f32.mrf.mxu0
    %v3654 = vadd.f32 0.0, %v3653
    %3655 = vmatmul.f32.gmra.mxu0 %v842
    %v3656 = vpop.f32.mrf.mxu0
    %v3657 = vadd.f32 0.0, %v3656
    %3658 = vmatmul.f32.gmra.mxu0 %v847
    %v3659 = vpop.f32.mrf.mxu0
    %v3660 = vadd.f32 0.0, %v3659
    %3661 = vmatmul.f32.gmra.mxu0 %v852
    %v3662 = vpop.f32.mrf.mxu0
    %v3663 = vadd.f32 0.0, %v3662
    %3664 = vmatmul.f32.gmra.mxu0 %v857
    %v3665 = vpop.f32.mrf.mxu0
    %v3666 = vadd.f32 0.0, %v3665
    %3667 = vmatmul.f32.gmra.mxu0 %v862
    %v3668 = vpop.f32.mrf.mxu0
    %v3669 = vadd.f32 0.0, %v3668
    %3670 = vmatmul.f32.gmra.mxu0 %v867
    %v3671 = vpop.f32.mrf.mxu0
    %v3672 = vadd.f32 0.0, %v3671
    %3673 = vmatmul.f32.gmra.mxu0 %v872
    %v3674 = vpop.f32.mrf.mxu0
    %v3675 = vadd.f32 0.0, %v3674
    %3676 = vmatmul.f32.gmra.mxu0 %v877
    %v3677 = vpop.f32.mrf.mxu0
    %v3678 = vadd.f32 0.0, %v3677
    %3679 = vmatmul.f32.gmra.mxu0 %v882
    %v3680 = vpop.f32.mrf.mxu0
    %v3681 = vadd.f32 0.0, %v3680
    %3682 = vmatmul.f32.gmra.mxu0 %v887
    %v3683 = vpop.f32.mrf.mxu0
    %v3684 = vadd.f32 0.0, %v3683
    %3685 = vmatmul.f32.gmra.mxu0 %v892
    %v3686 = vpop.f32.mrf.mxu0
    %v3687 = vadd.f32 0.0, %v3686
    %3688 = vmatmul.f32.gmra.mxu0 %v897
    %v3689 = vpop.f32.mrf.mxu0
    %v3690 = vadd.f32 0.0, %v3689
    %3691 = vmatmul.f32.gmra.mxu0 %v902
    %v3692 = vpop.f32.mrf.mxu0
    %v3693 = vadd.f32 0.0, %v3692
    %3694 = vdwg.mxu0
    %3695 = vmatpush.msra.mxu0 %v3585
    %3696 = vmatpush.msra.mxu0 %v3584
    %3697 = vmatpush.msra.mxu0 %v3583
    %3698 = vmatpush.msra.mxu0 %v3582
    %3699 = vmatpush.msra.mxu0 %v3581
    %3700 = vmatpush.msra.mxu0 %v3580
    %3701 = vmatpush.msra.mxu0 %v3579
    %3702 = vmatpush.msra.mxu0 %v3578
    %3703 = vmatpush.msra.mxu0 %v3577
    %3704 = vmatpush.msra.mxu0 %v3576
    %3705 = vmatpush.msra.mxu0 %v3575
    %3706 = vmatpush.msra.mxu0 %v3574
    %3707 = vmatpush.msra.mxu0 %v3573
    %3708 = vmatpush.msra.mxu0 %v3572
    %3709 = vmatpush.msra.mxu0 %v3571
    %3710 = vmatpush.msra.mxu0 %v3570
    %3711 = vmatmul.f32.gmra.mxu0 %v828
    %v3712 = vpop.f32.mrf.mxu0
    %v3713 = vadd.f32 %v3648, %v3712
    %3714 = vmatmul.f32.gmra.mxu0 %v833
    %v3715 = vpop.f32.mrf.mxu0
    %v3716 = vadd.f32 %v3651, %v3715
    %3717 = vmatmul.f32.gmra.mxu0 %v838
    %v3718 = vpop.f32.mrf.mxu0
    %v3719 = vadd.f32 %v3654, %v3718
    %3720 = vmatmul.f32.gmra.mxu0 %v843
    %v3721 = vpop.f32.mrf.mxu0
    %v3722 = vadd.f32 %v3657, %v3721
    %3723 = vmatmul.f32.gmra.mxu0 %v848
    %v3724 = vpop.f32.mrf.mxu0
    %v3725 = vadd.f32 %v3660, %v3724
    %3726 = vmatmul.f32.gmra.mxu0 %v853
    %v3727 = vpop.f32.mrf.mxu0
    %v3728 = vadd.f32 %v3663, %v3727
    %3729 = vmatmul.f32.gmra.mxu0 %v858
    %v3730 = vpop.f32.mrf.mxu0
    %v3731 = vadd.f32 %v3666, %v3730
    %3732 = vmatmul.f32.gmra.mxu0 %v863
    %v3733 = vpop.f32.mrf.mxu0
    %v3734 = vadd.f32 %v3669, %v3733
    %3735 = vmatmul.f32.gmra.mxu0 %v868
    %v3736 = vpop.f32.mrf.mxu0
    %v3737 = vadd.f32 %v3672, %v3736
    %3738 = vmatmul.f32.gmra.mxu0 %v873
    %v3739 = vpop.f32.mrf.mxu0
    %v3740 = vadd.f32 %v3675, %v3739
    %3741 = vmatmul.f32.gmra.mxu0 %v878
    %v3742 = vpop.f32.mrf.mxu0
    %v3743 = vadd.f32 %v3678, %v3742
    %3744 = vmatmul.f32.gmra.mxu0 %v883
    %v3745 = vpop.f32.mrf.mxu0
    %v3746 = vadd.f32 %v3681, %v3745
    %3747 = vmatmul.f32.gmra.mxu0 %v888
    %v3748 = vpop.f32.mrf.mxu0
    %v3749 = vadd.f32 %v3684, %v3748
    %3750 = vmatmul.f32.gmra.mxu0 %v893
    %v3751 = vpop.f32.mrf.mxu0
    %v3752 = vadd.f32 %v3687, %v3751
    %3753 = vmatmul.f32.gmra.mxu0 %v898
    %v3754 = vpop.f32.mrf.mxu0
    %v3755 = vadd.f32 %v3690, %v3754
    %3756 = vmatmul.f32.gmra.mxu0 %v903
    %v3757 = vpop.f32.mrf.mxu0
    %v3758 = vadd.f32 %v3693, %v3757
    %3759 = vdwg.mxu0
    %3760 = vmatpush.msra.mxu0 %v3601
    %3761 = vmatpush.msra.mxu0 %v3600
    %3762 = vmatpush.msra.mxu0 %v3599
    %3763 = vmatpush.msra.mxu0 %v3598
    %3764 = vmatpush.msra.mxu0 %v3597
    %3765 = vmatpush.msra.mxu0 %v3596
    %3766 = vmatpush.msra.mxu0 %v3595
    %3767 = vmatpush.msra.mxu0 %v3594
    %3768 = vmatpush.msra.mxu0 %v3593
    %3769 = vmatpush.msra.mxu0 %v3592
    %3770 = vmatpush.msra.mxu0 %v3591
    %3771 = vmatpush.msra.mxu0 %v3590
    %3772 = vmatpush.msra.mxu0 %v3589
    %3773 = vmatpush.msra.mxu0 %v3588
    %3774 = vmatpush.msra.mxu0 %v3587
    %3775 = vmatpush.msra.mxu0 %v3586
    %3776 = vmatmul.f32.gmra.mxu0 %v829
    %v3777 = vpop.f32.mrf.mxu0
    %v3778 = vadd.f32 %v3713, %v3777
    %3779 = vmatmul.f32.gmra.mxu0 %v834
    %v3780 = vpop.f32.mrf.mxu0
    %v3781 = vadd.f32 %v3716, %v3780
    %3782 = vmatmul.f32.gmra.mxu0 %v839
    %v3783 = vpop.f32.mrf.mxu0
    %v3784 = vadd.f32 %v3719, %v3783
    %3785 = vmatmul.f32.gmra.mxu0 %v844
    %v3786 = vpop.f32.mrf.mxu0
    %v3787 = vadd.f32 %v3722, %v3786
    %3788 = vmatmul.f32.gmra.mxu0 %v849
    %v3789 = vpop.f32.mrf.mxu0
    %v3790 = vadd.f32 %v3725, %v3789
    %3791 = vmatmul.f32.gmra.mxu0 %v854
    %v3792 = vpop.f32.mrf.mxu0
    %v3793 = vadd.f32 %v3728, %v3792
    %3794 = vmatmul.f32.gmra.mxu0 %v859
    %v3795 = vpop.f32.mrf.mxu0
    %v3796 = vadd.f32 %v3731, %v3795
    %3797 = vmatmul.f32.gmra.mxu0 %v864
    %v3798 = vpop.f32.mrf.mxu0
    %v3799 = vadd.f32 %v3734, %v3798
    %3800 = vmatmul.f32.gmra.mxu0 %v869
    %v3801 = vpop.f32.mrf.mxu0
    %v3802 = vadd.f32 %v3737, %v3801
    %3803 = vmatmul.f32.gmra.mxu0 %v874
    %v3804 = vpop.f32.mrf.mxu0
    %v3805 = vadd.f32 %v3740, %v3804
    %3806 = vmatmul.f32.gmra.mxu0 %v879
    %v3807 = vpop.f32.mrf.mxu0
    %v3808 = vadd.f32 %v3743, %v3807
    %3809 = vmatmul.f32.gmra.mxu0 %v884
    %v3810 = vpop.f32.mrf.mxu0
    %v3811 = vadd.f32 %v3746, %v3810
    %3812 = vmatmul.f32.gmra.mxu0 %v889
    %v3813 = vpop.f32.mrf.mxu0
    %v3814 = vadd.f32 %v3749, %v3813
    %3815 = vmatmul.f32.gmra.mxu0 %v894
    %v3816 = vpop.f32.mrf.mxu0
    %v3817 = vadd.f32 %v3752, %v3816
    %3818 = vmatmul.f32.gmra.mxu0 %v899
    %v3819 = vpop.f32.mrf.mxu0
    %v3820 = vadd.f32 %v3755, %v3819
    %3821 = vmatmul.f32.gmra.mxu0 %v904
    %v3822 = vpop.f32.mrf.mxu0
    %v3823 = vadd.f32 %v3758, %v3822
    %3824 = vdwg.mxu0
    %3825 = vmatpush.msra.mxu0 %v3617
    %3826 = vmatpush.msra.mxu0 %v3616
    %3827 = vmatpush.msra.mxu0 %v3615
    %3828 = vmatpush.msra.mxu0 %v3614
    %3829 = vmatpush.msra.mxu0 %v3613
    %3830 = vmatpush.msra.mxu0 %v3612
    %3831 = vmatpush.msra.mxu0 %v3611
    %3832 = vmatpush.msra.mxu0 %v3610
    %3833 = vmatpush.msra.mxu0 %v3609
    %3834 = vmatpush.msra.mxu0 %v3608
    %3835 = vmatpush.msra.mxu0 %v3607
    %3836 = vmatpush.msra.mxu0 %v3606
    %3837 = vmatpush.msra.mxu0 %v3605
    %3838 = vmatpush.msra.mxu0 %v3604
    %3839 = vmatpush.msra.mxu0 %v3603
    %3840 = vmatpush.msra.mxu0 %v3602
    %3841 = vmatmul.f32.gmra.mxu0 %v830
    %v3842 = vpop.f32.mrf.mxu0
    %v3843 = vadd.f32 %v3778, %v3842
    %3844 = vmatmul.f32.gmra.mxu0 %v835
    %v3845 = vpop.f32.mrf.mxu0
    %v3846 = vadd.f32 %v3781, %v3845
    %3847 = vmatmul.f32.gmra.mxu0 %v840
    %v3848 = vpop.f32.mrf.mxu0
    %v3849 = vadd.f32 %v3784, %v3848
    %3850 = vmatmul.f32.gmra.mxu0 %v845
    %v3851 = vpop.f32.mrf.mxu0
    %v3852 = vadd.f32 %v3787, %v3851
    %3853 = vmatmul.f32.gmra.mxu0 %v850
    %v3854 = vpop.f32.mrf.mxu0
    %v3855 = vadd.f32 %v3790, %v3854
    %3856 = vmatmul.f32.gmra.mxu0 %v855
    %v3857 = vpop.f32.mrf.mxu0
    %v3858 = vadd.f32 %v3793, %v3857
    %3859 = vmatmul.f32.gmra.mxu0 %v860
    %v3860 = vpop.f32.mrf.mxu0
    %v3861 = vadd.f32 %v3796, %v3860
    %3862 = vmatmul.f32.gmra.mxu0 %v865
    %v3863 = vpop.f32.mrf.mxu0
    %v3864 = vadd.f32 %v3799, %v3863
    %3865 = vmatmul.f32.gmra.mxu0 %v870
    %v3866 = vpop.f32.mrf.mxu0
    %v3867 = vadd.f32 %v3802, %v3866
    %3868 = vmatmul.f32.gmra.mxu0 %v875
    %v3869 = vpop.f32.mrf.mxu0
    %v3870 = vadd.f32 %v3805, %v3869
    %3871 = vmatmul.f32.gmra.mxu0 %v880
    %v3872 = vpop.f32.mrf.mxu0
    %v3873 = vadd.f32 %v3808, %v3872
    %3874 = vmatmul.f32.gmra.mxu0 %v885
    %v3875 = vpop.f32.mrf.mxu0
    %v3876 = vadd.f32 %v3811, %v3875
    %3877 = vmatmul.f32.gmra.mxu0 %v890
    %v3878 = vpop.f32.mrf.mxu0
    %v3879 = vadd.f32 %v3814, %v3878
    %3880 = vmatmul.f32.gmra.mxu0 %v895
    %v3881 = vpop.f32.mrf.mxu0
    %v3882 = vadd.f32 %v3817, %v3881
    %3883 = vmatmul.f32.gmra.mxu0 %v900
    %v3884 = vpop.f32.mrf.mxu0
    %v3885 = vadd.f32 %v3820, %v3884
    %3886 = vmatmul.f32.gmra.mxu0 %v905
    %v3887 = vpop.f32.mrf.mxu0
    %v3888 = vadd.f32 %v3823, %v3887
    %3889 = vdwg.mxu0
    %3890 = vmatpush.msra.mxu0 0.0
    %3891 = vmatpush.msra.mxu0 0.0
    %3892 = vmatpush.msra.mxu0 0.0
    %3893 = vmatpush.msra.mxu0 0.0
    %3894 = vmatpush.msra.mxu0 %v3629
    %3895 = vmatpush.msra.mxu0 %v3628
    %3896 = vmatpush.msra.mxu0 %v3627
    %3897 = vmatpush.msra.mxu0 %v3626
    %3898 = vmatpush.msra.mxu0 %v3625
    %3899 = vmatpush.msra.mxu0 %v3624
    %3900 = vmatpush.msra.mxu0 %v3623
    %3901 = vmatpush.msra.mxu0 %v3622
    %3902 = vmatpush.msra.mxu0 %v3621
    %3903 = vmatpush.msra.mxu0 %v3620
    %3904 = vmatpush.msra.mxu0 %v3619
    %3905 = vmatpush.msra.mxu0 %v3618
    %3906 = vmatmul.f32.gmra.mxu0 %v909
    %v3907 = vpop.f32.mrf.mxu0
    %v3908 = vadd.f32 %v3843, %v3907
    %3909 = vmatmul.f32.gmra.mxu0 %v912
    %v3910 = vpop.f32.mrf.mxu0
    %v3911 = vadd.f32 %v3846, %v3910
    %3912 = vmatmul.f32.gmra.mxu0 %v915
    %v3913 = vpop.f32.mrf.mxu0
    %v3914 = vadd.f32 %v3849, %v3913
    %3915 = vmatmul.f32.gmra.mxu0 %v918
    %v3916 = vpop.f32.mrf.mxu0
    %v3917 = vadd.f32 %v3852, %v3916
    %3918 = vmatmul.f32.gmra.mxu0 %v921
    %v3919 = vpop.f32.mrf.mxu0
    %v3920 = vadd.f32 %v3855, %v3919
    %3921 = vmatmul.f32.gmra.mxu0 %v924
    %v3922 = vpop.f32.mrf.mxu0
    %v3923 = vadd.f32 %v3858, %v3922
    %3924 = vmatmul.f32.gmra.mxu0 %v927
    %v3925 = vpop.f32.mrf.mxu0
    %v3926 = vadd.f32 %v3861, %v3925
    %3927 = vmatmul.f32.gmra.mxu0 %v930
    %v3928 = vpop.f32.mrf.mxu0
    %v3929 = vadd.f32 %v3864, %v3928
    %3930 = vmatmul.f32.gmra.mxu0 %v933
    %v3931 = vpop.f32.mrf.mxu0
    %v3932 = vadd.f32 %v3867, %v3931
    %3933 = vmatmul.f32.gmra.mxu0 %v936
    %v3934 = vpop.f32.mrf.mxu0
    %v3935 = vadd.f32 %v3870, %v3934
    %3936 = vmatmul.f32.gmra.mxu0 %v939
    %v3937 = vpop.f32.mrf.mxu0
    %v3938 = vadd.f32 %v3873, %v3937
    %3939 = vmatmul.f32.gmra.mxu0 %v942
    %v3940 = vpop.f32.mrf.mxu0
    %v3941 = vadd.f32 %v3876, %v3940
    %3942 = vmatmul.f32.gmra.mxu0 %v945
    %v3943 = vpop.f32.mrf.mxu0
    %v3944 = vadd.f32 %v3879, %v3943
    %3945 = vmatmul.f32.gmra.mxu0 %v948
    %v3946 = vpop.f32.mrf.mxu0
    %v3947 = vadd.f32 %v3882, %v3946
    %3948 = vmatmul.f32.gmra.mxu0 %v951
    %v3949 = vpop.f32.mrf.mxu0
    %v3950 = vadd.f32 %v3885, %v3949
    %3951 = vmatmul.f32.gmra.mxu0 %v954
    %v3952 = vpop.f32.mrf.mxu0
    %v3953 = vadd.f32 %v3888, %v3952
    %3954 = vdwg.mxu0
    %s3955 = scalar_lea.vmem %s4, 160
    %v3956 = vld [vmem:[%s3955] sm:$0xff]
    %v3957 = vld [vmem:[%s3955 + $0x8] sm:$0xff]
    %v3958 = vld [vmem:[%s3955 + $0x10] sm:$0xff]
    %v3959 = vld [vmem:[%s3955 + $0x18] sm:$0xff]
    %v3961 = vsel %vm601, %v3908, 0
    %v3964 = vsel %vm601, %v3911, 0
    %v3967 = vsel %vm601, %v3914, 0
    %v3970 = vsel %vm601, %v3917, 0
    %v3973 = vsel %vm601, %v3920, 0
    %v3976 = vsel %vm601, %v3923, 0
    %v3979 = vsel %vm601, %v3926, 0
    %v3982 = vsel %vm601, %v3929, 0
    %v3985 = vsel %vm601, %v3932, 0
    %v3988 = vsel %vm601, %v3935, 0
    %v3991 = vsel %vm601, %v3938, 0
    %v3994 = vsel %vm601, %v3941, 0
    %v3997 = vsel %vm601, %v3944, 0
    %v4000 = vsel %vm601, %v3947, 0
    %v4003 = vsel %vm601, %v3950, 0
    %v4006 = vsel %vm601, %v3953, 0
    %4008 = vmatpush.msra.mxu0 0.0
    %4009 = vmatpush.msra.mxu0 0.0
    %4010 = vmatpush.msra.mxu0 0.0
    %4011 = vmatpush.msra.mxu0 0.0
    %4012 = vmatpush.msra.mxu0 0.0
    %4013 = vmatpush.msra.mxu0 0.0
    %4014 = vmatpush.msra.mxu0 0.0
    %4015 = vmatpush.msra.mxu0 0.0
    %4016 = vmatpush.msra.mxu0 0.0
    %4017 = vmatpush.msra.mxu0 0.0
    %4018 = vmatpush.msra.mxu0 0.0
    %4019 = vmatpush.msra.mxu0 0.0
    %4020 = vmatpush.msra.mxu0 %v3959
    %4021 = vmatpush.msra.mxu0 %v3958
    %4022 = vmatpush.msra.mxu0 %v3957
    %4023 = vmatpush.msra.mxu0 %v3956
    %4024 = vmatmul.f32.gmra.mxu0 %v3961
    %v4025 = vpop.f32.mrf.mxu0
    %v4026 = vadd.f32 0.0, %v4025
    %4027 = vmatmul.f32.gmra.mxu0 %v3964
    %v4028 = vpop.f32.mrf.mxu0
    %v4029 = vadd.f32 0.0, %v4028
    %4030 = vmatmul.f32.gmra.mxu0 %v3967
    %v4031 = vpop.f32.mrf.mxu0
    %v4032 = vadd.f32 0.0, %v4031
    %4033 = vmatmul.f32.gmra.mxu0 %v3970
    %v4034 = vpop.f32.mrf.mxu0
    %v4035 = vadd.f32 0.0, %v4034
    %4036 = vmatmul.f32.gmra.mxu0 %v3973
    %v4037 = vpop.f32.mrf.mxu0
    %v4038 = vadd.f32 0.0, %v4037
    %4039 = vmatmul.f32.gmra.mxu0 %v3976
    %v4040 = vpop.f32.mrf.mxu0
    %v4041 = vadd.f32 0.0, %v4040
    %4042 = vmatmul.f32.gmra.mxu0 %v3979
    %v4043 = vpop.f32.mrf.mxu0
    %v4044 = vadd.f32 0.0, %v4043
    %4045 = vmatmul.f32.gmra.mxu0 %v3982
    %v4046 = vpop.f32.mrf.mxu0
    %v4047 = vadd.f32 0.0, %v4046
    %4048 = vmatmul.f32.gmra.mxu0 %v3985
    %v4049 = vpop.f32.mrf.mxu0
    %v4050 = vadd.f32 0.0, %v4049
    %4051 = vmatmul.f32.gmra.mxu0 %v3988
    %v4052 = vpop.f32.mrf.mxu0
    %v4053 = vadd.f32 0.0, %v4052
    %4054 = vmatmul.f32.gmra.mxu0 %v3991
    %v4055 = vpop.f32.mrf.mxu0
    %v4056 = vadd.f32 0.0, %v4055
    %4057 = vmatmul.f32.gmra.mxu0 %v3994
    %v4058 = vpop.f32.mrf.mxu0
    %v4059 = vadd.f32 0.0, %v4058
    %4060 = vmatmul.f32.gmra.mxu0 %v3997
    %v4061 = vpop.f32.mrf.mxu0
    %v4062 = vadd.f32 0.0, %v4061
    %4063 = vmatmul.f32.gmra.mxu0 %v4000
    %v4064 = vpop.f32.mrf.mxu0
    %v4065 = vadd.f32 0.0, %v4064
    %4066 = vmatmul.f32.gmra.mxu0 %v4003
    %v4067 = vpop.f32.mrf.mxu0
    %v4068 = vadd.f32 0.0, %v4067
    %4069 = vmatmul.f32.gmra.mxu0 %v4006
    %v4070 = vpop.f32.mrf.mxu0
    %v4071 = vadd.f32 0.0, %v4070
    %4072 = vdwg.mxu0
    %v4073 = vadd.f32 %v3538, %v4026
    %v4074 = vadd.f32 %v3539, %v4029
    %v4075 = vadd.f32 %v3540, %v4032
    %v4076 = vadd.f32 %v3541, %v4035
    %v4077 = vadd.f32 %v3542, %v4038
    %v4078 = vadd.f32 %v3543, %v4041
    %v4079 = vadd.f32 %v3544, %v4044
    %v4080 = vadd.f32 %v3545, %v4047
    %v4081 = vadd.f32 %v3546, %v4050
    %v4082 = vadd.f32 %v3547, %v4053
    %v4083 = vadd.f32 %v3548, %v4056
    %v4084 = vadd.f32 %v3549, %v4059
    %v4085 = vadd.f32 %v3550, %v4062
    %v4086 = vadd.f32 %v3551, %v4065
    %v4087 = vadd.f32 %v3552, %v4068
    %v4088 = vadd.f32 %v3553, %v4071
    %v4089 = vld [vmem:[#allocation2 + $0x24] sm:$0xff]
    %v4090 = vld [vmem:[#allocation2 + $0x2c] sm:$0xff]
    %v4091 = vld [vmem:[#allocation2 + $0x34] sm:$0xff]
    %v4092 = vld [vmem:[#allocation2 + $0x3c] sm:$0xff]
    %v4093 = vld [vmem:[#allocation2 + $0x44] sm:$0xff]
    %v4094 = vld [vmem:[#allocation2 + $0x4c] sm:$0xff]
    %v4095 = vld [vmem:[#allocation2 + $0x54] sm:$0xff]
    %v4096 = vld [vmem:[#allocation2 + $0x5c] sm:$0xff]
    %v4097 = vld [vmem:[#allocation2 + $0x64] sm:$0xff]
    %v4098 = vld [vmem:[#allocation2 + $0x6c] sm:$0xff]
    %v4099 = vld [vmem:[#allocation2 + $0x74] sm:$0xff]
    %v4100 = vld [vmem:[#allocation2 + $0x7c] sm:$0xff]
    %v4101 = vld [vmem:[#allocation2 + $0x84] sm:$0xff]
    %v4102 = vld [vmem:[#allocation2 + $0x8c] sm:$0xff]
    %v4103 = vld [vmem:[#allocation2 + $0x94] sm:$0xff]
    %v4104 = vld [vmem:[#allocation2 + $0x9c] sm:$0xff]
    %v4105 = vld [vmem:[#allocation2 + $0xa4] sm:$0xff]
    %v4106 = vld [vmem:[#allocation2 + $0xac] sm:$0xff]
    %v4107 = vld [vmem:[#allocation2 + $0xb4] sm:$0xff]
    %v4108 = vld [vmem:[#allocation2 + $0xbc] sm:$0xff]
    %v4109 = vld [vmem:[#allocation2 + $0xc4] sm:$0xff]
    %v4110 = vld [vmem:[#allocation2 + $0xcc] sm:$0xff]
    %v4111 = vld [vmem:[#allocation2 + $0xd4] sm:$0xff]
    %v4112 = vld [vmem:[#allocation2 + $0xdc] sm:$0xff]
    %v4113 = vld [vmem:[#allocation2 + $0xe4] sm:$0xff]
    %v4114 = vld [vmem:[#allocation2 + $0xec] sm:$0xff]
    %v4115 = vld [vmem:[#allocation2 + $0xf4] sm:$0xff]
    %v4116 = vld [vmem:[#allocation2 + $0xfc] sm:$0xff]
    %v4117 = vld [vmem:[#allocation2 + $0x104] sm:$0xff]
    %v4118 = vld [vmem:[#allocation2 + $0x10c] sm:$0xff]
    %v4119 = vld [vmem:[#allocation2 + $0x114] sm:$0xff]
    %v4120 = vld [vmem:[#allocation2 + $0x11c] sm:$0xff]
    %v4121 = vld [vmem:[#allocation2 + $0x124] sm:$0xff]
    %v4122 = vld [vmem:[#allocation2 + $0x12c] sm:$0xff]
    %v4123 = vld [vmem:[#allocation2 + $0x134] sm:$0xff]
    %v4124 = vld [vmem:[#allocation2 + $0x13c] sm:$0xff]
    %v4125 = vld [vmem:[#allocation2 + $0x144] sm:$0xff]
    %v4126 = vld [vmem:[#allocation2 + $0x14c] sm:$0xff]
    %v4127 = vld [vmem:[#allocation2 + $0x154] sm:$0xff]
    %v4128 = vld [vmem:[#allocation2 + $0x15c] sm:$0xff]
    %v4129 = vld [vmem:[#allocation2 + $0x164] sm:$0xff]
    %v4130 = vld [vmem:[#allocation2 + $0x16c] sm:$0xff]
    %v4131 = vld [vmem:[#allocation2 + $0x174] sm:$0xff]
    %v4132 = vld [vmem:[#allocation2 + $0x17c] sm:$0xff]
    %v4133 = vld [vmem:[#allocation2 + $0x184] sm:$0xff]
    %v4134 = vld [vmem:[#allocation2 + $0x18c] sm:$0xff]
    %v4135 = vld [vmem:[#allocation2 + $0x194] sm:$0xff]
    %v4136 = vld [vmem:[#allocation2 + $0x19c] sm:$0xff]
    %v4137 = vld [vmem:[#allocation2 + $0x1a4] sm:$0xff]
    %v4138 = vld [vmem:[#allocation2 + $0x1ac] sm:$0xff]
    %v4139 = vld [vmem:[#allocation2 + $0x1b4] sm:$0xff]
    %v4140 = vld [vmem:[#allocation2 + $0x1bc] sm:$0xff]
    %v4141 = vld [vmem:[#allocation2 + $0x1c4] sm:$0xff]
    %v4142 = vld [vmem:[#allocation2 + $0x1cc] sm:$0xff]
    %v4143 = vld [vmem:[#allocation2 + $0x1d4] sm:$0xff]
    %v4144 = vld [vmem:[#allocation2 + $0x1dc] sm:$0xff]
    %v4145 = vld [vmem:[#allocation2 + $0x1e4] sm:$0xff]
    %v4146 = vld [vmem:[#allocation2 + $0x1ec] sm:$0xff]
    %v4147 = vld [vmem:[#allocation2 + $0x1f4] sm:$0xff]
    %v4148 = vld [vmem:[#allocation2 + $0x1fc] sm:$0xff]
    %v4149 = vld [vmem:[#allocation2 + $0x204] sm:$0xff]
    %v4150 = vld [vmem:[#allocation2 + $0x20c] sm:$0xff]
    %v4151 = vld [vmem:[#allocation2 + $0x214] sm:$0xff]
    %v4152 = vld [vmem:[#allocation2 + $0x21c] sm:$0xff]
    %v4153 = vld [vmem:[#allocation2 + $0x224] sm:$0xff]
    %v4154 = vld [vmem:[#allocation2 + $0x22c] sm:$0xff]
    %v4155 = vld [vmem:[#allocation2 + $0x234] sm:$0xff]
    %v4156 = vld [vmem:[#allocation2 + $0x23c] sm:$0xff]
    %v4157 = vld [vmem:[#allocation2 + $0x244] sm:$0xff]
    %v4158 = vld [vmem:[#allocation2 + $0x24c] sm:$0xff]
    %v4159 = vld [vmem:[#allocation2 + $0x254] sm:$0xff]
    %v4160 = vld [vmem:[#allocation2 + $0x25c] sm:$0xff]
    %v4161 = vld [vmem:[#allocation2 + $0x264] sm:$0xff]
    %v4162 = vld [vmem:[#allocation2 + $0x26c] sm:$0xff]
    %v4163 = vld [vmem:[#allocation2 + $0x274] sm:$0xff]
    %v4164 = vld [vmem:[#allocation2 + $0x27c] sm:$0xff]
    %4165 = vmatpush.msra.mxu0 %v4104
    %4166 = vmatpush.msra.mxu0 %v4103
    %4167 = vmatpush.msra.mxu0 %v4102
    %4168 = vmatpush.msra.mxu0 %v4101
    %4169 = vmatpush.msra.mxu0 %v4100
    %4170 = vmatpush.msra.mxu0 %v4099
    %4171 = vmatpush.msra.mxu0 %v4098
    %4172 = vmatpush.msra.mxu0 %v4097
    %4173 = vmatpush.msra.mxu0 %v4096
    %4174 = vmatpush.msra.mxu0 %v4095
    %4175 = vmatpush.msra.mxu0 %v4094
    %4176 = vmatpush.msra.mxu0 %v4093
    %4177 = vmatpush.msra.mxu0 %v4092
    %4178 = vmatpush.msra.mxu0 %v4091
    %4179 = vmatpush.msra.mxu0 %v4090
    %4180 = vmatpush.msra.mxu0 %v4089
    %4181 = vmatmul.f32.gmra.mxu0 %v827
    %v4182 = vpop.f32.mrf.mxu0
    %v4183 = vadd.f32 0.0, %v4182
    %4184 = vmatmul.f32.gmra.mxu0 %v832
    %v4185 = vpop.f32.mrf.mxu0
    %v4186 = vadd.f32 0.0, %v4185
    %4187 = vmatmul.f32.gmra.mxu0 %v837
    %v4188 = vpop.f32.mrf.mxu0
    %v4189 = vadd.f32 0.0, %v4188
    %4190 = vmatmul.f32.gmra.mxu0 %v842
    %v4191 = vpop.f32.mrf.mxu0
    %v4192 = vadd.f32 0.0, %v4191
    %4193 = vmatmul.f32.gmra.mxu0 %v847
    %v4194 = vpop.f32.mrf.mxu0
    %v4195 = vadd.f32 0.0, %v4194
    %4196 = vmatmul.f32.gmra.mxu0 %v852
    %v4197 = vpop.f32.mrf.mxu0
    %v4198 = vadd.f32 0.0, %v4197
    %4199 = vmatmul.f32.gmra.mxu0 %v857
    %v4200 = vpop.f32.mrf.mxu0
    %v4201 = vadd.f32 0.0, %v4200
    %4202 = vmatmul.f32.gmra.mxu0 %v862
    %v4203 = vpop.f32.mrf.mxu0
    %v4204 = vadd.f32 0.0, %v4203
    %4205 = vmatmul.f32.gmra.mxu0 %v867
    %v4206 = vpop.f32.mrf.mxu0
    %v4207 = vadd.f32 0.0, %v4206
    %4208 = vmatmul.f32.gmra.mxu0 %v872
    %v4209 = vpop.f32.mrf.mxu0
    %v4210 = vadd.f32 0.0, %v4209
    %4211 = vmatmul.f32.gmra.mxu0 %v877
    %v4212 = vpop.f32.mrf.mxu0
    %v4213 = vadd.f32 0.0, %v4212
    %4214 = vmatmul.f32.gmra.mxu0 %v882
    %v4215 = vpop.f32.mrf.mxu0
    %v4216 = vadd.f32 0.0, %v4215
    %4217 = vmatmul.f32.gmra.mxu0 %v887
    %v4218 = vpop.f32.mrf.mxu0
    %v4219 = vadd.f32 0.0, %v4218
    %4220 = vmatmul.f32.gmra.mxu0 %v892
    %v4221 = vpop.f32.mrf.mxu0
    %v4222 = vadd.f32 0.0, %v4221
    %4223 = vmatmul.f32.gmra.mxu0 %v897
    %v4224 = vpop.f32.mrf.mxu0
    %v4225 = vadd.f32 0.0, %v4224
    %4226 = vmatmul.f32.gmra.mxu0 %v902
    %v4227 = vpop.f32.mrf.mxu0
    %v4228 = vadd.f32 0.0, %v4227
    %4229 = vdwg.mxu0
    %4230 = vmatpush.msra.mxu0 %v4120
    %4231 = vmatpush.msra.mxu0 %v4119
    %4232 = vmatpush.msra.mxu0 %v4118
    %4233 = vmatpush.msra.mxu0 %v4117
    %4234 = vmatpush.msra.mxu0 %v4116
    %4235 = vmatpush.msra.mxu0 %v4115
    %4236 = vmatpush.msra.mxu0 %v4114
    %4237 = vmatpush.msra.mxu0 %v4113
    %4238 = vmatpush.msra.mxu0 %v4112
    %4239 = vmatpush.msra.mxu0 %v4111
    %4240 = vmatpush.msra.mxu0 %v4110
    %4241 = vmatpush.msra.mxu0 %v4109
    %4242 = vmatpush.msra.mxu0 %v4108
    %4243 = vmatpush.msra.mxu0 %v4107
    %4244 = vmatpush.msra.mxu0 %v4106
    %4245 = vmatpush.msra.mxu0 %v4105
    %4246 = vmatmul.f32.gmra.mxu0 %v828
    %v4247 = vpop.f32.mrf.mxu0
    %v4248 = vadd.f32 %v4183, %v4247
    %4249 = vmatmul.f32.gmra.mxu0 %v833
    %v4250 = vpop.f32.mrf.mxu0
    %v4251 = vadd.f32 %v4186, %v4250
    %4252 = vmatmul.f32.gmra.mxu0 %v838
    %v4253 = vpop.f32.mrf.mxu0
    %v4254 = vadd.f32 %v4189, %v4253
    %4255 = vmatmul.f32.gmra.mxu0 %v843
    %v4256 = vpop.f32.mrf.mxu0
    %v4257 = vadd.f32 %v4192, %v4256
    %4258 = vmatmul.f32.gmra.mxu0 %v848
    %v4259 = vpop.f32.mrf.mxu0
    %v4260 = vadd.f32 %v4195, %v4259
    %4261 = vmatmul.f32.gmra.mxu0 %v853
    %v4262 = vpop.f32.mrf.mxu0
    %v4263 = vadd.f32 %v4198, %v4262
    %4264 = vmatmul.f32.gmra.mxu0 %v858
    %v4265 = vpop.f32.mrf.mxu0
    %v4266 = vadd.f32 %v4201, %v4265
    %4267 = vmatmul.f32.gmra.mxu0 %v863
    %v4268 = vpop.f32.mrf.mxu0
    %v4269 = vadd.f32 %v4204, %v4268
    %4270 = vmatmul.f32.gmra.mxu0 %v868
    %v4271 = vpop.f32.mrf.mxu0
    %v4272 = vadd.f32 %v4207, %v4271
    %4273 = vmatmul.f32.gmra.mxu0 %v873
    %v4274 = vpop.f32.mrf.mxu0
    %v4275 = vadd.f32 %v4210, %v4274
    %4276 = vmatmul.f32.gmra.mxu0 %v878
    %v4277 = vpop.f32.mrf.mxu0
    %v4278 = vadd.f32 %v4213, %v4277
    %4279 = vmatmul.f32.gmra.mxu0 %v883
    %v4280 = vpop.f32.mrf.mxu0
    %v4281 = vadd.f32 %v4216, %v4280
    %4282 = vmatmul.f32.gmra.mxu0 %v888
    %v4283 = vpop.f32.mrf.mxu0
    %v4284 = vadd.f32 %v4219, %v4283
    %4285 = vmatmul.f32.gmra.mxu0 %v893
    %v4286 = vpop.f32.mrf.mxu0
    %v4287 = vadd.f32 %v4222, %v4286
    %4288 = vmatmul.f32.gmra.mxu0 %v898
    %v4289 = vpop.f32.mrf.mxu0
    %v4290 = vadd.f32 %v4225, %v4289
    %4291 = vmatmul.f32.gmra.mxu0 %v903
    %v4292 = vpop.f32.mrf.mxu0
    %v4293 = vadd.f32 %v4228, %v4292
    %4294 = vdwg.mxu0
    %4295 = vmatpush.msra.mxu0 %v4136
    %4296 = vmatpush.msra.mxu0 %v4135
    %4297 = vmatpush.msra.mxu0 %v4134
    %4298 = vmatpush.msra.mxu0 %v4133
    %4299 = vmatpush.msra.mxu0 %v4132
    %4300 = vmatpush.msra.mxu0 %v4131
    %4301 = vmatpush.msra.mxu0 %v4130
    %4302 = vmatpush.msra.mxu0 %v4129
    %4303 = vmatpush.msra.mxu0 %v4128
    %4304 = vmatpush.msra.mxu0 %v4127
    %4305 = vmatpush.msra.mxu0 %v4126
    %4306 = vmatpush.msra.mxu0 %v4125
    %4307 = vmatpush.msra.mxu0 %v4124
    %4308 = vmatpush.msra.mxu0 %v4123
    %4309 = vmatpush.msra.mxu0 %v4122
    %4310 = vmatpush.msra.mxu0 %v4121
    %4311 = vmatmul.f32.gmra.mxu0 %v829
    %v4312 = vpop.f32.mrf.mxu0
    %v4313 = vadd.f32 %v4248, %v4312
    %4314 = vmatmul.f32.gmra.mxu0 %v834
    %v4315 = vpop.f32.mrf.mxu0
    %v4316 = vadd.f32 %v4251, %v4315
    %4317 = vmatmul.f32.gmra.mxu0 %v839
    %v4318 = vpop.f32.mrf.mxu0
    %v4319 = vadd.f32 %v4254, %v4318
    %4320 = vmatmul.f32.gmra.mxu0 %v844
    %v4321 = vpop.f32.mrf.mxu0
    %v4322 = vadd.f32 %v4257, %v4321
    %4323 = vmatmul.f32.gmra.mxu0 %v849
    %v4324 = vpop.f32.mrf.mxu0
    %v4325 = vadd.f32 %v4260, %v4324
    %4326 = vmatmul.f32.gmra.mxu0 %v854
    %v4327 = vpop.f32.mrf.mxu0
    %v4328 = vadd.f32 %v4263, %v4327
    %4329 = vmatmul.f32.gmra.mxu0 %v859
    %v4330 = vpop.f32.mrf.mxu0
    %v4331 = vadd.f32 %v4266, %v4330
    %4332 = vmatmul.f32.gmra.mxu0 %v864
    %v4333 = vpop.f32.mrf.mxu0
    %v4334 = vadd.f32 %v4269, %v4333
    %4335 = vmatmul.f32.gmra.mxu0 %v869
    %v4336 = vpop.f32.mrf.mxu0
    %v4337 = vadd.f32 %v4272, %v4336
    %4338 = vmatmul.f32.gmra.mxu0 %v874
    %v4339 = vpop.f32.mrf.mxu0
    %v4340 = vadd.f32 %v4275, %v4339
    %4341 = vmatmul.f32.gmra.mxu0 %v879
    %v4342 = vpop.f32.mrf.mxu0
    %v4343 = vadd.f32 %v4278, %v4342
    %4344 = vmatmul.f32.gmra.mxu0 %v884
    %v4345 = vpop.f32.mrf.mxu0
    %v4346 = vadd.f32 %v4281, %v4345
    %4347 = vmatmul.f32.gmra.mxu0 %v889
    %v4348 = vpop.f32.mrf.mxu0
    %v4349 = vadd.f32 %v4284, %v4348
    %4350 = vmatmul.f32.gmra.mxu0 %v894
    %v4351 = vpop.f32.mrf.mxu0
    %v4352 = vadd.f32 %v4287, %v4351
    %4353 = vmatmul.f32.gmra.mxu0 %v899
    %v4354 = vpop.f32.mrf.mxu0
    %v4355 = vadd.f32 %v4290, %v4354
    %4356 = vmatmul.f32.gmra.mxu0 %v904
    %v4357 = vpop.f32.mrf.mxu0
    %v4358 = vadd.f32 %v4293, %v4357
    %4359 = vdwg.mxu0
    %4360 = vmatpush.msra.mxu0 %v4152
    %4361 = vmatpush.msra.mxu0 %v4151
    %4362 = vmatpush.msra.mxu0 %v4150
    %4363 = vmatpush.msra.mxu0 %v4149
    %4364 = vmatpush.msra.mxu0 %v4148
    %4365 = vmatpush.msra.mxu0 %v4147
    %4366 = vmatpush.msra.mxu0 %v4146
    %4367 = vmatpush.msra.mxu0 %v4145
    %4368 = vmatpush.msra.mxu0 %v4144
    %4369 = vmatpush.msra.mxu0 %v4143
    %4370 = vmatpush.msra.mxu0 %v4142
    %4371 = vmatpush.msra.mxu0 %v4141
    %4372 = vmatpush.msra.mxu0 %v4140
    %4373 = vmatpush.msra.mxu0 %v4139
    %4374 = vmatpush.msra.mxu0 %v4138
    %4375 = vmatpush.msra.mxu0 %v4137
    %4376 = vmatmul.f32.gmra.mxu0 %v830
    %v4377 = vpop.f32.mrf.mxu0
    %v4378 = vadd.f32 %v4313, %v4377
    %4379 = vmatmul.f32.gmra.mxu0 %v835
    %v4380 = vpop.f32.mrf.mxu0
    %v4381 = vadd.f32 %v4316, %v4380
    %4382 = vmatmul.f32.gmra.mxu0 %v840
    %v4383 = vpop.f32.mrf.mxu0
    %v4384 = vadd.f32 %v4319, %v4383
    %4385 = vmatmul.f32.gmra.mxu0 %v845
    %v4386 = vpop.f32.mrf.mxu0
    %v4387 = vadd.f32 %v4322, %v4386
    %4388 = vmatmul.f32.gmra.mxu0 %v850
    %v4389 = vpop.f32.mrf.mxu0
    %v4390 = vadd.f32 %v4325, %v4389
    %4391 = vmatmul.f32.gmra.mxu0 %v855
    %v4392 = vpop.f32.mrf.mxu0
    %v4393 = vadd.f32 %v4328, %v4392
    %4394 = vmatmul.f32.gmra.mxu0 %v860
    %v4395 = vpop.f32.mrf.mxu0
    %v4396 = vadd.f32 %v4331, %v4395
    %4397 = vmatmul.f32.gmra.mxu0 %v865
    %v4398 = vpop.f32.mrf.mxu0
    %v4399 = vadd.f32 %v4334, %v4398
    %4400 = vmatmul.f32.gmra.mxu0 %v870
    %v4401 = vpop.f32.mrf.mxu0
    %v4402 = vadd.f32 %v4337, %v4401
    %4403 = vmatmul.f32.gmra.mxu0 %v875
    %v4404 = vpop.f32.mrf.mxu0
    %v4405 = vadd.f32 %v4340, %v4404
    %4406 = vmatmul.f32.gmra.mxu0 %v880
    %v4407 = vpop.f32.mrf.mxu0
    %v4408 = vadd.f32 %v4343, %v4407
    %4409 = vmatmul.f32.gmra.mxu0 %v885
    %v4410 = vpop.f32.mrf.mxu0
    %v4411 = vadd.f32 %v4346, %v4410
    %4412 = vmatmul.f32.gmra.mxu0 %v890
    %v4413 = vpop.f32.mrf.mxu0
    %v4414 = vadd.f32 %v4349, %v4413
    %4415 = vmatmul.f32.gmra.mxu0 %v895
    %v4416 = vpop.f32.mrf.mxu0
    %v4417 = vadd.f32 %v4352, %v4416
    %4418 = vmatmul.f32.gmra.mxu0 %v900
    %v4419 = vpop.f32.mrf.mxu0
    %v4420 = vadd.f32 %v4355, %v4419
    %4421 = vmatmul.f32.gmra.mxu0 %v905
    %v4422 = vpop.f32.mrf.mxu0
    %v4423 = vadd.f32 %v4358, %v4422
    %4424 = vdwg.mxu0
    %4425 = vmatpush.msra.mxu0 0.0
    %4426 = vmatpush.msra.mxu0 0.0
    %4427 = vmatpush.msra.mxu0 0.0
    %4428 = vmatpush.msra.mxu0 0.0
    %4429 = vmatpush.msra.mxu0 %v4164
    %4430 = vmatpush.msra.mxu0 %v4163
    %4431 = vmatpush.msra.mxu0 %v4162
    %4432 = vmatpush.msra.mxu0 %v4161
    %4433 = vmatpush.msra.mxu0 %v4160
    %4434 = vmatpush.msra.mxu0 %v4159
    %4435 = vmatpush.msra.mxu0 %v4158
    %4436 = vmatpush.msra.mxu0 %v4157
    %4437 = vmatpush.msra.mxu0 %v4156
    %4438 = vmatpush.msra.mxu0 %v4155
    %4439 = vmatpush.msra.mxu0 %v4154
    %4440 = vmatpush.msra.mxu0 %v4153
    %4441 = vmatmul.f32.gmra.mxu0 %v909
    %v4442 = vpop.f32.mrf.mxu0
    %v4443 = vadd.f32 %v4378, %v4442
    %4444 = vmatmul.f32.gmra.mxu0 %v912
    %v4445 = vpop.f32.mrf.mxu0
    %v4446 = vadd.f32 %v4381, %v4445
    %4447 = vmatmul.f32.gmra.mxu0 %v915
    %v4448 = vpop.f32.mrf.mxu0
    %v4449 = vadd.f32 %v4384, %v4448
    %4450 = vmatmul.f32.gmra.mxu0 %v918
    %v4451 = vpop.f32.mrf.mxu0
    %v4452 = vadd.f32 %v4387, %v4451
    %4453 = vmatmul.f32.gmra.mxu0 %v921
    %v4454 = vpop.f32.mrf.mxu0
    %v4455 = vadd.f32 %v4390, %v4454
    %4456 = vmatmul.f32.gmra.mxu0 %v924
    %v4457 = vpop.f32.mrf.mxu0
    %v4458 = vadd.f32 %v4393, %v4457
    %4459 = vmatmul.f32.gmra.mxu0 %v927
    %v4460 = vpop.f32.mrf.mxu0
    %v4461 = vadd.f32 %v4396, %v4460
    %4462 = vmatmul.f32.gmra.mxu0 %v930
    %v4463 = vpop.f32.mrf.mxu0
    %v4464 = vadd.f32 %v4399, %v4463
    %4465 = vmatmul.f32.gmra.mxu0 %v933
    %v4466 = vpop.f32.mrf.mxu0
    %v4467 = vadd.f32 %v4402, %v4466
    %4468 = vmatmul.f32.gmra.mxu0 %v936
    %v4469 = vpop.f32.mrf.mxu0
    %v4470 = vadd.f32 %v4405, %v4469
    %4471 = vmatmul.f32.gmra.mxu0 %v939
    %v4472 = vpop.f32.mrf.mxu0
    %v4473 = vadd.f32 %v4408, %v4472
    %4474 = vmatmul.f32.gmra.mxu0 %v942
    %v4475 = vpop.f32.mrf.mxu0
    %v4476 = vadd.f32 %v4411, %v4475
    %4477 = vmatmul.f32.gmra.mxu0 %v945
    %v4478 = vpop.f32.mrf.mxu0
    %v4479 = vadd.f32 %v4414, %v4478
    %4480 = vmatmul.f32.gmra.mxu0 %v948
    %v4481 = vpop.f32.mrf.mxu0
    %v4482 = vadd.f32 %v4417, %v4481
    %4483 = vmatmul.f32.gmra.mxu0 %v951
    %v4484 = vpop.f32.mrf.mxu0
    %v4485 = vadd.f32 %v4420, %v4484
    %4486 = vmatmul.f32.gmra.mxu0 %v954
    %v4487 = vpop.f32.mrf.mxu0
    %v4488 = vadd.f32 %v4423, %v4487
    %4489 = vdwg.mxu0
    %s4490 = scalar_lea.vmem %s4, 192
    %v4491 = vld [vmem:[%s4490] sm:$0xff]
    %v4492 = vld [vmem:[%s4490 + $0x8] sm:$0xff]
    %v4493 = vld [vmem:[%s4490 + $0x10] sm:$0xff]
    %v4494 = vld [vmem:[%s4490 + $0x18] sm:$0xff]
    %v4496 = vsel %vm601, %v4443, 0
    %v4499 = vsel %vm601, %v4446, 0
    %v4502 = vsel %vm601, %v4449, 0
    %v4505 = vsel %vm601, %v4452, 0
    %v4508 = vsel %vm601, %v4455, 0
    %v4511 = vsel %vm601, %v4458, 0
    %v4514 = vsel %vm601, %v4461, 0
    %v4517 = vsel %vm601, %v4464, 0
    %v4520 = vsel %vm601, %v4467, 0
    %v4523 = vsel %vm601, %v4470, 0
    %v4526 = vsel %vm601, %v4473, 0
    %v4529 = vsel %vm601, %v4476, 0
    %v4532 = vsel %vm601, %v4479, 0
    %v4535 = vsel %vm601, %v4482, 0
    %v4538 = vsel %vm601, %v4485, 0
    %v4541 = vsel %vm601, %v4488, 0
    %4543 = vmatpush.msra.mxu0 0.0
    %4544 = vmatpush.msra.mxu0 0.0
    %4545 = vmatpush.msra.mxu0 0.0
    %4546 = vmatpush.msra.mxu0 0.0
    %4547 = vmatpush.msra.mxu0 0.0
    %4548 = vmatpush.msra.mxu0 0.0
    %4549 = vmatpush.msra.mxu0 0.0
    %4550 = vmatpush.msra.mxu0 0.0
    %4551 = vmatpush.msra.mxu0 0.0
    %4552 = vmatpush.msra.mxu0 0.0
    %4553 = vmatpush.msra.mxu0 0.0
    %4554 = vmatpush.msra.mxu0 0.0
    %4555 = vmatpush.msra.mxu0 %v4494
    %4556 = vmatpush.msra.mxu0 %v4493
    %4557 = vmatpush.msra.mxu0 %v4492
    %4558 = vmatpush.msra.mxu0 %v4491
    %4559 = vmatmul.f32.gmra.mxu0 %v4496
    %v4560 = vpop.f32.mrf.mxu0
    %v4561 = vadd.f32 0.0, %v4560
    %4562 = vmatmul.f32.gmra.mxu0 %v4499
    %v4563 = vpop.f32.mrf.mxu0
    %v4564 = vadd.f32 0.0, %v4563
    %4565 = vmatmul.f32.gmra.mxu0 %v4502
    %v4566 = vpop.f32.mrf.mxu0
    %v4567 = vadd.f32 0.0, %v4566
    %4568 = vmatmul.f32.gmra.mxu0 %v4505
    %v4569 = vpop.f32.mrf.mxu0
    %v4570 = vadd.f32 0.0, %v4569
    %4571 = vmatmul.f32.gmra.mxu0 %v4508
    %v4572 = vpop.f32.mrf.mxu0
    %v4573 = vadd.f32 0.0, %v4572
    %4574 = vmatmul.f32.gmra.mxu0 %v4511
    %v4575 = vpop.f32.mrf.mxu0
    %v4576 = vadd.f32 0.0, %v4575
    %4577 = vmatmul.f32.gmra.mxu0 %v4514
    %v4578 = vpop.f32.mrf.mxu0
    %v4579 = vadd.f32 0.0, %v4578
    %4580 = vmatmul.f32.gmra.mxu0 %v4517
    %v4581 = vpop.f32.mrf.mxu0
    %v4582 = vadd.f32 0.0, %v4581
    %4583 = vmatmul.f32.gmra.mxu0 %v4520
    %v4584 = vpop.f32.mrf.mxu0
    %v4585 = vadd.f32 0.0, %v4584
    %4586 = vmatmul.f32.gmra.mxu0 %v4523
    %v4587 = vpop.f32.mrf.mxu0
    %v4588 = vadd.f32 0.0, %v4587
    %4589 = vmatmul.f32.gmra.mxu0 %v4526
    %v4590 = vpop.f32.mrf.mxu0
    %v4591 = vadd.f32 0.0, %v4590
    %4592 = vmatmul.f32.gmra.mxu0 %v4529
    %v4593 = vpop.f32.mrf.mxu0
    %v4594 = vadd.f32 0.0, %v4593
    %4595 = vmatmul.f32.gmra.mxu0 %v4532
    %v4596 = vpop.f32.mrf.mxu0
    %v4597 = vadd.f32 0.0, %v4596
    %4598 = vmatmul.f32.gmra.mxu0 %v4535
    %v4599 = vpop.f32.mrf.mxu0
    %v4600 = vadd.f32 0.0, %v4599
    %4601 = vmatmul.f32.gmra.mxu0 %v4538
    %v4602 = vpop.f32.mrf.mxu0
    %v4603 = vadd.f32 0.0, %v4602
    %4604 = vmatmul.f32.gmra.mxu0 %v4541
    %v4605 = vpop.f32.mrf.mxu0
    %v4606 = vadd.f32 0.0, %v4605
    %4607 = vdwg.mxu0
    %v4608 = vadd.f32 %v4073, %v4561
    %v4609 = vadd.f32 %v4074, %v4564
    %v4610 = vadd.f32 %v4075, %v4567
    %v4611 = vadd.f32 %v4076, %v4570
    %v4612 = vadd.f32 %v4077, %v4573
    %v4613 = vadd.f32 %v4078, %v4576
    %v4614 = vadd.f32 %v4079, %v4579
    %v4615 = vadd.f32 %v4080, %v4582
    %v4616 = vadd.f32 %v4081, %v4585
    %v4617 = vadd.f32 %v4082, %v4588
    %v4618 = vadd.f32 %v4083, %v4591
    %v4619 = vadd.f32 %v4084, %v4594
    %v4620 = vadd.f32 %v4085, %v4597
    %v4621 = vadd.f32 %v4086, %v4600
    %v4622 = vadd.f32 %v4087, %v4603
    %v4623 = vadd.f32 %v4088, %v4606
    %v4624 = vld [vmem:[#allocation2 + $0x25] sm:$0xff]
    %v4625 = vld [vmem:[#allocation2 + $0x2d] sm:$0xff]
    %v4626 = vld [vmem:[#allocation2 + $0x35] sm:$0xff]
    %v4627 = vld [vmem:[#allocation2 + $0x3d] sm:$0xff]
    %v4628 = vld [vmem:[#allocation2 + $0x45] sm:$0xff]
    %v4629 = vld [vmem:[#allocation2 + $0x4d] sm:$0xff]
    %v4630 = vld [vmem:[#allocation2 + $0x55] sm:$0xff]
    %v4631 = vld [vmem:[#allocation2 + $0x5d] sm:$0xff]
    %v4632 = vld [vmem:[#allocation2 + $0x65] sm:$0xff]
    %v4633 = vld [vmem:[#allocation2 + $0x6d] sm:$0xff]
    %v4634 = vld [vmem:[#allocation2 + $0x75] sm:$0xff]
    %v4635 = vld [vmem:[#allocation2 + $0x7d] sm:$0xff]
    %v4636 = vld [vmem:[#allocation2 + $0x85] sm:$0xff]
    %v4637 = vld [vmem:[#allocation2 + $0x8d] sm:$0xff]
    %v4638 = vld [vmem:[#allocation2 + $0x95] sm:$0xff]
    %v4639 = vld [vmem:[#allocation2 + $0x9d] sm:$0xff]
    %v4640 = vld [vmem:[#allocation2 + $0xa5] sm:$0xff]
    %v4641 = vld [vmem:[#allocation2 + $0xad] sm:$0xff]
    %v4642 = vld [vmem:[#allocation2 + $0xb5] sm:$0xff]
    %v4643 = vld [vmem:[#allocation2 + $0xbd] sm:$0xff]
    %v4644 = vld [vmem:[#allocation2 + $0xc5] sm:$0xff]
    %v4645 = vld [vmem:[#allocation2 + $0xcd] sm:$0xff]
    %v4646 = vld [vmem:[#allocation2 + $0xd5] sm:$0xff]
    %v4647 = vld [vmem:[#allocation2 + $0xdd] sm:$0xff]
    %v4648 = vld [vmem:[#allocation2 + $0xe5] sm:$0xff]
    %v4649 = vld [vmem:[#allocation2 + $0xed] sm:$0xff]
    %v4650 = vld [vmem:[#allocation2 + $0xf5] sm:$0xff]
    %v4651 = vld [vmem:[#allocation2 + $0xfd] sm:$0xff]
    %v4652 = vld [vmem:[#allocation2 + $0x105] sm:$0xff]
    %v4653 = vld [vmem:[#allocation2 + $0x10d] sm:$0xff]
    %v4654 = vld [vmem:[#allocation2 + $0x115] sm:$0xff]
    %v4655 = vld [vmem:[#allocation2 + $0x11d] sm:$0xff]
    %v4656 = vld [vmem:[#allocation2 + $0x125] sm:$0xff]
    %v4657 = vld [vmem:[#allocation2 + $0x12d] sm:$0xff]
    %v4658 = vld [vmem:[#allocation2 + $0x135] sm:$0xff]
    %v4659 = vld [vmem:[#allocation2 + $0x13d] sm:$0xff]
    %v4660 = vld [vmem:[#allocation2 + $0x145] sm:$0xff]
    %v4661 = vld [vmem:[#allocation2 + $0x14d] sm:$0xff]
    %v4662 = vld [vmem:[#allocation2 + $0x155] sm:$0xff]
    %v4663 = vld [vmem:[#allocation2 + $0x15d] sm:$0xff]
    %v4664 = vld [vmem:[#allocation2 + $0x165] sm:$0xff]
    %v4665 = vld [vmem:[#allocation2 + $0x16d] sm:$0xff]
    %v4666 = vld [vmem:[#allocation2 + $0x175] sm:$0xff]
    %v4667 = vld [vmem:[#allocation2 + $0x17d] sm:$0xff]
    %v4668 = vld [vmem:[#allocation2 + $0x185] sm:$0xff]
    %v4669 = vld [vmem:[#allocation2 + $0x18d] sm:$0xff]
    %v4670 = vld [vmem:[#allocation2 + $0x195] sm:$0xff]
    %v4671 = vld [vmem:[#allocation2 + $0x19d] sm:$0xff]
    %v4672 = vld [vmem:[#allocation2 + $0x1a5] sm:$0xff]
    %v4673 = vld [vmem:[#allocation2 + $0x1ad] sm:$0xff]
    %v4674 = vld [vmem:[#allocation2 + $0x1b5] sm:$0xff]
    %v4675 = vld [vmem:[#allocation2 + $0x1bd] sm:$0xff]
    %v4676 = vld [vmem:[#allocation2 + $0x1c5] sm:$0xff]
    %v4677 = vld [vmem:[#allocation2 + $0x1cd] sm:$0xff]
    %v4678 = vld [vmem:[#allocation2 + $0x1d5] sm:$0xff]
    %v4679 = vld [vmem:[#allocation2 + $0x1dd] sm:$0xff]
    %v4680 = vld [vmem:[#allocation2 + $0x1e5] sm:$0xff]
    %v4681 = vld [vmem:[#allocation2 + $0x1ed] sm:$0xff]
    %v4682 = vld [vmem:[#allocation2 + $0x1f5] sm:$0xff]
    %v4683 = vld [vmem:[#allocation2 + $0x1fd] sm:$0xff]
    %v4684 = vld [vmem:[#allocation2 + $0x205] sm:$0xff]
    %v4685 = vld [vmem:[#allocation2 + $0x20d] sm:$0xff]
    %v4686 = vld [vmem:[#allocation2 + $0x215] sm:$0xff]
    %v4687 = vld [vmem:[#allocation2 + $0x21d] sm:$0xff]
    %v4688 = vld [vmem:[#allocation2 + $0x225] sm:$0xff]
    %v4689 = vld [vmem:[#allocation2 + $0x22d] sm:$0xff]
    %v4690 = vld [vmem:[#allocation2 + $0x235] sm:$0xff]
    %v4691 = vld [vmem:[#allocation2 + $0x23d] sm:$0xff]
    %v4692 = vld [vmem:[#allocation2 + $0x245] sm:$0xff]
    %v4693 = vld [vmem:[#allocation2 + $0x24d] sm:$0xff]
    %v4694 = vld [vmem:[#allocation2 + $0x255] sm:$0xff]
    %v4695 = vld [vmem:[#allocation2 + $0x25d] sm:$0xff]
    %v4696 = vld [vmem:[#allocation2 + $0x265] sm:$0xff]
    %v4697 = vld [vmem:[#allocation2 + $0x26d] sm:$0xff]
    %v4698 = vld [vmem:[#allocation2 + $0x275] sm:$0xff]
    %v4699 = vld [vmem:[#allocation2 + $0x27d] sm:$0xff]
    %4700 = vmatpush.msra.mxu0 %v4639
    %4701 = vmatpush.msra.mxu0 %v4638
    %4702 = vmatpush.msra.mxu0 %v4637
    %4703 = vmatpush.msra.mxu0 %v4636
    %4704 = vmatpush.msra.mxu0 %v4635
    %4705 = vmatpush.msra.mxu0 %v4634
    %4706 = vmatpush.msra.mxu0 %v4633
    %4707 = vmatpush.msra.mxu0 %v4632
    %4708 = vmatpush.msra.mxu0 %v4631
    %4709 = vmatpush.msra.mxu0 %v4630
    %4710 = vmatpush.msra.mxu0 %v4629
    %4711 = vmatpush.msra.mxu0 %v4628
    %4712 = vmatpush.msra.mxu0 %v4627
    %4713 = vmatpush.msra.mxu0 %v4626
    %4714 = vmatpush.msra.mxu0 %v4625
    %4715 = vmatpush.msra.mxu0 %v4624
    %4716 = vmatmul.f32.gmra.mxu0 %v827
    %v4717 = vpop.f32.mrf.mxu0
    %v4718 = vadd.f32 0.0, %v4717
    %4719 = vmatmul.f32.gmra.mxu0 %v832
    %v4720 = vpop.f32.mrf.mxu0
    %v4721 = vadd.f32 0.0, %v4720
    %4722 = vmatmul.f32.gmra.mxu0 %v837
    %v4723 = vpop.f32.mrf.mxu0
    %v4724 = vadd.f32 0.0, %v4723
    %4725 = vmatmul.f32.gmra.mxu0 %v842
    %v4726 = vpop.f32.mrf.mxu0
    %v4727 = vadd.f32 0.0, %v4726
    %4728 = vmatmul.f32.gmra.mxu0 %v847
    %v4729 = vpop.f32.mrf.mxu0
    %v4730 = vadd.f32 0.0, %v4729
    %4731 = vmatmul.f32.gmra.mxu0 %v852
    %v4732 = vpop.f32.mrf.mxu0
    %v4733 = vadd.f32 0.0, %v4732
    %4734 = vmatmul.f32.gmra.mxu0 %v857
    %v4735 = vpop.f32.mrf.mxu0
    %v4736 = vadd.f32 0.0, %v4735
    %4737 = vmatmul.f32.gmra.mxu0 %v862
    %v4738 = vpop.f32.mrf.mxu0
    %v4739 = vadd.f32 0.0, %v4738
    %4740 = vmatmul.f32.gmra.mxu0 %v867
    %v4741 = vpop.f32.mrf.mxu0
    %v4742 = vadd.f32 0.0, %v4741
    %4743 = vmatmul.f32.gmra.mxu0 %v872
    %v4744 = vpop.f32.mrf.mxu0
    %v4745 = vadd.f32 0.0, %v4744
    %4746 = vmatmul.f32.gmra.mxu0 %v877
    %v4747 = vpop.f32.mrf.mxu0
    %v4748 = vadd.f32 0.0, %v4747
    %4749 = vmatmul.f32.gmra.mxu0 %v882
    %v4750 = vpop.f32.mrf.mxu0
    %v4751 = vadd.f32 0.0, %v4750
    %4752 = vmatmul.f32.gmra.mxu0 %v887
    %v4753 = vpop.f32.mrf.mxu0
    %v4754 = vadd.f32 0.0, %v4753
    %4755 = vmatmul.f32.gmra.mxu0 %v892
    %v4756 = vpop.f32.mrf.mxu0
    %v4757 = vadd.f32 0.0, %v4756
    %4758 = vmatmul.f32.gmra.mxu0 %v897
    %v4759 = vpop.f32.mrf.mxu0
    %v4760 = vadd.f32 0.0, %v4759
    %4761 = vmatmul.f32.gmra.mxu0 %v902
    %v4762 = vpop.f32.mrf.mxu0
    %v4763 = vadd.f32 0.0, %v4762
    %4764 = vdwg.mxu0
    %4765 = vmatpush.msra.mxu0 %v4655
    %4766 = vmatpush.msra.mxu0 %v4654
    %4767 = vmatpush.msra.mxu0 %v4653
    %4768 = vmatpush.msra.mxu0 %v4652
    %4769 = vmatpush.msra.mxu0 %v4651
    %4770 = vmatpush.msra.mxu0 %v4650
    %4771 = vmatpush.msra.mxu0 %v4649
    %4772 = vmatpush.msra.mxu0 %v4648
    %4773 = vmatpush.msra.mxu0 %v4647
    %4774 = vmatpush.msra.mxu0 %v4646
    %4775 = vmatpush.msra.mxu0 %v4645
    %4776 = vmatpush.msra.mxu0 %v4644
    %4777 = vmatpush.msra.mxu0 %v4643
    %4778 = vmatpush.msra.mxu0 %v4642
    %4779 = vmatpush.msra.mxu0 %v4641
    %4780 = vmatpush.msra.mxu0 %v4640
    %4781 = vmatmul.f32.gmra.mxu0 %v828
    %v4782 = vpop.f32.mrf.mxu0
    %v4783 = vadd.f32 %v4718, %v4782
    %4784 = vmatmul.f32.gmra.mxu0 %v833
    %v4785 = vpop.f32.mrf.mxu0
    %v4786 = vadd.f32 %v4721, %v4785
    %4787 = vmatmul.f32.gmra.mxu0 %v838
    %v4788 = vpop.f32.mrf.mxu0
    %v4789 = vadd.f32 %v4724, %v4788
    %4790 = vmatmul.f32.gmra.mxu0 %v843
    %v4791 = vpop.f32.mrf.mxu0
    %v4792 = vadd.f32 %v4727, %v4791
    %4793 = vmatmul.f32.gmra.mxu0 %v848
    %v4794 = vpop.f32.mrf.mxu0
    %v4795 = vadd.f32 %v4730, %v4794
    %4796 = vmatmul.f32.gmra.mxu0 %v853
    %v4797 = vpop.f32.mrf.mxu0
    %v4798 = vadd.f32 %v4733, %v4797
    %4799 = vmatmul.f32.gmra.mxu0 %v858
    %v4800 = vpop.f32.mrf.mxu0
    %v4801 = vadd.f32 %v4736, %v4800
    %4802 = vmatmul.f32.gmra.mxu0 %v863
    %v4803 = vpop.f32.mrf.mxu0
    %v4804 = vadd.f32 %v4739, %v4803
    %4805 = vmatmul.f32.gmra.mxu0 %v868
    %v4806 = vpop.f32.mrf.mxu0
    %v4807 = vadd.f32 %v4742, %v4806
    %4808 = vmatmul.f32.gmra.mxu0 %v873
    %v4809 = vpop.f32.mrf.mxu0
    %v4810 = vadd.f32 %v4745, %v4809
    %4811 = vmatmul.f32.gmra.mxu0 %v878
    %v4812 = vpop.f32.mrf.mxu0
    %v4813 = vadd.f32 %v4748, %v4812
    %4814 = vmatmul.f32.gmra.mxu0 %v883
    %v4815 = vpop.f32.mrf.mxu0
    %v4816 = vadd.f32 %v4751, %v4815
    %4817 = vmatmul.f32.gmra.mxu0 %v888
    %v4818 = vpop.f32.mrf.mxu0
    %v4819 = vadd.f32 %v4754, %v4818
    %4820 = vmatmul.f32.gmra.mxu0 %v893
    %v4821 = vpop.f32.mrf.mxu0
    %v4822 = vadd.f32 %v4757, %v4821
    %4823 = vmatmul.f32.gmra.mxu0 %v898
    %v4824 = vpop.f32.mrf.mxu0
    %v4825 = vadd.f32 %v4760, %v4824
    %4826 = vmatmul.f32.gmra.mxu0 %v903
    %v4827 = vpop.f32.mrf.mxu0
    %v4828 = vadd.f32 %v4763, %v4827
    %4829 = vdwg.mxu0
    %4830 = vmatpush.msra.mxu0 %v4671
    %4831 = vmatpush.msra.mxu0 %v4670
    %4832 = vmatpush.msra.mxu0 %v4669
    %4833 = vmatpush.msra.mxu0 %v4668
    %4834 = vmatpush.msra.mxu0 %v4667
    %4835 = vmatpush.msra.mxu0 %v4666
    %4836 = vmatpush.msra.mxu0 %v4665
    %4837 = vmatpush.msra.mxu0 %v4664
    %4838 = vmatpush.msra.mxu0 %v4663
    %4839 = vmatpush.msra.mxu0 %v4662
    %4840 = vmatpush.msra.mxu0 %v4661
    %4841 = vmatpush.msra.mxu0 %v4660
    %4842 = vmatpush.msra.mxu0 %v4659
    %4843 = vmatpush.msra.mxu0 %v4658
    %4844 = vmatpush.msra.mxu0 %v4657
    %4845 = vmatpush.msra.mxu0 %v4656
    %4846 = vmatmul.f32.gmra.mxu0 %v829
    %v4847 = vpop.f32.mrf.mxu0
    %v4848 = vadd.f32 %v4783, %v4847
    %4849 = vmatmul.f32.gmra.mxu0 %v834
    %v4850 = vpop.f32.mrf.mxu0
    %v4851 = vadd.f32 %v4786, %v4850
    %4852 = vmatmul.f32.gmra.mxu0 %v839
    %v4853 = vpop.f32.mrf.mxu0
    %v4854 = vadd.f32 %v4789, %v4853
    %4855 = vmatmul.f32.gmra.mxu0 %v844
    %v4856 = vpop.f32.mrf.mxu0
    %v4857 = vadd.f32 %v4792, %v4856
    %4858 = vmatmul.f32.gmra.mxu0 %v849
    %v4859 = vpop.f32.mrf.mxu0
    %v4860 = vadd.f32 %v4795, %v4859
    %4861 = vmatmul.f32.gmra.mxu0 %v854
    %v4862 = vpop.f32.mrf.mxu0
    %v4863 = vadd.f32 %v4798, %v4862
    %4864 = vmatmul.f32.gmra.mxu0 %v859
    %v4865 = vpop.f32.mrf.mxu0
    %v4866 = vadd.f32 %v4801, %v4865
    %4867 = vmatmul.f32.gmra.mxu0 %v864
    %v4868 = vpop.f32.mrf.mxu0
    %v4869 = vadd.f32 %v4804, %v4868
    %4870 = vmatmul.f32.gmra.mxu0 %v869
    %v4871 = vpop.f32.mrf.mxu0
    %v4872 = vadd.f32 %v4807, %v4871
    %4873 = vmatmul.f32.gmra.mxu0 %v874
    %v4874 = vpop.f32.mrf.mxu0
    %v4875 = vadd.f32 %v4810, %v4874
    %4876 = vmatmul.f32.gmra.mxu0 %v879
    %v4877 = vpop.f32.mrf.mxu0
    %v4878 = vadd.f32 %v4813, %v4877
    %4879 = vmatmul.f32.gmra.mxu0 %v884
    %v4880 = vpop.f32.mrf.mxu0
    %v4881 = vadd.f32 %v4816, %v4880
    %4882 = vmatmul.f32.gmra.mxu0 %v889
    %v4883 = vpop.f32.mrf.mxu0
    %v4884 = vadd.f32 %v4819, %v4883
    %4885 = vmatmul.f32.gmra.mxu0 %v894
    %v4886 = vpop.f32.mrf.mxu0
    %v4887 = vadd.f32 %v4822, %v4886
    %4888 = vmatmul.f32.gmra.mxu0 %v899
    %v4889 = vpop.f32.mrf.mxu0
    %v4890 = vadd.f32 %v4825, %v4889
    %4891 = vmatmul.f32.gmra.mxu0 %v904
    %v4892 = vpop.f32.mrf.mxu0
    %v4893 = vadd.f32 %v4828, %v4892
    %4894 = vdwg.mxu0
    %4895 = vmatpush.msra.mxu0 %v4687
    %4896 = vmatpush.msra.mxu0 %v4686
    %4897 = vmatpush.msra.mxu0 %v4685
    %4898 = vmatpush.msra.mxu0 %v4684
    %4899 = vmatpush.msra.mxu0 %v4683
    %4900 = vmatpush.msra.mxu0 %v4682
    %4901 = vmatpush.msra.mxu0 %v4681
    %4902 = vmatpush.msra.mxu0 %v4680
    %4903 = vmatpush.msra.mxu0 %v4679
    %4904 = vmatpush.msra.mxu0 %v4678
    %4905 = vmatpush.msra.mxu0 %v4677
    %4906 = vmatpush.msra.mxu0 %v4676
    %4907 = vmatpush.msra.mxu0 %v4675
    %4908 = vmatpush.msra.mxu0 %v4674
    %4909 = vmatpush.msra.mxu0 %v4673
    %4910 = vmatpush.msra.mxu0 %v4672
    %4911 = vmatmul.f32.gmra.mxu0 %v830
    %v4912 = vpop.f32.mrf.mxu0
    %v4913 = vadd.f32 %v4848, %v4912
    %4914 = vmatmul.f32.gmra.mxu0 %v835
    %v4915 = vpop.f32.mrf.mxu0
    %v4916 = vadd.f32 %v4851, %v4915
    %4917 = vmatmul.f32.gmra.mxu0 %v840
    %v4918 = vpop.f32.mrf.mxu0
    %v4919 = vadd.f32 %v4854, %v4918
    %4920 = vmatmul.f32.gmra.mxu0 %v845
    %v4921 = vpop.f32.mrf.mxu0
    %v4922 = vadd.f32 %v4857, %v4921
    %4923 = vmatmul.f32.gmra.mxu0 %v850
    %v4924 = vpop.f32.mrf.mxu0
    %v4925 = vadd.f32 %v4860, %v4924
    %4926 = vmatmul.f32.gmra.mxu0 %v855
    %v4927 = vpop.f32.mrf.mxu0
    %v4928 = vadd.f32 %v4863, %v4927
    %4929 = vmatmul.f32.gmra.mxu0 %v860
    %v4930 = vpop.f32.mrf.mxu0
    %v4931 = vadd.f32 %v4866, %v4930
    %4932 = vmatmul.f32.gmra.mxu0 %v865
    %v4933 = vpop.f32.mrf.mxu0
    %v4934 = vadd.f32 %v4869, %v4933
    %4935 = vmatmul.f32.gmra.mxu0 %v870
    %v4936 = vpop.f32.mrf.mxu0
    %v4937 = vadd.f32 %v4872, %v4936
    %4938 = vmatmul.f32.gmra.mxu0 %v875
    %v4939 = vpop.f32.mrf.mxu0
    %v4940 = vadd.f32 %v4875, %v4939
    %4941 = vmatmul.f32.gmra.mxu0 %v880
    %v4942 = vpop.f32.mrf.mxu0
    %v4943 = vadd.f32 %v4878, %v4942
    %4944 = vmatmul.f32.gmra.mxu0 %v885
    %v4945 = vpop.f32.mrf.mxu0
    %v4946 = vadd.f32 %v4881, %v4945
    %4947 = vmatmul.f32.gmra.mxu0 %v890
    %v4948 = vpop.f32.mrf.mxu0
    %v4949 = vadd.f32 %v4884, %v4948
    %4950 = vmatmul.f32.gmra.mxu0 %v895
    %v4951 = vpop.f32.mrf.mxu0
    %v4952 = vadd.f32 %v4887, %v4951
    %4953 = vmatmul.f32.gmra.mxu0 %v900
    %v4954 = vpop.f32.mrf.mxu0
    %v4955 = vadd.f32 %v4890, %v4954
    %4956 = vmatmul.f32.gmra.mxu0 %v905
    %v4957 = vpop.f32.mrf.mxu0
    %v4958 = vadd.f32 %v4893, %v4957
    %4959 = vdwg.mxu0
    %4960 = vmatpush.msra.mxu0 0.0
    %4961 = vmatpush.msra.mxu0 0.0
    %4962 = vmatpush.msra.mxu0 0.0
    %4963 = vmatpush.msra.mxu0 0.0
    %4964 = vmatpush.msra.mxu0 %v4699
    %4965 = vmatpush.msra.mxu0 %v4698
    %4966 = vmatpush.msra.mxu0 %v4697
    %4967 = vmatpush.msra.mxu0 %v4696
    %4968 = vmatpush.msra.mxu0 %v4695
    %4969 = vmatpush.msra.mxu0 %v4694
    %4970 = vmatpush.msra.mxu0 %v4693
    %4971 = vmatpush.msra.mxu0 %v4692
    %4972 = vmatpush.msra.mxu0 %v4691
    %4973 = vmatpush.msra.mxu0 %v4690
    %4974 = vmatpush.msra.mxu0 %v4689
    %4975 = vmatpush.msra.mxu0 %v4688
    %4976 = vmatmul.f32.gmra.mxu0 %v909
    %v4977 = vpop.f32.mrf.mxu0
    %v4978 = vadd.f32 %v4913, %v4977
    %4979 = vmatmul.f32.gmra.mxu0 %v912
    %v4980 = vpop.f32.mrf.mxu0
    %v4981 = vadd.f32 %v4916, %v4980
    %4982 = vmatmul.f32.gmra.mxu0 %v915
    %v4983 = vpop.f32.mrf.mxu0
    %v4984 = vadd.f32 %v4919, %v4983
    %4985 = vmatmul.f32.gmra.mxu0 %v918
    %v4986 = vpop.f32.mrf.mxu0
    %v4987 = vadd.f32 %v4922, %v4986
    %4988 = vmatmul.f32.gmra.mxu0 %v921
    %v4989 = vpop.f32.mrf.mxu0
    %v4990 = vadd.f32 %v4925, %v4989
    %4991 = vmatmul.f32.gmra.mxu0 %v924
    %v4992 = vpop.f32.mrf.mxu0
    %v4993 = vadd.f32 %v4928, %v4992
    %4994 = vmatmul.f32.gmra.mxu0 %v927
    %v4995 = vpop.f32.mrf.mxu0
    %v4996 = vadd.f32 %v4931, %v4995
    %4997 = vmatmul.f32.gmra.mxu0 %v930
    %v4998 = vpop.f32.mrf.mxu0
    %v4999 = vadd.f32 %v4934, %v4998
    %5000 = vmatmul.f32.gmra.mxu0 %v933
    %v5001 = vpop.f32.mrf.mxu0
    %v5002 = vadd.f32 %v4937, %v5001
    %5003 = vmatmul.f32.gmra.mxu0 %v936
    %v5004 = vpop.f32.mrf.mxu0
    %v5005 = vadd.f32 %v4940, %v5004
    %5006 = vmatmul.f32.gmra.mxu0 %v939
    %v5007 = vpop.f32.mrf.mxu0
    %v5008 = vadd.f32 %v4943, %v5007
    %5009 = vmatmul.f32.gmra.mxu0 %v942
    %v5010 = vpop.f32.mrf.mxu0
    %v5011 = vadd.f32 %v4946, %v5010
    %5012 = vmatmul.f32.gmra.mxu0 %v945
    %v5013 = vpop.f32.mrf.mxu0
    %v5014 = vadd.f32 %v4949, %v5013
    %5015 = vmatmul.f32.gmra.mxu0 %v948
    %v5016 = vpop.f32.mrf.mxu0
    %v5017 = vadd.f32 %v4952, %v5016
    %5018 = vmatmul.f32.gmra.mxu0 %v951
    %v5019 = vpop.f32.mrf.mxu0
    %v5020 = vadd.f32 %v4955, %v5019
    %5021 = vmatmul.f32.gmra.mxu0 %v954
    %v5022 = vpop.f32.mrf.mxu0
    %v5023 = vadd.f32 %v4958, %v5022
    %5024 = vdwg.mxu0
    %s5025 = scalar_lea.vmem %s4, 224
    %v5026 = vld [vmem:[%s5025] sm:$0xff]
    %v5027 = vld [vmem:[%s5025 + $0x8] sm:$0xff]
    %v5028 = vld [vmem:[%s5025 + $0x10] sm:$0xff]
    %v5029 = vld [vmem:[%s5025 + $0x18] sm:$0xff]
    %v5031 = vsel %vm601, %v4978, 0
    %v5034 = vsel %vm601, %v4981, 0
    %v5037 = vsel %vm601, %v4984, 0
    %v5040 = vsel %vm601, %v4987, 0
    %v5043 = vsel %vm601, %v4990, 0
    %v5046 = vsel %vm601, %v4993, 0
    %v5049 = vsel %vm601, %v4996, 0
    %v5052 = vsel %vm601, %v4999, 0
    %v5055 = vsel %vm601, %v5002, 0
    %v5058 = vsel %vm601, %v5005, 0
    %v5061 = vsel %vm601, %v5008, 0
    %v5064 = vsel %vm601, %v5011, 0
    %v5067 = vsel %vm601, %v5014, 0
    %v5070 = vsel %vm601, %v5017, 0
    %v5073 = vsel %vm601, %v5020, 0
    %v5076 = vsel %vm601, %v5023, 0
    %5078 = vmatpush.msra.mxu0 0.0
    %5079 = vmatpush.msra.mxu0 0.0
    %5080 = vmatpush.msra.mxu0 0.0
    %5081 = vmatpush.msra.mxu0 0.0
    %5082 = vmatpush.msra.mxu0 0.0
    %5083 = vmatpush.msra.mxu0 0.0
    %5084 = vmatpush.msra.mxu0 0.0
    %5085 = vmatpush.msra.mxu0 0.0
    %5086 = vmatpush.msra.mxu0 0.0
    %5087 = vmatpush.msra.mxu0 0.0
    %5088 = vmatpush.msra.mxu0 0.0
    %5089 = vmatpush.msra.mxu0 0.0
    %5090 = vmatpush.msra.mxu0 %v5029
    %5091 = vmatpush.msra.mxu0 %v5028
    %5092 = vmatpush.msra.mxu0 %v5027
    %5093 = vmatpush.msra.mxu0 %v5026
    %5094 = vmatmul.f32.gmra.mxu0 %v5031
    %v5095 = vpop.f32.mrf.mxu0
    %v5096 = vadd.f32 0.0, %v5095
    %5097 = vmatmul.f32.gmra.mxu0 %v5034
    %v5098 = vpop.f32.mrf.mxu0
    %v5099 = vadd.f32 0.0, %v5098
    %5100 = vmatmul.f32.gmra.mxu0 %v5037
    %v5101 = vpop.f32.mrf.mxu0
    %v5102 = vadd.f32 0.0, %v5101
    %5103 = vmatmul.f32.gmra.mxu0 %v5040
    %v5104 = vpop.f32.mrf.mxu0
    %v5105 = vadd.f32 0.0, %v5104
    %5106 = vmatmul.f32.gmra.mxu0 %v5043
    %v5107 = vpop.f32.mrf.mxu0
    %v5108 = vadd.f32 0.0, %v5107
    %5109 = vmatmul.f32.gmra.mxu0 %v5046
    %v5110 = vpop.f32.mrf.mxu0
    %v5111 = vadd.f32 0.0, %v5110
    %5112 = vmatmul.f32.gmra.mxu0 %v5049
    %v5113 = vpop.f32.mrf.mxu0
    %v5114 = vadd.f32 0.0, %v5113
    %5115 = vmatmul.f32.gmra.mxu0 %v5052
    %v5116 = vpop.f32.mrf.mxu0
    %v5117 = vadd.f32 0.0, %v5116
    %5118 = vmatmul.f32.gmra.mxu0 %v5055
    %v5119 = vpop.f32.mrf.mxu0
    %v5120 = vadd.f32 0.0, %v5119
    %5121 = vmatmul.f32.gmra.mxu0 %v5058
    %v5122 = vpop.f32.mrf.mxu0
    %v5123 = vadd.f32 0.0, %v5122
    %5124 = vmatmul.f32.gmra.mxu0 %v5061
    %v5125 = vpop.f32.mrf.mxu0
    %v5126 = vadd.f32 0.0, %v5125
    %5127 = vmatmul.f32.gmra.mxu0 %v5064
    %v5128 = vpop.f32.mrf.mxu0
    %v5129 = vadd.f32 0.0, %v5128
    %5130 = vmatmul.f32.gmra.mxu0 %v5067
    %v5131 = vpop.f32.mrf.mxu0
    %v5132 = vadd.f32 0.0, %v5131
    %5133 = vmatmul.f32.gmra.mxu0 %v5070
    %v5134 = vpop.f32.mrf.mxu0
    %v5135 = vadd.f32 0.0, %v5134
    %5136 = vmatmul.f32.gmra.mxu0 %v5073
    %v5137 = vpop.f32.mrf.mxu0
    %v5138 = vadd.f32 0.0, %v5137
    %5139 = vmatmul.f32.gmra.mxu0 %v5076
    %v5140 = vpop.f32.mrf.mxu0
    %v5141 = vadd.f32 0.0, %v5140
    %5142 = vdwg.mxu0
    %v5143 = vadd.f32 %v4608, %v5096
    %v5144 = vadd.f32 %v4609, %v5099
    %v5145 = vadd.f32 %v4610, %v5102
    %v5146 = vadd.f32 %v4611, %v5105
    %v5147 = vadd.f32 %v4612, %v5108
    %v5148 = vadd.f32 %v4613, %v5111
    %v5149 = vadd.f32 %v4614, %v5114
    %v5150 = vadd.f32 %v4615, %v5117
    %v5151 = vadd.f32 %v4616, %v5120
    %v5152 = vadd.f32 %v4617, %v5123
    %v5153 = vadd.f32 %v4618, %v5126
    %v5154 = vadd.f32 %v4619, %v5129
    %v5155 = vadd.f32 %v4620, %v5132
    %v5156 = vadd.f32 %v4621, %v5135
    %v5157 = vadd.f32 %v4622, %v5138
    %v5158 = vadd.f32 %v4623, %v5141
    %v5159 = vld [vmem:[#allocation2 + $0x26] sm:$0xff]
    %v5160 = vld [vmem:[#allocation2 + $0x2e] sm:$0xff]
    %v5161 = vld [vmem:[#allocation2 + $0x36] sm:$0xff]
    %v5162 = vld [vmem:[#allocation2 + $0x3e] sm:$0xff]
    %v5163 = vld [vmem:[#allocation2 + $0x46] sm:$0xff]
    %v5164 = vld [vmem:[#allocation2 + $0x4e] sm:$0xff]
    %v5165 = vld [vmem:[#allocation2 + $0x56] sm:$0xff]
    %v5166 = vld [vmem:[#allocation2 + $0x5e] sm:$0xff]
    %v5167 = vld [vmem:[#allocation2 + $0x66] sm:$0xff]
    %v5168 = vld [vmem:[#allocation2 + $0x6e] sm:$0xff]
    %v5169 = vld [vmem:[#allocation2 + $0x76] sm:$0xff]
    %v5170 = vld [vmem:[#allocation2 + $0x7e] sm:$0xff]
    %v5171 = vld [vmem:[#allocation2 + $0x86] sm:$0xff]
    %v5172 = vld [vmem:[#allocation2 + $0x8e] sm:$0xff]
    %v5173 = vld [vmem:[#allocation2 + $0x96] sm:$0xff]
    %v5174 = vld [vmem:[#allocation2 + $0x9e] sm:$0xff]
    %v5175 = vld [vmem:[#allocation2 + $0xa6] sm:$0xff]
    %v5176 = vld [vmem:[#allocation2 + $0xae] sm:$0xff]
    %v5177 = vld [vmem:[#allocation2 + $0xb6] sm:$0xff]
    %v5178 = vld [vmem:[#allocation2 + $0xbe] sm:$0xff]
    %v5179 = vld [vmem:[#allocation2 + $0xc6] sm:$0xff]
    %v5180 = vld [vmem:[#allocation2 + $0xce] sm:$0xff]
    %v5181 = vld [vmem:[#allocation2 + $0xd6] sm:$0xff]
    %v5182 = vld [vmem:[#allocation2 + $0xde] sm:$0xff]
    %v5183 = vld [vmem:[#allocation2 + $0xe6] sm:$0xff]
    %v5184 = vld [vmem:[#allocation2 + $0xee] sm:$0xff]
    %v5185 = vld [vmem:[#allocation2 + $0xf6] sm:$0xff]
    %v5186 = vld [vmem:[#allocation2 + $0xfe] sm:$0xff]
    %v5187 = vld [vmem:[#allocation2 + $0x106] sm:$0xff]
    %v5188 = vld [vmem:[#allocation2 + $0x10e] sm:$0xff]
    %v5189 = vld [vmem:[#allocation2 + $0x116] sm:$0xff]
    %v5190 = vld [vmem:[#allocation2 + $0x11e] sm:$0xff]
    %v5191 = vld [vmem:[#allocation2 + $0x126] sm:$0xff]
    %v5192 = vld [vmem:[#allocation2 + $0x12e] sm:$0xff]
    %v5193 = vld [vmem:[#allocation2 + $0x136] sm:$0xff]
    %v5194 = vld [vmem:[#allocation2 + $0x13e] sm:$0xff]
    %v5195 = vld [vmem:[#allocation2 + $0x146] sm:$0xff]
    %v5196 = vld [vmem:[#allocation2 + $0x14e] sm:$0xff]
    %v5197 = vld [vmem:[#allocation2 + $0x156] sm:$0xff]
    %v5198 = vld [vmem:[#allocation2 + $0x15e] sm:$0xff]
    %v5199 = vld [vmem:[#allocation2 + $0x166] sm:$0xff]
    %v5200 = vld [vmem:[#allocation2 + $0x16e] sm:$0xff]
    %v5201 = vld [vmem:[#allocation2 + $0x176] sm:$0xff]
    %v5202 = vld [vmem:[#allocation2 + $0x17e] sm:$0xff]
    %v5203 = vld [vmem:[#allocation2 + $0x186] sm:$0xff]
    %v5204 = vld [vmem:[#allocation2 + $0x18e] sm:$0xff]
    %v5205 = vld [vmem:[#allocation2 + $0x196] sm:$0xff]
    %v5206 = vld [vmem:[#allocation2 + $0x19e] sm:$0xff]
    %v5207 = vld [vmem:[#allocation2 + $0x1a6] sm:$0xff]
    %v5208 = vld [vmem:[#allocation2 + $0x1ae] sm:$0xff]
    %v5209 = vld [vmem:[#allocation2 + $0x1b6] sm:$0xff]
    %v5210 = vld [vmem:[#allocation2 + $0x1be] sm:$0xff]
    %v5211 = vld [vmem:[#allocation2 + $0x1c6] sm:$0xff]
    %v5212 = vld [vmem:[#allocation2 + $0x1ce] sm:$0xff]
    %v5213 = vld [vmem:[#allocation2 + $0x1d6] sm:$0xff]
    %v5214 = vld [vmem:[#allocation2 + $0x1de] sm:$0xff]
    %v5215 = vld [vmem:[#allocation2 + $0x1e6] sm:$0xff]
    %v5216 = vld [vmem:[#allocation2 + $0x1ee] sm:$0xff]
    %v5217 = vld [vmem:[#allocation2 + $0x1f6] sm:$0xff]
    %v5218 = vld [vmem:[#allocation2 + $0x1fe] sm:$0xff]
    %v5219 = vld [vmem:[#allocation2 + $0x206] sm:$0xff]
    %v5220 = vld [vmem:[#allocation2 + $0x20e] sm:$0xff]
    %v5221 = vld [vmem:[#allocation2 + $0x216] sm:$0xff]
    %v5222 = vld [vmem:[#allocation2 + $0x21e] sm:$0xff]
    %v5223 = vld [vmem:[#allocation2 + $0x226] sm:$0xff]
    %v5224 = vld [vmem:[#allocation2 + $0x22e] sm:$0xff]
    %v5225 = vld [vmem:[#allocation2 + $0x236] sm:$0xff]
    %v5226 = vld [vmem:[#allocation2 + $0x23e] sm:$0xff]
    %v5227 = vld [vmem:[#allocation2 + $0x246] sm:$0xff]
    %v5228 = vld [vmem:[#allocation2 + $0x24e] sm:$0xff]
    %v5229 = vld [vmem:[#allocation2 + $0x256] sm:$0xff]
    %v5230 = vld [vmem:[#allocation2 + $0x25e] sm:$0xff]
    %v5231 = vld [vmem:[#allocation2 + $0x266] sm:$0xff]
    %v5232 = vld [vmem:[#allocation2 + $0x26e] sm:$0xff]
    %v5233 = vld [vmem:[#allocation2 + $0x276] sm:$0xff]
    %v5234 = vld [vmem:[#allocation2 + $0x27e] sm:$0xff]
    %5235 = vmatpush.msra.mxu0 %v5174
    %5236 = vmatpush.msra.mxu0 %v5173
    %5237 = vmatpush.msra.mxu0 %v5172
    %5238 = vmatpush.msra.mxu0 %v5171
    %5239 = vmatpush.msra.mxu0 %v5170
    %5240 = vmatpush.msra.mxu0 %v5169
    %5241 = vmatpush.msra.mxu0 %v5168
    %5242 = vmatpush.msra.mxu0 %v5167
    %5243 = vmatpush.msra.mxu0 %v5166
    %5244 = vmatpush.msra.mxu0 %v5165
    %5245 = vmatpush.msra.mxu0 %v5164
    %5246 = vmatpush.msra.mxu0 %v5163
    %5247 = vmatpush.msra.mxu0 %v5162
    %5248 = vmatpush.msra.mxu0 %v5161
    %5249 = vmatpush.msra.mxu0 %v5160
    %5250 = vmatpush.msra.mxu0 %v5159
    %5251 = vmatmul.f32.gmra.mxu0 %v827
    %v5252 = vpop.f32.mrf.mxu0
    %v5253 = vadd.f32 0.0, %v5252
    %5254 = vmatmul.f32.gmra.mxu0 %v832
    %v5255 = vpop.f32.mrf.mxu0
    %v5256 = vadd.f32 0.0, %v5255
    %5257 = vmatmul.f32.gmra.mxu0 %v837
    %v5258 = vpop.f32.mrf.mxu0
    %v5259 = vadd.f32 0.0, %v5258
    %5260 = vmatmul.f32.gmra.mxu0 %v842
    %v5261 = vpop.f32.mrf.mxu0
    %v5262 = vadd.f32 0.0, %v5261
    %5263 = vmatmul.f32.gmra.mxu0 %v847
    %v5264 = vpop.f32.mrf.mxu0
    %v5265 = vadd.f32 0.0, %v5264
    %5266 = vmatmul.f32.gmra.mxu0 %v852
    %v5267 = vpop.f32.mrf.mxu0
    %v5268 = vadd.f32 0.0, %v5267
    %5269 = vmatmul.f32.gmra.mxu0 %v857
    %v5270 = vpop.f32.mrf.mxu0
    %v5271 = vadd.f32 0.0, %v5270
    %5272 = vmatmul.f32.gmra.mxu0 %v862
    %v5273 = vpop.f32.mrf.mxu0
    %v5274 = vadd.f32 0.0, %v5273
    %5275 = vmatmul.f32.gmra.mxu0 %v867
    %v5276 = vpop.f32.mrf.mxu0
    %v5277 = vadd.f32 0.0, %v5276
    %5278 = vmatmul.f32.gmra.mxu0 %v872
    %v5279 = vpop.f32.mrf.mxu0
    %v5280 = vadd.f32 0.0, %v5279
    %5281 = vmatmul.f32.gmra.mxu0 %v877
    %v5282 = vpop.f32.mrf.mxu0
    %v5283 = vadd.f32 0.0, %v5282
    %5284 = vmatmul.f32.gmra.mxu0 %v882
    %v5285 = vpop.f32.mrf.mxu0
    %v5286 = vadd.f32 0.0, %v5285
    %5287 = vmatmul.f32.gmra.mxu0 %v887
    %v5288 = vpop.f32.mrf.mxu0
    %v5289 = vadd.f32 0.0, %v5288
    %5290 = vmatmul.f32.gmra.mxu0 %v892
    %v5291 = vpop.f32.mrf.mxu0
    %v5292 = vadd.f32 0.0, %v5291
    %5293 = vmatmul.f32.gmra.mxu0 %v897
    %v5294 = vpop.f32.mrf.mxu0
    %v5295 = vadd.f32 0.0, %v5294
    %5296 = vmatmul.f32.gmra.mxu0 %v902
    %v5297 = vpop.f32.mrf.mxu0
    %v5298 = vadd.f32 0.0, %v5297
    %5299 = vdwg.mxu0
    %5300 = vmatpush.msra.mxu0 %v5190
    %5301 = vmatpush.msra.mxu0 %v5189
    %5302 = vmatpush.msra.mxu0 %v5188
    %5303 = vmatpush.msra.mxu0 %v5187
    %5304 = vmatpush.msra.mxu0 %v5186
    %5305 = vmatpush.msra.mxu0 %v5185
    %5306 = vmatpush.msra.mxu0 %v5184
    %5307 = vmatpush.msra.mxu0 %v5183
    %5308 = vmatpush.msra.mxu0 %v5182
    %5309 = vmatpush.msra.mxu0 %v5181
    %5310 = vmatpush.msra.mxu0 %v5180
    %5311 = vmatpush.msra.mxu0 %v5179
    %5312 = vmatpush.msra.mxu0 %v5178
    %5313 = vmatpush.msra.mxu0 %v5177
    %5314 = vmatpush.msra.mxu0 %v5176
    %5315 = vmatpush.msra.mxu0 %v5175
    %5316 = vmatmul.f32.gmra.mxu0 %v828
    %v5317 = vpop.f32.mrf.mxu0
    %v5318 = vadd.f32 %v5253, %v5317
    %5319 = vmatmul.f32.gmra.mxu0 %v833
    %v5320 = vpop.f32.mrf.mxu0
    %v5321 = vadd.f32 %v5256, %v5320
    %5322 = vmatmul.f32.gmra.mxu0 %v838
    %v5323 = vpop.f32.mrf.mxu0
    %v5324 = vadd.f32 %v5259, %v5323
    %5325 = vmatmul.f32.gmra.mxu0 %v843
    %v5326 = vpop.f32.mrf.mxu0
    %v5327 = vadd.f32 %v5262, %v5326
    %5328 = vmatmul.f32.gmra.mxu0 %v848
    %v5329 = vpop.f32.mrf.mxu0
    %v5330 = vadd.f32 %v5265, %v5329
    %5331 = vmatmul.f32.gmra.mxu0 %v853
    %v5332 = vpop.f32.mrf.mxu0
    %v5333 = vadd.f32 %v5268, %v5332
    %5334 = vmatmul.f32.gmra.mxu0 %v858
    %v5335 = vpop.f32.mrf.mxu0
    %v5336 = vadd.f32 %v5271, %v5335
    %5337 = vmatmul.f32.gmra.mxu0 %v863
    %v5338 = vpop.f32.mrf.mxu0
    %v5339 = vadd.f32 %v5274, %v5338
    %5340 = vmatmul.f32.gmra.mxu0 %v868
    %v5341 = vpop.f32.mrf.mxu0
    %v5342 = vadd.f32 %v5277, %v5341
    %5343 = vmatmul.f32.gmra.mxu0 %v873
    %v5344 = vpop.f32.mrf.mxu0
    %v5345 = vadd.f32 %v5280, %v5344
    %5346 = vmatmul.f32.gmra.mxu0 %v878
    %v5347 = vpop.f32.mrf.mxu0
    %v5348 = vadd.f32 %v5283, %v5347
    %5349 = vmatmul.f32.gmra.mxu0 %v883
    %v5350 = vpop.f32.mrf.mxu0
    %v5351 = vadd.f32 %v5286, %v5350
    %5352 = vmatmul.f32.gmra.mxu0 %v888
    %v5353 = vpop.f32.mrf.mxu0
    %v5354 = vadd.f32 %v5289, %v5353
    %5355 = vmatmul.f32.gmra.mxu0 %v893
    %v5356 = vpop.f32.mrf.mxu0
    %v5357 = vadd.f32 %v5292, %v5356
    %5358 = vmatmul.f32.gmra.mxu0 %v898
    %v5359 = vpop.f32.mrf.mxu0
    %v5360 = vadd.f32 %v5295, %v5359
    %5361 = vmatmul.f32.gmra.mxu0 %v903
    %v5362 = vpop.f32.mrf.mxu0
    %v5363 = vadd.f32 %v5298, %v5362
    %5364 = vdwg.mxu0
    %5365 = vmatpush.msra.mxu0 %v5206
    %5366 = vmatpush.msra.mxu0 %v5205
    %5367 = vmatpush.msra.mxu0 %v5204
    %5368 = vmatpush.msra.mxu0 %v5203
    %5369 = vmatpush.msra.mxu0 %v5202
    %5370 = vmatpush.msra.mxu0 %v5201
    %5371 = vmatpush.msra.mxu0 %v5200
    %5372 = vmatpush.msra.mxu0 %v5199
    %5373 = vmatpush.msra.mxu0 %v5198
    %5374 = vmatpush.msra.mxu0 %v5197
    %5375 = vmatpush.msra.mxu0 %v5196
    %5376 = vmatpush.msra.mxu0 %v5195
    %5377 = vmatpush.msra.mxu0 %v5194
    %5378 = vmatpush.msra.mxu0 %v5193
    %5379 = vmatpush.msra.mxu0 %v5192
    %5380 = vmatpush.msra.mxu0 %v5191
    %5381 = vmatmul.f32.gmra.mxu0 %v829
    %v5382 = vpop.f32.mrf.mxu0
    %v5383 = vadd.f32 %v5318, %v5382
    %5384 = vmatmul.f32.gmra.mxu0 %v834
    %v5385 = vpop.f32.mrf.mxu0
    %v5386 = vadd.f32 %v5321, %v5385
    %5387 = vmatmul.f32.gmra.mxu0 %v839
    %v5388 = vpop.f32.mrf.mxu0
    %v5389 = vadd.f32 %v5324, %v5388
    %5390 = vmatmul.f32.gmra.mxu0 %v844
    %v5391 = vpop.f32.mrf.mxu0
    %v5392 = vadd.f32 %v5327, %v5391
    %5393 = vmatmul.f32.gmra.mxu0 %v849
    %v5394 = vpop.f32.mrf.mxu0
    %v5395 = vadd.f32 %v5330, %v5394
    %5396 = vmatmul.f32.gmra.mxu0 %v854
    %v5397 = vpop.f32.mrf.mxu0
    %v5398 = vadd.f32 %v5333, %v5397
    %5399 = vmatmul.f32.gmra.mxu0 %v859
    %v5400 = vpop.f32.mrf.mxu0
    %v5401 = vadd.f32 %v5336, %v5400
    %5402 = vmatmul.f32.gmra.mxu0 %v864
    %v5403 = vpop.f32.mrf.mxu0
    %v5404 = vadd.f32 %v5339, %v5403
    %5405 = vmatmul.f32.gmra.mxu0 %v869
    %v5406 = vpop.f32.mrf.mxu0
    %v5407 = vadd.f32 %v5342, %v5406
    %5408 = vmatmul.f32.gmra.mxu0 %v874
    %v5409 = vpop.f32.mrf.mxu0
    %v5410 = vadd.f32 %v5345, %v5409
    %5411 = vmatmul.f32.gmra.mxu0 %v879
    %v5412 = vpop.f32.mrf.mxu0
    %v5413 = vadd.f32 %v5348, %v5412
    %5414 = vmatmul.f32.gmra.mxu0 %v884
    %v5415 = vpop.f32.mrf.mxu0
    %v5416 = vadd.f32 %v5351, %v5415
    %5417 = vmatmul.f32.gmra.mxu0 %v889
    %v5418 = vpop.f32.mrf.mxu0
    %v5419 = vadd.f32 %v5354, %v5418
    %5420 = vmatmul.f32.gmra.mxu0 %v894
    %v5421 = vpop.f32.mrf.mxu0
    %v5422 = vadd.f32 %v5357, %v5421
    %5423 = vmatmul.f32.gmra.mxu0 %v899
    %v5424 = vpop.f32.mrf.mxu0
    %v5425 = vadd.f32 %v5360, %v5424
    %5426 = vmatmul.f32.gmra.mxu0 %v904
    %v5427 = vpop.f32.mrf.mxu0
    %v5428 = vadd.f32 %v5363, %v5427
    %5429 = vdwg.mxu0
    %5430 = vmatpush.msra.mxu0 %v5222
    %5431 = vmatpush.msra.mxu0 %v5221
    %5432 = vmatpush.msra.mxu0 %v5220
    %5433 = vmatpush.msra.mxu0 %v5219
    %5434 = vmatpush.msra.mxu0 %v5218
    %5435 = vmatpush.msra.mxu0 %v5217
    %5436 = vmatpush.msra.mxu0 %v5216
    %5437 = vmatpush.msra.mxu0 %v5215
    %5438 = vmatpush.msra.mxu0 %v5214
    %5439 = vmatpush.msra.mxu0 %v5213
    %5440 = vmatpush.msra.mxu0 %v5212
    %5441 = vmatpush.msra.mxu0 %v5211
    %5442 = vmatpush.msra.mxu0 %v5210
    %5443 = vmatpush.msra.mxu0 %v5209
    %5444 = vmatpush.msra.mxu0 %v5208
    %5445 = vmatpush.msra.mxu0 %v5207
    %5446 = vmatmul.f32.gmra.mxu0 %v830
    %v5447 = vpop.f32.mrf.mxu0
    %v5448 = vadd.f32 %v5383, %v5447
    %5449 = vmatmul.f32.gmra.mxu0 %v835
    %v5450 = vpop.f32.mrf.mxu0
    %v5451 = vadd.f32 %v5386, %v5450
    %5452 = vmatmul.f32.gmra.mxu0 %v840
    %v5453 = vpop.f32.mrf.mxu0
    %v5454 = vadd.f32 %v5389, %v5453
    %5455 = vmatmul.f32.gmra.mxu0 %v845
    %v5456 = vpop.f32.mrf.mxu0
    %v5457 = vadd.f32 %v5392, %v5456
    %5458 = vmatmul.f32.gmra.mxu0 %v850
    %v5459 = vpop.f32.mrf.mxu0
    %v5460 = vadd.f32 %v5395, %v5459
    %5461 = vmatmul.f32.gmra.mxu0 %v855
    %v5462 = vpop.f32.mrf.mxu0
    %v5463 = vadd.f32 %v5398, %v5462
    %5464 = vmatmul.f32.gmra.mxu0 %v860
    %v5465 = vpop.f32.mrf.mxu0
    %v5466 = vadd.f32 %v5401, %v5465
    %5467 = vmatmul.f32.gmra.mxu0 %v865
    %v5468 = vpop.f32.mrf.mxu0
    %v5469 = vadd.f32 %v5404, %v5468
    %5470 = vmatmul.f32.gmra.mxu0 %v870
    %v5471 = vpop.f32.mrf.mxu0
    %v5472 = vadd.f32 %v5407, %v5471
    %5473 = vmatmul.f32.gmra.mxu0 %v875
    %v5474 = vpop.f32.mrf.mxu0
    %v5475 = vadd.f32 %v5410, %v5474
    %5476 = vmatmul.f32.gmra.mxu0 %v880
    %v5477 = vpop.f32.mrf.mxu0
    %v5478 = vadd.f32 %v5413, %v5477
    %5479 = vmatmul.f32.gmra.mxu0 %v885
    %v5480 = vpop.f32.mrf.mxu0
    %v5481 = vadd.f32 %v5416, %v5480
    %5482 = vmatmul.f32.gmra.mxu0 %v890
    %v5483 = vpop.f32.mrf.mxu0
    %v5484 = vadd.f32 %v5419, %v5483
    %5485 = vmatmul.f32.gmra.mxu0 %v895
    %v5486 = vpop.f32.mrf.mxu0
    %v5487 = vadd.f32 %v5422, %v5486
    %5488 = vmatmul.f32.gmra.mxu0 %v900
    %v5489 = vpop.f32.mrf.mxu0
    %v5490 = vadd.f32 %v5425, %v5489
    %5491 = vmatmul.f32.gmra.mxu0 %v905
    %v5492 = vpop.f32.mrf.mxu0
    %v5493 = vadd.f32 %v5428, %v5492
    %5494 = vdwg.mxu0
    %5495 = vmatpush.msra.mxu0 0.0
    %5496 = vmatpush.msra.mxu0 0.0
    %5497 = vmatpush.msra.mxu0 0.0
    %5498 = vmatpush.msra.mxu0 0.0
    %5499 = vmatpush.msra.mxu0 %v5234
    %5500 = vmatpush.msra.mxu0 %v5233
    %5501 = vmatpush.msra.mxu0 %v5232
    %5502 = vmatpush.msra.mxu0 %v5231
    %5503 = vmatpush.msra.mxu0 %v5230
    %5504 = vmatpush.msra.mxu0 %v5229
    %5505 = vmatpush.msra.mxu0 %v5228
    %5506 = vmatpush.msra.mxu0 %v5227
    %5507 = vmatpush.msra.mxu0 %v5226
    %5508 = vmatpush.msra.mxu0 %v5225
    %5509 = vmatpush.msra.mxu0 %v5224
    %5510 = vmatpush.msra.mxu0 %v5223
    %5511 = vmatmul.f32.gmra.mxu0 %v909
    %v5512 = vpop.f32.mrf.mxu0
    %v5513 = vadd.f32 %v5448, %v5512
    %5514 = vmatmul.f32.gmra.mxu0 %v912
    %v5515 = vpop.f32.mrf.mxu0
    %v5516 = vadd.f32 %v5451, %v5515
    %5517 = vmatmul.f32.gmra.mxu0 %v915
    %v5518 = vpop.f32.mrf.mxu0
    %v5519 = vadd.f32 %v5454, %v5518
    %5520 = vmatmul.f32.gmra.mxu0 %v918
    %v5521 = vpop.f32.mrf.mxu0
    %v5522 = vadd.f32 %v5457, %v5521
    %5523 = vmatmul.f32.gmra.mxu0 %v921
    %v5524 = vpop.f32.mrf.mxu0
    %v5525 = vadd.f32 %v5460, %v5524
    %5526 = vmatmul.f32.gmra.mxu0 %v924
    %v5527 = vpop.f32.mrf.mxu0
    %v5528 = vadd.f32 %v5463, %v5527
    %5529 = vmatmul.f32.gmra.mxu0 %v927
    %v5530 = vpop.f32.mrf.mxu0
    %v5531 = vadd.f32 %v5466, %v5530
    %5532 = vmatmul.f32.gmra.mxu0 %v930
    %v5533 = vpop.f32.mrf.mxu0
    %v5534 = vadd.f32 %v5469, %v5533
    %5535 = vmatmul.f32.gmra.mxu0 %v933
    %v5536 = vpop.f32.mrf.mxu0
    %v5537 = vadd.f32 %v5472, %v5536
    %5538 = vmatmul.f32.gmra.mxu0 %v936
    %v5539 = vpop.f32.mrf.mxu0
    %v5540 = vadd.f32 %v5475, %v5539
    %5541 = vmatmul.f32.gmra.mxu0 %v939
    %v5542 = vpop.f32.mrf.mxu0
    %v5543 = vadd.f32 %v5478, %v5542
    %5544 = vmatmul.f32.gmra.mxu0 %v942
    %v5545 = vpop.f32.mrf.mxu0
    %v5546 = vadd.f32 %v5481, %v5545
    %5547 = vmatmul.f32.gmra.mxu0 %v945
    %v5548 = vpop.f32.mrf.mxu0
    %v5549 = vadd.f32 %v5484, %v5548
    %5550 = vmatmul.f32.gmra.mxu0 %v948
    %v5551 = vpop.f32.mrf.mxu0
    %v5552 = vadd.f32 %v5487, %v5551
    %5553 = vmatmul.f32.gmra.mxu0 %v951
    %v5554 = vpop.f32.mrf.mxu0
    %v5555 = vadd.f32 %v5490, %v5554
    %5556 = vmatmul.f32.gmra.mxu0 %v954
    %v5557 = vpop.f32.mrf.mxu0
    %v5558 = vadd.f32 %v5493, %v5557
    %5559 = vdwg.mxu0
    %s5560 = scalar_lea.vmem %s4, 256
    %v5561 = vld [vmem:[%s5560] sm:$0xff]
    %v5562 = vld [vmem:[%s5560 + $0x8] sm:$0xff]
    %v5563 = vld [vmem:[%s5560 + $0x10] sm:$0xff]
    %v5564 = vld [vmem:[%s5560 + $0x18] sm:$0xff]
    %v5566 = vsel %vm601, %v5513, 0
    %v5569 = vsel %vm601, %v5516, 0
    %v5572 = vsel %vm601, %v5519, 0
    %v5575 = vsel %vm601, %v5522, 0
    %v5578 = vsel %vm601, %v5525, 0
    %v5581 = vsel %vm601, %v5528, 0
    %v5584 = vsel %vm601, %v5531, 0
    %v5587 = vsel %vm601, %v5534, 0
    %v5590 = vsel %vm601, %v5537, 0
    %v5593 = vsel %vm601, %v5540, 0
    %v5596 = vsel %vm601, %v5543, 0
    %v5599 = vsel %vm601, %v5546, 0
    %v5602 = vsel %vm601, %v5549, 0
    %v5605 = vsel %vm601, %v5552, 0
    %v5608 = vsel %vm601, %v5555, 0
    %v5611 = vsel %vm601, %v5558, 0
    %5613 = vmatpush.msra.mxu0 0.0
    %5614 = vmatpush.msra.mxu0 0.0
    %5615 = vmatpush.msra.mxu0 0.0
    %5616 = vmatpush.msra.mxu0 0.0
    %5617 = vmatpush.msra.mxu0 0.0
    %5618 = vmatpush.msra.mxu0 0.0
    %5619 = vmatpush.msra.mxu0 0.0
    %5620 = vmatpush.msra.mxu0 0.0
    %5621 = vmatpush.msra.mxu0 0.0
    %5622 = vmatpush.msra.mxu0 0.0
    %5623 = vmatpush.msra.mxu0 0.0
    %5624 = vmatpush.msra.mxu0 0.0
    %5625 = vmatpush.msra.mxu0 %v5564
    %5626 = vmatpush.msra.mxu0 %v5563
    %5627 = vmatpush.msra.mxu0 %v5562
    %5628 = vmatpush.msra.mxu0 %v5561
    %5629 = vmatmul.f32.gmra.mxu0 %v5566
    %v5630 = vpop.f32.mrf.mxu0
    %v5631 = vadd.f32 0.0, %v5630
    %5632 = vmatmul.f32.gmra.mxu0 %v5569
    %v5633 = vpop.f32.mrf.mxu0
    %v5634 = vadd.f32 0.0, %v5633
    %5635 = vmatmul.f32.gmra.mxu0 %v5572
    %v5636 = vpop.f32.mrf.mxu0
    %v5637 = vadd.f32 0.0, %v5636
    %5638 = vmatmul.f32.gmra.mxu0 %v5575
    %v5639 = vpop.f32.mrf.mxu0
    %v5640 = vadd.f32 0.0, %v5639
    %5641 = vmatmul.f32.gmra.mxu0 %v5578
    %v5642 = vpop.f32.mrf.mxu0
    %v5643 = vadd.f32 0.0, %v5642
    %5644 = vmatmul.f32.gmra.mxu0 %v5581
    %v5645 = vpop.f32.mrf.mxu0
    %v5646 = vadd.f32 0.0, %v5645
    %5647 = vmatmul.f32.gmra.mxu0 %v5584
    %v5648 = vpop.f32.mrf.mxu0
    %v5649 = vadd.f32 0.0, %v5648
    %5650 = vmatmul.f32.gmra.mxu0 %v5587
    %v5651 = vpop.f32.mrf.mxu0
    %v5652 = vadd.f32 0.0, %v5651
    %5653 = vmatmul.f32.gmra.mxu0 %v5590
    %v5654 = vpop.f32.mrf.mxu0
    %v5655 = vadd.f32 0.0, %v5654
    %5656 = vmatmul.f32.gmra.mxu0 %v5593
    %v5657 = vpop.f32.mrf.mxu0
    %v5658 = vadd.f32 0.0, %v5657
    %5659 = vmatmul.f32.gmra.mxu0 %v5596
    %v5660 = vpop.f32.mrf.mxu0
    %v5661 = vadd.f32 0.0, %v5660
    %5662 = vmatmul.f32.gmra.mxu0 %v5599
    %v5663 = vpop.f32.mrf.mxu0
    %v5664 = vadd.f32 0.0, %v5663
    %5665 = vmatmul.f32.gmra.mxu0 %v5602
    %v5666 = vpop.f32.mrf.mxu0
    %v5667 = vadd.f32 0.0, %v5666
    %5668 = vmatmul.f32.gmra.mxu0 %v5605
    %v5669 = vpop.f32.mrf.mxu0
    %v5670 = vadd.f32 0.0, %v5669
    %5671 = vmatmul.f32.gmra.mxu0 %v5608
    %v5672 = vpop.f32.mrf.mxu0
    %v5673 = vadd.f32 0.0, %v5672
    %5674 = vmatmul.f32.gmra.mxu0 %v5611
    %v5675 = vpop.f32.mrf.mxu0
    %v5676 = vadd.f32 0.0, %v5675
    %5677 = vdwg.mxu0
    %v5678 = vadd.f32 %v5143, %v5631
    %v5679 = vadd.f32 %v5144, %v5634
    %v5680 = vadd.f32 %v5145, %v5637
    %v5681 = vadd.f32 %v5146, %v5640
    %v5682 = vadd.f32 %v5147, %v5643
    %v5683 = vadd.f32 %v5148, %v5646
    %v5684 = vadd.f32 %v5149, %v5649
    %v5685 = vadd.f32 %v5150, %v5652
    %v5686 = vadd.f32 %v5151, %v5655
    %v5687 = vadd.f32 %v5152, %v5658
    %v5688 = vadd.f32 %v5153, %v5661
    %v5689 = vadd.f32 %v5154, %v5664
    %v5690 = vadd.f32 %v5155, %v5667
    %v5691 = vadd.f32 %v5156, %v5670
    %v5692 = vadd.f32 %v5157, %v5673
    %v5693 = vadd.f32 %v5158, %v5676
    %v5694 = vmax.f32 %v5678, 0.0
    %v5695 = vmax.f32 %v5679, 0.0
    %v5696 = vmax.f32 %v5680, 0.0
    %v5697 = vmax.f32 %v5681, 0.0
    %v5698 = vmax.f32 %v5682, 0.0
    %v5699 = vmax.f32 %v5683, 0.0
    %v5700 = vmax.f32 %v5684, 0.0
    %v5701 = vmax.f32 %v5685, 0.0
    %v5702 = vmax.f32 %v5686, 0.0
    %v5703 = vmax.f32 %v5687, 0.0
    %v5704 = vmax.f32 %v5688, 0.0
    %v5705 = vmax.f32 %v5689, 0.0
    %v5706 = vmax.f32 %v5690, 0.0
    %v5707 = vmax.f32 %v5691, 0.0
    %v5708 = vmax.f32 %v5692, 0.0
    %v5709 = vmax.f32 %v5693, 0.0
    %vm5710 = vcmask 523264
    %5711 = vst.msk [vmem:[#allocation3] sm:$0xff] %vm5710, 0.0
    %5712 = vst.msk [vmem:[#allocation3 + $0x8] sm:$0xff] %vm5710, 0.0
    %5713 = vst.msk [vmem:[#allocation3 + $0x10] sm:$0xff] %vm5710, 0.0
    %5714 = vst.msk [vmem:[#allocation3 + $0x18] sm:$0xff] %vm5710, 0.0
    %5715 = vst.msk [vmem:[#allocation3 + $0x20] sm:$0xff] %vm5710, 0.0
    %5716 = vst.msk [vmem:[#allocation3 + $0x28] sm:$0xff] %vm5710, 0.0
    %5717 = vst.msk [vmem:[#allocation3 + $0x30] sm:$0xff] %vm5710, 0.0
    %5718 = vst.msk [vmem:[#allocation3 + $0x38] sm:$0xff] %vm5710, 0.0
    %5719 = vst.msk [vmem:[#allocation3 + $0x40] sm:$0xff] %vm5710, 0.0
    %5720 = vst.msk [vmem:[#allocation3 + $0x48] sm:$0xff] %vm5710, 0.0
    %5721 = vst.msk [vmem:[#allocation3 + $0x50] sm:$0xff] %vm5710, 0.0
    %5722 = vst.msk [vmem:[#allocation3 + $0x58] sm:$0xff] %vm5710, 0.0
    %5723 = vst.msk [vmem:[#allocation3 + $0x60] sm:$0xff] %vm5710, 0.0
    %5724 = vst.msk [vmem:[#allocation3 + $0x68] sm:$0xff] %vm5710, 0.0
    %5725 = vst.msk [vmem:[#allocation3 + $0x70] sm:$0xff] %vm5710, 0.0
    %5726 = vst.msk [vmem:[#allocation3 + $0x78] sm:$0xff] %vm5710, 0.0
    %5727 = vst.msk [vmem:[#allocation3 + $0x80] sm:$0xff] %vm5710, 0.0
    %5728 = vst.msk [vmem:[#allocation3 + $0x88] sm:$0xff] %vm5710, 0.0
    %5729 = vst.msk [vmem:[#allocation3 + $0x90] sm:$0xff] %vm5710, 0.0
    %5730 = vst.msk [vmem:[#allocation3 + $0x98] sm:$0xff] %vm5710, 0.0
    %5731 = vst.msk [vmem:[#allocation3 + $0xa0] sm:$0xff] %vm5710, 0.0
    %5732 = vst.msk [vmem:[#allocation3 + $0xa8] sm:$0xff] %vm5710, 0.0
    %5733 = vst.msk [vmem:[#allocation3 + $0xb0] sm:$0xff] %vm5710, 0.0
    %5734 = vst.msk [vmem:[#allocation3 + $0xb8] sm:$0xff] %vm5710, 0.0
    %5735 = vst.msk [vmem:[#allocation3 + $0xc0] sm:$0xff] %vm5710, 0.0
    %5736 = vst.msk [vmem:[#allocation3 + $0xb] sm:$0xff] %vm5710, %v5694
    %5737 = vst.msk [vmem:[#allocation3 + $0x15] sm:$0xff] %vm5710, %v5695
    %5738 = vst.msk [vmem:[#allocation3 + $0x1f] sm:$0xff] %vm5710, %v5696
    %5739 = vst.msk [vmem:[#allocation3 + $0x29] sm:$0xff] %vm5710, %v5697
    %5740 = vst.msk [vmem:[#allocation3 + $0x33] sm:$0xff] %vm5710, %v5698
    %5741 = vst.msk [vmem:[#allocation3 + $0x3d] sm:$0xff] %vm5710, %v5699
    %5742 = vst.msk [vmem:[#allocation3 + $0x47] sm:$0xff] %vm5710, %v5700
    %5743 = vst.msk [vmem:[#allocation3 + $0x51] sm:$0xff] %vm5710, %v5701
    %5744 = vst.msk [vmem:[#allocation3 + $0x6f] sm:$0xff] %vm5710, %v5702
    %5745 = vst.msk [vmem:[#allocation3 + $0x79] sm:$0xff] %vm5710, %v5703
    %5746 = vst.msk [vmem:[#allocation3 + $0x83] sm:$0xff] %vm5710, %v5704
    %5747 = vst.msk [vmem:[#allocation3 + $0x8d] sm:$0xff] %vm5710, %v5705
    %5748 = vst.msk [vmem:[#allocation3 + $0x97] sm:$0xff] %vm5710, %v5706
    %5749 = vst.msk [vmem:[#allocation3 + $0xa1] sm:$0xff] %vm5710, %v5707
    %5750 = vst.msk [vmem:[#allocation3 + $0xab] sm:$0xff] %vm5710, %v5708
    %5751 = vst.msk [vmem:[#allocation3 + $0xb5] sm:$0xff] %vm5710, %v5709
    %v5752 = vld [vmem:[%s8] sm:$0x1]
    %v5754 = vperm.slane %v5752, 0
    %v5756 = vld [vmem:[#allocation3] sm:$0xff]
    %v5757 = vld [vmem:[#allocation3 + $0x8] sm:$0xff]
    %v5758 = vld [vmem:[#allocation3 + $0x10] sm:$0xff]
    %v5759 = vld [vmem:[#allocation3 + $0x18] sm:$0xff]
    %v5760 = vld [vmem:[#allocation3 + $0x20] sm:$0xff]
    %v5761 = vld [vmem:[#allocation3 + $0x28] sm:$0xff]
    %v5762 = vld [vmem:[#allocation3 + $0x30] sm:$0xff]
    %v5763 = vld [vmem:[#allocation3 + $0x38] sm:$0xff]
    %v5764 = vld [vmem:[#allocation3 + $0x40] sm:$0xff]
    %v5765 = vld [vmem:[#allocation3 + $0x48] sm:$0xff]
    %v5766 = vld [vmem:[#allocation3 + $0x50] sm:$0xff]
    %v5767 = vld [vmem:[#allocation3 + $0x58] sm:$0xff]
    %v5768 = vld [vmem:[#allocation3 + $0x60] sm:$0xff]
    %v5769 = vld [vmem:[#allocation3 + $0x68] sm:$0xff]
    %v5770 = vld [vmem:[#allocation3 + $0x70] sm:$0xff]
    %v5771 = vld [vmem:[#allocation3 + $0x78] sm:$0xff]
    %v5772 = vld [vmem:[#allocation3 + $0x80] sm:$0xff]
    %v5773 = vld [vmem:[#allocation3 + $0x88] sm:$0xff]
    %v5774 = vld [vmem:[#allocation3 + $0x90] sm:$0xff]
    %v5775 = vld [vmem:[#allocation3 + $0x98] sm:$0xff]
    %v5776 = vld [vmem:[#allocation3 + $0xa0] sm:$0xff]
    %v5777 = vld [vmem:[#allocation3 + $0xa8] sm:$0xff]
    %v5778 = vld [vmem:[%s6] sm:$0xff]
    %v5779 = vld [vmem:[%s6 + $0x8] sm:$0xff]
    %v5780 = vld [vmem:[%s6 + $0x10] sm:$0xff]
    %v5781 = vld [vmem:[%s6 + $0x18] sm:$0xff]
    %v5782 = vld [vmem:[%s6 + $0x20] sm:$0xff]
    %v5783 = vld [vmem:[%s6 + $0x28] sm:$0xff]
    %v5784 = vld [vmem:[%s6 + $0x30] sm:$0xff]
    %v5785 = vld [vmem:[%s6 + $0x38] sm:$0xff]
    %vm5786 = vcmask 392192
    %v5788 = vsel %vm5786, %v5779, 0
    %v5791 = vsel %vm5786, %v5781, 0
    %v5794 = vsel %vm5786, %v5783, 0
    %v5797 = vsel %vm5786, %v5785, 0
    %5799 = vmatpush.msra.mxu0 %v5771
    %5800 = vmatpush.msra.mxu0 %v5770
    %5801 = vmatpush.msra.mxu0 %v5769
    %5802 = vmatpush.msra.mxu0 %v5768
    %5803 = vmatpush.msra.mxu0 %v5767
    %5804 = vmatpush.msra.mxu0 %v5766
    %5805 = vmatpush.msra.mxu0 %v5765
    %5806 = vmatpush.msra.mxu0 %v5764
    %5807 = vmatpush.msra.mxu0 %v5763
    %5808 = vmatpush.msra.mxu0 %v5762
    %5809 = vmatpush.msra.mxu0 %v5761
    %5810 = vmatpush.msra.mxu0 %v5760
    %5811 = vmatpush.msra.mxu0 %v5759
    %5812 = vmatpush.msra.mxu0 %v5758
    %5813 = vmatpush.msra.mxu0 %v5757
    %5814 = vmatpush.msra.mxu0 %v5756
    %5815 = vmatmul.f32.gmra.mxu0 %v5778
    %v5816 = vpop.f32.mrf.mxu0
    %v5817 = vadd.f32 0.0, %v5816
    %5818 = vmatmul.f32.gmra.mxu0 %v5780
    %v5819 = vpop.f32.mrf.mxu0
    %v5820 = vadd.f32 0.0, %v5819
    %5821 = vmatmul.f32.gmra.mxu0 %v5782
    %v5822 = vpop.f32.mrf.mxu0
    %v5823 = vadd.f32 0.0, %v5822
    %5824 = vmatmul.f32.gmra.mxu0 %v5784
    %v5825 = vpop.f32.mrf.mxu0
    %v5826 = vadd.f32 0.0, %v5825
    %5827 = vdwg.mxu0
    %5828 = vmatpush.msra.mxu0 0.0
    %5829 = vmatpush.msra.mxu0 0.0
    %5830 = vmatpush.msra.mxu0 0.0
    %5831 = vmatpush.msra.mxu0 0.0
    %5832 = vmatpush.msra.mxu0 0.0
    %5833 = vmatpush.msra.mxu0 0.0
    %5834 = vmatpush.msra.mxu0 0.0
    %5835 = vmatpush.msra.mxu0 0.0
    %5836 = vmatpush.msra.mxu0 0.0
    %5837 = vmatpush.msra.mxu0 0.0
    %5838 = vmatpush.msra.mxu0 %v5777
    %5839 = vmatpush.msra.mxu0 %v5776
    %5840 = vmatpush.msra.mxu0 %v5775
    %5841 = vmatpush.msra.mxu0 %v5774
    %5842 = vmatpush.msra.mxu0 %v5773
    %5843 = vmatpush.msra.mxu0 %v5772
    %5844 = vmatmul.f32.gmra.mxu0 %v5788
    %v5845 = vpop.f32.mrf.mxu0
    %v5846 = vadd.f32 %v5817, %v5845
    %5847 = vmatmul.f32.gmra.mxu0 %v5791
    %v5848 = vpop.f32.mrf.mxu0
    %v5849 = vadd.f32 %v5820, %v5848
    %5850 = vmatmul.f32.gmra.mxu0 %v5794
    %v5851 = vpop.f32.mrf.mxu0
    %v5852 = vadd.f32 %v5823, %v5851
    %5853 = vmatmul.f32.gmra.mxu0 %v5797
    %v5854 = vpop.f32.mrf.mxu0
    %v5855 = vadd.f32 %v5826, %v5854
    %5856 = vdwg.mxu0
    %v5857 = vld [vmem:[%s7] sm:$0xff]
    %v5858 = vld [vmem:[%s7 + $0x8] sm:$0xff]
    %v5859 = vld [vmem:[%s7 + $0x10] sm:$0xff]
    %v5860 = vld [vmem:[%s7 + $0x18] sm:$0xff]
    %v5861 = vld [vmem:[%s7 + $0x20] sm:$0xff]
    %v5862 = vld [vmem:[%s7 + $0x28] sm:$0xff]
    %v5863 = vld [vmem:[%s7 + $0x30] sm:$0xff]
    %v5864 = vld [vmem:[%s7 + $0x38] sm:$0xff]
    %v5866 = vsel %vm5710, %v5846, 0
    %v5869 = vsel %vm5710, %v5849, 0
    %v5872 = vsel %vm5710, %v5852, 0
    %v5875 = vsel %vm5710, %v5855, 0
    %5877 = vmatpush.msra.mxu0 0.0
    %5878 = vmatpush.msra.mxu0 0.0
    %5879 = vmatpush.msra.mxu0 0.0
    %5880 = vmatpush.msra.mxu0 0.0
    %5881 = vmatpush.msra.mxu0 0.0
    %5882 = vmatpush.msra.mxu0 0.0
    %5883 = vmatpush.msra.mxu0 0.0
    %5884 = vmatpush.msra.mxu0 0.0
    %5885 = vmatpush.msra.mxu0 %v5864
    %5886 = vmatpush.msra.mxu0 %v5863
    %5887 = vmatpush.msra.mxu0 %v5862
    %5888 = vmatpush.msra.mxu0 %v5861
    %5889 = vmatpush.msra.mxu0 %v5860
    %5890 = vmatpush.msra.mxu0 %v5859
    %5891 = vmatpush.msra.mxu0 %v5858
    %5892 = vmatpush.msra.mxu0 %v5857
    %5893 = vmatmul.f32.gmra.mxu0 %v5866
    %v5894 = vpop.f32.mrf.mxu0
    %v5895 = vadd.f32 0.0, %v5894
    %5896 = vmatmul.f32.gmra.mxu0 %v5869
    %v5897 = vpop.f32.mrf.mxu0
    %v5898 = vadd.f32 0.0, %v5897
    %5899 = vmatmul.f32.gmra.mxu0 %v5872
    %v5900 = vpop.f32.mrf.mxu0
    %v5901 = vadd.f32 0.0, %v5900
    %5902 = vmatmul.f32.gmra.mxu0 %v5875
    %v5903 = vpop.f32.mrf.mxu0
    %v5904 = vadd.f32 0.0, %v5903
    %5905 = vdwg.mxu0
    %v5906 = vadd.f32 %v5754, %v5895
    %v5907 = vadd.f32 %v5754, %v5898
    %v5908 = vadd.f32 %v5754, %v5901
    %v5909 = vadd.f32 %v5754, %v5904
    %v5910 = vld [vmem:[#allocation3 + $0x1] sm:$0xff]
    %v5911 = vld [vmem:[#allocation3 + $0x9] sm:$0xff]
    %v5912 = vld [vmem:[#allocation3 + $0x11] sm:$0xff]
    %v5913 = vld [vmem:[#allocation3 + $0x19] sm:$0xff]
    %v5914 = vld [vmem:[#allocation3 + $0x21] sm:$0xff]
    %v5915 = vld [vmem:[#allocation3 + $0x29] sm:$0xff]
    %v5916 = vld [vmem:[#allocation3 + $0x31] sm:$0xff]
    %v5917 = vld [vmem:[#allocation3 + $0x39] sm:$0xff]
    %v5918 = vld [vmem:[#allocation3 + $0x41] sm:$0xff]
    %v5919 = vld [vmem:[#allocation3 + $0x49] sm:$0xff]
    %v5920 = vld [vmem:[#allocation3 + $0x51] sm:$0xff]
    %v5921 = vld [vmem:[#allocation3 + $0x59] sm:$0xff]
    %v5922 = vld [vmem:[#allocation3 + $0x61] sm:$0xff]
    %v5923 = vld [vmem:[#allocation3 + $0x69] sm:$0xff]
    %v5924 = vld [vmem:[#allocation3 + $0x71] sm:$0xff]
    %v5925 = vld [vmem:[#allocation3 + $0x79] sm:$0xff]
    %v5926 = vld [vmem:[#allocation3 + $0x81] sm:$0xff]
    %v5927 = vld [vmem:[#allocation3 + $0x89] sm:$0xff]
    %v5928 = vld [vmem:[#allocation3 + $0x91] sm:$0xff]
    %v5929 = vld [vmem:[#allocation3 + $0x99] sm:$0xff]
    %v5930 = vld [vmem:[#allocation3 + $0xa1] sm:$0xff]
    %v5931 = vld [vmem:[#allocation3 + $0xa9] sm:$0xff]
    %5932 = vmatpush.msra.mxu0 %v5925
    %5933 = vmatpush.msra.mxu0 %v5924
    %5934 = vmatpush.msra.mxu0 %v5923
    %5935 = vmatpush.msra.mxu0 %v5922
    %5936 = vmatpush.msra.mxu0 %v5921
    %5937 = vmatpush.msra.mxu0 %v5920
    %5938 = vmatpush.msra.mxu0 %v5919
    %5939 = vmatpush.msra.mxu0 %v5918
    %5940 = vmatpush.msra.mxu0 %v5917
    %5941 = vmatpush.msra.mxu0 %v5916
    %5942 = vmatpush.msra.mxu0 %v5915
    %5943 = vmatpush.msra.mxu0 %v5914
    %5944 = vmatpush.msra.mxu0 %v5913
    %5945 = vmatpush.msra.mxu0 %v5912
    %5946 = vmatpush.msra.mxu0 %v5911
    %5947 = vmatpush.msra.mxu0 %v5910
    %5948 = vmatmul.f32.gmra.mxu0 %v5778
    %v5949 = vpop.f32.mrf.mxu0
    %v5950 = vadd.f32 0.0, %v5949
    %5951 = vmatmul.f32.gmra.mxu0 %v5780
    %v5952 = vpop.f32.mrf.mxu0
    %v5953 = vadd.f32 0.0, %v5952
    %5954 = vmatmul.f32.gmra.mxu0 %v5782
    %v5955 = vpop.f32.mrf.mxu0
    %v5956 = vadd.f32 0.0, %v5955
    %5957 = vmatmul.f32.gmra.mxu0 %v5784
    %v5958 = vpop.f32.mrf.mxu0
    %v5959 = vadd.f32 0.0, %v5958
    %5960 = vdwg.mxu0
    %5961 = vmatpush.msra.mxu0 0.0
    %5962 = vmatpush.msra.mxu0 0.0
    %5963 = vmatpush.msra.mxu0 0.0
    %5964 = vmatpush.msra.mxu0 0.0
    %5965 = vmatpush.msra.mxu0 0.0
    %5966 = vmatpush.msra.mxu0 0.0
    %5967 = vmatpush.msra.mxu0 0.0
    %5968 = vmatpush.msra.mxu0 0.0
    %5969 = vmatpush.msra.mxu0 0.0
    %5970 = vmatpush.msra.mxu0 0.0
    %5971 = vmatpush.msra.mxu0 %v5931
    %5972 = vmatpush.msra.mxu0 %v5930
    %5973 = vmatpush.msra.mxu0 %v5929
    %5974 = vmatpush.msra.mxu0 %v5928
    %5975 = vmatpush.msra.mxu0 %v5927
    %5976 = vmatpush.msra.mxu0 %v5926
    %5977 = vmatmul.f32.gmra.mxu0 %v5788
    %v5978 = vpop.f32.mrf.mxu0
    %v5979 = vadd.f32 %v5950, %v5978
    %5980 = vmatmul.f32.gmra.mxu0 %v5791
    %v5981 = vpop.f32.mrf.mxu0
    %v5982 = vadd.f32 %v5953, %v5981
    %5983 = vmatmul.f32.gmra.mxu0 %v5794
    %v5984 = vpop.f32.mrf.mxu0
    %v5985 = vadd.f32 %v5956, %v5984
    %5986 = vmatmul.f32.gmra.mxu0 %v5797
    %v5987 = vpop.f32.mrf.mxu0
    %v5988 = vadd.f32 %v5959, %v5987
    %5989 = vdwg.mxu0
    %s5990 = scalar_lea.vmem %s7, 64
    %v5991 = vld [vmem:[%s5990] sm:$0xff]
    %v5992 = vld [vmem:[%s5990 + $0x8] sm:$0xff]
    %v5993 = vld [vmem:[%s5990 + $0x10] sm:$0xff]
    %v5994 = vld [vmem:[%s5990 + $0x18] sm:$0xff]
    %v5995 = vld [vmem:[%s5990 + $0x20] sm:$0xff]
    %v5996 = vld [vmem:[%s5990 + $0x28] sm:$0xff]
    %v5997 = vld [vmem:[%s5990 + $0x30] sm:$0xff]
    %v5998 = vld [vmem:[%s5990 + $0x38] sm:$0xff]
    %v6000 = vsel %vm5710, %v5979, 0
    %v6003 = vsel %vm5710, %v5982, 0
    %v6006 = vsel %vm5710, %v5985, 0
    %v6009 = vsel %vm5710, %v5988, 0
    %6011 = vmatpush.msra.mxu0 0.0
    %6012 = vmatpush.msra.mxu0 0.0
    %6013 = vmatpush.msra.mxu0 0.0
    %6014 = vmatpush.msra.mxu0 0.0
    %6015 = vmatpush.msra.mxu0 0.0
    %6016 = vmatpush.msra.mxu0 0.0
    %6017 = vmatpush.msra.mxu0 0.0
    %6018 = vmatpush.msra.mxu0 0.0
    %6019 = vmatpush.msra.mxu0 %v5998
    %6020 = vmatpush.msra.mxu0 %v5997
    %6021 = vmatpush.msra.mxu0 %v5996
    %6022 = vmatpush.msra.mxu0 %v5995
    %6023 = vmatpush.msra.mxu0 %v5994
    %6024 = vmatpush.msra.mxu0 %v5993
    %6025 = vmatpush.msra.mxu0 %v5992
    %6026 = vmatpush.msra.mxu0 %v5991
    %6027 = vmatmul.f32.gmra.mxu0 %v6000
    %v6028 = vpop.f32.mrf.mxu0
    %v6029 = vadd.f32 0.0, %v6028
    %6030 = vmatmul.f32.gmra.mxu0 %v6003
    %v6031 = vpop.f32.mrf.mxu0
    %v6032 = vadd.f32 0.0, %v6031
    %6033 = vmatmul.f32.gmra.mxu0 %v6006
    %v6034 = vpop.f32.mrf.mxu0
    %v6035 = vadd.f32 0.0, %v6034
    %6036 = vmatmul.f32.gmra.mxu0 %v6009
    %v6037 = vpop.f32.mrf.mxu0
    %v6038 = vadd.f32 0.0, %v6037
    %6039 = vdwg.mxu0
    %v6040 = vadd.f32 %v5906, %v6029
    %v6041 = vadd.f32 %v5907, %v6032
    %v6042 = vadd.f32 %v5908, %v6035
    %v6043 = vadd.f32 %v5909, %v6038
    %v6044 = vld [vmem:[#allocation3 + $0x2] sm:$0xff]
    %v6045 = vld [vmem:[#allocation3 + $0xa] sm:$0xff]
    %v6046 = vld [vmem:[#allocation3 + $0x12] sm:$0xff]
    %v6047 = vld [vmem:[#allocation3 + $0x1a] sm:$0xff]
    %v6048 = vld [vmem:[#allocation3 + $0x22] sm:$0xff]
    %v6049 = vld [vmem:[#allocation3 + $0x2a] sm:$0xff]
    %v6050 = vld [vmem:[#allocation3 + $0x32] sm:$0xff]
    %v6051 = vld [vmem:[#allocation3 + $0x3a] sm:$0xff]
    %v6052 = vld [vmem:[#allocation3 + $0x42] sm:$0xff]
    %v6053 = vld [vmem:[#allocation3 + $0x4a] sm:$0xff]
    %v6054 = vld [vmem:[#allocation3 + $0x52] sm:$0xff]
    %v6055 = vld [vmem:[#allocation3 + $0x5a] sm:$0xff]
    %v6056 = vld [vmem:[#allocation3 + $0x62] sm:$0xff]
    %v6057 = vld [vmem:[#allocation3 + $0x6a] sm:$0xff]
    %v6058 = vld [vmem:[#allocation3 + $0x72] sm:$0xff]
    %v6059 = vld [vmem:[#allocation3 + $0x7a] sm:$0xff]
    %v6060 = vld [vmem:[#allocation3 + $0x82] sm:$0xff]
    %v6061 = vld [vmem:[#allocation3 + $0x8a] sm:$0xff]
    %v6062 = vld [vmem:[#allocation3 + $0x92] sm:$0xff]
    %v6063 = vld [vmem:[#allocation3 + $0x9a] sm:$0xff]
    %v6064 = vld [vmem:[#allocation3 + $0xa2] sm:$0xff]
    %v6065 = vld [vmem:[#allocation3 + $0xaa] sm:$0xff]
    %6066 = vmatpush.msra.mxu0 %v6059
    %6067 = vmatpush.msra.mxu0 %v6058
    %6068 = vmatpush.msra.mxu0 %v6057
    %6069 = vmatpush.msra.mxu0 %v6056
    %6070 = vmatpush.msra.mxu0 %v6055
    %6071 = vmatpush.msra.mxu0 %v6054
    %6072 = vmatpush.msra.mxu0 %v6053
    %6073 = vmatpush.msra.mxu0 %v6052
    %6074 = vmatpush.msra.mxu0 %v6051
    %6075 = vmatpush.msra.mxu0 %v6050
    %6076 = vmatpush.msra.mxu0 %v6049
    %6077 = vmatpush.msra.mxu0 %v6048
    %6078 = vmatpush.msra.mxu0 %v6047
    %6079 = vmatpush.msra.mxu0 %v6046
    %6080 = vmatpush.msra.mxu0 %v6045
    %6081 = vmatpush.msra.mxu0 %v6044
    %6082 = vmatmul.f32.gmra.mxu0 %v5778
    %v6083 = vpop.f32.mrf.mxu0
    %v6084 = vadd.f32 0.0, %v6083
    %6085 = vmatmul.f32.gmra.mxu0 %v5780
    %v6086 = vpop.f32.mrf.mxu0
    %v6087 = vadd.f32 0.0, %v6086
    %6088 = vmatmul.f32.gmra.mxu0 %v5782
    %v6089 = vpop.f32.mrf.mxu0
    %v6090 = vadd.f32 0.0, %v6089
    %6091 = vmatmul.f32.gmra.mxu0 %v5784
    %v6092 = vpop.f32.mrf.mxu0
    %v6093 = vadd.f32 0.0, %v6092
    %6094 = vdwg.mxu0
    %6095 = vmatpush.msra.mxu0 0.0
    %6096 = vmatpush.msra.mxu0 0.0
    %6097 = vmatpush.msra.mxu0 0.0
    %6098 = vmatpush.msra.mxu0 0.0
    %6099 = vmatpush.msra.mxu0 0.0
    %6100 = vmatpush.msra.mxu0 0.0
    %6101 = vmatpush.msra.mxu0 0.0
    %6102 = vmatpush.msra.mxu0 0.0
    %6103 = vmatpush.msra.mxu0 0.0
    %6104 = vmatpush.msra.mxu0 0.0
    %6105 = vmatpush.msra.mxu0 %v6065
    %6106 = vmatpush.msra.mxu0 %v6064
    %6107 = vmatpush.msra.mxu0 %v6063
    %6108 = vmatpush.msra.mxu0 %v6062
    %6109 = vmatpush.msra.mxu0 %v6061
    %6110 = vmatpush.msra.mxu0 %v6060
    %6111 = vmatmul.f32.gmra.mxu0 %v5788
    %v6112 = vpop.f32.mrf.mxu0
    %v6113 = vadd.f32 %v6084, %v6112
    %6114 = vmatmul.f32.gmra.mxu0 %v5791
    %v6115 = vpop.f32.mrf.mxu0
    %v6116 = vadd.f32 %v6087, %v6115
    %6117 = vmatmul.f32.gmra.mxu0 %v5794
    %v6118 = vpop.f32.mrf.mxu0
    %v6119 = vadd.f32 %v6090, %v6118
    %6120 = vmatmul.f32.gmra.mxu0 %v5797
    %v6121 = vpop.f32.mrf.mxu0
    %v6122 = vadd.f32 %v6093, %v6121
    %6123 = vdwg.mxu0
    %s6124 = scalar_lea.vmem %s7, 128
    %v6125 = vld [vmem:[%s6124] sm:$0xff]
    %v6126 = vld [vmem:[%s6124 + $0x8] sm:$0xff]
    %v6127 = vld [vmem:[%s6124 + $0x10] sm:$0xff]
    %v6128 = vld [vmem:[%s6124 + $0x18] sm:$0xff]
    %v6129 = vld [vmem:[%s6124 + $0x20] sm:$0xff]
    %v6130 = vld [vmem:[%s6124 + $0x28] sm:$0xff]
    %v6131 = vld [vmem:[%s6124 + $0x30] sm:$0xff]
    %v6132 = vld [vmem:[%s6124 + $0x38] sm:$0xff]
    %v6134 = vsel %vm5710, %v6113, 0
    %v6137 = vsel %vm5710, %v6116, 0
    %v6140 = vsel %vm5710, %v6119, 0
    %v6143 = vsel %vm5710, %v6122, 0
    %6145 = vmatpush.msra.mxu0 0.0
    %6146 = vmatpush.msra.mxu0 0.0
    %6147 = vmatpush.msra.mxu0 0.0
    %6148 = vmatpush.msra.mxu0 0.0
    %6149 = vmatpush.msra.mxu0 0.0
    %6150 = vmatpush.msra.mxu0 0.0
    %6151 = vmatpush.msra.mxu0 0.0
    %6152 = vmatpush.msra.mxu0 0.0
    %6153 = vmatpush.msra.mxu0 %v6132
    %6154 = vmatpush.msra.mxu0 %v6131
    %6155 = vmatpush.msra.mxu0 %v6130
    %6156 = vmatpush.msra.mxu0 %v6129
    %6157 = vmatpush.msra.mxu0 %v6128
    %6158 = vmatpush.msra.mxu0 %v6127
    %6159 = vmatpush.msra.mxu0 %v6126
    %6160 = vmatpush.msra.mxu0 %v6125
    %6161 = vmatmul.f32.gmra.mxu0 %v6134
    %v6162 = vpop.f32.mrf.mxu0
    %v6163 = vadd.f32 0.0, %v6162
    %6164 = vmatmul.f32.gmra.mxu0 %v6137
    %v6165 = vpop.f32.mrf.mxu0
    %v6166 = vadd.f32 0.0, %v6165
    %6167 = vmatmul.f32.gmra.mxu0 %v6140
    %v6168 = vpop.f32.mrf.mxu0
    %v6169 = vadd.f32 0.0, %v6168
    %6170 = vmatmul.f32.gmra.mxu0 %v6143
    %v6171 = vpop.f32.mrf.mxu0
    %v6172 = vadd.f32 0.0, %v6171
    %6173 = vdwg.mxu0
    %v6174 = vadd.f32 %v6040, %v6163
    %v6175 = vadd.f32 %v6041, %v6166
    %v6176 = vadd.f32 %v6042, %v6169
    %v6177 = vadd.f32 %v6043, %v6172
    %v6178 = vld [vmem:[#allocation3 + $0xa] sm:$0xff]
    %v6179 = vld [vmem:[#allocation3 + $0x12] sm:$0xff]
    %v6180 = vld [vmem:[#allocation3 + $0x1a] sm:$0xff]
    %v6181 = vld [vmem:[#allocation3 + $0x22] sm:$0xff]
    %v6182 = vld [vmem:[#allocation3 + $0x2a] sm:$0xff]
    %v6183 = vld [vmem:[#allocation3 + $0x32] sm:$0xff]
    %v6184 = vld [vmem:[#allocation3 + $0x3a] sm:$0xff]
    %v6185 = vld [vmem:[#allocation3 + $0x42] sm:$0xff]
    %v6186 = vld [vmem:[#allocation3 + $0x4a] sm:$0xff]
    %v6187 = vld [vmem:[#allocation3 + $0x52] sm:$0xff]
    %v6188 = vld [vmem:[#allocation3 + $0x5a] sm:$0xff]
    %v6189 = vld [vmem:[#allocation3 + $0x62] sm:$0xff]
    %v6190 = vld [vmem:[#allocation3 + $0x6a] sm:$0xff]
    %v6191 = vld [vmem:[#allocation3 + $0x72] sm:$0xff]
    %v6192 = vld [vmem:[#allocation3 + $0x7a] sm:$0xff]
    %v6193 = vld [vmem:[#allocation3 + $0x82] sm:$0xff]
    %v6194 = vld [vmem:[#allocation3 + $0x8a] sm:$0xff]
    %v6195 = vld [vmem:[#allocation3 + $0x92] sm:$0xff]
    %v6196 = vld [vmem:[#allocation3 + $0x9a] sm:$0xff]
    %v6197 = vld [vmem:[#allocation3 + $0xa2] sm:$0xff]
    %v6198 = vld [vmem:[#allocation3 + $0xaa] sm:$0xff]
    %v6199 = vld [vmem:[#allocation3 + $0xb2] sm:$0xff]
    %6200 = vmatpush.msra.mxu0 %v6193
    %6201 = vmatpush.msra.mxu0 %v6192
    %6202 = vmatpush.msra.mxu0 %v6191
    %6203 = vmatpush.msra.mxu0 %v6190
    %6204 = vmatpush.msra.mxu0 %v6189
    %6205 = vmatpush.msra.mxu0 %v6188
    %6206 = vmatpush.msra.mxu0 %v6187
    %6207 = vmatpush.msra.mxu0 %v6186
    %6208 = vmatpush.msra.mxu0 %v6185
    %6209 = vmatpush.msra.mxu0 %v6184
    %6210 = vmatpush.msra.mxu0 %v6183
    %6211 = vmatpush.msra.mxu0 %v6182
    %6212 = vmatpush.msra.mxu0 %v6181
    %6213 = vmatpush.msra.mxu0 %v6180
    %6214 = vmatpush.msra.mxu0 %v6179
    %6215 = vmatpush.msra.mxu0 %v6178
    %6216 = vmatmul.f32.gmra.mxu0 %v5778
    %v6217 = vpop.f32.mrf.mxu0
    %v6218 = vadd.f32 0.0, %v6217
    %6219 = vmatmul.f32.gmra.mxu0 %v5780
    %v6220 = vpop.f32.mrf.mxu0
    %v6221 = vadd.f32 0.0, %v6220
    %6222 = vmatmul.f32.gmra.mxu0 %v5782
    %v6223 = vpop.f32.mrf.mxu0
    %v6224 = vadd.f32 0.0, %v6223
    %6225 = vmatmul.f32.gmra.mxu0 %v5784
    %v6226 = vpop.f32.mrf.mxu0
    %v6227 = vadd.f32 0.0, %v6226
    %6228 = vdwg.mxu0
    %6229 = vmatpush.msra.mxu0 0.0
    %6230 = vmatpush.msra.mxu0 0.0
    %6231 = vmatpush.msra.mxu0 0.0
    %6232 = vmatpush.msra.mxu0 0.0
    %6233 = vmatpush.msra.mxu0 0.0
    %6234 = vmatpush.msra.mxu0 0.0
    %6235 = vmatpush.msra.mxu0 0.0
    %6236 = vmatpush.msra.mxu0 0.0
    %6237 = vmatpush.msra.mxu0 0.0
    %6238 = vmatpush.msra.mxu0 0.0
    %6239 = vmatpush.msra.mxu0 %v6199
    %6240 = vmatpush.msra.mxu0 %v6198
    %6241 = vmatpush.msra.mxu0 %v6197
    %6242 = vmatpush.msra.mxu0 %v6196
    %6243 = vmatpush.msra.mxu0 %v6195
    %6244 = vmatpush.msra.mxu0 %v6194
    %6245 = vmatmul.f32.gmra.mxu0 %v5788
    %v6246 = vpop.f32.mrf.mxu0
    %v6247 = vadd.f32 %v6218, %v6246
    %6248 = vmatmul.f32.gmra.mxu0 %v5791
    %v6249 = vpop.f32.mrf.mxu0
    %v6250 = vadd.f32 %v6221, %v6249
    %6251 = vmatmul.f32.gmra.mxu0 %v5794
    %v6252 = vpop.f32.mrf.mxu0
    %v6253 = vadd.f32 %v6224, %v6252
    %6254 = vmatmul.f32.gmra.mxu0 %v5797
    %v6255 = vpop.f32.mrf.mxu0
    %v6256 = vadd.f32 %v6227, %v6255
    %6257 = vdwg.mxu0
    %s6258 = scalar_lea.vmem %s7, 192
    %v6259 = vld [vmem:[%s6258] sm:$0xff]
    %v6260 = vld [vmem:[%s6258 + $0x8] sm:$0xff]
    %v6261 = vld [vmem:[%s6258 + $0x10] sm:$0xff]
    %v6262 = vld [vmem:[%s6258 + $0x18] sm:$0xff]
    %v6263 = vld [vmem:[%s6258 + $0x20] sm:$0xff]
    %v6264 = vld [vmem:[%s6258 + $0x28] sm:$0xff]
    %v6265 = vld [vmem:[%s6258 + $0x30] sm:$0xff]
    %v6266 = vld [vmem:[%s6258 + $0x38] sm:$0xff]
    %v6268 = vsel %vm5710, %v6247, 0
    %v6271 = vsel %vm5710, %v6250, 0
    %v6274 = vsel %vm5710, %v6253, 0
    %v6277 = vsel %vm5710, %v6256, 0
    %6279 = vmatpush.msra.mxu0 0.0
    %6280 = vmatpush.msra.mxu0 0.0
    %6281 = vmatpush.msra.mxu0 0.0
    %6282 = vmatpush.msra.mxu0 0.0
    %6283 = vmatpush.msra.mxu0 0.0
    %6284 = vmatpush.msra.mxu0 0.0
    %6285 = vmatpush.msra.mxu0 0.0
    %6286 = vmatpush.msra.mxu0 0.0
    %6287 = vmatpush.msra.mxu0 %v6266
    %6288 = vmatpush.msra.mxu0 %v6265
    %6289 = vmatpush.msra.mxu0 %v6264
    %6290 = vmatpush.msra.mxu0 %v6263
    %6291 = vmatpush.msra.mxu0 %v6262
    %6292 = vmatpush.msra.mxu0 %v6261
    %6293 = vmatpush.msra.mxu0 %v6260
    %6294 = vmatpush.msra.mxu0 %v6259
    %6295 = vmatmul.f32.gmra.mxu0 %v6268
    %v6296 = vpop.f32.mrf.mxu0
    %v6297 = vadd.f32 0.0, %v6296
    %6298 = vmatmul.f32.gmra.mxu0 %v6271
    %v6299 = vpop.f32.mrf.mxu0
    %v6300 = vadd.f32 0.0, %v6299
    %6301 = vmatmul.f32.gmra.mxu0 %v6274
    %v6302 = vpop.f32.mrf.mxu0
    %v6303 = vadd.f32 0.0, %v6302
    %6304 = vmatmul.f32.gmra.mxu0 %v6277
    %v6305 = vpop.f32.mrf.mxu0
    %v6306 = vadd.f32 0.0, %v6305
    %6307 = vdwg.mxu0
    %v6308 = vadd.f32 %v6174, %v6297
    %v6309 = vadd.f32 %v6175, %v6300
    %v6310 = vadd.f32 %v6176, %v6303
    %v6311 = vadd.f32 %v6177, %v6306
    %v6312 = vld [vmem:[#allocation3 + $0xb] sm:$0xff]
    %v6313 = vld [vmem:[#allocation3 + $0x13] sm:$0xff]
    %v6314 = vld [vmem:[#allocation3 + $0x1b] sm:$0xff]
    %v6315 = vld [vmem:[#allocation3 + $0x23] sm:$0xff]
    %v6316 = vld [vmem:[#allocation3 + $0x2b] sm:$0xff]
    %v6317 = vld [vmem:[#allocation3 + $0x33] sm:$0xff]
    %v6318 = vld [vmem:[#allocation3 + $0x3b] sm:$0xff]
    %v6319 = vld [vmem:[#allocation3 + $0x43] sm:$0xff]
    %v6320 = vld [vmem:[#allocation3 + $0x4b] sm:$0xff]
    %v6321 = vld [vmem:[#allocation3 + $0x53] sm:$0xff]
    %v6322 = vld [vmem:[#allocation3 + $0x5b] sm:$0xff]
    %v6323 = vld [vmem:[#allocation3 + $0x63] sm:$0xff]
    %v6324 = vld [vmem:[#allocation3 + $0x6b] sm:$0xff]
    %v6325 = vld [vmem:[#allocation3 + $0x73] sm:$0xff]
    %v6326 = vld [vmem:[#allocation3 + $0x7b] sm:$0xff]
    %v6327 = vld [vmem:[#allocation3 + $0x83] sm:$0xff]
    %v6328 = vld [vmem:[#allocation3 + $0x8b] sm:$0xff]
    %v6329 = vld [vmem:[#allocation3 + $0x93] sm:$0xff]
    %v6330 = vld [vmem:[#allocation3 + $0x9b] sm:$0xff]
    %v6331 = vld [vmem:[#allocation3 + $0xa3] sm:$0xff]
    %v6332 = vld [vmem:[#allocation3 + $0xab] sm:$0xff]
    %v6333 = vld [vmem:[#allocation3 + $0xb3] sm:$0xff]
    %6334 = vmatpush.msra.mxu0 %v6327
    %6335 = vmatpush.msra.mxu0 %v6326
    %6336 = vmatpush.msra.mxu0 %v6325
    %6337 = vmatpush.msra.mxu0 %v6324
    %6338 = vmatpush.msra.mxu0 %v6323
    %6339 = vmatpush.msra.mxu0 %v6322
    %6340 = vmatpush.msra.mxu0 %v6321
    %6341 = vmatpush.msra.mxu0 %v6320
    %6342 = vmatpush.msra.mxu0 %v6319
    %6343 = vmatpush.msra.mxu0 %v6318
    %6344 = vmatpush.msra.mxu0 %v6317
    %6345 = vmatpush.msra.mxu0 %v6316
    %6346 = vmatpush.msra.mxu0 %v6315
    %6347 = vmatpush.msra.mxu0 %v6314
    %6348 = vmatpush.msra.mxu0 %v6313
    %6349 = vmatpush.msra.mxu0 %v6312
    %6350 = vmatmul.f32.gmra.mxu0 %v5778
    %v6351 = vpop.f32.mrf.mxu0
    %v6352 = vadd.f32 0.0, %v6351
    %6353 = vmatmul.f32.gmra.mxu0 %v5780
    %v6354 = vpop.f32.mrf.mxu0
    %v6355 = vadd.f32 0.0, %v6354
    %6356 = vmatmul.f32.gmra.mxu0 %v5782
    %v6357 = vpop.f32.mrf.mxu0
    %v6358 = vadd.f32 0.0, %v6357
    %6359 = vmatmul.f32.gmra.mxu0 %v5784
    %v6360 = vpop.f32.mrf.mxu0
    %v6361 = vadd.f32 0.0, %v6360
    %6362 = vdwg.mxu0
    %6363 = vmatpush.msra.mxu0 0.0
    %6364 = vmatpush.msra.mxu0 0.0
    %6365 = vmatpush.msra.mxu0 0.0
    %6366 = vmatpush.msra.mxu0 0.0
    %6367 = vmatpush.msra.mxu0 0.0
    %6368 = vmatpush.msra.mxu0 0.0
    %6369 = vmatpush.msra.mxu0 0.0
    %6370 = vmatpush.msra.mxu0 0.0
    %6371 = vmatpush.msra.mxu0 0.0
    %6372 = vmatpush.msra.mxu0 0.0
    %6373 = vmatpush.msra.mxu0 %v6333
    %6374 = vmatpush.msra.mxu0 %v6332
    %6375 = vmatpush.msra.mxu0 %v6331
    %6376 = vmatpush.msra.mxu0 %v6330
    %6377 = vmatpush.msra.mxu0 %v6329
    %6378 = vmatpush.msra.mxu0 %v6328
    %6379 = vmatmul.f32.gmra.mxu0 %v5788
    %v6380 = vpop.f32.mrf.mxu0
    %v6381 = vadd.f32 %v6352, %v6380
    %6382 = vmatmul.f32.gmra.mxu0 %v5791
    %v6383 = vpop.f32.mrf.mxu0
    %v6384 = vadd.f32 %v6355, %v6383
    %6385 = vmatmul.f32.gmra.mxu0 %v5794
    %v6386 = vpop.f32.mrf.mxu0
    %v6387 = vadd.f32 %v6358, %v6386
    %6388 = vmatmul.f32.gmra.mxu0 %v5797
    %v6389 = vpop.f32.mrf.mxu0
    %v6390 = vadd.f32 %v6361, %v6389
    %6391 = vdwg.mxu0
    %s6392 = scalar_lea.vmem %s7, 256
    %v6393 = vld [vmem:[%s6392] sm:$0xff]
    %v6394 = vld [vmem:[%s6392 + $0x8] sm:$0xff]
    %v6395 = vld [vmem:[%s6392 + $0x10] sm:$0xff]
    %v6396 = vld [vmem:[%s6392 + $0x18] sm:$0xff]
    %v6397 = vld [vmem:[%s6392 + $0x20] sm:$0xff]
    %v6398 = vld [vmem:[%s6392 + $0x28] sm:$0xff]
    %v6399 = vld [vmem:[%s6392 + $0x30] sm:$0xff]
    %v6400 = vld [vmem:[%s6392 + $0x38] sm:$0xff]
    %v6402 = vsel %vm5710, %v6381, 0
    %v6405 = vsel %vm5710, %v6384, 0
    %v6408 = vsel %vm5710, %v6387, 0
    %v6411 = vsel %vm5710, %v6390, 0
    %6413 = vmatpush.msra.mxu0 0.0
    %6414 = vmatpush.msra.mxu0 0.0
    %6415 = vmatpush.msra.mxu0 0.0
    %6416 = vmatpush.msra.mxu0 0.0
    %6417 = vmatpush.msra.mxu0 0.0
    %6418 = vmatpush.msra.mxu0 0.0
    %6419 = vmatpush.msra.mxu0 0.0
    %6420 = vmatpush.msra.mxu0 0.0
    %6421 = vmatpush.msra.mxu0 %v6400
    %6422 = vmatpush.msra.mxu0 %v6399
    %6423 = vmatpush.msra.mxu0 %v6398
    %6424 = vmatpush.msra.mxu0 %v6397
    %6425 = vmatpush.msra.mxu0 %v6396
    %6426 = vmatpush.msra.mxu0 %v6395
    %6427 = vmatpush.msra.mxu0 %v6394
    %6428 = vmatpush.msra.mxu0 %v6393
    %6429 = vmatmul.f32.gmra.mxu0 %v6402
    %v6430 = vpop.f32.mrf.mxu0
    %v6431 = vadd.f32 0.0, %v6430
    %6432 = vmatmul.f32.gmra.mxu0 %v6405
    %v6433 = vpop.f32.mrf.mxu0
    %v6434 = vadd.f32 0.0, %v6433
    %6435 = vmatmul.f32.gmra.mxu0 %v6408
    %v6436 = vpop.f32.mrf.mxu0
    %v6437 = vadd.f32 0.0, %v6436
    %6438 = vmatmul.f32.gmra.mxu0 %v6411
    %v6439 = vpop.f32.mrf.mxu0
    %v6440 = vadd.f32 0.0, %v6439
    %6441 = vdwg.mxu0
    %v6442 = vadd.f32 %v6308, %v6431
    %v6443 = vadd.f32 %v6309, %v6434
    %v6444 = vadd.f32 %v6310, %v6437
    %v6445 = vadd.f32 %v6311, %v6440
    %v6446 = vld [vmem:[#allocation3 + $0xc] sm:$0xff]
    %v6447 = vld [vmem:[#allocation3 + $0x14] sm:$0xff]
    %v6448 = vld [vmem:[#allocation3 + $0x1c] sm:$0xff]
    %v6449 = vld [vmem:[#allocation3 + $0x24] sm:$0xff]
    %v6450 = vld [vmem:[#allocation3 + $0x2c] sm:$0xff]
    %v6451 = vld [vmem:[#allocation3 + $0x34] sm:$0xff]
    %v6452 = vld [vmem:[#allocation3 + $0x3c] sm:$0xff]
    %v6453 = vld [vmem:[#allocation3 + $0x44] sm:$0xff]
    %v6454 = vld [vmem:[#allocation3 + $0x4c] sm:$0xff]
    %v6455 = vld [vmem:[#allocation3 + $0x54] sm:$0xff]
    %v6456 = vld [vmem:[#allocation3 + $0x5c] sm:$0xff]
    %v6457 = vld [vmem:[#allocation3 + $0x64] sm:$0xff]
    %v6458 = vld [vmem:[#allocation3 + $0x6c] sm:$0xff]
    %v6459 = vld [vmem:[#allocation3 + $0x74] sm:$0xff]
    %v6460 = vld [vmem:[#allocation3 + $0x7c] sm:$0xff]
    %v6461 = vld [vmem:[#allocation3 + $0x84] sm:$0xff]
    %v6462 = vld [vmem:[#allocation3 + $0x8c] sm:$0xff]
    %v6463 = vld [vmem:[#allocation3 + $0x94] sm:$0xff]
    %v6464 = vld [vmem:[#allocation3 + $0x9c] sm:$0xff]
    %v6465 = vld [vmem:[#allocation3 + $0xa4] sm:$0xff]
    %v6466 = vld [vmem:[#allocation3 + $0xac] sm:$0xff]
    %v6467 = vld [vmem:[#allocation3 + $0xb4] sm:$0xff]
    %6468 = vmatpush.msra.mxu0 %v6461
    %6469 = vmatpush.msra.mxu0 %v6460
    %6470 = vmatpush.msra.mxu0 %v6459
    %6471 = vmatpush.msra.mxu0 %v6458
    %6472 = vmatpush.msra.mxu0 %v6457
    %6473 = vmatpush.msra.mxu0 %v6456
    %6474 = vmatpush.msra.mxu0 %v6455
    %6475 = vmatpush.msra.mxu0 %v6454
    %6476 = vmatpush.msra.mxu0 %v6453
    %6477 = vmatpush.msra.mxu0 %v6452
    %6478 = vmatpush.msra.mxu0 %v6451
    %6479 = vmatpush.msra.mxu0 %v6450
    %6480 = vmatpush.msra.mxu0 %v6449
    %6481 = vmatpush.msra.mxu0 %v6448
    %6482 = vmatpush.msra.mxu0 %v6447
    %6483 = vmatpush.msra.mxu0 %v6446
    %6484 = vmatmul.f32.gmra.mxu0 %v5778
    %v6485 = vpop.f32.mrf.mxu0
    %v6486 = vadd.f32 0.0, %v6485
    %6487 = vmatmul.f32.gmra.mxu0 %v5780
    %v6488 = vpop.f32.mrf.mxu0
    %v6489 = vadd.f32 0.0, %v6488
    %6490 = vmatmul.f32.gmra.mxu0 %v5782
    %v6491 = vpop.f32.mrf.mxu0
    %v6492 = vadd.f32 0.0, %v6491
    %6493 = vmatmul.f32.gmra.mxu0 %v5784
    %v6494 = vpop.f32.mrf.mxu0
    %v6495 = vadd.f32 0.0, %v6494
    %6496 = vdwg.mxu0
    %6497 = vmatpush.msra.mxu0 0.0
    %6498 = vmatpush.msra.mxu0 0.0
    %6499 = vmatpush.msra.mxu0 0.0
    %6500 = vmatpush.msra.mxu0 0.0
    %6501 = vmatpush.msra.mxu0 0.0
    %6502 = vmatpush.msra.mxu0 0.0
    %6503 = vmatpush.msra.mxu0 0.0
    %6504 = vmatpush.msra.mxu0 0.0
    %6505 = vmatpush.msra.mxu0 0.0
    %6506 = vmatpush.msra.mxu0 0.0
    %6507 = vmatpush.msra.mxu0 %v6467
    %6508 = vmatpush.msra.mxu0 %v6466
    %6509 = vmatpush.msra.mxu0 %v6465
    %6510 = vmatpush.msra.mxu0 %v6464
    %6511 = vmatpush.msra.mxu0 %v6463
    %6512 = vmatpush.msra.mxu0 %v6462
    %6513 = vmatmul.f32.gmra.mxu0 %v5788
    %v6514 = vpop.f32.mrf.mxu0
    %v6515 = vadd.f32 %v6486, %v6514
    %6516 = vmatmul.f32.gmra.mxu0 %v5791
    %v6517 = vpop.f32.mrf.mxu0
    %v6518 = vadd.f32 %v6489, %v6517
    %6519 = vmatmul.f32.gmra.mxu0 %v5794
    %v6520 = vpop.f32.mrf.mxu0
    %v6521 = vadd.f32 %v6492, %v6520
    %6522 = vmatmul.f32.gmra.mxu0 %v5797
    %v6523 = vpop.f32.mrf.mxu0
    %v6524 = vadd.f32 %v6495, %v6523
    %6525 = vdwg.mxu0
    %s6526 = scalar_lea.vmem %s7, 320
    %v6527 = vld [vmem:[%s6526] sm:$0xff]
    %v6528 = vld [vmem:[%s6526 + $0x8] sm:$0xff]
    %v6529 = vld [vmem:[%s6526 + $0x10] sm:$0xff]
    %v6530 = vld [vmem:[%s6526 + $0x18] sm:$0xff]
    %v6531 = vld [vmem:[%s6526 + $0x20] sm:$0xff]
    %v6532 = vld [vmem:[%s6526 + $0x28] sm:$0xff]
    %v6533 = vld [vmem:[%s6526 + $0x30] sm:$0xff]
    %v6534 = vld [vmem:[%s6526 + $0x38] sm:$0xff]
    %v6536 = vsel %vm5710, %v6515, 0
    %v6539 = vsel %vm5710, %v6518, 0
    %v6542 = vsel %vm5710, %v6521, 0
    %v6545 = vsel %vm5710, %v6524, 0
    %6547 = vmatpush.msra.mxu0 0.0
    %6548 = vmatpush.msra.mxu0 0.0
    %6549 = vmatpush.msra.mxu0 0.0
    %6550 = vmatpush.msra.mxu0 0.0
    %6551 = vmatpush.msra.mxu0 0.0
    %6552 = vmatpush.msra.mxu0 0.0
    %6553 = vmatpush.msra.mxu0 0.0
    %6554 = vmatpush.msra.mxu0 0.0
    %6555 = vmatpush.msra.mxu0 %v6534
    %6556 = vmatpush.msra.mxu0 %v6533
    %6557 = vmatpush.msra.mxu0 %v6532
    %6558 = vmatpush.msra.mxu0 %v6531
    %6559 = vmatpush.msra.mxu0 %v6530
    %6560 = vmatpush.msra.mxu0 %v6529
    %6561 = vmatpush.msra.mxu0 %v6528
    %6562 = vmatpush.msra.mxu0 %v6527
    %6563 = vmatmul.f32.gmra.mxu0 %v6536
    %v6564 = vpop.f32.mrf.mxu0
    %v6565 = vadd.f32 0.0, %v6564
    %6566 = vmatmul.f32.gmra.mxu0 %v6539
    %v6567 = vpop.f32.mrf.mxu0
    %v6568 = vadd.f32 0.0, %v6567
    %6569 = vmatmul.f32.gmra.mxu0 %v6542
    %v6570 = vpop.f32.mrf.mxu0
    %v6571 = vadd.f32 0.0, %v6570
    %6572 = vmatmul.f32.gmra.mxu0 %v6545
    %v6573 = vpop.f32.mrf.mxu0
    %v6574 = vadd.f32 0.0, %v6573
    %6575 = vdwg.mxu0
    %v6576 = vadd.f32 %v6442, %v6565
    %v6577 = vadd.f32 %v6443, %v6568
    %v6578 = vadd.f32 %v6444, %v6571
    %v6579 = vadd.f32 %v6445, %v6574
    %v6580 = vld [vmem:[#allocation3 + $0x14] sm:$0xff]
    %v6581 = vld [vmem:[#allocation3 + $0x1c] sm:$0xff]
    %v6582 = vld [vmem:[#allocation3 + $0x24] sm:$0xff]
    %v6583 = vld [vmem:[#allocation3 + $0x2c] sm:$0xff]
    %v6584 = vld [vmem:[#allocation3 + $0x34] sm:$0xff]
    %v6585 = vld [vmem:[#allocation3 + $0x3c] sm:$0xff]
    %v6586 = vld [vmem:[#allocation3 + $0x44] sm:$0xff]
    %v6587 = vld [vmem:[#allocation3 + $0x4c] sm:$0xff]
    %v6588 = vld [vmem:[#allocation3 + $0x54] sm:$0xff]
    %v6589 = vld [vmem:[#allocation3 + $0x5c] sm:$0xff]
    %v6590 = vld [vmem:[#allocation3 + $0x64] sm:$0xff]
    %v6591 = vld [vmem:[#allocation3 + $0x6c] sm:$0xff]
    %v6592 = vld [vmem:[#allocation3 + $0x74] sm:$0xff]
    %v6593 = vld [vmem:[#allocation3 + $0x7c] sm:$0xff]
    %v6594 = vld [vmem:[#allocation3 + $0x84] sm:$0xff]
    %v6595 = vld [vmem:[#allocation3 + $0x8c] sm:$0xff]
    %v6596 = vld [vmem:[#allocation3 + $0x94] sm:$0xff]
    %v6597 = vld [vmem:[#allocation3 + $0x9c] sm:$0xff]
    %v6598 = vld [vmem:[#allocation3 + $0xa4] sm:$0xff]
    %v6599 = vld [vmem:[#allocation3 + $0xac] sm:$0xff]
    %v6600 = vld [vmem:[#allocation3 + $0xb4] sm:$0xff]
    %v6601 = vld [vmem:[#allocation3 + $0xbc] sm:$0xff]
    %6602 = vmatpush.msra.mxu0 %v6595
    %6603 = vmatpush.msra.mxu0 %v6594
    %6604 = vmatpush.msra.mxu0 %v6593
    %6605 = vmatpush.msra.mxu0 %v6592
    %6606 = vmatpush.msra.mxu0 %v6591
    %6607 = vmatpush.msra.mxu0 %v6590
    %6608 = vmatpush.msra.mxu0 %v6589
    %6609 = vmatpush.msra.mxu0 %v6588
    %6610 = vmatpush.msra.mxu0 %v6587
    %6611 = vmatpush.msra.mxu0 %v6586
    %6612 = vmatpush.msra.mxu0 %v6585
    %6613 = vmatpush.msra.mxu0 %v6584
    %6614 = vmatpush.msra.mxu0 %v6583
    %6615 = vmatpush.msra.mxu0 %v6582
    %6616 = vmatpush.msra.mxu0 %v6581
    %6617 = vmatpush.msra.mxu0 %v6580
    %6618 = vmatmul.f32.gmra.mxu0 %v5778
    %v6619 = vpop.f32.mrf.mxu0
    %v6620 = vadd.f32 0.0, %v6619
    %6621 = vmatmul.f32.gmra.mxu0 %v5780
    %v6622 = vpop.f32.mrf.mxu0
    %v6623 = vadd.f32 0.0, %v6622
    %6624 = vmatmul.f32.gmra.mxu0 %v5782
    %v6625 = vpop.f32.mrf.mxu0
    %v6626 = vadd.f32 0.0, %v6625
    %6627 = vmatmul.f32.gmra.mxu0 %v5784
    %v6628 = vpop.f32.mrf.mxu0
    %v6629 = vadd.f32 0.0, %v6628
    %6630 = vdwg.mxu0
    %6631 = vmatpush.msra.mxu0 0.0
    %6632 = vmatpush.msra.mxu0 0.0
    %6633 = vmatpush.msra.mxu0 0.0
    %6634 = vmatpush.msra.mxu0 0.0
    %6635 = vmatpush.msra.mxu0 0.0
    %6636 = vmatpush.msra.mxu0 0.0
    %6637 = vmatpush.msra.mxu0 0.0
    %6638 = vmatpush.msra.mxu0 0.0
    %6639 = vmatpush.msra.mxu0 0.0
    %6640 = vmatpush.msra.mxu0 0.0
    %6641 = vmatpush.msra.mxu0 %v6601
    %6642 = vmatpush.msra.mxu0 %v6600
    %6643 = vmatpush.msra.mxu0 %v6599
    %6644 = vmatpush.msra.mxu0 %v6598
    %6645 = vmatpush.msra.mxu0 %v6597
    %6646 = vmatpush.msra.mxu0 %v6596
    %6647 = vmatmul.f32.gmra.mxu0 %v5788
    %v6648 = vpop.f32.mrf.mxu0
    %v6649 = vadd.f32 %v6620, %v6648
    %6650 = vmatmul.f32.gmra.mxu0 %v5791
    %v6651 = vpop.f32.mrf.mxu0
    %v6652 = vadd.f32 %v6623, %v6651
    %6653 = vmatmul.f32.gmra.mxu0 %v5794
    %v6654 = vpop.f32.mrf.mxu0
    %v6655 = vadd.f32 %v6626, %v6654
    %6656 = vmatmul.f32.gmra.mxu0 %v5797
    %v6657 = vpop.f32.mrf.mxu0
    %v6658 = vadd.f32 %v6629, %v6657
    %6659 = vdwg.mxu0
    %s6660 = scalar_lea.vmem %s7, 384
    %v6661 = vld [vmem:[%s6660] sm:$0xff]
    %v6662 = vld [vmem:[%s6660 + $0x8] sm:$0xff]
    %v6663 = vld [vmem:[%s6660 + $0x10] sm:$0xff]
    %v6664 = vld [vmem:[%s6660 + $0x18] sm:$0xff]
    %v6665 = vld [vmem:[%s6660 + $0x20] sm:$0xff]
    %v6666 = vld [vmem:[%s6660 + $0x28] sm:$0xff]
    %v6667 = vld [vmem:[%s6660 + $0x30] sm:$0xff]
    %v6668 = vld [vmem:[%s6660 + $0x38] sm:$0xff]
    %v6670 = vsel %vm5710, %v6649, 0
    %v6673 = vsel %vm5710, %v6652, 0
    %v6676 = vsel %vm5710, %v6655, 0
    %v6679 = vsel %vm5710, %v6658, 0
    %6681 = vmatpush.msra.mxu0 0.0
    %6682 = vmatpush.msra.mxu0 0.0
    %6683 = vmatpush.msra.mxu0 0.0
    %6684 = vmatpush.msra.mxu0 0.0
    %6685 = vmatpush.msra.mxu0 0.0
    %6686 = vmatpush.msra.mxu0 0.0
    %6687 = vmatpush.msra.mxu0 0.0
    %6688 = vmatpush.msra.mxu0 0.0
    %6689 = vmatpush.msra.mxu0 %v6668
    %6690 = vmatpush.msra.mxu0 %v6667
    %6691 = vmatpush.msra.mxu0 %v6666
    %6692 = vmatpush.msra.mxu0 %v6665
    %6693 = vmatpush.msra.mxu0 %v6664
    %6694 = vmatpush.msra.mxu0 %v6663
    %6695 = vmatpush.msra.mxu0 %v6662
    %6696 = vmatpush.msra.mxu0 %v6661
    %6697 = vmatmul.f32.gmra.mxu0 %v6670
    %v6698 = vpop.f32.mrf.mxu0
    %v6699 = vadd.f32 0.0, %v6698
    %6700 = vmatmul.f32.gmra.mxu0 %v6673
    %v6701 = vpop.f32.mrf.mxu0
    %v6702 = vadd.f32 0.0, %v6701
    %6703 = vmatmul.f32.gmra.mxu0 %v6676
    %v6704 = vpop.f32.mrf.mxu0
    %v6705 = vadd.f32 0.0, %v6704
    %6706 = vmatmul.f32.gmra.mxu0 %v6679
    %v6707 = vpop.f32.mrf.mxu0
    %v6708 = vadd.f32 0.0, %v6707
    %6709 = vdwg.mxu0
    %v6710 = vadd.f32 %v6576, %v6699
    %v6711 = vadd.f32 %v6577, %v6702
    %v6712 = vadd.f32 %v6578, %v6705
    %v6713 = vadd.f32 %v6579, %v6708
    %v6714 = vld [vmem:[#allocation3 + $0x15] sm:$0xff]
    %v6715 = vld [vmem:[#allocation3 + $0x1d] sm:$0xff]
    %v6716 = vld [vmem:[#allocation3 + $0x25] sm:$0xff]
    %v6717 = vld [vmem:[#allocation3 + $0x2d] sm:$0xff]
    %v6718 = vld [vmem:[#allocation3 + $0x35] sm:$0xff]
    %v6719 = vld [vmem:[#allocation3 + $0x3d] sm:$0xff]
    %v6720 = vld [vmem:[#allocation3 + $0x45] sm:$0xff]
    %v6721 = vld [vmem:[#allocation3 + $0x4d] sm:$0xff]
    %v6722 = vld [vmem:[#allocation3 + $0x55] sm:$0xff]
    %v6723 = vld [vmem:[#allocation3 + $0x5d] sm:$0xff]
    %v6724 = vld [vmem:[#allocation3 + $0x65] sm:$0xff]
    %v6725 = vld [vmem:[#allocation3 + $0x6d] sm:$0xff]
    %v6726 = vld [vmem:[#allocation3 + $0x75] sm:$0xff]
    %v6727 = vld [vmem:[#allocation3 + $0x7d] sm:$0xff]
    %v6728 = vld [vmem:[#allocation3 + $0x85] sm:$0xff]
    %v6729 = vld [vmem:[#allocation3 + $0x8d] sm:$0xff]
    %v6730 = vld [vmem:[#allocation3 + $0x95] sm:$0xff]
    %v6731 = vld [vmem:[#allocation3 + $0x9d] sm:$0xff]
    %v6732 = vld [vmem:[#allocation3 + $0xa5] sm:$0xff]
    %v6733 = vld [vmem:[#allocation3 + $0xad] sm:$0xff]
    %v6734 = vld [vmem:[#allocation3 + $0xb5] sm:$0xff]
    %v6735 = vld [vmem:[#allocation3 + $0xbd] sm:$0xff]
    %6736 = vmatpush.msra.mxu0 %v6729
    %6737 = vmatpush.msra.mxu0 %v6728
    %6738 = vmatpush.msra.mxu0 %v6727
    %6739 = vmatpush.msra.mxu0 %v6726
    %6740 = vmatpush.msra.mxu0 %v6725
    %6741 = vmatpush.msra.mxu0 %v6724
    %6742 = vmatpush.msra.mxu0 %v6723
    %6743 = vmatpush.msra.mxu0 %v6722
    %6744 = vmatpush.msra.mxu0 %v6721
    %6745 = vmatpush.msra.mxu0 %v6720
    %6746 = vmatpush.msra.mxu0 %v6719
    %6747 = vmatpush.msra.mxu0 %v6718
    %6748 = vmatpush.msra.mxu0 %v6717
    %6749 = vmatpush.msra.mxu0 %v6716
    %6750 = vmatpush.msra.mxu0 %v6715
    %6751 = vmatpush.msra.mxu0 %v6714
    %6752 = vmatmul.f32.gmra.mxu0 %v5778
    %v6753 = vpop.f32.mrf.mxu0
    %v6754 = vadd.f32 0.0, %v6753
    %6755 = vmatmul.f32.gmra.mxu0 %v5780
    %v6756 = vpop.f32.mrf.mxu0
    %v6757 = vadd.f32 0.0, %v6756
    %6758 = vmatmul.f32.gmra.mxu0 %v5782
    %v6759 = vpop.f32.mrf.mxu0
    %v6760 = vadd.f32 0.0, %v6759
    %6761 = vmatmul.f32.gmra.mxu0 %v5784
    %v6762 = vpop.f32.mrf.mxu0
    %v6763 = vadd.f32 0.0, %v6762
    %6764 = vdwg.mxu0
    %6765 = vmatpush.msra.mxu0 0.0
    %6766 = vmatpush.msra.mxu0 0.0
    %6767 = vmatpush.msra.mxu0 0.0
    %6768 = vmatpush.msra.mxu0 0.0
    %6769 = vmatpush.msra.mxu0 0.0
    %6770 = vmatpush.msra.mxu0 0.0
    %6771 = vmatpush.msra.mxu0 0.0
    %6772 = vmatpush.msra.mxu0 0.0
    %6773 = vmatpush.msra.mxu0 0.0
    %6774 = vmatpush.msra.mxu0 0.0
    %6775 = vmatpush.msra.mxu0 %v6735
    %6776 = vmatpush.msra.mxu0 %v6734
    %6777 = vmatpush.msra.mxu0 %v6733
    %6778 = vmatpush.msra.mxu0 %v6732
    %6779 = vmatpush.msra.mxu0 %v6731
    %6780 = vmatpush.msra.mxu0 %v6730
    %6781 = vmatmul.f32.gmra.mxu0 %v5788
    %v6782 = vpop.f32.mrf.mxu0
    %v6783 = vadd.f32 %v6754, %v6782
    %6784 = vmatmul.f32.gmra.mxu0 %v5791
    %v6785 = vpop.f32.mrf.mxu0
    %v6786 = vadd.f32 %v6757, %v6785
    %6787 = vmatmul.f32.gmra.mxu0 %v5794
    %v6788 = vpop.f32.mrf.mxu0
    %v6789 = vadd.f32 %v6760, %v6788
    %6790 = vmatmul.f32.gmra.mxu0 %v5797
    %v6791 = vpop.f32.mrf.mxu0
    %v6792 = vadd.f32 %v6763, %v6791
    %6793 = vdwg.mxu0
    %s6794 = scalar_lea.vmem %s7, 448
    %v6795 = vld [vmem:[%s6794] sm:$0xff]
    %v6796 = vld [vmem:[%s6794 + $0x8] sm:$0xff]
    %v6797 = vld [vmem:[%s6794 + $0x10] sm:$0xff]
    %v6798 = vld [vmem:[%s6794 + $0x18] sm:$0xff]
    %v6799 = vld [vmem:[%s6794 + $0x20] sm:$0xff]
    %v6800 = vld [vmem:[%s6794 + $0x28] sm:$0xff]
    %v6801 = vld [vmem:[%s6794 + $0x30] sm:$0xff]
    %v6802 = vld [vmem:[%s6794 + $0x38] sm:$0xff]
    %v6804 = vsel %vm5710, %v6783, 0
    %v6807 = vsel %vm5710, %v6786, 0
    %v6810 = vsel %vm5710, %v6789, 0
    %v6813 = vsel %vm5710, %v6792, 0
    %6815 = vmatpush.msra.mxu0 0.0
    %6816 = vmatpush.msra.mxu0 0.0
    %6817 = vmatpush.msra.mxu0 0.0
    %6818 = vmatpush.msra.mxu0 0.0
    %6819 = vmatpush.msra.mxu0 0.0
    %6820 = vmatpush.msra.mxu0 0.0
    %6821 = vmatpush.msra.mxu0 0.0
    %6822 = vmatpush.msra.mxu0 0.0
    %6823 = vmatpush.msra.mxu0 %v6802
    %6824 = vmatpush.msra.mxu0 %v6801
    %6825 = vmatpush.msra.mxu0 %v6800
    %6826 = vmatpush.msra.mxu0 %v6799
    %6827 = vmatpush.msra.mxu0 %v6798
    %6828 = vmatpush.msra.mxu0 %v6797
    %6829 = vmatpush.msra.mxu0 %v6796
    %6830 = vmatpush.msra.mxu0 %v6795
    %6831 = vmatmul.f32.gmra.mxu0 %v6804
    %v6832 = vpop.f32.mrf.mxu0
    %v6833 = vadd.f32 0.0, %v6832
    %6834 = vmatmul.f32.gmra.mxu0 %v6807
    %v6835 = vpop.f32.mrf.mxu0
    %v6836 = vadd.f32 0.0, %v6835
    %6837 = vmatmul.f32.gmra.mxu0 %v6810
    %v6838 = vpop.f32.mrf.mxu0
    %v6839 = vadd.f32 0.0, %v6838
    %6840 = vmatmul.f32.gmra.mxu0 %v6813
    %v6841 = vpop.f32.mrf.mxu0
    %v6842 = vadd.f32 0.0, %v6841
    %6843 = vdwg.mxu0
    %v6844 = vadd.f32 %v6710, %v6833
    %v6845 = vadd.f32 %v6711, %v6836
    %v6846 = vadd.f32 %v6712, %v6839
    %v6847 = vadd.f32 %v6713, %v6842
    %v6848 = vld [vmem:[#allocation3 + $0x16] sm:$0xff]
    %v6849 = vld [vmem:[#allocation3 + $0x1e] sm:$0xff]
    %v6850 = vld [vmem:[#allocation3 + $0x26] sm:$0xff]
    %v6851 = vld [vmem:[#allocation3 + $0x2e] sm:$0xff]
    %v6852 = vld [vmem:[#allocation3 + $0x36] sm:$0xff]
    %v6853 = vld [vmem:[#allocation3 + $0x3e] sm:$0xff]
    %v6854 = vld [vmem:[#allocation3 + $0x46] sm:$0xff]
    %v6855 = vld [vmem:[#allocation3 + $0x4e] sm:$0xff]
    %v6856 = vld [vmem:[#allocation3 + $0x56] sm:$0xff]
    %v6857 = vld [vmem:[#allocation3 + $0x5e] sm:$0xff]
    %v6858 = vld [vmem:[#allocation3 + $0x66] sm:$0xff]
    %v6859 = vld [vmem:[#allocation3 + $0x6e] sm:$0xff]
    %v6860 = vld [vmem:[#allocation3 + $0x76] sm:$0xff]
    %v6861 = vld [vmem:[#allocation3 + $0x7e] sm:$0xff]
    %v6862 = vld [vmem:[#allocation3 + $0x86] sm:$0xff]
    %v6863 = vld [vmem:[#allocation3 + $0x8e] sm:$0xff]
    %v6864 = vld [vmem:[#allocation3 + $0x96] sm:$0xff]
    %v6865 = vld [vmem:[#allocation3 + $0x9e] sm:$0xff]
    %v6866 = vld [vmem:[#allocation3 + $0xa6] sm:$0xff]
    %v6867 = vld [vmem:[#allocation3 + $0xae] sm:$0xff]
    %v6868 = vld [vmem:[#allocation3 + $0xb6] sm:$0xff]
    %v6869 = vld [vmem:[#allocation3 + $0xbe] sm:$0xff]
    %6870 = vmatpush.msra.mxu0 %v6863
    %6871 = vmatpush.msra.mxu0 %v6862
    %6872 = vmatpush.msra.mxu0 %v6861
    %6873 = vmatpush.msra.mxu0 %v6860
    %6874 = vmatpush.msra.mxu0 %v6859
    %6875 = vmatpush.msra.mxu0 %v6858
    %6876 = vmatpush.msra.mxu0 %v6857
    %6877 = vmatpush.msra.mxu0 %v6856
    %6878 = vmatpush.msra.mxu0 %v6855
    %6879 = vmatpush.msra.mxu0 %v6854
    %6880 = vmatpush.msra.mxu0 %v6853
    %6881 = vmatpush.msra.mxu0 %v6852
    %6882 = vmatpush.msra.mxu0 %v6851
    %6883 = vmatpush.msra.mxu0 %v6850
    %6884 = vmatpush.msra.mxu0 %v6849
    %6885 = vmatpush.msra.mxu0 %v6848
    %6886 = vmatmul.f32.gmra.mxu0 %v5778
    %v6887 = vpop.f32.mrf.mxu0
    %v6888 = vadd.f32 0.0, %v6887
    %6889 = vmatmul.f32.gmra.mxu0 %v5780
    %v6890 = vpop.f32.mrf.mxu0
    %v6891 = vadd.f32 0.0, %v6890
    %6892 = vmatmul.f32.gmra.mxu0 %v5782
    %v6893 = vpop.f32.mrf.mxu0
    %v6894 = vadd.f32 0.0, %v6893
    %6895 = vmatmul.f32.gmra.mxu0 %v5784
    %v6896 = vpop.f32.mrf.mxu0
    %v6897 = vadd.f32 0.0, %v6896
    %6898 = vdwg.mxu0
    %6899 = vmatpush.msra.mxu0 0.0
    %6900 = vmatpush.msra.mxu0 0.0
    %6901 = vmatpush.msra.mxu0 0.0
    %6902 = vmatpush.msra.mxu0 0.0
    %6903 = vmatpush.msra.mxu0 0.0
    %6904 = vmatpush.msra.mxu0 0.0
    %6905 = vmatpush.msra.mxu0 0.0
    %6906 = vmatpush.msra.mxu0 0.0
    %6907 = vmatpush.msra.mxu0 0.0
    %6908 = vmatpush.msra.mxu0 0.0
    %6909 = vmatpush.msra.mxu0 %v6869
    %6910 = vmatpush.msra.mxu0 %v6868
    %6911 = vmatpush.msra.mxu0 %v6867
    %6912 = vmatpush.msra.mxu0 %v6866
    %6913 = vmatpush.msra.mxu0 %v6865
    %6914 = vmatpush.msra.mxu0 %v6864
    %6915 = vmatmul.f32.gmra.mxu0 %v5788
    %v6916 = vpop.f32.mrf.mxu0
    %v6917 = vadd.f32 %v6888, %v6916
    %6918 = vmatmul.f32.gmra.mxu0 %v5791
    %v6919 = vpop.f32.mrf.mxu0
    %v6920 = vadd.f32 %v6891, %v6919
    %6921 = vmatmul.f32.gmra.mxu0 %v5794
    %v6922 = vpop.f32.mrf.mxu0
    %v6923 = vadd.f32 %v6894, %v6922
    %6924 = vmatmul.f32.gmra.mxu0 %v5797
    %v6925 = vpop.f32.mrf.mxu0
    %v6926 = vadd.f32 %v6897, %v6925
    %6927 = vdwg.mxu0
    %s6928 = scalar_lea.vmem %s7, 512
    %v6929 = vld [vmem:[%s6928] sm:$0xff]
    %v6930 = vld [vmem:[%s6928 + $0x8] sm:$0xff]
    %v6931 = vld [vmem:[%s6928 + $0x10] sm:$0xff]
    %v6932 = vld [vmem:[%s6928 + $0x18] sm:$0xff]
    %v6933 = vld [vmem:[%s6928 + $0x20] sm:$0xff]
    %v6934 = vld [vmem:[%s6928 + $0x28] sm:$0xff]
    %v6935 = vld [vmem:[%s6928 + $0x30] sm:$0xff]
    %v6936 = vld [vmem:[%s6928 + $0x38] sm:$0xff]
    %v6938 = vsel %vm5710, %v6917, 0
    %v6941 = vsel %vm5710, %v6920, 0
    %v6944 = vsel %vm5710, %v6923, 0
    %v6947 = vsel %vm5710, %v6926, 0
    %6949 = vmatpush.msra.mxu0 0.0
    %6950 = vmatpush.msra.mxu0 0.0
    %6951 = vmatpush.msra.mxu0 0.0
    %6952 = vmatpush.msra.mxu0 0.0
    %6953 = vmatpush.msra.mxu0 0.0
    %6954 = vmatpush.msra.mxu0 0.0
    %6955 = vmatpush.msra.mxu0 0.0
    %6956 = vmatpush.msra.mxu0 0.0
    %6957 = vmatpush.msra.mxu0 %v6936
    %6958 = vmatpush.msra.mxu0 %v6935
    %6959 = vmatpush.msra.mxu0 %v6934
    %6960 = vmatpush.msra.mxu0 %v6933
    %6961 = vmatpush.msra.mxu0 %v6932
    %6962 = vmatpush.msra.mxu0 %v6931
    %6963 = vmatpush.msra.mxu0 %v6930
    %6964 = vmatpush.msra.mxu0 %v6929
    %6965 = vmatmul.f32.gmra.mxu0 %v6938
    %v6966 = vpop.f32.mrf.mxu0
    %v6967 = vadd.f32 0.0, %v6966
    %6968 = vmatmul.f32.gmra.mxu0 %v6941
    %v6969 = vpop.f32.mrf.mxu0
    %v6970 = vadd.f32 0.0, %v6969
    %6971 = vmatmul.f32.gmra.mxu0 %v6944
    %v6972 = vpop.f32.mrf.mxu0
    %v6973 = vadd.f32 0.0, %v6972
    %6974 = vmatmul.f32.gmra.mxu0 %v6947
    %v6975 = vpop.f32.mrf.mxu0
    %v6976 = vadd.f32 0.0, %v6975
    %6977 = vdwg.mxu0
    %v6978 = vadd.f32 %v6844, %v6967
    %v6979 = vadd.f32 %v6845, %v6970
    %v6980 = vadd.f32 %v6846, %v6973
    %v6981 = vadd.f32 %v6847, %v6976
    %v6982 = vmax.f32 %v6978, 0.0
    %v6983 = vmax.f32 %v6979, 0.0
    %v6984 = vmax.f32 %v6980, 0.0
    %v6985 = vmax.f32 %v6981, 0.0
    %v6986 = vld [vmem:[%s10] sm:$0x1]
    %v6988 = vperm.slane %v6986, 0
    %v6990 = vld [vmem:[#allocation4] sm:$0xff]
    %v6991 = vld [vmem:[#allocation4 + $0x8] sm:$0xff]
    %v6992 = vld [vmem:[#allocation4 + $0x10] sm:$0xff]
    %v6993 = vld [vmem:[#allocation4 + $0x18] sm:$0xff]
    %v6994 = vld [vmem:[#allocation4 + $0x20] sm:$0xff]
    %v6995 = vld [vmem:[#allocation4 + $0x28] sm:$0xff]
    %v6996 = vld [vmem:[#allocation4 + $0x30] sm:$0xff]
    %v6997 = vld [vmem:[#allocation4 + $0x38] sm:$0xff]
    %v6998 = vld [vmem:[#allocation4 + $0x40] sm:$0xff]
    %v6999 = vld [vmem:[#allocation4 + $0x48] sm:$0xff]
    %v7000 = vld [vmem:[#allocation4 + $0x50] sm:$0xff]
    %v7001 = vld [vmem:[#allocation4 + $0x58] sm:$0xff]
    %v7002 = vld [vmem:[#allocation4 + $0x60] sm:$0xff]
    %v7003 = vld [vmem:[#allocation4 + $0x68] sm:$0xff]
    %v7004 = vld [vmem:[#allocation4 + $0x70] sm:$0xff]
    %v7005 = vld [vmem:[#allocation4 + $0x78] sm:$0xff]
    %7006 = vmatpush.msra.mxu0 %v7005
    %7007 = vmatpush.msra.mxu0 %v7004
    %7008 = vmatpush.msra.mxu0 %v7003
    %7009 = vmatpush.msra.mxu0 %v7002
    %7010 = vmatpush.msra.mxu0 %v7001
    %7011 = vmatpush.msra.mxu0 %v7000
    %7012 = vmatpush.msra.mxu0 %v6999
    %7013 = vmatpush.msra.mxu0 %v6998
    %7014 = vmatpush.msra.mxu0 %v6997
    %7015 = vmatpush.msra.mxu0 %v6996
    %7016 = vmatpush.msra.mxu0 %v6995
    %7017 = vmatpush.msra.mxu0 %v6994
    %7018 = vmatpush.msra.mxu0 %v6993
    %7019 = vmatpush.msra.mxu0 %v6992
    %7020 = vmatpush.msra.mxu0 %v6991
    %7021 = vmatpush.msra.mxu0 %v6990
    %7022 = vmatmul.f32.gmra.mxu0 %v6982
    %v7023 = vpop.f32.mrf.mxu0
    %v7024 = vadd.f32 0.0, %v7023
    %7025 = vdwg.mxu0
    %v7026 = vadd.f32 %v6988, %v7024
    %v7027 = vld [vmem:[#allocation4 + $0x80] sm:$0xff]
    %v7028 = vld [vmem:[#allocation4 + $0x88] sm:$0xff]
    %v7029 = vld [vmem:[#allocation4 + $0x90] sm:$0xff]
    %v7030 = vld [vmem:[#allocation4 + $0x98] sm:$0xff]
    %v7031 = vld [vmem:[#allocation4 + $0xa0] sm:$0xff]
    %v7032 = vld [vmem:[#allocation4 + $0xa8] sm:$0xff]
    %v7033 = vld [vmem:[#allocation4 + $0xb0] sm:$0xff]
    %v7034 = vld [vmem:[#allocation4 + $0xb8] sm:$0xff]
    %v7035 = vld [vmem:[#allocation4 + $0xc0] sm:$0xff]
    %v7036 = vld [vmem:[#allocation4 + $0xc8] sm:$0xff]
    %v7037 = vld [vmem:[#allocation4 + $0xd0] sm:$0xff]
    %v7038 = vld [vmem:[#allocation4 + $0xd8] sm:$0xff]
    %v7039 = vld [vmem:[#allocation4 + $0xe0] sm:$0xff]
    %v7040 = vld [vmem:[#allocation4 + $0xe8] sm:$0xff]
    %v7041 = vld [vmem:[#allocation4 + $0xf0] sm:$0xff]
    %v7042 = vld [vmem:[#allocation4 + $0xf8] sm:$0xff]
    %v7044 = vrot.slane %v6982, 2
    %7046 = vmatpush.msra.mxu0 %v7042
    %7047 = vmatpush.msra.mxu0 %v7041
    %7048 = vmatpush.msra.mxu0 %v7040
    %7049 = vmatpush.msra.mxu0 %v7039
    %7050 = vmatpush.msra.mxu0 %v7038
    %7051 = vmatpush.msra.mxu0 %v7037
    %7052 = vmatpush.msra.mxu0 %v7036
    %7053 = vmatpush.msra.mxu0 %v7035
    %7054 = vmatpush.msra.mxu0 %v7034
    %7055 = vmatpush.msra.mxu0 %v7033
    %7056 = vmatpush.msra.mxu0 %v7032
    %7057 = vmatpush.msra.mxu0 %v7031
    %7058 = vmatpush.msra.mxu0 %v7030
    %7059 = vmatpush.msra.mxu0 %v7029
    %7060 = vmatpush.msra.mxu0 %v7028
    %7061 = vmatpush.msra.mxu0 %v7027
    %7062 = vmatmul.f32.gmra.mxu0 %v7044
    %v7063 = vpop.f32.mrf.mxu0
    %v7064 = vadd.f32 0.0, %v7063
    %7065 = vdwg.mxu0
    %v7066 = vadd.f32 %v7026, %v7064
    %v7067 = vld [vmem:[#allocation4 + $0x100] sm:$0xff]
    %v7068 = vld [vmem:[#allocation4 + $0x108] sm:$0xff]
    %v7069 = vld [vmem:[#allocation4 + $0x110] sm:$0xff]
    %v7070 = vld [vmem:[#allocation4 + $0x118] sm:$0xff]
    %v7071 = vld [vmem:[#allocation4 + $0x120] sm:$0xff]
    %v7072 = vld [vmem:[#allocation4 + $0x128] sm:$0xff]
    %v7073 = vld [vmem:[#allocation4 + $0x130] sm:$0xff]
    %v7074 = vld [vmem:[#allocation4 + $0x138] sm:$0xff]
    %v7075 = vld [vmem:[#allocation4 + $0x140] sm:$0xff]
    %v7076 = vld [vmem:[#allocation4 + $0x148] sm:$0xff]
    %v7077 = vld [vmem:[#allocation4 + $0x150] sm:$0xff]
    %v7078 = vld [vmem:[#allocation4 + $0x158] sm:$0xff]
    %v7079 = vld [vmem:[#allocation4 + $0x160] sm:$0xff]
    %v7080 = vld [vmem:[#allocation4 + $0x168] sm:$0xff]
    %v7081 = vld [vmem:[#allocation4 + $0x170] sm:$0xff]
    %v7082 = vld [vmem:[#allocation4 + $0x178] sm:$0xff]
    %v7083 = vrot.slane %v6982, 4
    %7085 = vmatpush.msra.mxu0 %v7082
    %7086 = vmatpush.msra.mxu0 %v7081
    %7087 = vmatpush.msra.mxu0 %v7080
    %7088 = vmatpush.msra.mxu0 %v7079
    %7089 = vmatpush.msra.mxu0 %v7078
    %7090 = vmatpush.msra.mxu0 %v7077
    %7091 = vmatpush.msra.mxu0 %v7076
    %7092 = vmatpush.msra.mxu0 %v7075
    %7093 = vmatpush.msra.mxu0 %v7074
    %7094 = vmatpush.msra.mxu0 %v7073
    %7095 = vmatpush.msra.mxu0 %v7072
    %7096 = vmatpush.msra.mxu0 %v7071
    %7097 = vmatpush.msra.mxu0 %v7070
    %7098 = vmatpush.msra.mxu0 %v7069
    %7099 = vmatpush.msra.mxu0 %v7068
    %7100 = vmatpush.msra.mxu0 %v7067
    %7101 = vmatmul.f32.gmra.mxu0 %v7083
    %v7102 = vpop.f32.mrf.mxu0
    %v7103 = vadd.f32 0.0, %v7102
    %7104 = vdwg.mxu0
    %v7105 = vadd.f32 %v7066, %v7103
    %v7106 = vld [vmem:[#allocation4 + $0x180] sm:$0xff]
    %v7107 = vld [vmem:[#allocation4 + $0x188] sm:$0xff]
    %v7108 = vld [vmem:[#allocation4 + $0x190] sm:$0xff]
    %v7109 = vld [vmem:[#allocation4 + $0x198] sm:$0xff]
    %v7110 = vld [vmem:[#allocation4 + $0x1a0] sm:$0xff]
    %v7111 = vld [vmem:[#allocation4 + $0x1a8] sm:$0xff]
    %v7112 = vld [vmem:[#allocation4 + $0x1b0] sm:$0xff]
    %v7113 = vld [vmem:[#allocation4 + $0x1b8] sm:$0xff]
    %v7114 = vld [vmem:[#allocation4 + $0x1c0] sm:$0xff]
    %v7115 = vld [vmem:[#allocation4 + $0x1c8] sm:$0xff]
    %v7116 = vld [vmem:[#allocation4 + $0x1d0] sm:$0xff]
    %v7117 = vld [vmem:[#allocation4 + $0x1d8] sm:$0xff]
    %v7118 = vld [vmem:[#allocation4 + $0x1e0] sm:$0xff]
    %v7119 = vld [vmem:[#allocation4 + $0x1e8] sm:$0xff]
    %v7120 = vld [vmem:[#allocation4 + $0x1f0] sm:$0xff]
    %v7121 = vld [vmem:[#allocation4 + $0x1f8] sm:$0xff]
    %v7122 = vrot.slane %v6982, 6
    %7124 = vmatpush.msra.mxu0 %v7121
    %7125 = vmatpush.msra.mxu0 %v7120
    %7126 = vmatpush.msra.mxu0 %v7119
    %7127 = vmatpush.msra.mxu0 %v7118
    %7128 = vmatpush.msra.mxu0 %v7117
    %7129 = vmatpush.msra.mxu0 %v7116
    %7130 = vmatpush.msra.mxu0 %v7115
    %7131 = vmatpush.msra.mxu0 %v7114
    %7132 = vmatpush.msra.mxu0 %v7113
    %7133 = vmatpush.msra.mxu0 %v7112
    %7134 = vmatpush.msra.mxu0 %v7111
    %7135 = vmatpush.msra.mxu0 %v7110
    %7136 = vmatpush.msra.mxu0 %v7109
    %7137 = vmatpush.msra.mxu0 %v7108
    %7138 = vmatpush.msra.mxu0 %v7107
    %7139 = vmatpush.msra.mxu0 %v7106
    %7140 = vmatmul.f32.gmra.mxu0 %v7122
    %v7141 = vpop.f32.mrf.mxu0
    %v7142 = vadd.f32 0.0, %v7141
    %7143 = vdwg.mxu0
    %v7144 = vadd.f32 %v7105, %v7142
    %v7145 = vld [vmem:[#allocation4 + $0x200] sm:$0xff]
    %v7146 = vld [vmem:[#allocation4 + $0x208] sm:$0xff]
    %v7147 = vld [vmem:[#allocation4 + $0x210] sm:$0xff]
    %v7148 = vld [vmem:[#allocation4 + $0x218] sm:$0xff]
    %v7149 = vld [vmem:[#allocation4 + $0x220] sm:$0xff]
    %v7150 = vld [vmem:[#allocation4 + $0x228] sm:$0xff]
    %v7151 = vld [vmem:[#allocation4 + $0x230] sm:$0xff]
    %v7152 = vld [vmem:[#allocation4 + $0x238] sm:$0xff]
    %v7153 = vld [vmem:[#allocation4 + $0x240] sm:$0xff]
    %v7154 = vld [vmem:[#allocation4 + $0x248] sm:$0xff]
    %v7155 = vld [vmem:[#allocation4 + $0x250] sm:$0xff]
    %v7156 = vld [vmem:[#allocation4 + $0x258] sm:$0xff]
    %v7157 = vld [vmem:[#allocation4 + $0x260] sm:$0xff]
    %v7158 = vld [vmem:[#allocation4 + $0x268] sm:$0xff]
    %v7159 = vld [vmem:[#allocation4 + $0x270] sm:$0xff]
    %v7160 = vld [vmem:[#allocation4 + $0x278] sm:$0xff]
    %7161 = vmatpush.msra.mxu0 %v7160
    %7162 = vmatpush.msra.mxu0 %v7159
    %7163 = vmatpush.msra.mxu0 %v7158
    %7164 = vmatpush.msra.mxu0 %v7157
    %7165 = vmatpush.msra.mxu0 %v7156
    %7166 = vmatpush.msra.mxu0 %v7155
    %7167 = vmatpush.msra.mxu0 %v7154
    %7168 = vmatpush.msra.mxu0 %v7153
    %7169 = vmatpush.msra.mxu0 %v7152
    %7170 = vmatpush.msra.mxu0 %v7151
    %7171 = vmatpush.msra.mxu0 %v7150
    %7172 = vmatpush.msra.mxu0 %v7149
    %7173 = vmatpush.msra.mxu0 %v7148
    %7174 = vmatpush.msra.mxu0 %v7147
    %7175 = vmatpush.msra.mxu0 %v7146
    %7176 = vmatpush.msra.mxu0 %v7145
    %7177 = vmatmul.f32.gmra.mxu0 %v6983
    %v7178 = vpop.f32.mrf.mxu0
    %v7179 = vadd.f32 0.0, %v7178
    %7180 = vdwg.mxu0
    %v7181 = vadd.f32 %v7144, %v7179
    %v7182 = vld [vmem:[#allocation4 + $0x280] sm:$0xff]
    %v7183 = vld [vmem:[#allocation4 + $0x288] sm:$0xff]
    %v7184 = vld [vmem:[#allocation4 + $0x290] sm:$0xff]
    %v7185 = vld [vmem:[#allocation4 + $0x298] sm:$0xff]
    %v7186 = vld [vmem:[#allocation4 + $0x2a0] sm:$0xff]
    %v7187 = vld [vmem:[#allocation4 + $0x2a8] sm:$0xff]
    %v7188 = vld [vmem:[#allocation4 + $0x2b0] sm:$0xff]
    %v7189 = vld [vmem:[#allocation4 + $0x2b8] sm:$0xff]
    %v7190 = vld [vmem:[#allocation4 + $0x2c0] sm:$0xff]
    %v7191 = vld [vmem:[#allocation4 + $0x2c8] sm:$0xff]
    %v7192 = vld [vmem:[#allocation4 + $0x2d0] sm:$0xff]
    %v7193 = vld [vmem:[#allocation4 + $0x2d8] sm:$0xff]
    %v7194 = vld [vmem:[#allocation4 + $0x2e0] sm:$0xff]
    %v7195 = vld [vmem:[#allocation4 + $0x2e8] sm:$0xff]
    %v7196 = vld [vmem:[#allocation4 + $0x2f0] sm:$0xff]
    %v7197 = vld [vmem:[#allocation4 + $0x2f8] sm:$0xff]
    %v7199 = vrot.slane %v6983, 2
    %7201 = vmatpush.msra.mxu0 %v7197
    %7202 = vmatpush.msra.mxu0 %v7196
    %7203 = vmatpush.msra.mxu0 %v7195
    %7204 = vmatpush.msra.mxu0 %v7194
    %7205 = vmatpush.msra.mxu0 %v7193
    %7206 = vmatpush.msra.mxu0 %v7192
    %7207 = vmatpush.msra.mxu0 %v7191
    %7208 = vmatpush.msra.mxu0 %v7190
    %7209 = vmatpush.msra.mxu0 %v7189
    %7210 = vmatpush.msra.mxu0 %v7188
    %7211 = vmatpush.msra.mxu0 %v7187
    %7212 = vmatpush.msra.mxu0 %v7186
    %7213 = vmatpush.msra.mxu0 %v7185
    %7214 = vmatpush.msra.mxu0 %v7184
    %7215 = vmatpush.msra.mxu0 %v7183
    %7216 = vmatpush.msra.mxu0 %v7182
    %7217 = vmatmul.f32.gmra.mxu0 %v7199
    %v7218 = vpop.f32.mrf.mxu0
    %v7219 = vadd.f32 0.0, %v7218
    %7220 = vdwg.mxu0
    %v7221 = vadd.f32 %v7181, %v7219
    %v7222 = vld [vmem:[#allocation4 + $0x300] sm:$0xff]
    %v7223 = vld [vmem:[#allocation4 + $0x308] sm:$0xff]
    %v7224 = vld [vmem:[#allocation4 + $0x310] sm:$0xff]
    %v7225 = vld [vmem:[#allocation4 + $0x318] sm:$0xff]
    %v7226 = vld [vmem:[#allocation4 + $0x320] sm:$0xff]
    %v7227 = vld [vmem:[#allocation4 + $0x328] sm:$0xff]
    %v7228 = vld [vmem:[#allocation4 + $0x330] sm:$0xff]
    %v7229 = vld [vmem:[#allocation4 + $0x338] sm:$0xff]
    %v7230 = vld [vmem:[#allocation4 + $0x340] sm:$0xff]
    %v7231 = vld [vmem:[#allocation4 + $0x348] sm:$0xff]
    %v7232 = vld [vmem:[#allocation4 + $0x350] sm:$0xff]
    %v7233 = vld [vmem:[#allocation4 + $0x358] sm:$0xff]
    %v7234 = vld [vmem:[#allocation4 + $0x360] sm:$0xff]
    %v7235 = vld [vmem:[#allocation4 + $0x368] sm:$0xff]
    %v7236 = vld [vmem:[#allocation4 + $0x370] sm:$0xff]
    %v7237 = vld [vmem:[#allocation4 + $0x378] sm:$0xff]
    %v7238 = vrot.slane %v6983, 4
    %7240 = vmatpush.msra.mxu0 %v7237
    %7241 = vmatpush.msra.mxu0 %v7236
    %7242 = vmatpush.msra.mxu0 %v7235
    %7243 = vmatpush.msra.mxu0 %v7234
    %7244 = vmatpush.msra.mxu0 %v7233
    %7245 = vmatpush.msra.mxu0 %v7232
    %7246 = vmatpush.msra.mxu0 %v7231
    %7247 = vmatpush.msra.mxu0 %v7230
    %7248 = vmatpush.msra.mxu0 %v7229
    %7249 = vmatpush.msra.mxu0 %v7228
    %7250 = vmatpush.msra.mxu0 %v7227
    %7251 = vmatpush.msra.mxu0 %v7226
    %7252 = vmatpush.msra.mxu0 %v7225
    %7253 = vmatpush.msra.mxu0 %v7224
    %7254 = vmatpush.msra.mxu0 %v7223
    %7255 = vmatpush.msra.mxu0 %v7222
    %7256 = vmatmul.f32.gmra.mxu0 %v7238
    %v7257 = vpop.f32.mrf.mxu0
    %v7258 = vadd.f32 0.0, %v7257
    %7259 = vdwg.mxu0
    %v7260 = vadd.f32 %v7221, %v7258
    %v7261 = vld [vmem:[#allocation4 + $0x380] sm:$0xff]
    %v7262 = vld [vmem:[#allocation4 + $0x388] sm:$0xff]
    %v7263 = vld [vmem:[#allocation4 + $0x390] sm:$0xff]
    %v7264 = vld [vmem:[#allocation4 + $0x398] sm:$0xff]
    %v7265 = vld [vmem:[#allocation4 + $0x3a0] sm:$0xff]
    %v7266 = vld [vmem:[#allocation4 + $0x3a8] sm:$0xff]
    %v7267 = vld [vmem:[#allocation4 + $0x3b0] sm:$0xff]
    %v7268 = vld [vmem:[#allocation4 + $0x3b8] sm:$0xff]
    %v7269 = vld [vmem:[#allocation4 + $0x3c0] sm:$0xff]
    %v7270 = vld [vmem:[#allocation4 + $0x3c8] sm:$0xff]
    %v7271 = vld [vmem:[#allocation4 + $0x3d0] sm:$0xff]
    %v7272 = vld [vmem:[#allocation4 + $0x3d8] sm:$0xff]
    %v7273 = vld [vmem:[#allocation4 + $0x3e0] sm:$0xff]
    %v7274 = vld [vmem:[#allocation4 + $0x3e8] sm:$0xff]
    %v7275 = vld [vmem:[#allocation4 + $0x3f0] sm:$0xff]
    %v7276 = vld [vmem:[#allocation4 + $0x3f8] sm:$0xff]
    %v7277 = vrot.slane %v6983, 6
    %7279 = vmatpush.msra.mxu0 %v7276
    %7280 = vmatpush.msra.mxu0 %v7275
    %7281 = vmatpush.msra.mxu0 %v7274
    %7282 = vmatpush.msra.mxu0 %v7273
    %7283 = vmatpush.msra.mxu0 %v7272
    %7284 = vmatpush.msra.mxu0 %v7271
    %7285 = vmatpush.msra.mxu0 %v7270
    %7286 = vmatpush.msra.mxu0 %v7269
    %7287 = vmatpush.msra.mxu0 %v7268
    %7288 = vmatpush.msra.mxu0 %v7267
    %7289 = vmatpush.msra.mxu0 %v7266
    %7290 = vmatpush.msra.mxu0 %v7265
    %7291 = vmatpush.msra.mxu0 %v7264
    %7292 = vmatpush.msra.mxu0 %v7263
    %7293 = vmatpush.msra.mxu0 %v7262
    %7294 = vmatpush.msra.mxu0 %v7261
    %7295 = vmatmul.f32.gmra.mxu0 %v7277
    %v7296 = vpop.f32.mrf.mxu0
    %v7297 = vadd.f32 0.0, %v7296
    %7298 = vdwg.mxu0
    %v7299 = vadd.f32 %v7260, %v7297
    %v7300 = vld [vmem:[#allocation4 + $0x400] sm:$0xff]
    %v7301 = vld [vmem:[#allocation4 + $0x408] sm:$0xff]
    %v7302 = vld [vmem:[#allocation4 + $0x410] sm:$0xff]
    %v7303 = vld [vmem:[#allocation4 + $0x418] sm:$0xff]
    %v7304 = vld [vmem:[#allocation4 + $0x420] sm:$0xff]
    %v7305 = vld [vmem:[#allocation4 + $0x428] sm:$0xff]
    %v7306 = vld [vmem:[#allocation4 + $0x430] sm:$0xff]
    %v7307 = vld [vmem:[#allocation4 + $0x438] sm:$0xff]
    %v7308 = vld [vmem:[#allocation4 + $0x440] sm:$0xff]
    %v7309 = vld [vmem:[#allocation4 + $0x448] sm:$0xff]
    %v7310 = vld [vmem:[#allocation4 + $0x450] sm:$0xff]
    %v7311 = vld [vmem:[#allocation4 + $0x458] sm:$0xff]
    %v7312 = vld [vmem:[#allocation4 + $0x460] sm:$0xff]
    %v7313 = vld [vmem:[#allocation4 + $0x468] sm:$0xff]
    %v7314 = vld [vmem:[#allocation4 + $0x470] sm:$0xff]
    %v7315 = vld [vmem:[#allocation4 + $0x478] sm:$0xff]
    %7316 = vmatpush.msra.mxu0 %v7315
    %7317 = vmatpush.msra.mxu0 %v7314
    %7318 = vmatpush.msra.mxu0 %v7313
    %7319 = vmatpush.msra.mxu0 %v7312
    %7320 = vmatpush.msra.mxu0 %v7311
    %7321 = vmatpush.msra.mxu0 %v7310
    %7322 = vmatpush.msra.mxu0 %v7309
    %7323 = vmatpush.msra.mxu0 %v7308
    %7324 = vmatpush.msra.mxu0 %v7307
    %7325 = vmatpush.msra.mxu0 %v7306
    %7326 = vmatpush.msra.mxu0 %v7305
    %7327 = vmatpush.msra.mxu0 %v7304
    %7328 = vmatpush.msra.mxu0 %v7303
    %7329 = vmatpush.msra.mxu0 %v7302
    %7330 = vmatpush.msra.mxu0 %v7301
    %7331 = vmatpush.msra.mxu0 %v7300
    %7332 = vmatmul.f32.gmra.mxu0 %v6984
    %v7333 = vpop.f32.mrf.mxu0
    %v7334 = vadd.f32 0.0, %v7333
    %7335 = vdwg.mxu0
    %v7336 = vadd.f32 %v7299, %v7334
    %v7337 = vld [vmem:[#allocation4 + $0x480] sm:$0xff]
    %v7338 = vld [vmem:[#allocation4 + $0x488] sm:$0xff]
    %v7339 = vld [vmem:[#allocation4 + $0x490] sm:$0xff]
    %v7340 = vld [vmem:[#allocation4 + $0x498] sm:$0xff]
    %v7341 = vld [vmem:[#allocation4 + $0x4a0] sm:$0xff]
    %v7342 = vld [vmem:[#allocation4 + $0x4a8] sm:$0xff]
    %v7343 = vld [vmem:[#allocation4 + $0x4b0] sm:$0xff]
    %v7344 = vld [vmem:[#allocation4 + $0x4b8] sm:$0xff]
    %v7345 = vld [vmem:[#allocation4 + $0x4c0] sm:$0xff]
    %v7346 = vld [vmem:[#allocation4 + $0x4c8] sm:$0xff]
    %v7347 = vld [vmem:[#allocation4 + $0x4d0] sm:$0xff]
    %v7348 = vld [vmem:[#allocation4 + $0x4d8] sm:$0xff]
    %v7349 = vld [vmem:[#allocation4 + $0x4e0] sm:$0xff]
    %v7350 = vld [vmem:[#allocation4 + $0x4e8] sm:$0xff]
    %v7351 = vld [vmem:[#allocation4 + $0x4f0] sm:$0xff]
    %v7352 = vld [vmem:[#allocation4 + $0x4f8] sm:$0xff]
    %v7354 = vrot.slane %v6984, 2
    %7356 = vmatpush.msra.mxu0 %v7352
    %7357 = vmatpush.msra.mxu0 %v7351
    %7358 = vmatpush.msra.mxu0 %v7350
    %7359 = vmatpush.msra.mxu0 %v7349
    %7360 = vmatpush.msra.mxu0 %v7348
    %7361 = vmatpush.msra.mxu0 %v7347
    %7362 = vmatpush.msra.mxu0 %v7346
    %7363 = vmatpush.msra.mxu0 %v7345
    %7364 = vmatpush.msra.mxu0 %v7344
    %7365 = vmatpush.msra.mxu0 %v7343
    %7366 = vmatpush.msra.mxu0 %v7342
    %7367 = vmatpush.msra.mxu0 %v7341
    %7368 = vmatpush.msra.mxu0 %v7340
    %7369 = vmatpush.msra.mxu0 %v7339
    %7370 = vmatpush.msra.mxu0 %v7338
    %7371 = vmatpush.msra.mxu0 %v7337
    %7372 = vmatmul.f32.gmra.mxu0 %v7354
    %v7373 = vpop.f32.mrf.mxu0
    %v7374 = vadd.f32 0.0, %v7373
    %7375 = vdwg.mxu0
    %v7376 = vadd.f32 %v7336, %v7374
    %v7377 = vld [vmem:[#allocation4 + $0x500] sm:$0xff]
    %v7378 = vld [vmem:[#allocation4 + $0x508] sm:$0xff]
    %v7379 = vld [vmem:[#allocation4 + $0x510] sm:$0xff]
    %v7380 = vld [vmem:[#allocation4 + $0x518] sm:$0xff]
    %v7381 = vld [vmem:[#allocation4 + $0x520] sm:$0xff]
    %v7382 = vld [vmem:[#allocation4 + $0x528] sm:$0xff]
    %v7383 = vld [vmem:[#allocation4 + $0x530] sm:$0xff]
    %v7384 = vld [vmem:[#allocation4 + $0x538] sm:$0xff]
    %v7385 = vld [vmem:[#allocation4 + $0x540] sm:$0xff]
    %v7386 = vld [vmem:[#allocation4 + $0x548] sm:$0xff]
    %v7387 = vld [vmem:[#allocation4 + $0x550] sm:$0xff]
    %v7388 = vld [vmem:[#allocation4 + $0x558] sm:$0xff]
    %v7389 = vld [vmem:[#allocation4 + $0x560] sm:$0xff]
    %v7390 = vld [vmem:[#allocation4 + $0x568] sm:$0xff]
    %v7391 = vld [vmem:[#allocation4 + $0x570] sm:$0xff]
    %v7392 = vld [vmem:[#allocation4 + $0x578] sm:$0xff]
    %v7393 = vrot.slane %v6984, 4
    %7395 = vmatpush.msra.mxu0 %v7392
    %7396 = vmatpush.msra.mxu0 %v7391
    %7397 = vmatpush.msra.mxu0 %v7390
    %7398 = vmatpush.msra.mxu0 %v7389
    %7399 = vmatpush.msra.mxu0 %v7388
    %7400 = vmatpush.msra.mxu0 %v7387
    %7401 = vmatpush.msra.mxu0 %v7386
    %7402 = vmatpush.msra.mxu0 %v7385
    %7403 = vmatpush.msra.mxu0 %v7384
    %7404 = vmatpush.msra.mxu0 %v7383
    %7405 = vmatpush.msra.mxu0 %v7382
    %7406 = vmatpush.msra.mxu0 %v7381
    %7407 = vmatpush.msra.mxu0 %v7380
    %7408 = vmatpush.msra.mxu0 %v7379
    %7409 = vmatpush.msra.mxu0 %v7378
    %7410 = vmatpush.msra.mxu0 %v7377
    %7411 = vmatmul.f32.gmra.mxu0 %v7393
    %v7412 = vpop.f32.mrf.mxu0
    %v7413 = vadd.f32 0.0, %v7412
    %7414 = vdwg.mxu0
    %v7415 = vadd.f32 %v7376, %v7413
    %v7416 = vld [vmem:[#allocation4 + $0x580] sm:$0xff]
    %v7417 = vld [vmem:[#allocation4 + $0x588] sm:$0xff]
    %v7418 = vld [vmem:[#allocation4 + $0x590] sm:$0xff]
    %v7419 = vld [vmem:[#allocation4 + $0x598] sm:$0xff]
    %v7420 = vld [vmem:[#allocation4 + $0x5a0] sm:$0xff]
    %v7421 = vld [vmem:[#allocation4 + $0x5a8] sm:$0xff]
    %v7422 = vld [vmem:[#allocation4 + $0x5b0] sm:$0xff]
    %v7423 = vld [vmem:[#allocation4 + $0x5b8] sm:$0xff]
    %v7424 = vld [vmem:[#allocation4 + $0x5c0] sm:$0xff]
    %v7425 = vld [vmem:[#allocation4 + $0x5c8] sm:$0xff]
    %v7426 = vld [vmem:[#allocation4 + $0x5d0] sm:$0xff]
    %v7427 = vld [vmem:[#allocation4 + $0x5d8] sm:$0xff]
    %v7428 = vld [vmem:[#allocation4 + $0x5e0] sm:$0xff]
    %v7429 = vld [vmem:[#allocation4 + $0x5e8] sm:$0xff]
    %v7430 = vld [vmem:[#allocation4 + $0x5f0] sm:$0xff]
    %v7431 = vld [vmem:[#allocation4 + $0x5f8] sm:$0xff]
    %v7432 = vrot.slane %v6984, 6
    %7434 = vmatpush.msra.mxu0 %v7431
    %7435 = vmatpush.msra.mxu0 %v7430
    %7436 = vmatpush.msra.mxu0 %v7429
    %7437 = vmatpush.msra.mxu0 %v7428
    %7438 = vmatpush.msra.mxu0 %v7427
    %7439 = vmatpush.msra.mxu0 %v7426
    %7440 = vmatpush.msra.mxu0 %v7425
    %7441 = vmatpush.msra.mxu0 %v7424
    %7442 = vmatpush.msra.mxu0 %v7423
    %7443 = vmatpush.msra.mxu0 %v7422
    %7444 = vmatpush.msra.mxu0 %v7421
    %7445 = vmatpush.msra.mxu0 %v7420
    %7446 = vmatpush.msra.mxu0 %v7419
    %7447 = vmatpush.msra.mxu0 %v7418
    %7448 = vmatpush.msra.mxu0 %v7417
    %7449 = vmatpush.msra.mxu0 %v7416
    %7450 = vmatmul.f32.gmra.mxu0 %v7432
    %v7451 = vpop.f32.mrf.mxu0
    %v7452 = vadd.f32 0.0, %v7451
    %7453 = vdwg.mxu0
    %v7454 = vadd.f32 %v7415, %v7452
    %v7455 = vld [vmem:[#allocation4 + $0x600] sm:$0xff]
    %v7456 = vld [vmem:[#allocation4 + $0x608] sm:$0xff]
    %v7457 = vld [vmem:[#allocation4 + $0x610] sm:$0xff]
    %v7458 = vld [vmem:[#allocation4 + $0x618] sm:$0xff]
    %v7459 = vld [vmem:[#allocation4 + $0x620] sm:$0xff]
    %v7460 = vld [vmem:[#allocation4 + $0x628] sm:$0xff]
    %v7461 = vld [vmem:[#allocation4 + $0x630] sm:$0xff]
    %v7462 = vld [vmem:[#allocation4 + $0x638] sm:$0xff]
    %v7463 = vld [vmem:[#allocation4 + $0x640] sm:$0xff]
    %v7464 = vld [vmem:[#allocation4 + $0x648] sm:$0xff]
    %v7465 = vld [vmem:[#allocation4 + $0x650] sm:$0xff]
    %v7466 = vld [vmem:[#allocation4 + $0x658] sm:$0xff]
    %v7467 = vld [vmem:[#allocation4 + $0x660] sm:$0xff]
    %v7468 = vld [vmem:[#allocation4 + $0x668] sm:$0xff]
    %v7469 = vld [vmem:[#allocation4 + $0x670] sm:$0xff]
    %v7470 = vld [vmem:[#allocation4 + $0x678] sm:$0xff]
    %7471 = vmatpush.msra.mxu0 %v7470
    %7472 = vmatpush.msra.mxu0 %v7469
    %7473 = vmatpush.msra.mxu0 %v7468
    %7474 = vmatpush.msra.mxu0 %v7467
    %7475 = vmatpush.msra.mxu0 %v7466
    %7476 = vmatpush.msra.mxu0 %v7465
    %7477 = vmatpush.msra.mxu0 %v7464
    %7478 = vmatpush.msra.mxu0 %v7463
    %7479 = vmatpush.msra.mxu0 %v7462
    %7480 = vmatpush.msra.mxu0 %v7461
    %7481 = vmatpush.msra.mxu0 %v7460
    %7482 = vmatpush.msra.mxu0 %v7459
    %7483 = vmatpush.msra.mxu0 %v7458
    %7484 = vmatpush.msra.mxu0 %v7457
    %7485 = vmatpush.msra.mxu0 %v7456
    %7486 = vmatpush.msra.mxu0 %v7455
    %7487 = vmatmul.f32.gmra.mxu0 %v6985
    %v7488 = vpop.f32.mrf.mxu0
    %v7489 = vadd.f32 0.0, %v7488
    %7490 = vdwg.mxu0
    %v7491 = vadd.f32 %v7454, %v7489
    %v7492 = vld [vmem:[#allocation4 + $0x680] sm:$0xff]
    %v7493 = vld [vmem:[#allocation4 + $0x688] sm:$0xff]
    %v7494 = vld [vmem:[#allocation4 + $0x690] sm:$0xff]
    %v7495 = vld [vmem:[#allocation4 + $0x698] sm:$0xff]
    %v7496 = vld [vmem:[#allocation4 + $0x6a0] sm:$0xff]
    %v7497 = vld [vmem:[#allocation4 + $0x6a8] sm:$0xff]
    %v7498 = vld [vmem:[#allocation4 + $0x6b0] sm:$0xff]
    %v7499 = vld [vmem:[#allocation4 + $0x6b8] sm:$0xff]
    %v7500 = vld [vmem:[#allocation4 + $0x6c0] sm:$0xff]
    %v7501 = vld [vmem:[#allocation4 + $0x6c8] sm:$0xff]
    %v7502 = vld [vmem:[#allocation4 + $0x6d0] sm:$0xff]
    %v7503 = vld [vmem:[#allocation4 + $0x6d8] sm:$0xff]
    %v7504 = vld [vmem:[#allocation4 + $0x6e0] sm:$0xff]
    %v7505 = vld [vmem:[#allocation4 + $0x6e8] sm:$0xff]
    %v7506 = vld [vmem:[#allocation4 + $0x6f0] sm:$0xff]
    %v7507 = vld [vmem:[#allocation4 + $0x6f8] sm:$0xff]
    %v7509 = vrot.slane %v6985, 2
    %7511 = vmatpush.msra.mxu0 %v7507
    %7512 = vmatpush.msra.mxu0 %v7506
    %7513 = vmatpush.msra.mxu0 %v7505
    %7514 = vmatpush.msra.mxu0 %v7504
    %7515 = vmatpush.msra.mxu0 %v7503
    %7516 = vmatpush.msra.mxu0 %v7502
    %7517 = vmatpush.msra.mxu0 %v7501
    %7518 = vmatpush.msra.mxu0 %v7500
    %7519 = vmatpush.msra.mxu0 %v7499
    %7520 = vmatpush.msra.mxu0 %v7498
    %7521 = vmatpush.msra.mxu0 %v7497
    %7522 = vmatpush.msra.mxu0 %v7496
    %7523 = vmatpush.msra.mxu0 %v7495
    %7524 = vmatpush.msra.mxu0 %v7494
    %7525 = vmatpush.msra.mxu0 %v7493
    %7526 = vmatpush.msra.mxu0 %v7492
    %7527 = vmatmul.f32.gmra.mxu0 %v7509
    %v7528 = vpop.f32.mrf.mxu0
    %v7529 = vadd.f32 0.0, %v7528
    %7530 = vdwg.mxu0
    %v7531 = vadd.f32 %v7491, %v7529
    %v7532 = vld [vmem:[#allocation4 + $0x700] sm:$0xff]
    %v7533 = vld [vmem:[#allocation4 + $0x708] sm:$0xff]
    %v7534 = vld [vmem:[#allocation4 + $0x710] sm:$0xff]
    %v7535 = vld [vmem:[#allocation4 + $0x718] sm:$0xff]
    %v7536 = vld [vmem:[#allocation4 + $0x720] sm:$0xff]
    %v7537 = vld [vmem:[#allocation4 + $0x728] sm:$0xff]
    %v7538 = vld [vmem:[#allocation4 + $0x730] sm:$0xff]
    %v7539 = vld [vmem:[#allocation4 + $0x738] sm:$0xff]
    %v7540 = vld [vmem:[#allocation4 + $0x740] sm:$0xff]
    %v7541 = vld [vmem:[#allocation4 + $0x748] sm:$0xff]
    %v7542 = vld [vmem:[#allocation4 + $0x750] sm:$0xff]
    %v7543 = vld [vmem:[#allocation4 + $0x758] sm:$0xff]
    %v7544 = vld [vmem:[#allocation4 + $0x760] sm:$0xff]
    %v7545 = vld [vmem:[#allocation4 + $0x768] sm:$0xff]
    %v7546 = vld [vmem:[#allocation4 + $0x770] sm:$0xff]
    %v7547 = vld [vmem:[#allocation4 + $0x778] sm:$0xff]
    %v7548 = vrot.slane %v6985, 4
    %7550 = vmatpush.msra.mxu0 %v7547
    %7551 = vmatpush.msra.mxu0 %v7546
    %7552 = vmatpush.msra.mxu0 %v7545
    %7553 = vmatpush.msra.mxu0 %v7544
    %7554 = vmatpush.msra.mxu0 %v7543
    %7555 = vmatpush.msra.mxu0 %v7542
    %7556 = vmatpush.msra.mxu0 %v7541
    %7557 = vmatpush.msra.mxu0 %v7540
    %7558 = vmatpush.msra.mxu0 %v7539
    %7559 = vmatpush.msra.mxu0 %v7538
    %7560 = vmatpush.msra.mxu0 %v7537
    %7561 = vmatpush.msra.mxu0 %v7536
    %7562 = vmatpush.msra.mxu0 %v7535
    %7563 = vmatpush.msra.mxu0 %v7534
    %7564 = vmatpush.msra.mxu0 %v7533
    %7565 = vmatpush.msra.mxu0 %v7532
    %7566 = vmatmul.f32.gmra.mxu0 %v7548
    %v7567 = vpop.f32.mrf.mxu0
    %v7568 = vadd.f32 0.0, %v7567
    %7569 = vdwg.mxu0
    %v7570 = vadd.f32 %v7531, %v7568
    %v7571 = vld [vmem:[#allocation4 + $0x780] sm:$0xff]
    %v7572 = vld [vmem:[#allocation4 + $0x788] sm:$0xff]
    %v7573 = vld [vmem:[#allocation4 + $0x790] sm:$0xff]
    %v7574 = vld [vmem:[#allocation4 + $0x798] sm:$0xff]
    %v7575 = vld [vmem:[#allocation4 + $0x7a0] sm:$0xff]
    %v7576 = vld [vmem:[#allocation4 + $0x7a8] sm:$0xff]
    %v7577 = vld [vmem:[#allocation4 + $0x7b0] sm:$0xff]
    %v7578 = vld [vmem:[#allocation4 + $0x7b8] sm:$0xff]
    %v7579 = vld [vmem:[#allocation4 + $0x7c0] sm:$0xff]
    %v7580 = vld [vmem:[#allocation4 + $0x7c8] sm:$0xff]
    %v7581 = vld [vmem:[#allocation4 + $0x7d0] sm:$0xff]
    %v7582 = vld [vmem:[#allocation4 + $0x7d8] sm:$0xff]
    %v7583 = vld [vmem:[#allocation4 + $0x7e0] sm:$0xff]
    %v7584 = vld [vmem:[#allocation4 + $0x7e8] sm:$0xff]
    %v7585 = vld [vmem:[#allocation4 + $0x7f0] sm:$0xff]
    %v7586 = vld [vmem:[#allocation4 + $0x7f8] sm:$0xff]
    %v7587 = vrot.slane %v6985, 6
    %7589 = vmatpush.msra.mxu0 %v7586
    %7590 = vmatpush.msra.mxu0 %v7585
    %7591 = vmatpush.msra.mxu0 %v7584
    %7592 = vmatpush.msra.mxu0 %v7583
    %7593 = vmatpush.msra.mxu0 %v7582
    %7594 = vmatpush.msra.mxu0 %v7581
    %7595 = vmatpush.msra.mxu0 %v7580
    %7596 = vmatpush.msra.mxu0 %v7579
    %7597 = vmatpush.msra.mxu0 %v7578
    %7598 = vmatpush.msra.mxu0 %v7577
    %7599 = vmatpush.msra.mxu0 %v7576
    %7600 = vmatpush.msra.mxu0 %v7575
    %7601 = vmatpush.msra.mxu0 %v7574
    %7602 = vmatpush.msra.mxu0 %v7573
    %7603 = vmatpush.msra.mxu0 %v7572
    %7604 = vmatpush.msra.mxu0 %v7571
    %7605 = vmatmul.f32.gmra.mxu0 %v7587
    %v7606 = vpop.f32.mrf.mxu0
    %v7607 = vadd.f32 0.0, %v7606
    %7608 = vdwg.mxu0
    %v7609 = vadd.f32 %v7570, %v7607
    %v7610 = vmax.f32 %v7609, 0.0
    %v7611 = vld [vmem:[%s11] sm:$0xff]
    %v7612 = vld [vmem:[%s11 + $0x8] sm:$0xff]
    %v7613 = vld [vmem:[%s11 + $0x10] sm:$0xff]
    %v7614 = vld [vmem:[%s11 + $0x18] sm:$0xff]
    %v7615 = vld [vmem:[%s11 + $0x20] sm:$0xff]
    %v7616 = vld [vmem:[%s11 + $0x28] sm:$0xff]
    %v7617 = vld [vmem:[%s11 + $0x30] sm:$0xff]
    %v7618 = vld [vmem:[%s11 + $0x38] sm:$0xff]
    %v7619 = vld [vmem:[%s11 + $0x40] sm:$0xff]
    %v7620 = vld [vmem:[%s11 + $0x48] sm:$0xff]
    %v7621 = vld [vmem:[%s11 + $0x50] sm:$0xff]
    %v7622 = vld [vmem:[%s11 + $0x58] sm:$0xff]
    %v7623 = vld [vmem:[%s11 + $0x60] sm:$0xff]
    %v7624 = vld [vmem:[%s11 + $0x68] sm:$0xff]
    %v7625 = vld [vmem:[%s11 + $0x70] sm:$0xff]
    %v7626 = vld [vmem:[%s11 + $0x78] sm:$0xff]
    %v7627 = vld [vmem:[%s12] sm:$0x1]
    %v7629 = vperm.slane %v7627, 0
    %7631 = vmatpush.msra.mxu0 %v7626
    %7632 = vmatpush.msra.mxu0 %v7625
    %7633 = vmatpush.msra.mxu0 %v7624
    %7634 = vmatpush.msra.mxu0 %v7623
    %7635 = vmatpush.msra.mxu0 %v7622
    %7636 = vmatpush.msra.mxu0 %v7621
    %7637 = vmatpush.msra.mxu0 %v7620
    %7638 = vmatpush.msra.mxu0 %v7619
    %7639 = vmatpush.msra.mxu0 %v7618
    %7640 = vmatpush.msra.mxu0 %v7617
    %7641 = vmatpush.msra.mxu0 %v7616
    %7642 = vmatpush.msra.mxu0 %v7615
    %7643 = vmatpush.msra.mxu0 %v7614
    %7644 = vmatpush.msra.mxu0 %v7613
    %7645 = vmatpush.msra.mxu0 %v7612
    %7646 = vmatpush.msra.mxu0 %v7611
    %7647 = vmatmul.f32.gmra.mxu0 %v7610
    %v7648 = vpop.f32.mrf.mxu0
    %v7649 = vadd.f32 %v7629, %v7648
    %7650 = vdwg.mxu0
    %vm7651 = vcmask 74752
    %v7652 = vsel %vm7651, %v7649, -inf
    %7653 = vmax.xlane.f32.xlu0 %v7652
    %v7654 = vpop.xlane.xlu0 %7653
    %v7655 = vsub.f32 %v7649, %v7654
    %v7656 = vmul.f32 %v7655, 1.442695
    %v7657 = vpow.pop %v7656
    %v7658 = vsel %vm7651, %v7657, 0.0
    %7659 = vadd.xlane.f32.xlu0 %v7658
    %v7660 = vpop.xlane.xlu0 %7659
    %v7661 = vlog2.pop %v7660
    %v7662 = vmul.f32 %v7661, 0.6931472
    %v7663 = vsub.f32 %v7655, %v7662
    %7664 = vst.msk [vmem:[#allocation7] sm:$0x3] %vm7651, %v7663
    // Predicated region
    $region58: #{net_forward.1} parent=1 // pred_check
      _
    $region59: #{net_forward.1} parent=1 // pred_check_branch
      %7666 = sbr.rel (0) target = $region61
    $region60: #{net_forward.1} parent=1 // pred_region
      %7668 = vsyncadd [#allocation6], 0
      %s7670 = sshll.u32 [#allocation7], 4
      %s7671 = int_to_ptr.vmem [resolvable:$true] %s7670
      %s7672 = sshll.u32 %s13, 4
      %s7673 = int_to_ptr.hbm [resolvable:$true] %s7672
      %7675 = dma.vmem_to_hbm [thread:$0]  %s7671, 32, %s7673, [#allocation6]
    $region61: #{net_forward.1} parent=1 // pred_fallthru
      _
    // Predicated region
    $region62: #{net_forward.1} parent=1 // pred_check
      _
    $region63: #{net_forward.1} parent=1 // pred_check_branch
      %7677 = sbr.rel (0) target = $region65
    $region64: #{net_forward.1} parent=1 // pred_region
      %7679 = dma.done [#allocation6], 32
    $region65: #{net_forward.1} parent=1 // pred_fallthru
      _
    %7680 = vsyncpa [#allocation5], 1
    %7681 = vsyncpa [#allocation6], 1

</llo_original>
